<compile_context>
chip_gen: v7x
topology: tpu7x:2x2x1
jax: 0.10.0
libtpu: 0.0.40
codegen_flags: <defaults>
</compile_context>

<pallas_src>
import functools

import jax
import jax.numpy as jnp
from jax.experimental import pallas as pl
from jax.experimental.pallas import tpu as pltpu  # noqa: F401  (no scratch needed at these shapes)


# ----------------------------------------------------------------------------
# Fused kernel: all LSTM layers + final projection in one invocation.
# ----------------------------------------------------------------------------
def _make_fused_kernel(T, B, H, num_layers):
    def kernel(*args):
        # args = (x, [wih, whh, bias] * L, wproj, bproj, hid_out, proj_out)
        x_ref = args[0]
        layer_refs = args[1:1 + 3 * num_layers]
        wproj_ref, bproj_ref = args[1 + 3 * num_layers:3 + 3 * num_layers]
        hid_out_ref, proj_out_ref = args[3 + 3 * num_layers:]

        f32 = jnp.float32
        highest = jax.lax.Precision.HIGHEST

        # g-gate lane mask over the [B, 4H] gate slab (PyTorch order i,f,g,o
        # -> g occupies lanes [2H, 3H)).  Hoisted once, reused every step.
        lane = jax.lax.broadcasted_iota(jnp.int32, (B, 4 * H), dimension=1)
        g_lanes = (lane >= 2 * H) & (lane < 3 * H)
        # Pre-scale so a single sigmoid pass also yields tanh on g lanes.
        pre_scale = jnp.where(g_lanes, 2.0, 1.0).astype(f32)

        # Load all weights / biases once (they stay resident as values).
        wih = [layer_refs[3 * l][...] for l in range(num_layers)]       # l=0 bf16, else f32
        whh = [layer_refs[3 * l + 1][...] for l in range(num_layers)]   # f32 [H, 4H]
        bias = [layer_refs[3 * l + 2][...] for l in range(num_layers)]  # f32 [1, 4H]

        # Hoisted non-recurrent projection for layer 0 over ALL timesteps at
        # once: lane-dense [T*B, D_in] x [D_in, 4H] bf16 MXU matmul, f32 acc.
        gx0 = jnp.dot(x_ref[...].astype(jnp.bfloat16), wih[0],
                      preferred_element_type=f32) + bias[0]              # [T*B, 4H]

        h = [jnp.zeros((B, H), f32) for _ in range(num_layers)]
        c = [jnp.zeros((B, H), f32) for _ in range(num_layers)]
        outs = []  # last-layer h_t, time-major

        # T, L are tiny & static: fully unrolled, time-outer / layer-inner
        # (wavefront).  (t, l) and (t+1, l-1) are independent -> the scheduler
        # overlaps them; critical path ~ T + L - 1 dependent stages.
        for t in range(T):
            for l in range(num_layers):
                if l == 0:
                    gx_t = gx0[t * B:(t + 1) * B, :]                     # free vreg slice
                else:
                    # Per-step input projection from the fresh h_t of layer
                    # l-1; sits on the recurrence path -> keep f32 precision.
                    gx_t = jnp.dot(h[l - 1], wih[l],
                                   preferred_element_type=f32,
                                   precision=highest) + bias[l]
                gates = gx_t + jnp.dot(h[l], whh[l],
                                       preferred_element_type=f32,
                                       precision=highest)                # [B, 4H]
                # One sigmoid pass over the whole slab; g lanes become tanh
                # via tanh(x) = 2*sigmoid(2x) - 1 (VPU fix-up).
                s = jax.nn.sigmoid(gates * pre_scale)
                act = jnp.where(g_lanes, 2.0 * s - 1.0, s)
                i_g = act[:, 0 * H:1 * H]
                f_g = act[:, 1 * H:2 * H]
                g_g = act[:, 2 * H:3 * H]
                o_g = act[:, 3 * H:4 * H]
                c[l] = f_g * c[l] + i_g * g_g
                h[l] = o_g * jnp.tanh(c[l])
            outs.append(h[num_layers - 1])
            # dropout=0.0 in the reference config -> no inter-layer dropout.

        # Single full-slab stores of both outputs.
        hid = jnp.concatenate(outs, axis=0)                              # [T*B, H]
        hid_out_ref[...] = hid
        proj_out_ref[...] = (
            jnp.dot(hid.astype(jnp.bfloat16), wproj_ref[...],
                    preferred_element_type=f32) + bproj_ref[...]
        )
        # TODO(synk): if bundle dumps show Whh re-pushed to the MXU every step,
        # drive it with pltpu.matmul_push_rhs / matmul_acc_lhs / matmul_pop to
        # keep it resident across the unrolled time loop (MRB accumulate on v7x).

    return kernel


# ----------------------------------------------------------------------------
# Parameter init (deterministic, matches PyTorch LSTM/Linear shapes)
# ----------------------------------------------------------------------------
def init_params(key, input_size, hidden_size, num_layers):
    params = {"lstm": [], "proj": {}}
    H = hidden_size
    bound = 1.0 / jnp.sqrt(jnp.float32(H))
    for layer in range(num_layers):
        d_in = input_size if layer == 0 else H
        key, k1, k2, k3, k4 = jax.random.split(key, 5)
        w_ih = jax.random.uniform(k1, (4 * H, d_in), jnp.float32, -bound, bound)
        w_hh = jax.random.uniform(k2, (4 * H, H), jnp.float32, -bound, bound)
        b_ih = jax.random.uniform(k3, (4 * H,), jnp.float32, -bound, bound)
        b_hh = jax.random.uniform(k4, (4 * H,), jnp.float32, -bound, bound)
        params["lstm"].append({
            "wih_t": w_ih.T,                                 # [d_in, 4H]
            "whh_t": w_hh.T,                                 # [H, 4H]
            "bias": (b_ih + b_hh).reshape(1, 4 * H),         # [1, 4H]
        })
    key, k1, k2 = jax.random.split(key, 3)
    w_proj = jax.random.uniform(k1, (input_size, H), jnp.float32, -bound, bound)
    b_proj = jax.random.uniform(k2, (input_size,), jnp.float32, -bound, bound)
    params["proj"] = {"w_t": w_proj.T, "b": b_proj.reshape(1, input_size)}
    return params


# ----------------------------------------------------------------------------
# Forward pass:  (hidden, proj(hidden))  — mirrors ApcLstm.forward
# ----------------------------------------------------------------------------
@functools.partial(jax.jit, static_argnames=("hidden_size",))
def apc_lstm_forward(feat, params, hidden_size):
    # feat: [B, T, input_size] (batch_first)
    B, T, D_in = feat.shape
    H = hidden_size
    num_layers = len(params["lstm"])

    # Time-major flattening; a tiny XLA transpose fused inside this jit.
    x_tm = jnp.transpose(feat, (1, 0, 2)).reshape(T * B, D_in).astype(jnp.float32)

    inputs = [x_tm]
    in_specs = [pl.BlockSpec((T * B, D_in), lambda: (0, 0))]
    for idx, lp in enumerate(params["lstm"]):
        # Layer-0 x@Wih is hoisted and fed to the MXU in bf16; everything on
        # the serial recurrence path (Whh, layer>0 Wih) stays f32.
        wih = lp["wih_t"].astype(jnp.bfloat16 if idx == 0 else jnp.float32)
        whh = lp["whh_t"].astype(jnp.float32)
        bias = lp["bias"].astype(jnp.float32)
        inputs += [wih, whh, bias]
        in_specs += [
            pl.BlockSpec(wih.shape, lambda: (0, 0)),
            pl.BlockSpec(whh.shape, lambda: (0, 0)),
            pl.BlockSpec(bias.shape, lambda: (0, 0)),
        ]
    wproj = params["proj"]["w_t"].astype(jnp.bfloat16)   # [H, D_in]
    bproj = params["proj"]["b"].astype(jnp.float32)      # [1, D_in]
    inputs += [wproj, bproj]
    in_specs += [
        pl.BlockSpec(wproj.shape, lambda: (0, 0)),
        pl.BlockSpec(bproj.shape, lambda: (0, 0)),
    ]

    kernel = _make_fused_kernel(T, B, H, num_layers)
    hid_flat, proj_flat = pl.pallas_call(
        kernel,
        out_shape=(
            jax.ShapeDtypeStruct((T * B, H), jnp.float32),
            jax.ShapeDtypeStruct((T * B, D_in), jnp.float32),
        ),
        in_specs=in_specs,
        out_specs=(
            pl.BlockSpec((T * B, H), lambda: (0, 0)),
            pl.BlockSpec((T * B, D_in), lambda: (0, 0)),
        ),
    )(*inputs)

    hidden = hid_flat.reshape(T, B, H).transpose(1, 0, 2)      # [B, T, H]
    proj = proj_flat.reshape(T, B, D_in).transpose(1, 0, 2)    # [B, T, D_in]
    return hidden, proj


if __name__ == "__main__":
    INPUT_SIZE = 16
    HIDDEN_SIZE = 32
    NUM_LAYERS = 2
    B, T = 2, 8

    key = jax.random.PRNGKey(0)
    key, feat_key, param_key = jax.random.split(key, 3)

    feat = jax.random.normal(feat_key, (B, T, INPUT_SIZE), dtype=jnp.float32)
    params = init_params(param_key, INPUT_SIZE, HIDDEN_SIZE, NUM_LAYERS)

    hidden, proj = apc_lstm_forward(feat, params, HIDDEN_SIZE)
    jax.block_until_ready((hidden, proj))

    assert hidden.shape == (B, T, HIDDEN_SIZE)
    assert proj.shape == (B, T, INPUT_SIZE)
    assert bool(jnp.all(jnp.isfinite(hidden))) and bool(jnp.all(jnp.isfinite(proj)))
    print("KERNEL_OK")
</pallas_src>

<mosaic_0001>
module attributes {stable_mosaic.version = 11 : i64} {
  func.func @kernel(%arg0: memref<16x16xf32, #tpu.memory_space<vmem>>, %arg1: memref<16x128xbf16, #tpu.memory_space<vmem>>, %arg2: memref<32x128xf32, #tpu.memory_space<vmem>>, %arg3: memref<1x128xf32, #tpu.memory_space<vmem>>, %arg4: memref<32x128xf32, #tpu.memory_space<vmem>>, %arg5: memref<32x128xf32, #tpu.memory_space<vmem>>, %arg6: memref<1x128xf32, #tpu.memory_space<vmem>>, %arg7: memref<32x16xbf16, #tpu.memory_space<vmem>>, %arg8: memref<1x16xf32, #tpu.memory_space<vmem>>, %arg9: memref<16x32xf32, #tpu.memory_space<vmem>>, %arg10: memref<16x16xf32, #tpu.memory_space<vmem>>) attributes {dimension_semantics = [], scalar_prefetch = 0 : i64, scratch_operands = 0 : i64, tpu.core_type = #tpu.core_type<tc>} {
    %0 = tpu.iota {dimensions = array<i32: 1>} : vector<2x128xi32>
    %c64_i32 = arith.constant 64 : i32
    %1 = vector.broadcast %c64_i32 : i32 to vector<2x128xi32>
    %2 = arith.cmpi sge, %0, %1 : vector<2x128xi32>
    %c96_i32 = arith.constant 96 : i32
    %3 = vector.broadcast %c96_i32 : i32 to vector<2x128xi32>
    %4 = arith.cmpi slt, %0, %3 : vector<2x128xi32>
    %5 = arith.andi %2, %4 : vector<2x128xi1>
    %cst = arith.constant 2.000000e+00 : f32
    %cst_0 = arith.constant 1.000000e+00 : f32
    %6 = vector.broadcast %cst : f32 to vector<2x128xf32>
    %7 = vector.broadcast %cst_0 : f32 to vector<2x128xf32>
    %8 = arith.select %5, %6, %7 : vector<2x128xi1>, vector<2x128xf32>
    %c0 = arith.constant 0 : index
    %c0_1 = arith.constant 0 : index
    %9 = vector.load %arg1[%c0, %c0_1] : memref<16x128xbf16, #tpu.memory_space<vmem>>, vector<16x128xbf16>
    %c0_2 = arith.constant 0 : index
    %c0_3 = arith.constant 0 : index
    %10 = vector.load %arg4[%c0_2, %c0_3] : memref<32x128xf32, #tpu.memory_space<vmem>>, vector<32x128xf32>
    %c0_4 = arith.constant 0 : index
    %c0_5 = arith.constant 0 : index
    %11 = vector.load %arg2[%c0_4, %c0_5] : memref<32x128xf32, #tpu.memory_space<vmem>>, vector<32x128xf32>
    %c0_6 = arith.constant 0 : index
    %c0_7 = arith.constant 0 : index
    %12 = vector.load %arg5[%c0_6, %c0_7] : memref<32x128xf32, #tpu.memory_space<vmem>>, vector<32x128xf32>
    %c0_8 = arith.constant 0 : index
    %c0_9 = arith.constant 0 : index
    %13 = vector.load %arg3[%c0_8, %c0_9] : memref<1x128xf32, #tpu.memory_space<vmem>>, vector<1x128xf32>
    %c0_10 = arith.constant 0 : index
    %c0_11 = arith.constant 0 : index
    %14 = vector.load %arg6[%c0_10, %c0_11] : memref<1x128xf32, #tpu.memory_space<vmem>>, vector<1x128xf32>
    %c0_12 = arith.constant 0 : index
    %c0_13 = arith.constant 0 : index
    %15 = vector.load %arg0[%c0_12, %c0_13] : memref<16x16xf32, #tpu.memory_space<vmem>>, vector<16x16xf32>
    %16 = arith.truncf %15 : vector<16x16xf32> to vector<16x16xbf16>
    %cst_14 = arith.constant dense<0.000000e+00> : vector<16x128xf32>
    %17 = tpu.matmul %16, %9, %cst_14 {dimension_numbers = #tpu.dot_dimension_numbers<[1], [0], [0], [1], [0, 0, 1, 1], [], []>} : vector<16x16xbf16>, vector<16x128xbf16>, vector<16x128xf32> -> vector<16x128xf32>
    %18 = vector.broadcast %13 : vector<1x128xf32> to vector<16x128xf32>
    %19 = arith.addf %17, %18 : vector<16x128xf32>
    %cst_15 = arith.constant 0.000000e+00 : f32
    %20 = vector.broadcast %cst_15 : f32 to vector<2x32xf32>
    %cst_16 = arith.constant 0.000000e+00 : f32
    %21 = vector.broadcast %cst_16 : f32 to vector<2x32xf32>
    %cst_17 = arith.constant 0.000000e+00 : f32
    %22 = vector.broadcast %cst_17 : f32 to vector<2x32xf32>
    %cst_18 = arith.constant 0.000000e+00 : f32
    %23 = vector.broadcast %cst_18 : f32 to vector<2x32xf32>
    %24 = vector.extract_strided_slice %19 {offsets = [0, 0], sizes = [2, 128], strides = [1, 1]} : vector<16x128xf32> to vector<2x128xf32>
    %cst_19 = arith.constant dense<0.000000e+00> : vector<2x128xf32>
    %25 = tpu.matmul %20, %11, %cst_19 {dimension_numbers = #tpu.dot_dimension_numbers<[1], [0], [0], [1], [0, 0, 1, 1], [], []>, precision = #tpu.contract_precision<fp32>} : vector<2x32xf32>, vector<32x128xf32>, vector<2x128xf32> -> vector<2x128xf32>
    %26 = arith.addf %24, %25 : vector<2x128xf32>
    %27 = arith.mulf %26, %8 : vector<2x128xf32>
    %28 = arith.negf %27 : vector<2x128xf32>
    %29 = math.exp %28 : vector<2x128xf32>
    %cst_20 = arith.constant 1.000000e+00 : f32
    %30 = vector.broadcast %cst_20 : f32 to vector<2x128xf32>
    %31 = arith.addf %30, %29 : vector<2x128xf32>
    %32 = arith.divf %30, %31 : vector<2x128xf32>
    %cst_21 = arith.constant 2.000000e+00 : f32
    %33 = vector.broadcast %cst_21 : f32 to vector<2x128xf32>
    %34 = arith.mulf %33, %32 : vector<2x128xf32>
    %cst_22 = arith.constant 1.000000e+00 : f32
    %35 = vector.broadcast %cst_22 : f32 to vector<2x128xf32>
    %36 = arith.subf %34, %35 : vector<2x128xf32>
    %37 = arith.select %5, %36, %32 : vector<2x128xi1>, vector<2x128xf32>
    %38 = vector.extract_strided_slice %37 {offsets = [0, 0], sizes = [2, 32], strides = [1, 1]} : vector<2x128xf32> to vector<2x32xf32>
    %39 = vector.extract_strided_slice %37 {offsets = [0, 32], sizes = [2, 32], strides = [1, 1]} : vector<2x128xf32> to vector<2x32xf32>
    %40 = vector.extract_strided_slice %37 {offsets = [0, 64], sizes = [2, 32], strides = [1, 1]} : vector<2x128xf32> to vector<2x32xf32>
    %41 = vector.extract_strided_slice %37 {offsets = [0, 96], sizes = [2, 32], strides = [1, 1]} : vector<2x128xf32> to vector<2x32xf32>
    %42 = arith.mulf %39, %22 : vector<2x32xf32>
    %43 = arith.mulf %38, %40 : vector<2x32xf32>
    %44 = arith.addf %42, %43 : vector<2x32xf32>
    %45 = math.tanh %44 : vector<2x32xf32>
    %46 = arith.mulf %41, %45 : vector<2x32xf32>
    %cst_23 = arith.constant dense<0.000000e+00> : vector<2x128xf32>
    %47 = tpu.matmul %46, %10, %cst_23 {dimension_numbers = #tpu.dot_dimension_numbers<[1], [0], [0], [1], [0, 0, 1, 1], [], []>, precision = #tpu.contract_precision<fp32>} : vector<2x32xf32>, vector<32x128xf32>, vector<2x128xf32> -> vector<2x128xf32>
    %48 = vector.broadcast %14 : vector<1x128xf32> to vector<2x128xf32>
    %49 = arith.addf %47, %48 : vector<2x128xf32>
    %cst_24 = arith.constant dense<0.000000e+00> : vector<2x128xf32>
    %50 = tpu.matmul %21, %12, %cst_24 {dimension_numbers = #tpu.dot_dimension_numbers<[1], [0], [0], [1], [0, 0, 1, 1], [], []>, precision = #tpu.contract_precision<fp32>} : vector<2x32xf32>, vector<32x128xf32>, vector<2x128xf32> -> vector<2x128xf32>
    %51 = arith.addf %49, %50 : vector<2x128xf32>
    %52 = arith.mulf %51, %8 : vector<2x128xf32>
    %53 = arith.negf %52 : vector<2x128xf32>
    %54 = math.exp %53 : vector<2x128xf32>
    %cst_25 = arith.constant 1.000000e+00 : f32
    %55 = vector.broadcast %cst_25 : f32 to vector<2x128xf32>
    %56 = arith.addf %55, %54 : vector<2x128xf32>
    %57 = arith.divf %55, %56 : vector<2x128xf32>
    %cst_26 = arith.constant 2.000000e+00 : f32
    %58 = vector.broadcast %cst_26 : f32 to vector<2x128xf32>
    %59 = arith.mulf %58, %57 : vector<2x128xf32>
    %cst_27 = arith.constant 1.000000e+00 : f32
    %60 = vector.broadcast %cst_27 : f32 to vector<2x128xf32>
    %61 = arith.subf %59, %60 : vector<2x128xf32>
    %62 = arith.select %5, %61, %57 : vector<2x128xi1>, vector<2x128xf32>
    %63 = vector.extract_strided_slice %62 {offsets = [0, 0], sizes = [2, 32], strides = [1, 1]} : vector<2x128xf32> to vector<2x32xf32>
    %64 = vector.extract_strided_slice %62 {offsets = [0, 32], sizes = [2, 32], strides = [1, 1]} : vector<2x128xf32> to vector<2x32xf32>
    %65 = vector.extract_strided_slice %62 {offsets = [0, 64], sizes = [2, 32], strides = [1, 1]} : vector<2x128xf32> to vector<2x32xf32>
    %66 = vector.extract_strided_slice %62 {offsets = [0, 96], sizes = [2, 32], strides = [1, 1]} : vector<2x128xf32> to vector<2x32xf32>
    %67 = arith.mulf %64, %23 : vector<2x32xf32>
    %68 = arith.mulf %63, %65 : vector<2x32xf32>
    %69 = arith.addf %67, %68 : vector<2x32xf32>
    %70 = math.tanh %69 : vector<2x32xf32>
    %71 = arith.mulf %66, %70 : vector<2x32xf32>
    %72 = vector.extract_strided_slice %19 {offsets = [2, 0], sizes = [2, 128], strides = [1, 1]} : vector<16x128xf32> to vector<2x128xf32>
    %cst_28 = arith.constant dense<0.000000e+00> : vector<2x128xf32>
    %73 = tpu.matmul %46, %11, %cst_28 {dimension_numbers = #tpu.dot_dimension_numbers<[1], [0], [0], [1], [0, 0, 1, 1], [], []>, precision = #tpu.contract_precision<fp32>} : vector<2x32xf32>, vector<32x128xf32>, vector<2x128xf32> -> vector<2x128xf32>
    %74 = arith.addf %72, %73 : vector<2x128xf32>
    %75 = arith.mulf %74, %8 : vector<2x128xf32>
    %76 = arith.negf %75 : vector<2x128xf32>
    %77 = math.exp %76 : vector<2x128xf32>
    %cst_29 = arith.constant 1.000000e+00 : f32
    %78 = vector.broadcast %cst_29 : f32 to vector<2x128xf32>
    %79 = arith.addf %78, %77 : vector<2x128xf32>
    %80 = arith.divf %78, %79 : vector<2x128xf32>
    %cst_30 = arith.constant 2.000000e+00 : f32
    %81 = vector.broadcast %cst_30 : f32 to vector<2x128xf32>
    %82 = arith.mulf %81, %80 : vector<2x128xf32>
    %cst_31 = arith.constant 1.000000e+00 : f32
    %83 = vector.broadcast %cst_31 : f32 to vector<2x128xf32>
    %84 = arith.subf %82, %83 : vector<2x128xf32>
    %85 = arith.select %5, %84, %80 : vector<2x128xi1>, vector<2x128xf32>
    %86 = vector.extract_strided_slice %85 {offsets = [0, 0], sizes = [2, 32], strides = [1, 1]} : vector<2x128xf32> to vector<2x32xf32>
    %87 = vector.extract_strided_slice %85 {offsets = [0, 32], sizes = [2, 32], strides = [1, 1]} : vector<2x128xf32> to vector<2x32xf32>
    %88 = vector.extract_strided_slice %85 {offsets = [0, 64], sizes = [2, 32], strides = [1, 1]} : vector<2x128xf32> to vector<2x32xf32>
    %89 = vector.extract_strided_slice %85 {offsets = [0, 96], sizes = [2, 32], strides = [1, 1]} : vector<2x128xf32> to vector<2x32xf32>
    %90 = arith.mulf %87, %44 : vector<2x32xf32>
    %91 = arith.mulf %86, %88 : vector<2x32xf32>
    %92 = arith.addf %90, %91 : vector<2x32xf32>
    %93 = math.tanh %92 : vector<2x32xf32>
    %94 = arith.mulf %89, %93 : vector<2x32xf32>
    %cst_32 = arith.constant dense<0.000000e+00> : vector<2x128xf32>
    %95 = tpu.matmul %94, %10, %cst_32 {dimension_numbers = #tpu.dot_dimension_numbers<[1], [0], [0], [1], [0, 0, 1, 1], [], []>, precision = #tpu.contract_precision<fp32>} : vector<2x32xf32>, vector<32x128xf32>, vector<2x128xf32> -> vector<2x128xf32>
    %96 = vector.broadcast %14 : vector<1x128xf32> to vector<2x128xf32>
    %97 = arith.addf %95, %96 : vector<2x128xf32>
    %cst_33 = arith.constant dense<0.000000e+00> : vector<2x128xf32>
    %98 = tpu.matmul %71, %12, %cst_33 {dimension_numbers = #tpu.dot_dimension_numbers<[1], [0], [0], [1], [0, 0, 1, 1], [], []>, precision = #tpu.contract_precision<fp32>} : vector<2x32xf32>, vector<32x128xf32>, vector<2x128xf32> -> vector<2x128xf32>
    %99 = arith.addf %97, %98 : vector<2x128xf32>
    %100 = arith.mulf %99, %8 : vector<2x128xf32>
    %101 = arith.negf %100 : vector<2x128xf32>
    %102 = math.exp %101 : vector<2x128xf32>
    %cst_34 = arith.constant 1.000000e+00 : f32
    %103 = vector.broadcast %cst_34 : f32 to vector<2x128xf32>
    %104 = arith.addf %103, %102 : vector<2x128xf32>
    %105 = arith.divf %103, %104 : vector<2x128xf32>
    %cst_35 = arith.constant 2.000000e+00 : f32
    %106 = vector.broadcast %cst_35 : f32 to vector<2x128xf32>
    %107 = arith.mulf %106, %105 : vector<2x128xf32>
    %cst_36 = arith.constant 1.000000e+00 : f32
    %108 = vector.broadcast %cst_36 : f32 to vector<2x128xf32>
    %109 = arith.subf %107, %108 : vector<2x128xf32>
    %110 = arith.select %5, %109, %105 : vector<2x128xi1>, vector<2x128xf32>
    %111 = vector.extract_strided_slice %110 {offsets = [0, 0], sizes = [2, 32], strides = [1, 1]} : vector<2x128xf32> to vector<2x32xf32>
    %112 = vector.extract_strided_slice %110 {offsets = [0, 32], sizes = [2, 32], strides = [1, 1]} : vector<2x128xf32> to vector<2x32xf32>
    %113 = vector.extract_strided_slice %110 {offsets = [0, 64], sizes = [2, 32], strides = [1, 1]} : vector<2x128xf32> to vector<2x32xf32>
    %114 = vector.extract_strided_slice %110 {offsets = [0, 96], sizes = [2, 32], strides = [1, 1]} : vector<2x128xf32> to vector<2x32xf32>
    %115 = arith.mulf %112, %69 : vector<2x32xf32>
    %116 = arith.mulf %111, %113 : vector<2x32xf32>
    %117 = arith.addf %115, %116 : vector<2x32xf32>
    %118 = math.tanh %117 : vector<2x32xf32>
    %119 = arith.mulf %114, %118 : vector<2x32xf32>
    %120 = vector.extract_strided_slice %19 {offsets = [4, 0], sizes = [2, 128], strides = [1, 1]} : vector<16x128xf32> to vector<2x128xf32>
    %cst_37 = arith.constant dense<0.000000e+00> : vector<2x128xf32>
    %121 = tpu.matmul %94, %11, %cst_37 {dimension_numbers = #tpu.dot_dimension_numbers<[1], [0], [0], [1], [0, 0, 1, 1], [], []>, precision = #tpu.contract_precision<fp32>} : vector<2x32xf32>, vector<32x128xf32>, vector<2x128xf32> -> vector<2x128xf32>
    %122 = arith.addf %120, %121 : vector<2x128xf32>
    %123 = arith.mulf %122, %8 : vector<2x128xf32>
    %124 = arith.negf %123 : vector<2x128xf32>
    %125 = math.exp %124 : vector<2x128xf32>
    %cst_38 = arith.constant 1.000000e+00 : f32
    %126 = vector.broadcast %cst_38 : f32 to vector<2x128xf32>
    %127 = arith.addf %126, %125 : vector<2x128xf32>
    %128 = arith.divf %126, %127 : vector<2x128xf32>
    %cst_39 = arith.constant 2.000000e+00 : f32
    %129 = vector.broadcast %cst_39 : f32 to vector<2x128xf32>
    %130 = arith.mulf %129, %128 : vector<2x128xf32>
    %cst_40 = arith.constant 1.000000e+00 : f32
    %131 = vector.broadcast %cst_40 : f32 to vector<2x128xf32>
    %132 = arith.subf %130, %131 : vector<2x128xf32>
    %133 = arith.select %5, %132, %128 : vector<2x128xi1>, vector<2x128xf32>
    %134 = vector.extract_strided_slice %133 {offsets = [0, 0], sizes = [2, 32], strides = [1, 1]} : vector<2x128xf32> to vector<2x32xf32>
    %135 = vector.extract_strided_slice %133 {offsets = [0, 32], sizes = [2, 32], strides = [1, 1]} : vector<2x128xf32> to vector<2x32xf32>
    %136 = vector.extract_strided_slice %133 {offsets = [0, 64], sizes = [2, 32], strides = [1, 1]} : vector<2x128xf32> to vector<2x32xf32>
    %137 = vector.extract_strided_slice %133 {offsets = [0, 96], sizes = [2, 32], strides = [1, 1]} : vector<2x128xf32> to vector<2x32xf32>
    %138 = arith.mulf %135, %92 : vector<2x32xf32>
    %139 = arith.mulf %134, %136 : vector<2x32xf32>
    %140 = arith.addf %138, %139 : vector<2x32xf32>
    %141 = math.tanh %140 : vector<2x32xf32>
    %142 = arith.mulf %137, %141 : vector<2x32xf32>
    %cst_41 = arith.constant dense<0.000000e+00> : vector<2x128xf32>
    %143 = tpu.matmul %142, %10, %cst_41 {dimension_numbers = #tpu.dot_dimension_numbers<[1], [0], [0], [1], [0, 0, 1, 1], [], []>, precision = #tpu.contract_precision<fp32>} : vector<2x32xf32>, vector<32x128xf32>, vector<2x128xf32> -> vector<2x128xf32>
    %144 = vector.broadcast %14 : vector<1x128xf32> to vector<2x128xf32>
    %145 = arith.addf %143, %144 : vector<2x128xf32>
    %cst_42 = arith.constant dense<0.000000e+00> : vector<2x128xf32>
    %146 = tpu.matmul %119, %12, %cst_42 {dimension_numbers = #tpu.dot_dimension_numbers<[1], [0], [0], [1], [0, 0, 1, 1], [], []>, precision = #tpu.contract_precision<fp32>} : vector<2x32xf32>, vector<32x128xf32>, vector<2x128xf32> -> vector<2x128xf32>
    %147 = arith.addf %145, %146 : vector<2x128xf32>
    %148 = arith.mulf %147, %8 : vector<2x128xf32>
    %149 = arith.negf %148 : vector<2x128xf32>
    %150 = math.exp %149 : vector<2x128xf32>
    %cst_43 = arith.constant 1.000000e+00 : f32
    %151 = vector.broadcast %cst_43 : f32 to vector<2x128xf32>
    %152 = arith.addf %151, %150 : vector<2x128xf32>
    %153 = arith.divf %151, %152 : vector<2x128xf32>
    %cst_44 = arith.constant 2.000000e+00 : f32
    %154 = vector.broadcast %cst_44 : f32 to vector<2x128xf32>
    %155 = arith.mulf %154, %153 : vector<2x128xf32>
    %cst_45 = arith.constant 1.000000e+00 : f32
    %156 = vector.broadcast %cst_45 : f32 to vector<2x128xf32>
    %157 = arith.subf %155, %156 : vector<2x128xf32>
    %158 = arith.select %5, %157, %153 : vector<2x128xi1>, vector<2x128xf32>
    %159 = vector.extract_strided_slice %158 {offsets = [0, 0], sizes = [2, 32], strides = [1, 1]} : vector<2x128xf32> to vector<2x32xf32>
    %160 = vector.extract_strided_slice %158 {offsets = [0, 32], sizes = [2, 32], strides = [1, 1]} : vector<2x128xf32> to vector<2x32xf32>
    %161 = vector.extract_strided_slice %158 {offsets = [0, 64], sizes = [2, 32], strides = [1, 1]} : vector<2x128xf32> to vector<2x32xf32>
    %162 = vector.extract_strided_slice %158 {offsets = [0, 96], sizes = [2, 32], strides = [1, 1]} : vector<2x128xf32> to vector<2x32xf32>
    %163 = arith.mulf %160, %117 : vector<2x32xf32>
    %164 = arith.mulf %159, %161 : vector<2x32xf32>
    %165 = arith.addf %163, %164 : vector<2x32xf32>
    %166 = math.tanh %165 : vector<2x32xf32>
    %167 = arith.mulf %162, %166 : vector<2x32xf32>
    %168 = vector.extract_strided_slice %19 {offsets = [6, 0], sizes = [2, 128], strides = [1, 1]} : vector<16x128xf32> to vector<2x128xf32>
    %cst_46 = arith.constant dense<0.000000e+00> : vector<2x128xf32>
    %169 = tpu.matmul %142, %11, %cst_46 {dimension_numbers = #tpu.dot_dimension_numbers<[1], [0], [0], [1], [0, 0, 1, 1], [], []>, precision = #tpu.contract_precision<fp32>} : vector<2x32xf32>, vector<32x128xf32>, vector<2x128xf32> -> vector<2x128xf32>
    %170 = arith.addf %168, %169 : vector<2x128xf32>
    %171 = arith.mulf %170, %8 : vector<2x128xf32>
    %172 = arith.negf %171 : vector<2x128xf32>
    %173 = math.exp %172 : vector<2x128xf32>
    %cst_47 = arith.constant 1.000000e+00 : f32
    %174 = vector.broadcast %cst_47 : f32 to vector<2x128xf32>
    %175 = arith.addf %174, %173 : vector<2x128xf32>
    %176 = arith.divf %174, %175 : vector<2x128xf32>
    %cst_48 = arith.constant 2.000000e+00 : f32
    %177 = vector.broadcast %cst_48 : f32 to vector<2x128xf32>
    %178 = arith.mulf %177, %176 : vector<2x128xf32>
    %cst_49 = arith.constant 1.000000e+00 : f32
    %179 = vector.broadcast %cst_49 : f32 to vector<2x128xf32>
    %180 = arith.subf %178, %179 : vector<2x128xf32>
    %181 = arith.select %5, %180, %176 : vector<2x128xi1>, vector<2x128xf32>
    %182 = vector.extract_strided_slice %181 {offsets = [0, 0], sizes = [2, 32], strides = [1, 1]} : vector<2x128xf32> to vector<2x32xf32>
    %183 = vector.extract_strided_slice %181 {offsets = [0, 32], sizes = [2, 32], strides = [1, 1]} : vector<2x128xf32> to vector<2x32xf32>
    %184 = vector.extract_strided_slice %181 {offsets = [0, 64], sizes = [2, 32], strides = [1, 1]} : vector<2x128xf32> to vector<2x32xf32>
    %185 = vector.extract_strided_slice %181 {offsets = [0, 96], sizes = [2, 32], strides = [1, 1]} : vector<2x128xf32> to vector<2x32xf32>
    %186 = arith.mulf %183, %140 : vector<2x32xf32>
    %187 = arith.mulf %182, %184 : vector<2x32xf32>
    %188 = arith.addf %186, %187 : vector<2x32xf32>
    %189 = math.tanh %188 : vector<2x32xf32>
    %190 = arith.mulf %185, %189 : vector<2x32xf32>
    %cst_50 = arith.constant dense<0.000000e+00> : vector<2x128xf32>
    %191 = tpu.matmul %190, %10, %cst_50 {dimension_numbers = #tpu.dot_dimension_numbers<[1], [0], [0], [1], [0, 0, 1, 1], [], []>, precision = #tpu.contract_precision<fp32>} : vector<2x32xf32>, vector<32x128xf32>, vector<2x128xf32> -> vector<2x128xf32>
    %192 = vector.broadcast %14 : vector<1x128xf32> to vector<2x128xf32>
    %193 = arith.addf %191, %192 : vector<2x128xf32>
    %cst_51 = arith.constant dense<0.000000e+00> : vector<2x128xf32>
    %194 = tpu.matmul %167, %12, %cst_51 {dimension_numbers = #tpu.dot_dimension_numbers<[1], [0], [0], [1], [0, 0, 1, 1], [], []>, precision = #tpu.contract_precision<fp32>} : vector<2x32xf32>, vector<32x128xf32>, vector<2x128xf32> -> vector<2x128xf32>
    %195 = arith.addf %193, %194 : vector<2x128xf32>
    %196 = arith.mulf %195, %8 : vector<2x128xf32>
    %197 = arith.negf %196 : vector<2x128xf32>
    %198 = math.exp %197 : vector<2x128xf32>
    %cst_52 = arith.constant 1.000000e+00 : f32
    %199 = vector.broadcast %cst_52 : f32 to vector<2x128xf32>
    %200 = arith.addf %199, %198 : vector<2x128xf32>
    %201 = arith.divf %199, %200 : vector<2x128xf32>
    %cst_53 = arith.constant 2.000000e+00 : f32
    %202 = vector.broadcast %cst_53 : f32 to vector<2x128xf32>
    %203 = arith.mulf %202, %201 : vector<2x128xf32>
    %cst_54 = arith.constant 1.000000e+00 : f32
    %204 = vector.broadcast %cst_54 : f32 to vector<2x128xf32>
    %205 = arith.subf %203, %204 : vector<2x128xf32>
    %206 = arith.select %5, %205, %201 : vector<2x128xi1>, vector<2x128xf32>
    %207 = vector.extract_strided_slice %206 {offsets = [0, 0], sizes = [2, 32], strides = [1, 1]} : vector<2x128xf32> to vector<2x32xf32>
    %208 = vector.extract_strided_slice %206 {offsets = [0, 32], sizes = [2, 32], strides = [1, 1]} : vector<2x128xf32> to vector<2x32xf32>
    %209 = vector.extract_strided_slice %206 {offsets = [0, 64], sizes = [2, 32], strides = [1, 1]} : vector<2x128xf32> to vector<2x32xf32>
    %210 = vector.extract_strided_slice %206 {offsets = [0, 96], sizes = [2, 32], strides = [1, 1]} : vector<2x128xf32> to vector<2x32xf32>
    %211 = arith.mulf %208, %165 : vector<2x32xf32>
    %212 = arith.mulf %207, %209 : vector<2x32xf32>
    %213 = arith.addf %211, %212 : vector<2x32xf32>
    %214 = math.tanh %213 : vector<2x32xf32>
    %215 = arith.mulf %210, %214 : vector<2x32xf32>
    %216 = vector.extract_strided_slice %19 {offsets = [8, 0], sizes = [2, 128], strides = [1, 1]} : vector<16x128xf32> to vector<2x128xf32>
    %cst_55 = arith.constant dense<0.000000e+00> : vector<2x128xf32>
    %217 = tpu.matmul %190, %11, %cst_55 {dimension_numbers = #tpu.dot_dimension_numbers<[1], [0], [0], [1], [0, 0, 1, 1], [], []>, precision = #tpu.contract_precision<fp32>} : vector<2x32xf32>, vector<32x128xf32>, vector<2x128xf32> -> vector<2x128xf32>
    %218 = arith.addf %216, %217 : vector<2x128xf32>
    %219 = arith.mulf %218, %8 : vector<2x128xf32>
    %220 = arith.negf %219 : vector<2x128xf32>
    %221 = math.exp %220 : vector<2x128xf32>
    %cst_56 = arith.constant 1.000000e+00 : f32
    %222 = vector.broadcast %cst_56 : f32 to vector<2x128xf32>
    %223 = arith.addf %222, %221 : vector<2x128xf32>
    %224 = arith.divf %222, %223 : vector<2x128xf32>
    %cst_57 = arith.constant 2.000000e+00 : f32
    %225 = vector.broadcast %cst_57 : f32 to vector<2x128xf32>
    %226 = arith.mulf %225, %224 : vector<2x128xf32>
    %cst_58 = arith.constant 1.000000e+00 : f32
    %227 = vector.broadcast %cst_58 : f32 to vector<2x128xf32>
    %228 = arith.subf %226, %227 : vector<2x128xf32>
    %229 = arith.select %5, %228, %224 : vector<2x128xi1>, vector<2x128xf32>
    %230 = vector.extract_strided_slice %229 {offsets = [0, 0], sizes = [2, 32], strides = [1, 1]} : vector<2x128xf32> to vector<2x32xf32>
    %231 = vector.extract_strided_slice %229 {offsets = [0, 32], sizes = [2, 32], strides = [1, 1]} : vector<2x128xf32> to vector<2x32xf32>
    %232 = vector.extract_strided_slice %229 {offsets = [0, 64], sizes = [2, 32], strides = [1, 1]} : vector<2x128xf32> to vector<2x32xf32>
    %233 = vector.extract_strided_slice %229 {offsets = [0, 96], sizes = [2, 32], strides = [1, 1]} : vector<2x128xf32> to vector<2x32xf32>
    %234 = arith.mulf %231, %188 : vector<2x32xf32>
    %235 = arith.mulf %230, %232 : vector<2x32xf32>
    %236 = arith.addf %234, %235 : vector<2x32xf32>
    %237 = math.tanh %236 : vector<2x32xf32>
    %238 = arith.mulf %233, %237 : vector<2x32xf32>
    %cst_59 = arith.constant dense<0.000000e+00> : vector<2x128xf32>
    %239 = tpu.matmul %238, %10, %cst_59 {dimension_numbers = #tpu.dot_dimension_numbers<[1], [0], [0], [1], [0, 0, 1, 1], [], []>, precision = #tpu.contract_precision<fp32>} : vector<2x32xf32>, vector<32x128xf32>, vector<2x128xf32> -> vector<2x128xf32>
    %240 = vector.broadcast %14 : vector<1x128xf32> to vector<2x128xf32>
    %241 = arith.addf %239, %240 : vector<2x128xf32>
    %cst_60 = arith.constant dense<0.000000e+00> : vector<2x128xf32>
    %242 = tpu.matmul %215, %12, %cst_60 {dimension_numbers = #tpu.dot_dimension_numbers<[1], [0], [0], [1], [0, 0, 1, 1], [], []>, precision = #tpu.contract_precision<fp32>} : vector<2x32xf32>, vector<32x128xf32>, vector<2x128xf32> -> vector<2x128xf32>
    %243 = arith.addf %241, %242 : vector<2x128xf32>
    %244 = arith.mulf %243, %8 : vector<2x128xf32>
    %245 = arith.negf %244 : vector<2x128xf32>
    %246 = math.exp %245 : vector<2x128xf32>
    %cst_61 = arith.constant 1.000000e+00 : f32
    %247 = vector.broadcast %cst_61 : f32 to vector<2x128xf32>
    %248 = arith.addf %247, %246 : vector<2x128xf32>
    %249 = arith.divf %247, %248 : vector<2x128xf32>
    %cst_62 = arith.constant 2.000000e+00 : f32
    %250 = vector.broadcast %cst_62 : f32 to vector<2x128xf32>
    %251 = arith.mulf %250, %249 : vector<2x128xf32>
    %cst_63 = arith.constant 1.000000e+00 : f32
    %252 = vector.broadcast %cst_63 : f32 to vector<2x128xf32>
    %253 = arith.subf %251, %252 : vector<2x128xf32>
    %254 = arith.select %5, %253, %249 : vector<2x128xi1>, vector<2x128xf32>
    %255 = vector.extract_strided_slice %254 {offsets = [0, 0], sizes = [2, 32], strides = [1, 1]} : vector<2x128xf32> to vector<2x32xf32>
    %256 = vector.extract_strided_slice %254 {offsets = [0, 32], sizes = [2, 32], strides = [1, 1]} : vector<2x128xf32> to vector<2x32xf32>
    %257 = vector.extract_strided_slice %254 {offsets = [0, 64], sizes = [2, 32], strides = [1, 1]} : vector<2x128xf32> to vector<2x32xf32>
    %258 = vector.extract_strided_slice %254 {offsets = [0, 96], sizes = [2, 32], strides = [1, 1]} : vector<2x128xf32> to vector<2x32xf32>
    %259 = arith.mulf %256, %213 : vector<2x32xf32>
    %260 = arith.mulf %255, %257 : vector<2x32xf32>
    %261 = arith.addf %259, %260 : vector<2x32xf32>
    %262 = math.tanh %261 : vector<2x32xf32>
    %263 = arith.mulf %258, %262 : vector<2x32xf32>
    %264 = vector.extract_strided_slice %19 {offsets = [10, 0], sizes = [2, 128], strides = [1, 1]} : vector<16x128xf32> to vector<2x128xf32>
    %cst_64 = arith.constant dense<0.000000e+00> : vector<2x128xf32>
    %265 = tpu.matmul %238, %11, %cst_64 {dimension_numbers = #tpu.dot_dimension_numbers<[1], [0], [0], [1], [0, 0, 1, 1], [], []>, precision = #tpu.contract_precision<fp32>} : vector<2x32xf32>, vector<32x128xf32>, vector<2x128xf32> -> vector<2x128xf32>
    %266 = arith.addf %264, %265 : vector<2x128xf32>
    %267 = arith.mulf %266, %8 : vector<2x128xf32>
    %268 = arith.negf %267 : vector<2x128xf32>
    %269 = math.exp %268 : vector<2x128xf32>
    %cst_65 = arith.constant 1.000000e+00 : f32
    %270 = vector.broadcast %cst_65 : f32 to vector<2x128xf32>
    %271 = arith.addf %270, %269 : vector<2x128xf32>
    %272 = arith.divf %270, %271 : vector<2x128xf32>
    %cst_66 = arith.constant 2.000000e+00 : f32
    %273 = vector.broadcast %cst_66 : f32 to vector<2x128xf32>
    %274 = arith.mulf %273, %272 : vector<2x128xf32>
    %cst_67 = arith.constant 1.000000e+00 : f32
    %275 = vector.broadcast %cst_67 : f32 to vector<2x128xf32>
    %276 = arith.subf %274, %275 : vector<2x128xf32>
    %277 = arith.select %5, %276, %272 : vector<2x128xi1>, vector<2x128xf32>
    %278 = vector.extract_strided_slice %277 {offsets = [0, 0], sizes = [2, 32], strides = [1, 1]} : vector<2x128xf32> to vector<2x32xf32>
    %279 = vector.extract_strided_slice %277 {offsets = [0, 32], sizes = [2, 32], strides = [1, 1]} : vector<2x128xf32> to vector<2x32xf32>
    %280 = vector.extract_strided_slice %277 {offsets = [0, 64], sizes = [2, 32], strides = [1, 1]} : vector<2x128xf32> to vector<2x32xf32>
    %281 = vector.extract_strided_slice %277 {offsets = [0, 96], sizes = [2, 32], strides = [1, 1]} : vector<2x128xf32> to vector<2x32xf32>
    %282 = arith.mulf %279, %236 : vector<2x32xf32>
    %283 = arith.mulf %278, %280 : vector<2x32xf32>
    %284 = arith.addf %282, %283 : vector<2x32xf32>
    %285 = math.tanh %284 : vector<2x32xf32>
    %286 = arith.mulf %281, %285 : vector<2x32xf32>
    %cst_68 = arith.constant dense<0.000000e+00> : vector<2x128xf32>
    %287 = tpu.matmul %286, %10, %cst_68 {dimension_numbers = #tpu.dot_dimension_numbers<[1], [0], [0], [1], [0, 0, 1, 1], [], []>, precision = #tpu.contract_precision<fp32>} : vector<2x32xf32>, vector<32x128xf32>, vector<2x128xf32> -> vector<2x128xf32>
    %288 = vector.broadcast %14 : vector<1x128xf32> to vector<2x128xf32>
    %289 = arith.addf %287, %288 : vector<2x128xf32>
    %cst_69 = arith.constant dense<0.000000e+00> : vector<2x128xf32>
    %290 = tpu.matmul %263, %12, %cst_69 {dimension_numbers = #tpu.dot_dimension_numbers<[1], [0], [0], [1], [0, 0, 1, 1], [], []>, precision = #tpu.contract_precision<fp32>} : vector<2x32xf32>, vector<32x128xf32>, vector<2x128xf32> -> vector<2x128xf32>
    %291 = arith.addf %289, %290 : vector<2x128xf32>
    %292 = arith.mulf %291, %8 : vector<2x128xf32>
    %293 = arith.negf %292 : vector<2x128xf32>
    %294 = math.exp %293 : vector<2x128xf32>
    %cst_70 = arith.constant 1.000000e+00 : f32
    %295 = vector.broadcast %cst_70 : f32 to vector<2x128xf32>
    %296 = arith.addf %295, %294 : vector<2x128xf32>
    %297 = arith.divf %295, %296 : vector<2x128xf32>
    %cst_71 = arith.constant 2.000000e+00 : f32
    %298 = vector.broadcast %cst_71 : f32 to vector<2x128xf32>
    %299 = arith.mulf %298, %297 : vector<2x128xf32>
    %cst_72 = arith.constant 1.000000e+00 : f32
    %300 = vector.broadcast %cst_72 : f32 to vector<2x128xf32>
    %301 = arith.subf %299, %300 : vector<2x128xf32>
    %302 = arith.select %5, %301, %297 : vector<2x128xi1>, vector<2x128xf32>
    %303 = vector.extract_strided_slice %302 {offsets = [0, 0], sizes = [2, 32], strides = [1, 1]} : vector<2x128xf32> to vector<2x32xf32>
    %304 = vector.extract_strided_slice %302 {offsets = [0, 32], sizes = [2, 32], strides = [1, 1]} : vector<2x128xf32> to vector<2x32xf32>
    %305 = vector.extract_strided_slice %302 {offsets = [0, 64], sizes = [2, 32], strides = [1, 1]} : vector<2x128xf32> to vector<2x32xf32>
    %306 = vector.extract_strided_slice %302 {offsets = [0, 96], sizes = [2, 32], strides = [1, 1]} : vector<2x128xf32> to vector<2x32xf32>
    %307 = arith.mulf %304, %261 : vector<2x32xf32>
    %308 = arith.mulf %303, %305 : vector<2x32xf32>
    %309 = arith.addf %307, %308 : vector<2x32xf32>
    %310 = math.tanh %309 : vector<2x32xf32>
    %311 = arith.mulf %306, %310 : vector<2x32xf32>
    %312 = vector.extract_strided_slice %19 {offsets = [12, 0], sizes = [2, 128], strides = [1, 1]} : vector<16x128xf32> to vector<2x128xf32>
    %cst_73 = arith.constant dense<0.000000e+00> : vector<2x128xf32>
    %313 = tpu.matmul %286, %11, %cst_73 {dimension_numbers = #tpu.dot_dimension_numbers<[1], [0], [0], [1], [0, 0, 1, 1], [], []>, precision = #tpu.contract_precision<fp32>} : vector<2x32xf32>, vector<32x128xf32>, vector<2x128xf32> -> vector<2x128xf32>
    %314 = arith.addf %312, %313 : vector<2x128xf32>
    %315 = arith.mulf %314, %8 : vector<2x128xf32>
    %316 = arith.negf %315 : vector<2x128xf32>
    %317 = math.exp %316 : vector<2x128xf32>
    %cst_74 = arith.constant 1.000000e+00 : f32
    %318 = vector.broadcast %cst_74 : f32 to vector<2x128xf32>
    %319 = arith.addf %318, %317 : vector<2x128xf32>
    %320 = arith.divf %318, %319 : vector<2x128xf32>
    %cst_75 = arith.constant 2.000000e+00 : f32
    %321 = vector.broadcast %cst_75 : f32 to vector<2x128xf32>
    %322 = arith.mulf %321, %320 : vector<2x128xf32>
    %cst_76 = arith.constant 1.000000e+00 : f32
    %323 = vector.broadcast %cst_76 : f32 to vector<2x128xf32>
    %324 = arith.subf %322, %323 : vector<2x128xf32>
    %325 = arith.select %5, %324, %320 : vector<2x128xi1>, vector<2x128xf32>
    %326 = vector.extract_strided_slice %325 {offsets = [0, 0], sizes = [2, 32], strides = [1, 1]} : vector<2x128xf32> to vector<2x32xf32>
    %327 = vector.extract_strided_slice %325 {offsets = [0, 32], sizes = [2, 32], strides = [1, 1]} : vector<2x128xf32> to vector<2x32xf32>
    %328 = vector.extract_strided_slice %325 {offsets = [0, 64], sizes = [2, 32], strides = [1, 1]} : vector<2x128xf32> to vector<2x32xf32>
    %329 = vector.extract_strided_slice %325 {offsets = [0, 96], sizes = [2, 32], strides = [1, 1]} : vector<2x128xf32> to vector<2x32xf32>
    %330 = arith.mulf %327, %284 : vector<2x32xf32>
    %331 = arith.mulf %326, %328 : vector<2x32xf32>
    %332 = arith.addf %330, %331 : vector<2x32xf32>
    %333 = math.tanh %332 : vector<2x32xf32>
    %334 = arith.mulf %329, %333 : vector<2x32xf32>
    %cst_77 = arith.constant dense<0.000000e+00> : vector<2x128xf32>
    %335 = tpu.matmul %334, %10, %cst_77 {dimension_numbers = #tpu.dot_dimension_numbers<[1], [0], [0], [1], [0, 0, 1, 1], [], []>, precision = #tpu.contract_precision<fp32>} : vector<2x32xf32>, vector<32x128xf32>, vector<2x128xf32> -> vector<2x128xf32>
    %336 = vector.broadcast %14 : vector<1x128xf32> to vector<2x128xf32>
    %337 = arith.addf %335, %336 : vector<2x128xf32>
    %cst_78 = arith.constant dense<0.000000e+00> : vector<2x128xf32>
    %338 = tpu.matmul %311, %12, %cst_78 {dimension_numbers = #tpu.dot_dimension_numbers<[1], [0], [0], [1], [0, 0, 1, 1], [], []>, precision = #tpu.contract_precision<fp32>} : vector<2x32xf32>, vector<32x128xf32>, vector<2x128xf32> -> vector<2x128xf32>
    %339 = arith.addf %337, %338 : vector<2x128xf32>
    %340 = arith.mulf %339, %8 : vector<2x128xf32>
    %341 = arith.negf %340 : vector<2x128xf32>
    %342 = math.exp %341 : vector<2x128xf32>
    %cst_79 = arith.constant 1.000000e+00 : f32
    %343 = vector.broadcast %cst_79 : f32 to vector<2x128xf32>
    %344 = arith.addf %343, %342 : vector<2x128xf32>
    %345 = arith.divf %343, %344 : vector<2x128xf32>
    %cst_80 = arith.constant 2.000000e+00 : f32
    %346 = vector.broadcast %cst_80 : f32 to vector<2x128xf32>
    %347 = arith.mulf %346, %345 : vector<2x128xf32>
    %cst_81 = arith.constant 1.000000e+00 : f32
    %348 = vector.broadcast %cst_81 : f32 to vector<2x128xf32>
    %349 = arith.subf %347, %348 : vector<2x128xf32>
    %350 = arith.select %5, %349, %345 : vector<2x128xi1>, vector<2x128xf32>
    %351 = vector.extract_strided_slice %350 {offsets = [0, 0], sizes = [2, 32], strides = [1, 1]} : vector<2x128xf32> to vector<2x32xf32>
    %352 = vector.extract_strided_slice %350 {offsets = [0, 32], sizes = [2, 32], strides = [1, 1]} : vector<2x128xf32> to vector<2x32xf32>
    %353 = vector.extract_strided_slice %350 {offsets = [0, 64], sizes = [2, 32], strides = [1, 1]} : vector<2x128xf32> to vector<2x32xf32>
    %354 = vector.extract_strided_slice %350 {offsets = [0, 96], sizes = [2, 32], strides = [1, 1]} : vector<2x128xf32> to vector<2x32xf32>
    %355 = arith.mulf %352, %309 : vector<2x32xf32>
    %356 = arith.mulf %351, %353 : vector<2x32xf32>
    %357 = arith.addf %355, %356 : vector<2x32xf32>
    %358 = math.tanh %357 : vector<2x32xf32>
    %359 = arith.mulf %354, %358 : vector<2x32xf32>
    %360 = vector.extract_strided_slice %19 {offsets = [14, 0], sizes = [2, 128], strides = [1, 1]} : vector<16x128xf32> to vector<2x128xf32>
    %cst_82 = arith.constant dense<0.000000e+00> : vector<2x128xf32>
    %361 = tpu.matmul %334, %11, %cst_82 {dimension_numbers = #tpu.dot_dimension_numbers<[1], [0], [0], [1], [0, 0, 1, 1], [], []>, precision = #tpu.contract_precision<fp32>} : vector<2x32xf32>, vector<32x128xf32>, vector<2x128xf32> -> vector<2x128xf32>
    %362 = arith.addf %360, %361 : vector<2x128xf32>
    %363 = arith.mulf %362, %8 : vector<2x128xf32>
    %364 = arith.negf %363 : vector<2x128xf32>
    %365 = math.exp %364 : vector<2x128xf32>
    %cst_83 = arith.constant 1.000000e+00 : f32
    %366 = vector.broadcast %cst_83 : f32 to vector<2x128xf32>
    %367 = arith.addf %366, %365 : vector<2x128xf32>
    %368 = arith.divf %366, %367 : vector<2x128xf32>
    %cst_84 = arith.constant 2.000000e+00 : f32
    %369 = vector.broadcast %cst_84 : f32 to vector<2x128xf32>
    %370 = arith.mulf %369, %368 : vector<2x128xf32>
    %cst_85 = arith.constant 1.000000e+00 : f32
    %371 = vector.broadcast %cst_85 : f32 to vector<2x128xf32>
    %372 = arith.subf %370, %371 : vector<2x128xf32>
    %373 = arith.select %5, %372, %368 : vector<2x128xi1>, vector<2x128xf32>
    %374 = vector.extract_strided_slice %373 {offsets = [0, 0], sizes = [2, 32], strides = [1, 1]} : vector<2x128xf32> to vector<2x32xf32>
    %375 = vector.extract_strided_slice %373 {offsets = [0, 32], sizes = [2, 32], strides = [1, 1]} : vector<2x128xf32> to vector<2x32xf32>
    %376 = vector.extract_strided_slice %373 {offsets = [0, 64], sizes = [2, 32], strides = [1, 1]} : vector<2x128xf32> to vector<2x32xf32>
    %377 = vector.extract_strided_slice %373 {offsets = [0, 96], sizes = [2, 32], strides = [1, 1]} : vector<2x128xf32> to vector<2x32xf32>
    %378 = arith.mulf %375, %332 : vector<2x32xf32>
    %379 = arith.mulf %374, %376 : vector<2x32xf32>
    %380 = arith.addf %378, %379 : vector<2x32xf32>
    %381 = math.tanh %380 : vector<2x32xf32>
    %382 = arith.mulf %377, %381 : vector<2x32xf32>
    %cst_86 = arith.constant dense<0.000000e+00> : vector<2x128xf32>
    %383 = tpu.matmul %382, %10, %cst_86 {dimension_numbers = #tpu.dot_dimension_numbers<[1], [0], [0], [1], [0, 0, 1, 1], [], []>, precision = #tpu.contract_precision<fp32>} : vector<2x32xf32>, vector<32x128xf32>, vector<2x128xf32> -> vector<2x128xf32>
    %384 = vector.broadcast %14 : vector<1x128xf32> to vector<2x128xf32>
    %385 = arith.addf %383, %384 : vector<2x128xf32>
    %cst_87 = arith.constant dense<0.000000e+00> : vector<2x128xf32>
    %386 = tpu.matmul %359, %12, %cst_87 {dimension_numbers = #tpu.dot_dimension_numbers<[1], [0], [0], [1], [0, 0, 1, 1], [], []>, precision = #tpu.contract_precision<fp32>} : vector<2x32xf32>, vector<32x128xf32>, vector<2x128xf32> -> vector<2x128xf32>
    %387 = arith.addf %385, %386 : vector<2x128xf32>
    %388 = arith.mulf %387, %8 : vector<2x128xf32>
    %389 = arith.negf %388 : vector<2x128xf32>
    %390 = math.exp %389 : vector<2x128xf32>
    %cst_88 = arith.constant 1.000000e+00 : f32
    %391 = vector.broadcast %cst_88 : f32 to vector<2x128xf32>
    %392 = arith.addf %391, %390 : vector<2x128xf32>
    %393 = arith.divf %391, %392 : vector<2x128xf32>
    %cst_89 = arith.constant 2.000000e+00 : f32
    %394 = vector.broadcast %cst_89 : f32 to vector<2x128xf32>
    %395 = arith.mulf %394, %393 : vector<2x128xf32>
    %cst_90 = arith.constant 1.000000e+00 : f32
    %396 = vector.broadcast %cst_90 : f32 to vector<2x128xf32>
    %397 = arith.subf %395, %396 : vector<2x128xf32>
    %398 = arith.select %5, %397, %393 : vector<2x128xi1>, vector<2x128xf32>
    %399 = vector.extract_strided_slice %398 {offsets = [0, 0], sizes = [2, 32], strides = [1, 1]} : vector<2x128xf32> to vector<2x32xf32>
    %400 = vector.extract_strided_slice %398 {offsets = [0, 32], sizes = [2, 32], strides = [1, 1]} : vector<2x128xf32> to vector<2x32xf32>
    %401 = vector.extract_strided_slice %398 {offsets = [0, 64], sizes = [2, 32], strides = [1, 1]} : vector<2x128xf32> to vector<2x32xf32>
    %402 = vector.extract_strided_slice %398 {offsets = [0, 96], sizes = [2, 32], strides = [1, 1]} : vector<2x128xf32> to vector<2x32xf32>
    %403 = arith.mulf %400, %357 : vector<2x32xf32>
    %404 = arith.mulf %399, %401 : vector<2x32xf32>
    %405 = arith.addf %403, %404 : vector<2x32xf32>
    %406 = math.tanh %405 : vector<2x32xf32>
    %407 = arith.mulf %402, %406 : vector<2x32xf32>
    %408 = tpu.concatenate %71, %119, %167, %215, %263, %311, %359, %407 in 0 : vector<2x32xf32>, vector<2x32xf32>, vector<2x32xf32>, vector<2x32xf32>, vector<2x32xf32>, vector<2x32xf32>, vector<2x32xf32>, vector<2x32xf32> -> vector<16x32xf32>
    %c0_91 = arith.constant 0 : index
    %c0_92 = arith.constant 0 : index
    %409 = vector.load %arg9[%c0_91, %c0_92] : memref<16x32xf32, #tpu.memory_space<vmem>>, vector<16x32xf32>
    tpu.vector_store %arg9[%c0_91, %c0_92], %408 {strides = array<i32>} : memref<16x32xf32, #tpu.memory_space<vmem>>, vector<16x32xf32>,
    %410 = arith.truncf %408 : vector<16x32xf32> to vector<16x32xbf16>
    %c0_93 = arith.constant 0 : index
    %c0_94 = arith.constant 0 : index
    %411 = vector.load %arg7[%c0_93, %c0_94] : memref<32x16xbf16, #tpu.memory_space<vmem>>, vector<32x16xbf16>
    %cst_95 = arith.constant dense<0.000000e+00> : vector<16x16xf32>
    %412 = tpu.matmul %410, %411, %cst_95 {dimension_numbers = #tpu.dot_dimension_numbers<[1], [0], [0], [1], [0, 0, 1, 1], [], []>} : vector<16x32xbf16>, vector<32x16xbf16>, vector<16x16xf32> -> vector<16x16xf32>
    %c0_96 = arith.constant 0 : index
    %c0_97 = arith.constant 0 : index
    %413 = vector.load %arg8[%c0_96, %c0_97] : memref<1x16xf32, #tpu.memory_space<vmem>>, vector<1x16xf32>
    %414 = vector.broadcast %413 : vector<1x16xf32> to vector<16x16xf32>
    %415 = arith.addf %412, %414 : vector<16x16xf32>
    %c0_98 = arith.constant 0 : index
    %c0_99 = arith.constant 0 : index
    %416 = vector.load %arg10[%c0_98, %c0_99] : memref<16x16xf32, #tpu.memory_space<vmem>>, vector<16x16xf32>
    tpu.vector_store %arg10[%c0_98, %c0_99], %415 {strides = array<i32>} : memref<16x16xf32, #tpu.memory_space<vmem>>, vector<16x16xf32>,
    return
  }
}

</mosaic_0001>

<llo_original>
// kernel: apc_lstm_forward.1
$region0: #{apc_lstm_forward.1}
  #allocation0 [shape = 'u32[]', space=smem, size = 0x4, offset = 0x4, fixed_abs, tag = 'smem constant byte address 0x4 - core index']
  #allocation1 [shape = 'u32[144,128]{1,0:T(1,128)}', space=vmem, size = 0x12000, scoped, tag = 'internal scratch']
  %s0 = inlined_call_operand.vmem [shape: f32[16,16], index: 0, kind: input, shape index: {}]
  %s1 = inlined_call_operand.vmem [shape: bf16[16,128], index: 1, kind: input, shape index: {}]
  %s2 = inlined_call_operand.vmem [shape: f32[32,128], index: 2, kind: input, shape index: {}]
  %s3 = inlined_call_operand.vmem [shape: f32[1,128], index: 3, kind: input, shape index: {}]
  %s4 = inlined_call_operand.vmem [shape: f32[32,128], index: 4, kind: input, shape index: {}]
  %s5 = inlined_call_operand.vmem [shape: f32[32,128], index: 5, kind: input, shape index: {}]
  %s6 = inlined_call_operand.vmem [shape: f32[1,128], index: 6, kind: input, shape index: {}]
  %s7 = inlined_call_operand.vmem [shape: bf16[32,16], index: 7, kind: input, shape index: {}]
  %s8 = inlined_call_operand.vmem [shape: f32[1,16], index: 8, kind: input, shape index: {}]
  %s9 = inlined_call_operand.vmem [shape: f32[16,32], index: 9, kind: output, shape index: {0}]
  %s10 = inlined_call_operand.vmem [shape: f32[16,16], index: 10, kind: output, shape index: {1}]
  %11 = xla_tuple %s9, %s10
  %s12 = sld [smem:[#allocation0]]
  $region54: #{apc_lstm_forward.1} parent=0
    _
  %s14 = ssub.s32 1, %s12
  %s15 = scalar_select 0, %s14, %s12
  // Predicated region
  $region2: #{apc_lstm_forward.1} parent=0 // pred_check
    _
  $region3: #{apc_lstm_forward.1} parent=0 // pred_check_branch
    %17 = sbr.rel (0) target = $region5
  $region4: #{apc_lstm_forward.1} parent=0 // pred_region
    _
  $region5: #{apc_lstm_forward.1} parent=0 // pred_fallthru
    _
  // Predicated region
  $region6: #{apc_lstm_forward.1} parent=0 // pred_check
    _
  $region7: #{apc_lstm_forward.1} parent=0 // pred_check_branch
    %19 = sbr.rel (0) target = $region9
  $region8: #{apc_lstm_forward.1} parent=0 // pred_region
    _
  $region9: #{apc_lstm_forward.1} parent=0 // pred_fallthru
    _
  // Predicated region
  $region10: #{apc_lstm_forward.1} parent=0 // pred_check
    _
  $region11: #{apc_lstm_forward.1} parent=0 // pred_check_branch
    %21 = sbr.rel (0) target = $region13
  $region12: #{apc_lstm_forward.1} parent=0 // pred_region
    _
  $region13: #{apc_lstm_forward.1} parent=0 // pred_fallthru
    _
  // Predicated region
  $region14: #{apc_lstm_forward.1} parent=0 // pred_check
    _
  $region15: #{apc_lstm_forward.1} parent=0 // pred_check_branch
    %23 = sbr.rel (0) target = $region17
  $region16: #{apc_lstm_forward.1} parent=0 // pred_region
    _
  $region17: #{apc_lstm_forward.1} parent=0 // pred_fallthru
    _
  // Predicated region
  $region18: #{apc_lstm_forward.1} parent=0 // pred_check
    _
  $region19: #{apc_lstm_forward.1} parent=0 // pred_check_branch
    %25 = sbr.rel (0) target = $region21
  $region20: #{apc_lstm_forward.1} parent=0 // pred_region
    _
  $region21: #{apc_lstm_forward.1} parent=0 // pred_fallthru
    _
  // Predicated region
  $region22: #{apc_lstm_forward.1} parent=0 // pred_check
    _
  $region23: #{apc_lstm_forward.1} parent=0 // pred_check_branch
    %27 = sbr.rel (0) target = $region25
  $region24: #{apc_lstm_forward.1} parent=0 // pred_region
    _
  $region25: #{apc_lstm_forward.1} parent=0 // pred_fallthru
    _
  // Predicated region
  $region26: #{apc_lstm_forward.1} parent=0 // pred_check
    _
  $region27: #{apc_lstm_forward.1} parent=0 // pred_check_branch
    %29 = sbr.rel (0) target = $region29
  $region28: #{apc_lstm_forward.1} parent=0 // pred_region
    _
  $region29: #{apc_lstm_forward.1} parent=0 // pred_fallthru
    _
  // Predicated region
  $region30: #{apc_lstm_forward.1} parent=0 // pred_check
    _
  $region31: #{apc_lstm_forward.1} parent=0 // pred_check_branch
    %31 = sbr.rel (0) target = $region33
  $region32: #{apc_lstm_forward.1} parent=0 // pred_region
    _
  $region33: #{apc_lstm_forward.1} parent=0 // pred_fallthru
    _
  // Predicated region
  $region34: #{apc_lstm_forward.1} parent=0 // pred_check
    _
  $region35: #{apc_lstm_forward.1} parent=0 // pred_check_branch
    %33 = sbr.rel (0) target = $region37
  $region36: #{apc_lstm_forward.1} parent=0 // pred_region
    _
  $region37: #{apc_lstm_forward.1} parent=0 // pred_fallthru
    _
  %v35 = vlaneseq
  %v36 = vand.u32 %v35, 127
  %vm37 = vcmp.ge.s32.totalorder %v36, 64
  %vm38 = vcmp.lt.s32.totalorder %v36, 96
  %vm39 = vmand %vm37, %vm38
  %v40 = vsel %vm39, 2.0, 1.0
  %v41 = vld [vmem:[%s1] sm:$0xf]
  %v42 = vld [vmem:[%s1 + $0x4] sm:$0xf]
  %v43 = vld [vmem:[%s4] sm:$0xff]
  %v44 = vld [vmem:[%s4 + $0x8] sm:$0xff]
  %v45 = vld [vmem:[%s4 + $0x10] sm:$0xff]
  %v46 = vld [vmem:[%s4 + $0x18] sm:$0xff]
  %v47 = vld [vmem:[%s2] sm:$0xff]
  %v48 = vld [vmem:[%s2 + $0x8] sm:$0xff]
  %v49 = vld [vmem:[%s2 + $0x10] sm:$0xff]
  %v50 = vld [vmem:[%s2 + $0x18] sm:$0xff]
  %v51 = vld [vmem:[%s5] sm:$0xff]
  %v52 = vld [vmem:[%s5 + $0x8] sm:$0xff]
  %v53 = vld [vmem:[%s5 + $0x10] sm:$0xff]
  %v54 = vld [vmem:[%s5 + $0x18] sm:$0xff]
  %v55 = vld [vmem:[%s3] sm:$0x1]
  %v56 = vld [vmem:[%s6] sm:$0x1]
  %v57 = vld [vmem:[%s0] sm:$0xff]
  %v58 = vld [vmem:[%s0 + $0x8] sm:$0xff]
  %v59 = vpack.c.bf16 %v58, %v57
  %v61 = vlaneseq
  %v62 = vshrl.u32 %v61, 7
  %v63 = vsub.s32 0, %v62
  %v64 = vrot.slane %v55, %v63
  %v68 = vunpack.c.l.b16 %v41
  %v69 = vunpack.c.l.b16 %v42
  %v70 = vpack.c.b16 %v69, %v68
  %vm72 = vcmask 130048
  %v74 = vsel %vm72, %v59, 0
  %76 = vmatprep.subr.bf16.mxu0 0
  %77 = vmatpush1.bf16.msra.mxu0 %v70
  %78 = vmatprep.subr.bf16.mxu0 0
  %79 = vmatpush1.bf16.msra.mxu0 0
  %80 = vmatprep.subr.bf16.mxu0 0
  %81 = vmatpush1.bf16.msra.mxu0 0
  %82 = vmatprep.subr.bf16.mxu0 0
  %83 = vmatpush1.bf16.msra.mxu0 0
  %84 = vmatprep.subr.bf16.mxu0 0
  %85 = vmatpush1.bf16.msra.mxu0 0
  %86 = vmatprep.subr.bf16.mxu0 0
  %87 = vmatpush1.bf16.msra.mxu0 0
  %88 = vmatprep.subr.bf16.mxu0 0
  %89 = vmatpush1.bf16.msra.mxu0 0
  %90 = vmatprep.subr.bf16.mxu0 0
  %91 = vmatpush1.bf16.msra.mxu0 0
  %92 = vmatprep.subr.bf16.mxu0 0
  %93 = vmatpush1.bf16.msra.mxu0 0
  %94 = vmatprep.subr.bf16.mxu0 0
  %95 = vmatpush1.bf16.msra.mxu0 0
  %96 = vmatprep.subr.bf16.mxu0 0
  %97 = vmatpush1.bf16.msra.mxu0 0
  %98 = vmatprep.subr.bf16.mxu0 0
  %99 = vmatpush1.bf16.msra.mxu0 0
  %100 = vmatprep.subr.bf16.mxu0 0
  %101 = vmatpush1.bf16.msra.mxu0 0
  %102 = vmatprep.subr.bf16.mxu0 0
  %103 = vmatpush1.bf16.msra.mxu0 0
  %104 = vmatprep.subr.bf16.mxu0 0
  %105 = vmatpush1.bf16.msra.mxu0 0
  %106 = vmatprep.subr.bf16.mxu0 0
  %107 = vmatpush1.bf16.msra.mxu0 0
  %108 = vmatprep.mubr.bf16.mxu0 0
  %109 = vmatmul.mubr.bf16.gmra.mrb[0].mxu0 %v74
  %v110 = vpop.f32.mrb[0].mxu0
  %v111 = vadd.f32 %v64, %v110
  %v112 = vpop.f32.mrb[0].mxu0
  %v113 = vpop.f32.mrb[0].mxu0
  %v114 = vadd.f32 %v64, %v113
  %v115 = vpop.f32.mrb[0].mxu0
  %116 = vdwg.mxu0
  %vm117 = vcmask 261120
  %v119 = vsel %vm117, 0.0, 0
  %121 = vmatprep.subr.mxu0 0.0
  %v122 = vand.u32 %v47, 4294901760
  %123 = vmatpush1.msra.mxu0 %v122
  %124 = vmatprep.subr.mxu0 0.0
  %v125 = vand.u32 %v48, 4294901760
  %126 = vmatpush1.msra.mxu0 %v125
  %127 = vmatprep.subr.mxu0 0.0
  %v128 = vand.u32 %v49, 4294901760
  %129 = vmatpush1.msra.mxu0 %v128
  %130 = vmatprep.subr.mxu0 0.0
  %v131 = vand.u32 %v50, 4294901760
  %132 = vmatpush1.msra.mxu0 %v131
  %133 = vmatprep.subr.mxu0 0.0
  %134 = vmatpush1.msra.mxu0 0.0
  %135 = vmatprep.subr.mxu0 0.0
  %136 = vmatpush1.msra.mxu0 0.0
  %137 = vmatprep.subr.mxu0 0.0
  %138 = vmatpush1.msra.mxu0 0.0
  %139 = vmatprep.subr.mxu0 0.0
  %140 = vmatpush1.msra.mxu0 0.0
  %141 = vmatprep.subr.mxu0 0.0
  %142 = vmatpush1.msra.mxu0 0.0
  %143 = vmatprep.subr.mxu0 0.0
  %144 = vmatpush1.msra.mxu0 0.0
  %145 = vmatprep.subr.mxu0 0.0
  %146 = vmatpush1.msra.mxu0 0.0
  %147 = vmatprep.subr.mxu0 0.0
  %148 = vmatpush1.msra.mxu0 0.0
  %149 = vmatprep.subr.mxu0 0.0
  %150 = vmatpush1.msra.mxu0 0.0
  %151 = vmatprep.subr.mxu0 0.0
  %152 = vmatpush1.msra.mxu0 0.0
  %153 = vmatprep.subr.mxu0 0.0
  %154 = vmatpush1.msra.mxu0 0.0
  %155 = vmatprep.subr.mxu0 0.0
  %156 = vmatpush1.msra.mxu0 0.0
  %157 = vmatprep.subr.mxu0 0.0
  %158 = vmatpush1.msra.mxu0 0.0
  %159 = vmatprep.subr.mxu0 0.0
  %160 = vmatpush1.msra.mxu0 0.0
  %161 = vmatprep.subr.mxu0 0.0
  %162 = vmatpush1.msra.mxu0 0.0
  %163 = vmatprep.subr.mxu0 0.0
  %164 = vmatpush1.msra.mxu0 0.0
  %165 = vmatprep.subr.mxu0 0.0
  %166 = vmatpush1.msra.mxu0 0.0
  %167 = vmatprep.subr.mxu0 0.0
  %168 = vmatpush1.msra.mxu0 0.0
  %169 = vmatprep.subr.mxu0 0.0
  %170 = vmatpush1.msra.mxu0 0.0
  %171 = vmatprep.subr.mxu0 0.0
  %172 = vmatpush1.msra.mxu0 0.0
  %173 = vmatprep.subr.mxu0 0.0
  %174 = vmatpush1.msra.mxu0 0.0
  %175 = vmatprep.subr.mxu0 0.0
  %176 = vmatpush1.msra.mxu0 0.0
  %177 = vmatprep.subr.mxu0 0.0
  %178 = vmatpush1.msra.mxu0 0.0
  %179 = vmatprep.subr.mxu0 0.0
  %180 = vmatpush1.msra.mxu0 0.0
  %181 = vmatprep.subr.mxu0 0.0
  %182 = vmatpush1.msra.mxu0 0.0
  %183 = vmatprep.subr.mxu0 0.0
  %184 = vmatpush1.msra.mxu0 0.0
  %185 = vmatprep.subr.mxu0 0.0
  %186 = vmatpush1.msra.mxu0 0.0
  %187 = vmatprep.subr.mxu0 0.0
  %188 = vmatpush1.msra.mxu0 0.0
  %189 = vmatprep.mubr.f32.mxu0 0.0
  %v190 = vand.u32 %v119, 4294901760
  %v191 = vsub.f32 %v119, %v190
  %v192 = vand.u32 %v191, 4294901760
  %v193 = vsub.f32 %v191, %v192
  %v194 = vand.u32 %v193, 4294901760
  %195 = vmatmul.mubr.f32.gmra.mrb[0].mxu0 %v194
  %v196 = vpop.f32.mrb[0].mxu0
  %v197 = vadd.f32 0.0, %v196
  %v198 = vpop.f32.mrb[0].mxu0
  %199 = vdwg.mxu0
  %200 = vmatprep.subr.mxu0 0.0
  %v201 = vand.u32 %v47, 4294901760
  %v202 = vsub.f32 %v47, %v201
  %v203 = vand.u32 %v202, 4294901760
  %v204 = vsub.f32 %v202, %v203
  %v205 = vand.u32 %v204, 4294901760
  %206 = vmatpush1.msra.mxu0 %v205
  %207 = vmatprep.subr.mxu0 0.0
  %v208 = vand.u32 %v48, 4294901760
  %v209 = vsub.f32 %v48, %v208
  %v210 = vand.u32 %v209, 4294901760
  %v211 = vsub.f32 %v209, %v210
  %v212 = vand.u32 %v211, 4294901760
  %213 = vmatpush1.msra.mxu0 %v212
  %214 = vmatprep.subr.mxu0 0.0
  %v215 = vand.u32 %v49, 4294901760
  %v216 = vsub.f32 %v49, %v215
  %v217 = vand.u32 %v216, 4294901760
  %v218 = vsub.f32 %v216, %v217
  %v219 = vand.u32 %v218, 4294901760
  %220 = vmatpush1.msra.mxu0 %v219
  %221 = vmatprep.subr.mxu0 0.0
  %v222 = vand.u32 %v50, 4294901760
  %v223 = vsub.f32 %v50, %v222
  %v224 = vand.u32 %v223, 4294901760
  %v225 = vsub.f32 %v223, %v224
  %v226 = vand.u32 %v225, 4294901760
  %227 = vmatpush1.msra.mxu0 %v226
  %228 = vmatprep.subr.mxu0 0.0
  %229 = vmatpush1.msra.mxu0 0.0
  %230 = vmatprep.subr.mxu0 0.0
  %231 = vmatpush1.msra.mxu0 0.0
  %232 = vmatprep.subr.mxu0 0.0
  %233 = vmatpush1.msra.mxu0 0.0
  %234 = vmatprep.subr.mxu0 0.0
  %235 = vmatpush1.msra.mxu0 0.0
  %236 = vmatprep.subr.mxu0 0.0
  %237 = vmatpush1.msra.mxu0 0.0
  %238 = vmatprep.subr.mxu0 0.0
  %239 = vmatpush1.msra.mxu0 0.0
  %240 = vmatprep.subr.mxu0 0.0
  %241 = vmatpush1.msra.mxu0 0.0
  %242 = vmatprep.subr.mxu0 0.0
  %243 = vmatpush1.msra.mxu0 0.0
  %244 = vmatprep.subr.mxu0 0.0
  %245 = vmatpush1.msra.mxu0 0.0
  %246 = vmatprep.subr.mxu0 0.0
  %247 = vmatpush1.msra.mxu0 0.0
  %248 = vmatprep.subr.mxu0 0.0
  %249 = vmatpush1.msra.mxu0 0.0
  %250 = vmatprep.subr.mxu0 0.0
  %251 = vmatpush1.msra.mxu0 0.0
  %252 = vmatprep.subr.mxu0 0.0
  %253 = vmatpush1.msra.mxu0 0.0
  %254 = vmatprep.subr.mxu0 0.0
  %255 = vmatpush1.msra.mxu0 0.0
  %256 = vmatprep.subr.mxu0 0.0
  %257 = vmatpush1.msra.mxu0 0.0
  %258 = vmatprep.subr.mxu0 0.0
  %259 = vmatpush1.msra.mxu0 0.0
  %260 = vmatprep.subr.mxu0 0.0
  %261 = vmatpush1.msra.mxu0 0.0
  %262 = vmatprep.subr.mxu0 0.0
  %263 = vmatpush1.msra.mxu0 0.0
  %264 = vmatprep.subr.mxu0 0.0
  %265 = vmatpush1.msra.mxu0 0.0
  %266 = vmatprep.subr.mxu0 0.0
  %267 = vmatpush1.msra.mxu0 0.0
  %268 = vmatprep.subr.mxu0 0.0
  %269 = vmatpush1.msra.mxu0 0.0
  %270 = vmatprep.subr.mxu0 0.0
  %271 = vmatpush1.msra.mxu0 0.0
  %272 = vmatprep.subr.mxu0 0.0
  %273 = vmatpush1.msra.mxu0 0.0
  %274 = vmatprep.subr.mxu0 0.0
  %275 = vmatpush1.msra.mxu0 0.0
  %276 = vmatprep.subr.mxu0 0.0
  %277 = vmatpush1.msra.mxu0 0.0
  %278 = vmatprep.subr.mxu0 0.0
  %279 = vmatpush1.msra.mxu0 0.0
  %280 = vmatprep.subr.mxu0 0.0
  %281 = vmatpush1.msra.mxu0 0.0
  %282 = vmatprep.subr.mxu0 0.0
  %283 = vmatpush1.msra.mxu0 0.0
  %284 = vmatprep.mubr.f32.mxu0 0.0
  %v285 = vand.u32 %v119, 4294901760
  %286 = vmatmul.mubr.f32.gmra.mrb[0].mxu0 %v285
  %v287 = vpop.f32.mrb[0].mxu0
  %v288 = vadd.f32 %v197, %v287
  %v289 = vpop.f32.mrb[0].mxu0
  %290 = vdwg.mxu0
  %291 = vmatprep.subr.mxu0 0.0
  %v292 = vand.u32 %v47, 4294901760
  %v293 = vsub.f32 %v47, %v292
  %294 = vmatpush1.msra.mxu0 %v293
  %295 = vmatprep.subr.mxu0 0.0
  %v296 = vand.u32 %v48, 4294901760
  %v297 = vsub.f32 %v48, %v296
  %298 = vmatpush1.msra.mxu0 %v297
  %299 = vmatprep.subr.mxu0 0.0
  %v300 = vand.u32 %v49, 4294901760
  %v301 = vsub.f32 %v49, %v300
  %302 = vmatpush1.msra.mxu0 %v301
  %303 = vmatprep.subr.mxu0 0.0
  %v304 = vand.u32 %v50, 4294901760
  %v305 = vsub.f32 %v50, %v304
  %306 = vmatpush1.msra.mxu0 %v305
  %307 = vmatprep.subr.mxu0 0.0
  %308 = vmatpush1.msra.mxu0 0.0
  %309 = vmatprep.subr.mxu0 0.0
  %310 = vmatpush1.msra.mxu0 0.0
  %311 = vmatprep.subr.mxu0 0.0
  %312 = vmatpush1.msra.mxu0 0.0
  %313 = vmatprep.subr.mxu0 0.0
  %314 = vmatpush1.msra.mxu0 0.0
  %315 = vmatprep.subr.mxu0 0.0
  %316 = vmatpush1.msra.mxu0 0.0
  %317 = vmatprep.subr.mxu0 0.0
  %318 = vmatpush1.msra.mxu0 0.0
  %319 = vmatprep.subr.mxu0 0.0
  %320 = vmatpush1.msra.mxu0 0.0
  %321 = vmatprep.subr.mxu0 0.0
  %322 = vmatpush1.msra.mxu0 0.0
  %323 = vmatprep.subr.mxu0 0.0
  %324 = vmatpush1.msra.mxu0 0.0
  %325 = vmatprep.subr.mxu0 0.0
  %326 = vmatpush1.msra.mxu0 0.0
  %327 = vmatprep.subr.mxu0 0.0
  %328 = vmatpush1.msra.mxu0 0.0
  %329 = vmatprep.subr.mxu0 0.0
  %330 = vmatpush1.msra.mxu0 0.0
  %331 = vmatprep.subr.mxu0 0.0
  %332 = vmatpush1.msra.mxu0 0.0
  %333 = vmatprep.subr.mxu0 0.0
  %334 = vmatpush1.msra.mxu0 0.0
  %335 = vmatprep.subr.mxu0 0.0
  %336 = vmatpush1.msra.mxu0 0.0
  %337 = vmatprep.subr.mxu0 0.0
  %338 = vmatpush1.msra.mxu0 0.0
  %339 = vmatprep.subr.mxu0 0.0
  %340 = vmatpush1.msra.mxu0 0.0
  %341 = vmatprep.subr.mxu0 0.0
  %342 = vmatpush1.msra.mxu0 0.0
  %343 = vmatprep.subr.mxu0 0.0
  %344 = vmatpush1.msra.mxu0 0.0
  %345 = vmatprep.subr.mxu0 0.0
  %346 = vmatpush1.msra.mxu0 0.0
  %347 = vmatprep.subr.mxu0 0.0
  %348 = vmatpush1.msra.mxu0 0.0
  %349 = vmatprep.subr.mxu0 0.0
  %350 = vmatpush1.msra.mxu0 0.0
  %351 = vmatprep.subr.mxu0 0.0
  %352 = vmatpush1.msra.mxu0 0.0
  %353 = vmatprep.subr.mxu0 0.0
  %354 = vmatpush1.msra.mxu0 0.0
  %355 = vmatprep.subr.mxu0 0.0
  %356 = vmatpush1.msra.mxu0 0.0
  %357 = vmatprep.subr.mxu0 0.0
  %358 = vmatpush1.msra.mxu0 0.0
  %359 = vmatprep.subr.mxu0 0.0
  %360 = vmatpush1.msra.mxu0 0.0
  %361 = vmatprep.subr.mxu0 0.0
  %362 = vmatpush1.msra.mxu0 0.0
  %363 = vmatprep.mubr.f32.mxu0 0.0
  %v364 = vand.u32 %v119, 4294901760
  %v365 = vsub.f32 %v119, %v364
  %366 = vmatmul.mubr.f32.gmra.mrb[0].mxu0 %v365
  %v367 = vpop.f32.mrb[0].mxu0
  %v368 = vadd.f32 %v288, %v367
  %v369 = vpop.f32.mrb[0].mxu0
  %370 = vdwg.mxu0
  %371 = vmatprep.subr.mxu0 0.0
  %v372 = vand.u32 %v47, 4294901760
  %373 = vmatpush1.msra.mxu0 %v372
  %374 = vmatprep.subr.mxu0 0.0
  %v375 = vand.u32 %v48, 4294901760
  %376 = vmatpush1.msra.mxu0 %v375
  %377 = vmatprep.subr.mxu0 0.0
  %v378 = vand.u32 %v49, 4294901760
  %379 = vmatpush1.msra.mxu0 %v378
  %380 = vmatprep.subr.mxu0 0.0
  %v381 = vand.u32 %v50, 4294901760
  %382 = vmatpush1.msra.mxu0 %v381
  %383 = vmatprep.subr.mxu0 0.0
  %384 = vmatpush1.msra.mxu0 0.0
  %385 = vmatprep.subr.mxu0 0.0
  %386 = vmatpush1.msra.mxu0 0.0
  %387 = vmatprep.subr.mxu0 0.0
  %388 = vmatpush1.msra.mxu0 0.0
  %389 = vmatprep.subr.mxu0 0.0
  %390 = vmatpush1.msra.mxu0 0.0
  %391 = vmatprep.subr.mxu0 0.0
  %392 = vmatpush1.msra.mxu0 0.0
  %393 = vmatprep.subr.mxu0 0.0
  %394 = vmatpush1.msra.mxu0 0.0
  %395 = vmatprep.subr.mxu0 0.0
  %396 = vmatpush1.msra.mxu0 0.0
  %397 = vmatprep.subr.mxu0 0.0
  %398 = vmatpush1.msra.mxu0 0.0
  %399 = vmatprep.subr.mxu0 0.0
  %400 = vmatpush1.msra.mxu0 0.0
  %401 = vmatprep.subr.mxu0 0.0
  %402 = vmatpush1.msra.mxu0 0.0
  %403 = vmatprep.subr.mxu0 0.0
  %404 = vmatpush1.msra.mxu0 0.0
  %405 = vmatprep.subr.mxu0 0.0
  %406 = vmatpush1.msra.mxu0 0.0
  %407 = vmatprep.subr.mxu0 0.0
  %408 = vmatpush1.msra.mxu0 0.0
  %409 = vmatprep.subr.mxu0 0.0
  %410 = vmatpush1.msra.mxu0 0.0
  %411 = vmatprep.subr.mxu0 0.0
  %412 = vmatpush1.msra.mxu0 0.0
  %413 = vmatprep.subr.mxu0 0.0
  %414 = vmatpush1.msra.mxu0 0.0
  %415 = vmatprep.subr.mxu0 0.0
  %416 = vmatpush1.msra.mxu0 0.0
  %417 = vmatprep.subr.mxu0 0.0
  %418 = vmatpush1.msra.mxu0 0.0
  %419 = vmatprep.subr.mxu0 0.0
  %420 = vmatpush1.msra.mxu0 0.0
  %421 = vmatprep.subr.mxu0 0.0
  %422 = vmatpush1.msra.mxu0 0.0
  %423 = vmatprep.subr.mxu0 0.0
  %424 = vmatpush1.msra.mxu0 0.0
  %425 = vmatprep.subr.mxu0 0.0
  %426 = vmatpush1.msra.mxu0 0.0
  %427 = vmatprep.subr.mxu0 0.0
  %428 = vmatpush1.msra.mxu0 0.0
  %429 = vmatprep.subr.mxu0 0.0
  %430 = vmatpush1.msra.mxu0 0.0
  %431 = vmatprep.subr.mxu0 0.0
  %432 = vmatpush1.msra.mxu0 0.0
  %433 = vmatprep.subr.mxu0 0.0
  %434 = vmatpush1.msra.mxu0 0.0
  %435 = vmatprep.subr.mxu0 0.0
  %436 = vmatpush1.msra.mxu0 0.0
  %437 = vmatprep.subr.mxu0 0.0
  %438 = vmatpush1.msra.mxu0 0.0
  %439 = vmatprep.mubr.f32.mxu0 0.0
  %v440 = vand.u32 %v119, 4294901760
  %v441 = vsub.f32 %v119, %v440
  %v442 = vand.u32 %v441, 4294901760
  %443 = vmatmul.mubr.f32.gmra.mrb[0].mxu0 %v442
  %v444 = vpop.f32.mrb[0].mxu0
  %v445 = vadd.f32 %v368, %v444
  %v446 = vpop.f32.mrb[0].mxu0
  %447 = vdwg.mxu0
  %448 = vmatprep.subr.mxu0 0.0
  %v449 = vand.u32 %v47, 4294901760
  %v450 = vsub.f32 %v47, %v449
  %v451 = vand.u32 %v450, 4294901760
  %452 = vmatpush1.msra.mxu0 %v451
  %453 = vmatprep.subr.mxu0 0.0
  %v454 = vand.u32 %v48, 4294901760
  %v455 = vsub.f32 %v48, %v454
  %v456 = vand.u32 %v455, 4294901760
  %457 = vmatpush1.msra.mxu0 %v456
  %458 = vmatprep.subr.mxu0 0.0
  %v459 = vand.u32 %v49, 4294901760
  %v460 = vsub.f32 %v49, %v459
  %v461 = vand.u32 %v460, 4294901760
  %462 = vmatpush1.msra.mxu0 %v461
  %463 = vmatprep.subr.mxu0 0.0
  %v464 = vand.u32 %v50, 4294901760
  %v465 = vsub.f32 %v50, %v464
  %v466 = vand.u32 %v465, 4294901760
  %467 = vmatpush1.msra.mxu0 %v466
  %468 = vmatprep.subr.mxu0 0.0
  %469 = vmatpush1.msra.mxu0 0.0
  %470 = vmatprep.subr.mxu0 0.0
  %471 = vmatpush1.msra.mxu0 0.0
  %472 = vmatprep.subr.mxu0 0.0
  %473 = vmatpush1.msra.mxu0 0.0
  %474 = vmatprep.subr.mxu0 0.0
  %475 = vmatpush1.msra.mxu0 0.0
  %476 = vmatprep.subr.mxu0 0.0
  %477 = vmatpush1.msra.mxu0 0.0
  %478 = vmatprep.subr.mxu0 0.0
  %479 = vmatpush1.msra.mxu0 0.0
  %480 = vmatprep.subr.mxu0 0.0
  %481 = vmatpush1.msra.mxu0 0.0
  %482 = vmatprep.subr.mxu0 0.0
  %483 = vmatpush1.msra.mxu0 0.0
  %484 = vmatprep.subr.mxu0 0.0
  %485 = vmatpush1.msra.mxu0 0.0
  %486 = vmatprep.subr.mxu0 0.0
  %487 = vmatpush1.msra.mxu0 0.0
  %488 = vmatprep.subr.mxu0 0.0
  %489 = vmatpush1.msra.mxu0 0.0
  %490 = vmatprep.subr.mxu0 0.0
  %491 = vmatpush1.msra.mxu0 0.0
  %492 = vmatprep.subr.mxu0 0.0
  %493 = vmatpush1.msra.mxu0 0.0
  %494 = vmatprep.subr.mxu0 0.0
  %495 = vmatpush1.msra.mxu0 0.0
  %496 = vmatprep.subr.mxu0 0.0
  %497 = vmatpush1.msra.mxu0 0.0
  %498 = vmatprep.subr.mxu0 0.0
  %499 = vmatpush1.msra.mxu0 0.0
  %500 = vmatprep.subr.mxu0 0.0
  %501 = vmatpush1.msra.mxu0 0.0
  %502 = vmatprep.subr.mxu0 0.0
  %503 = vmatpush1.msra.mxu0 0.0
  %504 = vmatprep.subr.mxu0 0.0
  %505 = vmatpush1.msra.mxu0 0.0
  %506 = vmatprep.subr.mxu0 0.0
  %507 = vmatpush1.msra.mxu0 0.0
  %508 = vmatprep.subr.mxu0 0.0
  %509 = vmatpush1.msra.mxu0 0.0
  %510 = vmatprep.subr.mxu0 0.0
  %511 = vmatpush1.msra.mxu0 0.0
  %512 = vmatprep.subr.mxu0 0.0
  %513 = vmatpush1.msra.mxu0 0.0
  %514 = vmatprep.subr.mxu0 0.0
  %515 = vmatpush1.msra.mxu0 0.0
  %516 = vmatprep.subr.mxu0 0.0
  %517 = vmatpush1.msra.mxu0 0.0
  %518 = vmatprep.subr.mxu0 0.0
  %519 = vmatpush1.msra.mxu0 0.0
  %520 = vmatprep.subr.mxu0 0.0
  %521 = vmatpush1.msra.mxu0 0.0
  %522 = vmatprep.subr.mxu0 0.0
  %523 = vmatpush1.msra.mxu0 0.0
  %524 = vmatprep.mubr.f32.mxu0 0.0
  %v525 = vand.u32 %v119, 4294901760
  %526 = vmatmul.mubr.f32.gmra.mrb[0].mxu0 %v525
  %v527 = vpop.f32.mrb[0].mxu0
  %v528 = vadd.f32 %v445, %v527
  %v529 = vpop.f32.mrb[0].mxu0
  %530 = vdwg.mxu0
  %531 = vmatprep.subr.mxu0 0.0
  %v532 = vand.u32 %v47, 4294901760
  %533 = vmatpush1.msra.mxu0 %v532
  %534 = vmatprep.subr.mxu0 0.0
  %v535 = vand.u32 %v48, 4294901760
  %536 = vmatpush1.msra.mxu0 %v535
  %537 = vmatprep.subr.mxu0 0.0
  %v538 = vand.u32 %v49, 4294901760
  %539 = vmatpush1.msra.mxu0 %v538
  %540 = vmatprep.subr.mxu0 0.0
  %v541 = vand.u32 %v50, 4294901760
  %542 = vmatpush1.msra.mxu0 %v541
  %543 = vmatprep.subr.mxu0 0.0
  %544 = vmatpush1.msra.mxu0 0.0
  %545 = vmatprep.subr.mxu0 0.0
  %546 = vmatpush1.msra.mxu0 0.0
  %547 = vmatprep.subr.mxu0 0.0
  %548 = vmatpush1.msra.mxu0 0.0
  %549 = vmatprep.subr.mxu0 0.0
  %550 = vmatpush1.msra.mxu0 0.0
  %551 = vmatprep.subr.mxu0 0.0
  %552 = vmatpush1.msra.mxu0 0.0
  %553 = vmatprep.subr.mxu0 0.0
  %554 = vmatpush1.msra.mxu0 0.0
  %555 = vmatprep.subr.mxu0 0.0
  %556 = vmatpush1.msra.mxu0 0.0
  %557 = vmatprep.subr.mxu0 0.0
  %558 = vmatpush1.msra.mxu0 0.0
  %559 = vmatprep.subr.mxu0 0.0
  %560 = vmatpush1.msra.mxu0 0.0
  %561 = vmatprep.subr.mxu0 0.0
  %562 = vmatpush1.msra.mxu0 0.0
  %563 = vmatprep.subr.mxu0 0.0
  %564 = vmatpush1.msra.mxu0 0.0
  %565 = vmatprep.subr.mxu0 0.0
  %566 = vmatpush1.msra.mxu0 0.0
  %567 = vmatprep.subr.mxu0 0.0
  %568 = vmatpush1.msra.mxu0 0.0
  %569 = vmatprep.subr.mxu0 0.0
  %570 = vmatpush1.msra.mxu0 0.0
  %571 = vmatprep.subr.mxu0 0.0
  %572 = vmatpush1.msra.mxu0 0.0
  %573 = vmatprep.subr.mxu0 0.0
  %574 = vmatpush1.msra.mxu0 0.0
  %575 = vmatprep.subr.mxu0 0.0
  %576 = vmatpush1.msra.mxu0 0.0
  %577 = vmatprep.subr.mxu0 0.0
  %578 = vmatpush1.msra.mxu0 0.0
  %579 = vmatprep.subr.mxu0 0.0
  %580 = vmatpush1.msra.mxu0 0.0
  %581 = vmatprep.subr.mxu0 0.0
  %582 = vmatpush1.msra.mxu0 0.0
  %583 = vmatprep.subr.mxu0 0.0
  %584 = vmatpush1.msra.mxu0 0.0
  %585 = vmatprep.subr.mxu0 0.0
  %586 = vmatpush1.msra.mxu0 0.0
  %587 = vmatprep.subr.mxu0 0.0
  %588 = vmatpush1.msra.mxu0 0.0
  %589 = vmatprep.subr.mxu0 0.0
  %590 = vmatpush1.msra.mxu0 0.0
  %591 = vmatprep.subr.mxu0 0.0
  %592 = vmatpush1.msra.mxu0 0.0
  %593 = vmatprep.subr.mxu0 0.0
  %594 = vmatpush1.msra.mxu0 0.0
  %595 = vmatprep.subr.mxu0 0.0
  %596 = vmatpush1.msra.mxu0 0.0
  %597 = vmatprep.subr.mxu0 0.0
  %598 = vmatpush1.msra.mxu0 0.0
  %599 = vmatprep.mubr.f32.mxu0 0.0
  %v600 = vand.u32 %v119, 4294901760
  %601 = vmatmul.mubr.f32.gmra.mrb[0].mxu0 %v600
  %v602 = vpop.f32.mrb[0].mxu0
  %v603 = vadd.f32 %v528, %v602
  %v604 = vpop.f32.mrb[0].mxu0
  %605 = vdwg.mxu0
  %v606 = vadd.f32 %v111, %v603
  %v607 = vmul.f32 %v606, %v40
  %v608 = vxor.u32 %v607, 2147483648
  %v609 = vmul.f32 %v608, 1.442695
  %v610 = vpow.pop %v609
  %v611 = vadd.f32 %v610, 1.0
  %v612 = vrcp.pop %v611
  %v613 = vmul.f32 1.0, %v612
  %v614 = vmul.f32 %v613, 2.0
  %v615 = vsub.f32 %v614, 1.0
  %v616 = vsel %vm39, %v615, %v613
  %v617 = vmul.f32 %v616, 0.0
  %619 = vrot.lane.b32.xlu0 %v616, 64
  %v620 = vpop.permute.xlu0 %619
  %v622 = vmul.f32 %v616, %v620
  %624 = vrot.lane.b32.xlu0 %v622, 32
  %v625 = vpop.permute.xlu0 %624
  %v627 = vadd.f32 %v617, %v625
  %v628 = vtanh.pop %v627
  %630 = vrot.lane.b32.xlu0 %v628, 64
  %v631 = vpop.permute.xlu0 %630
  %v633 = vmul.f32 %v616, %v631
  %v635 = vlaneseq
  %v636 = vshrl.u32 %v635, 7
  %v637 = vsub.s32 0, %v636
  %v638 = vrot.slane %v56, %v637
  %641 = vrot.lane.b32.xlu0 %v633, 32
  %v642 = vpop.permute.xlu0 %641
  %v643 = vsel %vm117, %v642, 0
  %645 = vmatprep.subr.mxu0 0.0
  %v646 = vand.u32 %v43, 4294901760
  %647 = vmatpush1.msra.mxu0 %v646
  %648 = vmatprep.subr.mxu0 0.0
  %v649 = vand.u32 %v44, 4294901760
  %650 = vmatpush1.msra.mxu0 %v649
  %651 = vmatprep.subr.mxu0 0.0
  %v652 = vand.u32 %v45, 4294901760
  %653 = vmatpush1.msra.mxu0 %v652
  %654 = vmatprep.subr.mxu0 0.0
  %v655 = vand.u32 %v46, 4294901760
  %656 = vmatpush1.msra.mxu0 %v655
  %657 = vmatprep.subr.mxu0 0.0
  %658 = vmatpush1.msra.mxu0 0.0
  %659 = vmatprep.subr.mxu0 0.0
  %660 = vmatpush1.msra.mxu0 0.0
  %661 = vmatprep.subr.mxu0 0.0
  %662 = vmatpush1.msra.mxu0 0.0
  %663 = vmatprep.subr.mxu0 0.0
  %664 = vmatpush1.msra.mxu0 0.0
  %665 = vmatprep.subr.mxu0 0.0
  %666 = vmatpush1.msra.mxu0 0.0
  %667 = vmatprep.subr.mxu0 0.0
  %668 = vmatpush1.msra.mxu0 0.0
  %669 = vmatprep.subr.mxu0 0.0
  %670 = vmatpush1.msra.mxu0 0.0
  %671 = vmatprep.subr.mxu0 0.0
  %672 = vmatpush1.msra.mxu0 0.0
  %673 = vmatprep.subr.mxu0 0.0
  %674 = vmatpush1.msra.mxu0 0.0
  %675 = vmatprep.subr.mxu0 0.0
  %676 = vmatpush1.msra.mxu0 0.0
  %677 = vmatprep.subr.mxu0 0.0
  %678 = vmatpush1.msra.mxu0 0.0
  %679 = vmatprep.subr.mxu0 0.0
  %680 = vmatpush1.msra.mxu0 0.0
  %681 = vmatprep.subr.mxu0 0.0
  %682 = vmatpush1.msra.mxu0 0.0
  %683 = vmatprep.subr.mxu0 0.0
  %684 = vmatpush1.msra.mxu0 0.0
  %685 = vmatprep.subr.mxu0 0.0
  %686 = vmatpush1.msra.mxu0 0.0
  %687 = vmatprep.subr.mxu0 0.0
  %688 = vmatpush1.msra.mxu0 0.0
  %689 = vmatprep.subr.mxu0 0.0
  %690 = vmatpush1.msra.mxu0 0.0
  %691 = vmatprep.subr.mxu0 0.0
  %692 = vmatpush1.msra.mxu0 0.0
  %693 = vmatprep.subr.mxu0 0.0
  %694 = vmatpush1.msra.mxu0 0.0
  %695 = vmatprep.subr.mxu0 0.0
  %696 = vmatpush1.msra.mxu0 0.0
  %697 = vmatprep.subr.mxu0 0.0
  %698 = vmatpush1.msra.mxu0 0.0
  %699 = vmatprep.subr.mxu0 0.0
  %700 = vmatpush1.msra.mxu0 0.0
  %701 = vmatprep.subr.mxu0 0.0
  %702 = vmatpush1.msra.mxu0 0.0
  %703 = vmatprep.subr.mxu0 0.0
  %704 = vmatpush1.msra.mxu0 0.0
  %705 = vmatprep.subr.mxu0 0.0
  %706 = vmatpush1.msra.mxu0 0.0
  %707 = vmatprep.subr.mxu0 0.0
  %708 = vmatpush1.msra.mxu0 0.0
  %709 = vmatprep.subr.mxu0 0.0
  %710 = vmatpush1.msra.mxu0 0.0
  %711 = vmatprep.subr.mxu0 0.0
  %712 = vmatpush1.msra.mxu0 0.0
  %713 = vmatprep.mubr.f32.mxu0 0.0
  %v714 = vand.u32 %v643, 4294901760
  %v715 = vsub.f32 %v643, %v714
  %v716 = vand.u32 %v715, 4294901760
  %v717 = vsub.f32 %v715, %v716
  %v718 = vand.u32 %v717, 4294901760
  %719 = vmatmul.mubr.f32.gmra.mrb[0].mxu0 %v718
  %v720 = vpop.f32.mrb[0].mxu0
  %v721 = vadd.f32 %v638, %v720
  %v722 = vpop.f32.mrb[0].mxu0
  %723 = vdwg.mxu0
  %724 = vmatprep.subr.mxu0 0.0
  %v725 = vand.u32 %v43, 4294901760
  %v726 = vsub.f32 %v43, %v725
  %v727 = vand.u32 %v726, 4294901760
  %v728 = vsub.f32 %v726, %v727
  %v729 = vand.u32 %v728, 4294901760
  %730 = vmatpush1.msra.mxu0 %v729
  %731 = vmatprep.subr.mxu0 0.0
  %v732 = vand.u32 %v44, 4294901760
  %v733 = vsub.f32 %v44, %v732
  %v734 = vand.u32 %v733, 4294901760
  %v735 = vsub.f32 %v733, %v734
  %v736 = vand.u32 %v735, 4294901760
  %737 = vmatpush1.msra.mxu0 %v736
  %738 = vmatprep.subr.mxu0 0.0
  %v739 = vand.u32 %v45, 4294901760
  %v740 = vsub.f32 %v45, %v739
  %v741 = vand.u32 %v740, 4294901760
  %v742 = vsub.f32 %v740, %v741
  %v743 = vand.u32 %v742, 4294901760
  %744 = vmatpush1.msra.mxu0 %v743
  %745 = vmatprep.subr.mxu0 0.0
  %v746 = vand.u32 %v46, 4294901760
  %v747 = vsub.f32 %v46, %v746
  %v748 = vand.u32 %v747, 4294901760
  %v749 = vsub.f32 %v747, %v748
  %v750 = vand.u32 %v749, 4294901760
  %751 = vmatpush1.msra.mxu0 %v750
  %752 = vmatprep.subr.mxu0 0.0
  %753 = vmatpush1.msra.mxu0 0.0
  %754 = vmatprep.subr.mxu0 0.0
  %755 = vmatpush1.msra.mxu0 0.0
  %756 = vmatprep.subr.mxu0 0.0
  %757 = vmatpush1.msra.mxu0 0.0
  %758 = vmatprep.subr.mxu0 0.0
  %759 = vmatpush1.msra.mxu0 0.0
  %760 = vmatprep.subr.mxu0 0.0
  %761 = vmatpush1.msra.mxu0 0.0
  %762 = vmatprep.subr.mxu0 0.0
  %763 = vmatpush1.msra.mxu0 0.0
  %764 = vmatprep.subr.mxu0 0.0
  %765 = vmatpush1.msra.mxu0 0.0
  %766 = vmatprep.subr.mxu0 0.0
  %767 = vmatpush1.msra.mxu0 0.0
  %768 = vmatprep.subr.mxu0 0.0
  %769 = vmatpush1.msra.mxu0 0.0
  %770 = vmatprep.subr.mxu0 0.0
  %771 = vmatpush1.msra.mxu0 0.0
  %772 = vmatprep.subr.mxu0 0.0
  %773 = vmatpush1.msra.mxu0 0.0
  %774 = vmatprep.subr.mxu0 0.0
  %775 = vmatpush1.msra.mxu0 0.0
  %776 = vmatprep.subr.mxu0 0.0
  %777 = vmatpush1.msra.mxu0 0.0
  %778 = vmatprep.subr.mxu0 0.0
  %779 = vmatpush1.msra.mxu0 0.0
  %780 = vmatprep.subr.mxu0 0.0
  %781 = vmatpush1.msra.mxu0 0.0
  %782 = vmatprep.subr.mxu0 0.0
  %783 = vmatpush1.msra.mxu0 0.0
  %784 = vmatprep.subr.mxu0 0.0
  %785 = vmatpush1.msra.mxu0 0.0
  %786 = vmatprep.subr.mxu0 0.0
  %787 = vmatpush1.msra.mxu0 0.0
  %788 = vmatprep.subr.mxu0 0.0
  %789 = vmatpush1.msra.mxu0 0.0
  %790 = vmatprep.subr.mxu0 0.0
  %791 = vmatpush1.msra.mxu0 0.0
  %792 = vmatprep.subr.mxu0 0.0
  %793 = vmatpush1.msra.mxu0 0.0
  %794 = vmatprep.subr.mxu0 0.0
  %795 = vmatpush1.msra.mxu0 0.0
  %796 = vmatprep.subr.mxu0 0.0
  %797 = vmatpush1.msra.mxu0 0.0
  %798 = vmatprep.subr.mxu0 0.0
  %799 = vmatpush1.msra.mxu0 0.0
  %800 = vmatprep.subr.mxu0 0.0
  %801 = vmatpush1.msra.mxu0 0.0
  %802 = vmatprep.subr.mxu0 0.0
  %803 = vmatpush1.msra.mxu0 0.0
  %804 = vmatprep.subr.mxu0 0.0
  %805 = vmatpush1.msra.mxu0 0.0
  %806 = vmatprep.subr.mxu0 0.0
  %807 = vmatpush1.msra.mxu0 0.0
  %808 = vmatprep.mubr.f32.mxu0 0.0
  %v809 = vand.u32 %v643, 4294901760
  %810 = vmatmul.mubr.f32.gmra.mrb[0].mxu0 %v809
  %v811 = vpop.f32.mrb[0].mxu0
  %v812 = vadd.f32 %v721, %v811
  %v813 = vpop.f32.mrb[0].mxu0
  %814 = vdwg.mxu0
  %815 = vmatprep.subr.mxu0 0.0
  %v816 = vand.u32 %v43, 4294901760
  %v817 = vsub.f32 %v43, %v816
  %818 = vmatpush1.msra.mxu0 %v817
  %819 = vmatprep.subr.mxu0 0.0
  %v820 = vand.u32 %v44, 4294901760
  %v821 = vsub.f32 %v44, %v820
  %822 = vmatpush1.msra.mxu0 %v821
  %823 = vmatprep.subr.mxu0 0.0
  %v824 = vand.u32 %v45, 4294901760
  %v825 = vsub.f32 %v45, %v824
  %826 = vmatpush1.msra.mxu0 %v825
  %827 = vmatprep.subr.mxu0 0.0
  %v828 = vand.u32 %v46, 4294901760
  %v829 = vsub.f32 %v46, %v828
  %830 = vmatpush1.msra.mxu0 %v829
  %831 = vmatprep.subr.mxu0 0.0
  %832 = vmatpush1.msra.mxu0 0.0
  %833 = vmatprep.subr.mxu0 0.0
  %834 = vmatpush1.msra.mxu0 0.0
  %835 = vmatprep.subr.mxu0 0.0
  %836 = vmatpush1.msra.mxu0 0.0
  %837 = vmatprep.subr.mxu0 0.0
  %838 = vmatpush1.msra.mxu0 0.0
  %839 = vmatprep.subr.mxu0 0.0
  %840 = vmatpush1.msra.mxu0 0.0
  %841 = vmatprep.subr.mxu0 0.0
  %842 = vmatpush1.msra.mxu0 0.0
  %843 = vmatprep.subr.mxu0 0.0
  %844 = vmatpush1.msra.mxu0 0.0
  %845 = vmatprep.subr.mxu0 0.0
  %846 = vmatpush1.msra.mxu0 0.0
  %847 = vmatprep.subr.mxu0 0.0
  %848 = vmatpush1.msra.mxu0 0.0
  %849 = vmatprep.subr.mxu0 0.0
  %850 = vmatpush1.msra.mxu0 0.0
  %851 = vmatprep.subr.mxu0 0.0
  %852 = vmatpush1.msra.mxu0 0.0
  %853 = vmatprep.subr.mxu0 0.0
  %854 = vmatpush1.msra.mxu0 0.0
  %855 = vmatprep.subr.mxu0 0.0
  %856 = vmatpush1.msra.mxu0 0.0
  %857 = vmatprep.subr.mxu0 0.0
  %858 = vmatpush1.msra.mxu0 0.0
  %859 = vmatprep.subr.mxu0 0.0
  %860 = vmatpush1.msra.mxu0 0.0
  %861 = vmatprep.subr.mxu0 0.0
  %862 = vmatpush1.msra.mxu0 0.0
  %863 = vmatprep.subr.mxu0 0.0
  %864 = vmatpush1.msra.mxu0 0.0
  %865 = vmatprep.subr.mxu0 0.0
  %866 = vmatpush1.msra.mxu0 0.0
  %867 = vmatprep.subr.mxu0 0.0
  %868 = vmatpush1.msra.mxu0 0.0
  %869 = vmatprep.subr.mxu0 0.0
  %870 = vmatpush1.msra.mxu0 0.0
  %871 = vmatprep.subr.mxu0 0.0
  %872 = vmatpush1.msra.mxu0 0.0
  %873 = vmatprep.subr.mxu0 0.0
  %874 = vmatpush1.msra.mxu0 0.0
  %875 = vmatprep.subr.mxu0 0.0
  %876 = vmatpush1.msra.mxu0 0.0
  %877 = vmatprep.subr.mxu0 0.0
  %878 = vmatpush1.msra.mxu0 0.0
  %879 = vmatprep.subr.mxu0 0.0
  %880 = vmatpush1.msra.mxu0 0.0
  %881 = vmatprep.subr.mxu0 0.0
  %882 = vmatpush1.msra.mxu0 0.0
  %883 = vmatprep.subr.mxu0 0.0
  %884 = vmatpush1.msra.mxu0 0.0
  %885 = vmatprep.subr.mxu0 0.0
  %886 = vmatpush1.msra.mxu0 0.0
  %887 = vmatprep.mubr.f32.mxu0 0.0
  %v888 = vand.u32 %v643, 4294901760
  %v889 = vsub.f32 %v643, %v888
  %890 = vmatmul.mubr.f32.gmra.mrb[0].mxu0 %v889
  %v891 = vpop.f32.mrb[0].mxu0
  %v892 = vadd.f32 %v812, %v891
  %v893 = vpop.f32.mrb[0].mxu0
  %894 = vdwg.mxu0
  %895 = vmatprep.subr.mxu0 0.0
  %v896 = vand.u32 %v43, 4294901760
  %897 = vmatpush1.msra.mxu0 %v896
  %898 = vmatprep.subr.mxu0 0.0
  %v899 = vand.u32 %v44, 4294901760
  %900 = vmatpush1.msra.mxu0 %v899
  %901 = vmatprep.subr.mxu0 0.0
  %v902 = vand.u32 %v45, 4294901760
  %903 = vmatpush1.msra.mxu0 %v902
  %904 = vmatprep.subr.mxu0 0.0
  %v905 = vand.u32 %v46, 4294901760
  %906 = vmatpush1.msra.mxu0 %v905
  %907 = vmatprep.subr.mxu0 0.0
  %908 = vmatpush1.msra.mxu0 0.0
  %909 = vmatprep.subr.mxu0 0.0
  %910 = vmatpush1.msra.mxu0 0.0
  %911 = vmatprep.subr.mxu0 0.0
  %912 = vmatpush1.msra.mxu0 0.0
  %913 = vmatprep.subr.mxu0 0.0
  %914 = vmatpush1.msra.mxu0 0.0
  %915 = vmatprep.subr.mxu0 0.0
  %916 = vmatpush1.msra.mxu0 0.0
  %917 = vmatprep.subr.mxu0 0.0
  %918 = vmatpush1.msra.mxu0 0.0
  %919 = vmatprep.subr.mxu0 0.0
  %920 = vmatpush1.msra.mxu0 0.0
  %921 = vmatprep.subr.mxu0 0.0
  %922 = vmatpush1.msra.mxu0 0.0
  %923 = vmatprep.subr.mxu0 0.0
  %924 = vmatpush1.msra.mxu0 0.0
  %925 = vmatprep.subr.mxu0 0.0
  %926 = vmatpush1.msra.mxu0 0.0
  %927 = vmatprep.subr.mxu0 0.0
  %928 = vmatpush1.msra.mxu0 0.0
  %929 = vmatprep.subr.mxu0 0.0
  %930 = vmatpush1.msra.mxu0 0.0
  %931 = vmatprep.subr.mxu0 0.0
  %932 = vmatpush1.msra.mxu0 0.0
  %933 = vmatprep.subr.mxu0 0.0
  %934 = vmatpush1.msra.mxu0 0.0
  %935 = vmatprep.subr.mxu0 0.0
  %936 = vmatpush1.msra.mxu0 0.0
  %937 = vmatprep.subr.mxu0 0.0
  %938 = vmatpush1.msra.mxu0 0.0
  %939 = vmatprep.subr.mxu0 0.0
  %940 = vmatpush1.msra.mxu0 0.0
  %941 = vmatprep.subr.mxu0 0.0
  %942 = vmatpush1.msra.mxu0 0.0
  %943 = vmatprep.subr.mxu0 0.0
  %944 = vmatpush1.msra.mxu0 0.0
  %945 = vmatprep.subr.mxu0 0.0
  %946 = vmatpush1.msra.mxu0 0.0
  %947 = vmatprep.subr.mxu0 0.0
  %948 = vmatpush1.msra.mxu0 0.0
  %949 = vmatprep.subr.mxu0 0.0
  %950 = vmatpush1.msra.mxu0 0.0
  %951 = vmatprep.subr.mxu0 0.0
  %952 = vmatpush1.msra.mxu0 0.0
  %953 = vmatprep.subr.mxu0 0.0
  %954 = vmatpush1.msra.mxu0 0.0
  %955 = vmatprep.subr.mxu0 0.0
  %956 = vmatpush1.msra.mxu0 0.0
  %957 = vmatprep.subr.mxu0 0.0
  %958 = vmatpush1.msra.mxu0 0.0
  %959 = vmatprep.subr.mxu0 0.0
  %960 = vmatpush1.msra.mxu0 0.0
  %961 = vmatprep.subr.mxu0 0.0
  %962 = vmatpush1.msra.mxu0 0.0
  %963 = vmatprep.mubr.f32.mxu0 0.0
  %v964 = vand.u32 %v643, 4294901760
  %v965 = vsub.f32 %v643, %v964
  %v966 = vand.u32 %v965, 4294901760
  %967 = vmatmul.mubr.f32.gmra.mrb[0].mxu0 %v966
  %v968 = vpop.f32.mrb[0].mxu0
  %v969 = vadd.f32 %v892, %v968
  %v970 = vpop.f32.mrb[0].mxu0
  %971 = vdwg.mxu0
  %972 = vmatprep.subr.mxu0 0.0
  %v973 = vand.u32 %v43, 4294901760
  %v974 = vsub.f32 %v43, %v973
  %v975 = vand.u32 %v974, 4294901760
  %976 = vmatpush1.msra.mxu0 %v975
  %977 = vmatprep.subr.mxu0 0.0
  %v978 = vand.u32 %v44, 4294901760
  %v979 = vsub.f32 %v44, %v978
  %v980 = vand.u32 %v979, 4294901760
  %981 = vmatpush1.msra.mxu0 %v980
  %982 = vmatprep.subr.mxu0 0.0
  %v983 = vand.u32 %v45, 4294901760
  %v984 = vsub.f32 %v45, %v983
  %v985 = vand.u32 %v984, 4294901760
  %986 = vmatpush1.msra.mxu0 %v985
  %987 = vmatprep.subr.mxu0 0.0
  %v988 = vand.u32 %v46, 4294901760
  %v989 = vsub.f32 %v46, %v988
  %v990 = vand.u32 %v989, 4294901760
  %991 = vmatpush1.msra.mxu0 %v990
  %992 = vmatprep.subr.mxu0 0.0
  %993 = vmatpush1.msra.mxu0 0.0
  %994 = vmatprep.subr.mxu0 0.0
  %995 = vmatpush1.msra.mxu0 0.0
  %996 = vmatprep.subr.mxu0 0.0
  %997 = vmatpush1.msra.mxu0 0.0
  %998 = vmatprep.subr.mxu0 0.0
  %999 = vmatpush1.msra.mxu0 0.0
  %1000 = vmatprep.subr.mxu0 0.0
  %1001 = vmatpush1.msra.mxu0 0.0
  %1002 = vmatprep.subr.mxu0 0.0
  %1003 = vmatpush1.msra.mxu0 0.0
  %1004 = vmatprep.subr.mxu0 0.0
  %1005 = vmatpush1.msra.mxu0 0.0
  %1006 = vmatprep.subr.mxu0 0.0
  %1007 = vmatpush1.msra.mxu0 0.0
  %1008 = vmatprep.subr.mxu0 0.0
  %1009 = vmatpush1.msra.mxu0 0.0
  %1010 = vmatprep.subr.mxu0 0.0
  %1011 = vmatpush1.msra.mxu0 0.0
  %1012 = vmatprep.subr.mxu0 0.0
  %1013 = vmatpush1.msra.mxu0 0.0
  %1014 = vmatprep.subr.mxu0 0.0
  %1015 = vmatpush1.msra.mxu0 0.0
  %1016 = vmatprep.subr.mxu0 0.0
  %1017 = vmatpush1.msra.mxu0 0.0
  %1018 = vmatprep.subr.mxu0 0.0
  %1019 = vmatpush1.msra.mxu0 0.0
  %1020 = vmatprep.subr.mxu0 0.0
  %1021 = vmatpush1.msra.mxu0 0.0
  %1022 = vmatprep.subr.mxu0 0.0
  %1023 = vmatpush1.msra.mxu0 0.0
  %1024 = vmatprep.subr.mxu0 0.0
  %1025 = vmatpush1.msra.mxu0 0.0
  %1026 = vmatprep.subr.mxu0 0.0
  %1027 = vmatpush1.msra.mxu0 0.0
  %1028 = vmatprep.subr.mxu0 0.0
  %1029 = vmatpush1.msra.mxu0 0.0
  %1030 = vmatprep.subr.mxu0 0.0
  %1031 = vmatpush1.msra.mxu0 0.0
  %1032 = vmatprep.subr.mxu0 0.0
  %1033 = vmatpush1.msra.mxu0 0.0
  %1034 = vmatprep.subr.mxu0 0.0
  %1035 = vmatpush1.msra.mxu0 0.0
  %1036 = vmatprep.subr.mxu0 0.0
  %1037 = vmatpush1.msra.mxu0 0.0
  %1038 = vmatprep.subr.mxu0 0.0
  %1039 = vmatpush1.msra.mxu0 0.0
  %1040 = vmatprep.subr.mxu0 0.0
  %1041 = vmatpush1.msra.mxu0 0.0
  %1042 = vmatprep.subr.mxu0 0.0
  %1043 = vmatpush1.msra.mxu0 0.0
  %1044 = vmatprep.subr.mxu0 0.0
  %1045 = vmatpush1.msra.mxu0 0.0
  %1046 = vmatprep.subr.mxu0 0.0
  %1047 = vmatpush1.msra.mxu0 0.0
  %1048 = vmatprep.mubr.f32.mxu0 0.0
  %v1049 = vand.u32 %v643, 4294901760
  %1050 = vmatmul.mubr.f32.gmra.mrb[0].mxu0 %v1049
  %v1051 = vpop.f32.mrb[0].mxu0
  %v1052 = vadd.f32 %v969, %v1051
  %v1053 = vpop.f32.mrb[0].mxu0
  %1054 = vdwg.mxu0
  %1055 = vmatprep.subr.mxu0 0.0
  %v1056 = vand.u32 %v43, 4294901760
  %1057 = vmatpush1.msra.mxu0 %v1056
  %1058 = vmatprep.subr.mxu0 0.0
  %v1059 = vand.u32 %v44, 4294901760
  %1060 = vmatpush1.msra.mxu0 %v1059
  %1061 = vmatprep.subr.mxu0 0.0
  %v1062 = vand.u32 %v45, 4294901760
  %1063 = vmatpush1.msra.mxu0 %v1062
  %1064 = vmatprep.subr.mxu0 0.0
  %v1065 = vand.u32 %v46, 4294901760
  %1066 = vmatpush1.msra.mxu0 %v1065
  %1067 = vmatprep.subr.mxu0 0.0
  %1068 = vmatpush1.msra.mxu0 0.0
  %1069 = vmatprep.subr.mxu0 0.0
  %1070 = vmatpush1.msra.mxu0 0.0
  %1071 = vmatprep.subr.mxu0 0.0
  %1072 = vmatpush1.msra.mxu0 0.0
  %1073 = vmatprep.subr.mxu0 0.0
  %1074 = vmatpush1.msra.mxu0 0.0
  %1075 = vmatprep.subr.mxu0 0.0
  %1076 = vmatpush1.msra.mxu0 0.0
  %1077 = vmatprep.subr.mxu0 0.0
  %1078 = vmatpush1.msra.mxu0 0.0
  %1079 = vmatprep.subr.mxu0 0.0
  %1080 = vmatpush1.msra.mxu0 0.0
  %1081 = vmatprep.subr.mxu0 0.0
  %1082 = vmatpush1.msra.mxu0 0.0
  %1083 = vmatprep.subr.mxu0 0.0
  %1084 = vmatpush1.msra.mxu0 0.0
  %1085 = vmatprep.subr.mxu0 0.0
  %1086 = vmatpush1.msra.mxu0 0.0
  %1087 = vmatprep.subr.mxu0 0.0
  %1088 = vmatpush1.msra.mxu0 0.0
  %1089 = vmatprep.subr.mxu0 0.0
  %1090 = vmatpush1.msra.mxu0 0.0
  %1091 = vmatprep.subr.mxu0 0.0
  %1092 = vmatpush1.msra.mxu0 0.0
  %1093 = vmatprep.subr.mxu0 0.0
  %1094 = vmatpush1.msra.mxu0 0.0
  %1095 = vmatprep.subr.mxu0 0.0
  %1096 = vmatpush1.msra.mxu0 0.0
  %1097 = vmatprep.subr.mxu0 0.0
  %1098 = vmatpush1.msra.mxu0 0.0
  %1099 = vmatprep.subr.mxu0 0.0
  %1100 = vmatpush1.msra.mxu0 0.0
  %1101 = vmatprep.subr.mxu0 0.0
  %1102 = vmatpush1.msra.mxu0 0.0
  %1103 = vmatprep.subr.mxu0 0.0
  %1104 = vmatpush1.msra.mxu0 0.0
  %1105 = vmatprep.subr.mxu0 0.0
  %1106 = vmatpush1.msra.mxu0 0.0
  %1107 = vmatprep.subr.mxu0 0.0
  %1108 = vmatpush1.msra.mxu0 0.0
  %1109 = vmatprep.subr.mxu0 0.0
  %1110 = vmatpush1.msra.mxu0 0.0
  %1111 = vmatprep.subr.mxu0 0.0
  %1112 = vmatpush1.msra.mxu0 0.0
  %1113 = vmatprep.subr.mxu0 0.0
  %1114 = vmatpush1.msra.mxu0 0.0
  %1115 = vmatprep.subr.mxu0 0.0
  %1116 = vmatpush1.msra.mxu0 0.0
  %1117 = vmatprep.subr.mxu0 0.0
  %1118 = vmatpush1.msra.mxu0 0.0
  %1119 = vmatprep.subr.mxu0 0.0
  %1120 = vmatpush1.msra.mxu0 0.0
  %1121 = vmatprep.subr.mxu0 0.0
  %1122 = vmatpush1.msra.mxu0 0.0
  %1123 = vmatprep.mubr.f32.mxu0 0.0
  %v1124 = vand.u32 %v643, 4294901760
  %1125 = vmatmul.mubr.f32.gmra.mrb[0].mxu0 %v1124
  %v1126 = vpop.f32.mrb[0].mxu0
  %v1127 = vadd.f32 %v1052, %v1126
  %v1128 = vpop.f32.mrb[0].mxu0
  %1129 = vdwg.mxu0
  %1130 = vmatprep.subr.mxu0 0.0
  %v1131 = vand.u32 %v51, 4294901760
  %1132 = vmatpush1.msra.mxu0 %v1131
  %1133 = vmatprep.subr.mxu0 0.0
  %v1134 = vand.u32 %v52, 4294901760
  %1135 = vmatpush1.msra.mxu0 %v1134
  %1136 = vmatprep.subr.mxu0 0.0
  %v1137 = vand.u32 %v53, 4294901760
  %1138 = vmatpush1.msra.mxu0 %v1137
  %1139 = vmatprep.subr.mxu0 0.0
  %v1140 = vand.u32 %v54, 4294901760
  %1141 = vmatpush1.msra.mxu0 %v1140
  %1142 = vmatprep.subr.mxu0 0.0
  %1143 = vmatpush1.msra.mxu0 0.0
  %1144 = vmatprep.subr.mxu0 0.0
  %1145 = vmatpush1.msra.mxu0 0.0
  %1146 = vmatprep.subr.mxu0 0.0
  %1147 = vmatpush1.msra.mxu0 0.0
  %1148 = vmatprep.subr.mxu0 0.0
  %1149 = vmatpush1.msra.mxu0 0.0
  %1150 = vmatprep.subr.mxu0 0.0
  %1151 = vmatpush1.msra.mxu0 0.0
  %1152 = vmatprep.subr.mxu0 0.0
  %1153 = vmatpush1.msra.mxu0 0.0
  %1154 = vmatprep.subr.mxu0 0.0
  %1155 = vmatpush1.msra.mxu0 0.0
  %1156 = vmatprep.subr.mxu0 0.0
  %1157 = vmatpush1.msra.mxu0 0.0
  %1158 = vmatprep.subr.mxu0 0.0
  %1159 = vmatpush1.msra.mxu0 0.0
  %1160 = vmatprep.subr.mxu0 0.0
  %1161 = vmatpush1.msra.mxu0 0.0
  %1162 = vmatprep.subr.mxu0 0.0
  %1163 = vmatpush1.msra.mxu0 0.0
  %1164 = vmatprep.subr.mxu0 0.0
  %1165 = vmatpush1.msra.mxu0 0.0
  %1166 = vmatprep.subr.mxu0 0.0
  %1167 = vmatpush1.msra.mxu0 0.0
  %1168 = vmatprep.subr.mxu0 0.0
  %1169 = vmatpush1.msra.mxu0 0.0
  %1170 = vmatprep.subr.mxu0 0.0
  %1171 = vmatpush1.msra.mxu0 0.0
  %1172 = vmatprep.subr.mxu0 0.0
  %1173 = vmatpush1.msra.mxu0 0.0
  %1174 = vmatprep.subr.mxu0 0.0
  %1175 = vmatpush1.msra.mxu0 0.0
  %1176 = vmatprep.subr.mxu0 0.0
  %1177 = vmatpush1.msra.mxu0 0.0
  %1178 = vmatprep.subr.mxu0 0.0
  %1179 = vmatpush1.msra.mxu0 0.0
  %1180 = vmatprep.subr.mxu0 0.0
  %1181 = vmatpush1.msra.mxu0 0.0
  %1182 = vmatprep.subr.mxu0 0.0
  %1183 = vmatpush1.msra.mxu0 0.0
  %1184 = vmatprep.subr.mxu0 0.0
  %1185 = vmatpush1.msra.mxu0 0.0
  %1186 = vmatprep.subr.mxu0 0.0
  %1187 = vmatpush1.msra.mxu0 0.0
  %1188 = vmatprep.subr.mxu0 0.0
  %1189 = vmatpush1.msra.mxu0 0.0
  %1190 = vmatprep.subr.mxu0 0.0
  %1191 = vmatpush1.msra.mxu0 0.0
  %1192 = vmatprep.subr.mxu0 0.0
  %1193 = vmatpush1.msra.mxu0 0.0
  %1194 = vmatprep.subr.mxu0 0.0
  %1195 = vmatpush1.msra.mxu0 0.0
  %1196 = vmatprep.subr.mxu0 0.0
  %1197 = vmatpush1.msra.mxu0 0.0
  %1198 = vmatprep.mubr.f32.mxu0 0.0
  %v1199 = vand.u32 %v119, 4294901760
  %v1200 = vsub.f32 %v119, %v1199
  %v1201 = vand.u32 %v1200, 4294901760
  %v1202 = vsub.f32 %v1200, %v1201
  %v1203 = vand.u32 %v1202, 4294901760
  %1204 = vmatmul.mubr.f32.gmra.mrb[0].mxu0 %v1203
  %v1205 = vpop.f32.mrb[0].mxu0
  %v1206 = vadd.f32 0.0, %v1205
  %v1207 = vpop.f32.mrb[0].mxu0
  %1208 = vdwg.mxu0
  %1209 = vmatprep.subr.mxu0 0.0
  %v1210 = vand.u32 %v51, 4294901760
  %v1211 = vsub.f32 %v51, %v1210
  %v1212 = vand.u32 %v1211, 4294901760
  %v1213 = vsub.f32 %v1211, %v1212
  %v1214 = vand.u32 %v1213, 4294901760
  %1215 = vmatpush1.msra.mxu0 %v1214
  %1216 = vmatprep.subr.mxu0 0.0
  %v1217 = vand.u32 %v52, 4294901760
  %v1218 = vsub.f32 %v52, %v1217
  %v1219 = vand.u32 %v1218, 4294901760
  %v1220 = vsub.f32 %v1218, %v1219
  %v1221 = vand.u32 %v1220, 4294901760
  %1222 = vmatpush1.msra.mxu0 %v1221
  %1223 = vmatprep.subr.mxu0 0.0
  %v1224 = vand.u32 %v53, 4294901760
  %v1225 = vsub.f32 %v53, %v1224
  %v1226 = vand.u32 %v1225, 4294901760
  %v1227 = vsub.f32 %v1225, %v1226
  %v1228 = vand.u32 %v1227, 4294901760
  %1229 = vmatpush1.msra.mxu0 %v1228
  %1230 = vmatprep.subr.mxu0 0.0
  %v1231 = vand.u32 %v54, 4294901760
  %v1232 = vsub.f32 %v54, %v1231
  %v1233 = vand.u32 %v1232, 4294901760
  %v1234 = vsub.f32 %v1232, %v1233
  %v1235 = vand.u32 %v1234, 4294901760
  %1236 = vmatpush1.msra.mxu0 %v1235
  %1237 = vmatprep.subr.mxu0 0.0
  %1238 = vmatpush1.msra.mxu0 0.0
  %1239 = vmatprep.subr.mxu0 0.0
  %1240 = vmatpush1.msra.mxu0 0.0
  %1241 = vmatprep.subr.mxu0 0.0
  %1242 = vmatpush1.msra.mxu0 0.0
  %1243 = vmatprep.subr.mxu0 0.0
  %1244 = vmatpush1.msra.mxu0 0.0
  %1245 = vmatprep.subr.mxu0 0.0
  %1246 = vmatpush1.msra.mxu0 0.0
  %1247 = vmatprep.subr.mxu0 0.0
  %1248 = vmatpush1.msra.mxu0 0.0
  %1249 = vmatprep.subr.mxu0 0.0
  %1250 = vmatpush1.msra.mxu0 0.0
  %1251 = vmatprep.subr.mxu0 0.0
  %1252 = vmatpush1.msra.mxu0 0.0
  %1253 = vmatprep.subr.mxu0 0.0
  %1254 = vmatpush1.msra.mxu0 0.0
  %1255 = vmatprep.subr.mxu0 0.0
  %1256 = vmatpush1.msra.mxu0 0.0
  %1257 = vmatprep.subr.mxu0 0.0
  %1258 = vmatpush1.msra.mxu0 0.0
  %1259 = vmatprep.subr.mxu0 0.0
  %1260 = vmatpush1.msra.mxu0 0.0
  %1261 = vmatprep.subr.mxu0 0.0
  %1262 = vmatpush1.msra.mxu0 0.0
  %1263 = vmatprep.subr.mxu0 0.0
  %1264 = vmatpush1.msra.mxu0 0.0
  %1265 = vmatprep.subr.mxu0 0.0
  %1266 = vmatpush1.msra.mxu0 0.0
  %1267 = vmatprep.subr.mxu0 0.0
  %1268 = vmatpush1.msra.mxu0 0.0
  %1269 = vmatprep.subr.mxu0 0.0
  %1270 = vmatpush1.msra.mxu0 0.0
  %1271 = vmatprep.subr.mxu0 0.0
  %1272 = vmatpush1.msra.mxu0 0.0
  %1273 = vmatprep.subr.mxu0 0.0
  %1274 = vmatpush1.msra.mxu0 0.0
  %1275 = vmatprep.subr.mxu0 0.0
  %1276 = vmatpush1.msra.mxu0 0.0
  %1277 = vmatprep.subr.mxu0 0.0
  %1278 = vmatpush1.msra.mxu0 0.0
  %1279 = vmatprep.subr.mxu0 0.0
  %1280 = vmatpush1.msra.mxu0 0.0
  %1281 = vmatprep.subr.mxu0 0.0
  %1282 = vmatpush1.msra.mxu0 0.0
  %1283 = vmatprep.subr.mxu0 0.0
  %1284 = vmatpush1.msra.mxu0 0.0
  %1285 = vmatprep.subr.mxu0 0.0
  %1286 = vmatpush1.msra.mxu0 0.0
  %1287 = vmatprep.subr.mxu0 0.0
  %1288 = vmatpush1.msra.mxu0 0.0
  %1289 = vmatprep.subr.mxu0 0.0
  %1290 = vmatpush1.msra.mxu0 0.0
  %1291 = vmatprep.subr.mxu0 0.0
  %1292 = vmatpush1.msra.mxu0 0.0
  %1293 = vmatprep.mubr.f32.mxu0 0.0
  %v1294 = vand.u32 %v119, 4294901760
  %1295 = vmatmul.mubr.f32.gmra.mrb[0].mxu0 %v1294
  %v1296 = vpop.f32.mrb[0].mxu0
  %v1297 = vadd.f32 %v1206, %v1296
  %v1298 = vpop.f32.mrb[0].mxu0
  %1299 = vdwg.mxu0
  %1300 = vmatprep.subr.mxu0 0.0
  %v1301 = vand.u32 %v51, 4294901760
  %v1302 = vsub.f32 %v51, %v1301
  %1303 = vmatpush1.msra.mxu0 %v1302
  %1304 = vmatprep.subr.mxu0 0.0
  %v1305 = vand.u32 %v52, 4294901760
  %v1306 = vsub.f32 %v52, %v1305
  %1307 = vmatpush1.msra.mxu0 %v1306
  %1308 = vmatprep.subr.mxu0 0.0
  %v1309 = vand.u32 %v53, 4294901760
  %v1310 = vsub.f32 %v53, %v1309
  %1311 = vmatpush1.msra.mxu0 %v1310
  %1312 = vmatprep.subr.mxu0 0.0
  %v1313 = vand.u32 %v54, 4294901760
  %v1314 = vsub.f32 %v54, %v1313
  %1315 = vmatpush1.msra.mxu0 %v1314
  %1316 = vmatprep.subr.mxu0 0.0
  %1317 = vmatpush1.msra.mxu0 0.0
  %1318 = vmatprep.subr.mxu0 0.0
  %1319 = vmatpush1.msra.mxu0 0.0
  %1320 = vmatprep.subr.mxu0 0.0
  %1321 = vmatpush1.msra.mxu0 0.0
  %1322 = vmatprep.subr.mxu0 0.0
  %1323 = vmatpush1.msra.mxu0 0.0
  %1324 = vmatprep.subr.mxu0 0.0
  %1325 = vmatpush1.msra.mxu0 0.0
  %1326 = vmatprep.subr.mxu0 0.0
  %1327 = vmatpush1.msra.mxu0 0.0
  %1328 = vmatprep.subr.mxu0 0.0
  %1329 = vmatpush1.msra.mxu0 0.0
  %1330 = vmatprep.subr.mxu0 0.0
  %1331 = vmatpush1.msra.mxu0 0.0
  %1332 = vmatprep.subr.mxu0 0.0
  %1333 = vmatpush1.msra.mxu0 0.0
  %1334 = vmatprep.subr.mxu0 0.0
  %1335 = vmatpush1.msra.mxu0 0.0
  %1336 = vmatprep.subr.mxu0 0.0
  %1337 = vmatpush1.msra.mxu0 0.0
  %1338 = vmatprep.subr.mxu0 0.0
  %1339 = vmatpush1.msra.mxu0 0.0
  %1340 = vmatprep.subr.mxu0 0.0
  %1341 = vmatpush1.msra.mxu0 0.0
  %1342 = vmatprep.subr.mxu0 0.0
  %1343 = vmatpush1.msra.mxu0 0.0
  %1344 = vmatprep.subr.mxu0 0.0
  %1345 = vmatpush1.msra.mxu0 0.0
  %1346 = vmatprep.subr.mxu0 0.0
  %1347 = vmatpush1.msra.mxu0 0.0
  %1348 = vmatprep.subr.mxu0 0.0
  %1349 = vmatpush1.msra.mxu0 0.0
  %1350 = vmatprep.subr.mxu0 0.0
  %1351 = vmatpush1.msra.mxu0 0.0
  %1352 = vmatprep.subr.mxu0 0.0
  %1353 = vmatpush1.msra.mxu0 0.0
  %1354 = vmatprep.subr.mxu0 0.0
  %1355 = vmatpush1.msra.mxu0 0.0
  %1356 = vmatprep.subr.mxu0 0.0
  %1357 = vmatpush1.msra.mxu0 0.0
  %1358 = vmatprep.subr.mxu0 0.0
  %1359 = vmatpush1.msra.mxu0 0.0
  %1360 = vmatprep.subr.mxu0 0.0
  %1361 = vmatpush1.msra.mxu0 0.0
  %1362 = vmatprep.subr.mxu0 0.0
  %1363 = vmatpush1.msra.mxu0 0.0
  %1364 = vmatprep.subr.mxu0 0.0
  %1365 = vmatpush1.msra.mxu0 0.0
  %1366 = vmatprep.subr.mxu0 0.0
  %1367 = vmatpush1.msra.mxu0 0.0
  %1368 = vmatprep.subr.mxu0 0.0
  %1369 = vmatpush1.msra.mxu0 0.0
  %1370 = vmatprep.subr.mxu0 0.0
  %1371 = vmatpush1.msra.mxu0 0.0
  %1372 = vmatprep.mubr.f32.mxu0 0.0
  %v1373 = vand.u32 %v119, 4294901760
  %v1374 = vsub.f32 %v119, %v1373
  %1375 = vmatmul.mubr.f32.gmra.mrb[0].mxu0 %v1374
  %v1376 = vpop.f32.mrb[0].mxu0
  %v1377 = vadd.f32 %v1297, %v1376
  %v1378 = vpop.f32.mrb[0].mxu0
  %1379 = vdwg.mxu0
  %1380 = vmatprep.subr.mxu0 0.0
  %v1381 = vand.u32 %v51, 4294901760
  %1382 = vmatpush1.msra.mxu0 %v1381
  %1383 = vmatprep.subr.mxu0 0.0
  %v1384 = vand.u32 %v52, 4294901760
  %1385 = vmatpush1.msra.mxu0 %v1384
  %1386 = vmatprep.subr.mxu0 0.0
  %v1387 = vand.u32 %v53, 4294901760
  %1388 = vmatpush1.msra.mxu0 %v1387
  %1389 = vmatprep.subr.mxu0 0.0
  %v1390 = vand.u32 %v54, 4294901760
  %1391 = vmatpush1.msra.mxu0 %v1390
  %1392 = vmatprep.subr.mxu0 0.0
  %1393 = vmatpush1.msra.mxu0 0.0
  %1394 = vmatprep.subr.mxu0 0.0
  %1395 = vmatpush1.msra.mxu0 0.0
  %1396 = vmatprep.subr.mxu0 0.0
  %1397 = vmatpush1.msra.mxu0 0.0
  %1398 = vmatprep.subr.mxu0 0.0
  %1399 = vmatpush1.msra.mxu0 0.0
  %1400 = vmatprep.subr.mxu0 0.0
  %1401 = vmatpush1.msra.mxu0 0.0
  %1402 = vmatprep.subr.mxu0 0.0
  %1403 = vmatpush1.msra.mxu0 0.0
  %1404 = vmatprep.subr.mxu0 0.0
  %1405 = vmatpush1.msra.mxu0 0.0
  %1406 = vmatprep.subr.mxu0 0.0
  %1407 = vmatpush1.msra.mxu0 0.0
  %1408 = vmatprep.subr.mxu0 0.0
  %1409 = vmatpush1.msra.mxu0 0.0
  %1410 = vmatprep.subr.mxu0 0.0
  %1411 = vmatpush1.msra.mxu0 0.0
  %1412 = vmatprep.subr.mxu0 0.0
  %1413 = vmatpush1.msra.mxu0 0.0
  %1414 = vmatprep.subr.mxu0 0.0
  %1415 = vmatpush1.msra.mxu0 0.0
  %1416 = vmatprep.subr.mxu0 0.0
  %1417 = vmatpush1.msra.mxu0 0.0
  %1418 = vmatprep.subr.mxu0 0.0
  %1419 = vmatpush1.msra.mxu0 0.0
  %1420 = vmatprep.subr.mxu0 0.0
  %1421 = vmatpush1.msra.mxu0 0.0
  %1422 = vmatprep.subr.mxu0 0.0
  %1423 = vmatpush1.msra.mxu0 0.0
  %1424 = vmatprep.subr.mxu0 0.0
  %1425 = vmatpush1.msra.mxu0 0.0
  %1426 = vmatprep.subr.mxu0 0.0
  %1427 = vmatpush1.msra.mxu0 0.0
  %1428 = vmatprep.subr.mxu0 0.0
  %1429 = vmatpush1.msra.mxu0 0.0
  %1430 = vmatprep.subr.mxu0 0.0
  %1431 = vmatpush1.msra.mxu0 0.0
  %1432 = vmatprep.subr.mxu0 0.0
  %1433 = vmatpush1.msra.mxu0 0.0
  %1434 = vmatprep.subr.mxu0 0.0
  %1435 = vmatpush1.msra.mxu0 0.0
  %1436 = vmatprep.subr.mxu0 0.0
  %1437 = vmatpush1.msra.mxu0 0.0
  %1438 = vmatprep.subr.mxu0 0.0
  %1439 = vmatpush1.msra.mxu0 0.0
  %1440 = vmatprep.subr.mxu0 0.0
  %1441 = vmatpush1.msra.mxu0 0.0
  %1442 = vmatprep.subr.mxu0 0.0
  %1443 = vmatpush1.msra.mxu0 0.0
  %1444 = vmatprep.subr.mxu0 0.0
  %1445 = vmatpush1.msra.mxu0 0.0
  %1446 = vmatprep.subr.mxu0 0.0
  %1447 = vmatpush1.msra.mxu0 0.0
  %1448 = vmatprep.mubr.f32.mxu0 0.0
  %v1449 = vand.u32 %v119, 4294901760
  %v1450 = vsub.f32 %v119, %v1449
  %v1451 = vand.u32 %v1450, 4294901760
  %1452 = vmatmul.mubr.f32.gmra.mrb[0].mxu0 %v1451
  %v1453 = vpop.f32.mrb[0].mxu0
  %v1454 = vadd.f32 %v1377, %v1453
  %v1455 = vpop.f32.mrb[0].mxu0
  %1456 = vdwg.mxu0
  %1457 = vmatprep.subr.mxu0 0.0
  %v1458 = vand.u32 %v51, 4294901760
  %v1459 = vsub.f32 %v51, %v1458
  %v1460 = vand.u32 %v1459, 4294901760
  %1461 = vmatpush1.msra.mxu0 %v1460
  %1462 = vmatprep.subr.mxu0 0.0
  %v1463 = vand.u32 %v52, 4294901760
  %v1464 = vsub.f32 %v52, %v1463
  %v1465 = vand.u32 %v1464, 4294901760
  %1466 = vmatpush1.msra.mxu0 %v1465
  %1467 = vmatprep.subr.mxu0 0.0
  %v1468 = vand.u32 %v53, 4294901760
  %v1469 = vsub.f32 %v53, %v1468
  %v1470 = vand.u32 %v1469, 4294901760
  %1471 = vmatpush1.msra.mxu0 %v1470
  %1472 = vmatprep.subr.mxu0 0.0
  %v1473 = vand.u32 %v54, 4294901760
  %v1474 = vsub.f32 %v54, %v1473
  %v1475 = vand.u32 %v1474, 4294901760
  %1476 = vmatpush1.msra.mxu0 %v1475
  %1477 = vmatprep.subr.mxu0 0.0
  %1478 = vmatpush1.msra.mxu0 0.0
  %1479 = vmatprep.subr.mxu0 0.0
  %1480 = vmatpush1.msra.mxu0 0.0
  %1481 = vmatprep.subr.mxu0 0.0
  %1482 = vmatpush1.msra.mxu0 0.0
  %1483 = vmatprep.subr.mxu0 0.0
  %1484 = vmatpush1.msra.mxu0 0.0
  %1485 = vmatprep.subr.mxu0 0.0
  %1486 = vmatpush1.msra.mxu0 0.0
  %1487 = vmatprep.subr.mxu0 0.0
  %1488 = vmatpush1.msra.mxu0 0.0
  %1489 = vmatprep.subr.mxu0 0.0
  %1490 = vmatpush1.msra.mxu0 0.0
  %1491 = vmatprep.subr.mxu0 0.0
  %1492 = vmatpush1.msra.mxu0 0.0
  %1493 = vmatprep.subr.mxu0 0.0
  %1494 = vmatpush1.msra.mxu0 0.0
  %1495 = vmatprep.subr.mxu0 0.0
  %1496 = vmatpush1.msra.mxu0 0.0
  %1497 = vmatprep.subr.mxu0 0.0
  %1498 = vmatpush1.msra.mxu0 0.0
  %1499 = vmatprep.subr.mxu0 0.0
  %1500 = vmatpush1.msra.mxu0 0.0
  %1501 = vmatprep.subr.mxu0 0.0
  %1502 = vmatpush1.msra.mxu0 0.0
  %1503 = vmatprep.subr.mxu0 0.0
  %1504 = vmatpush1.msra.mxu0 0.0
  %1505 = vmatprep.subr.mxu0 0.0
  %1506 = vmatpush1.msra.mxu0 0.0
  %1507 = vmatprep.subr.mxu0 0.0
  %1508 = vmatpush1.msra.mxu0 0.0
  %1509 = vmatprep.subr.mxu0 0.0
  %1510 = vmatpush1.msra.mxu0 0.0
  %1511 = vmatprep.subr.mxu0 0.0
  %1512 = vmatpush1.msra.mxu0 0.0
  %1513 = vmatprep.subr.mxu0 0.0
  %1514 = vmatpush1.msra.mxu0 0.0
  %1515 = vmatprep.subr.mxu0 0.0
  %1516 = vmatpush1.msra.mxu0 0.0
  %1517 = vmatprep.subr.mxu0 0.0
  %1518 = vmatpush1.msra.mxu0 0.0
  %1519 = vmatprep.subr.mxu0 0.0
  %1520 = vmatpush1.msra.mxu0 0.0
  %1521 = vmatprep.subr.mxu0 0.0
  %1522 = vmatpush1.msra.mxu0 0.0
  %1523 = vmatprep.subr.mxu0 0.0
  %1524 = vmatpush1.msra.mxu0 0.0
  %1525 = vmatprep.subr.mxu0 0.0
  %1526 = vmatpush1.msra.mxu0 0.0
  %1527 = vmatprep.subr.mxu0 0.0
  %1528 = vmatpush1.msra.mxu0 0.0
  %1529 = vmatprep.subr.mxu0 0.0
  %1530 = vmatpush1.msra.mxu0 0.0
  %1531 = vmatprep.subr.mxu0 0.0
  %1532 = vmatpush1.msra.mxu0 0.0
  %1533 = vmatprep.mubr.f32.mxu0 0.0
  %v1534 = vand.u32 %v119, 4294901760
  %1535 = vmatmul.mubr.f32.gmra.mrb[0].mxu0 %v1534
  %v1536 = vpop.f32.mrb[0].mxu0
  %v1537 = vadd.f32 %v1454, %v1536
  %v1538 = vpop.f32.mrb[0].mxu0
  %1539 = vdwg.mxu0
  %1540 = vmatprep.subr.mxu0 0.0
  %v1541 = vand.u32 %v51, 4294901760
  %1542 = vmatpush1.msra.mxu0 %v1541
  %1543 = vmatprep.subr.mxu0 0.0
  %v1544 = vand.u32 %v52, 4294901760
  %1545 = vmatpush1.msra.mxu0 %v1544
  %1546 = vmatprep.subr.mxu0 0.0
  %v1547 = vand.u32 %v53, 4294901760
  %1548 = vmatpush1.msra.mxu0 %v1547
  %1549 = vmatprep.subr.mxu0 0.0
  %v1550 = vand.u32 %v54, 4294901760
  %1551 = vmatpush1.msra.mxu0 %v1550
  %1552 = vmatprep.subr.mxu0 0.0
  %1553 = vmatpush1.msra.mxu0 0.0
  %1554 = vmatprep.subr.mxu0 0.0
  %1555 = vmatpush1.msra.mxu0 0.0
  %1556 = vmatprep.subr.mxu0 0.0
  %1557 = vmatpush1.msra.mxu0 0.0
  %1558 = vmatprep.subr.mxu0 0.0
  %1559 = vmatpush1.msra.mxu0 0.0
  %1560 = vmatprep.subr.mxu0 0.0
  %1561 = vmatpush1.msra.mxu0 0.0
  %1562 = vmatprep.subr.mxu0 0.0
  %1563 = vmatpush1.msra.mxu0 0.0
  %1564 = vmatprep.subr.mxu0 0.0
  %1565 = vmatpush1.msra.mxu0 0.0
  %1566 = vmatprep.subr.mxu0 0.0
  %1567 = vmatpush1.msra.mxu0 0.0
  %1568 = vmatprep.subr.mxu0 0.0
  %1569 = vmatpush1.msra.mxu0 0.0
  %1570 = vmatprep.subr.mxu0 0.0
  %1571 = vmatpush1.msra.mxu0 0.0
  %1572 = vmatprep.subr.mxu0 0.0
  %1573 = vmatpush1.msra.mxu0 0.0
  %1574 = vmatprep.subr.mxu0 0.0
  %1575 = vmatpush1.msra.mxu0 0.0
  %1576 = vmatprep.subr.mxu0 0.0
  %1577 = vmatpush1.msra.mxu0 0.0
  %1578 = vmatprep.subr.mxu0 0.0
  %1579 = vmatpush1.msra.mxu0 0.0
  %1580 = vmatprep.subr.mxu0 0.0
  %1581 = vmatpush1.msra.mxu0 0.0
  %1582 = vmatprep.subr.mxu0 0.0
  %1583 = vmatpush1.msra.mxu0 0.0
  %1584 = vmatprep.subr.mxu0 0.0
  %1585 = vmatpush1.msra.mxu0 0.0
  %1586 = vmatprep.subr.mxu0 0.0
  %1587 = vmatpush1.msra.mxu0 0.0
  %1588 = vmatprep.subr.mxu0 0.0
  %1589 = vmatpush1.msra.mxu0 0.0
  %1590 = vmatprep.subr.mxu0 0.0
  %1591 = vmatpush1.msra.mxu0 0.0
  %1592 = vmatprep.subr.mxu0 0.0
  %1593 = vmatpush1.msra.mxu0 0.0
  %1594 = vmatprep.subr.mxu0 0.0
  %1595 = vmatpush1.msra.mxu0 0.0
  %1596 = vmatprep.subr.mxu0 0.0
  %1597 = vmatpush1.msra.mxu0 0.0
  %1598 = vmatprep.subr.mxu0 0.0
  %1599 = vmatpush1.msra.mxu0 0.0
  %1600 = vmatprep.subr.mxu0 0.0
  %1601 = vmatpush1.msra.mxu0 0.0
  %1602 = vmatprep.subr.mxu0 0.0
  %1603 = vmatpush1.msra.mxu0 0.0
  %1604 = vmatprep.subr.mxu0 0.0
  %1605 = vmatpush1.msra.mxu0 0.0
  %1606 = vmatprep.subr.mxu0 0.0
  %1607 = vmatpush1.msra.mxu0 0.0
  %1608 = vmatprep.mubr.f32.mxu0 0.0
  %v1609 = vand.u32 %v119, 4294901760
  %1610 = vmatmul.mubr.f32.gmra.mrb[0].mxu0 %v1609
  %v1611 = vpop.f32.mrb[0].mxu0
  %v1612 = vadd.f32 %v1537, %v1611
  %v1613 = vpop.f32.mrb[0].mxu0
  %1614 = vdwg.mxu0
  %v1615 = vadd.f32 %v1127, %v1612
  %v1616 = vmul.f32 %v1615, %v40
  %v1617 = vxor.u32 %v1616, 2147483648
  %v1618 = vmul.f32 %v1617, 1.442695
  %v1619 = vpow.pop %v1618
  %v1620 = vadd.f32 %v1619, 1.0
  %v1621 = vrcp.pop %v1620
  %v1622 = vmul.f32 1.0, %v1621
  %v1623 = vmul.f32 %v1622, 2.0
  %v1624 = vsub.f32 %v1623, 1.0
  %v1625 = vsel %vm39, %v1624, %v1622
  %v1626 = vmul.f32 %v1625, 0.0
  %1628 = vrot.lane.b32.xlu0 %v1625, 64
  %v1629 = vpop.permute.xlu0 %1628
  %v1631 = vmul.f32 %v1625, %v1629
  %1633 = vrot.lane.b32.xlu0 %v1631, 32
  %v1634 = vpop.permute.xlu0 %1633
  %v1636 = vadd.f32 %v1626, %v1634
  %v1637 = vtanh.pop %v1636
  %1639 = vrot.lane.b32.xlu0 %v1637, 64
  %v1640 = vpop.permute.xlu0 %1639
  %v1642 = vmul.f32 %v1625, %v1640
  %1643 = vmatprep.subr.mxu0 0.0
  %v1644 = vand.u32 %v47, 4294901760
  %1645 = vmatpush1.msra.mxu0 %v1644
  %1646 = vmatprep.subr.mxu0 0.0
  %v1647 = vand.u32 %v48, 4294901760
  %1648 = vmatpush1.msra.mxu0 %v1647
  %1649 = vmatprep.subr.mxu0 0.0
  %v1650 = vand.u32 %v49, 4294901760
  %1651 = vmatpush1.msra.mxu0 %v1650
  %1652 = vmatprep.subr.mxu0 0.0
  %v1653 = vand.u32 %v50, 4294901760
  %1654 = vmatpush1.msra.mxu0 %v1653
  %1655 = vmatprep.subr.mxu0 0.0
  %1656 = vmatpush1.msra.mxu0 0.0
  %1657 = vmatprep.subr.mxu0 0.0
  %1658 = vmatpush1.msra.mxu0 0.0
  %1659 = vmatprep.subr.mxu0 0.0
  %1660 = vmatpush1.msra.mxu0 0.0
  %1661 = vmatprep.subr.mxu0 0.0
  %1662 = vmatpush1.msra.mxu0 0.0
  %1663 = vmatprep.subr.mxu0 0.0
  %1664 = vmatpush1.msra.mxu0 0.0
  %1665 = vmatprep.subr.mxu0 0.0
  %1666 = vmatpush1.msra.mxu0 0.0
  %1667 = vmatprep.subr.mxu0 0.0
  %1668 = vmatpush1.msra.mxu0 0.0
  %1669 = vmatprep.subr.mxu0 0.0
  %1670 = vmatpush1.msra.mxu0 0.0
  %1671 = vmatprep.subr.mxu0 0.0
  %1672 = vmatpush1.msra.mxu0 0.0
  %1673 = vmatprep.subr.mxu0 0.0
  %1674 = vmatpush1.msra.mxu0 0.0
  %1675 = vmatprep.subr.mxu0 0.0
  %1676 = vmatpush1.msra.mxu0 0.0
  %1677 = vmatprep.subr.mxu0 0.0
  %1678 = vmatpush1.msra.mxu0 0.0
  %1679 = vmatprep.subr.mxu0 0.0
  %1680 = vmatpush1.msra.mxu0 0.0
  %1681 = vmatprep.subr.mxu0 0.0
  %1682 = vmatpush1.msra.mxu0 0.0
  %1683 = vmatprep.subr.mxu0 0.0
  %1684 = vmatpush1.msra.mxu0 0.0
  %1685 = vmatprep.subr.mxu0 0.0
  %1686 = vmatpush1.msra.mxu0 0.0
  %1687 = vmatprep.subr.mxu0 0.0
  %1688 = vmatpush1.msra.mxu0 0.0
  %1689 = vmatprep.subr.mxu0 0.0
  %1690 = vmatpush1.msra.mxu0 0.0
  %1691 = vmatprep.subr.mxu0 0.0
  %1692 = vmatpush1.msra.mxu0 0.0
  %1693 = vmatprep.subr.mxu0 0.0
  %1694 = vmatpush1.msra.mxu0 0.0
  %1695 = vmatprep.subr.mxu0 0.0
  %1696 = vmatpush1.msra.mxu0 0.0
  %1697 = vmatprep.subr.mxu0 0.0
  %1698 = vmatpush1.msra.mxu0 0.0
  %1699 = vmatprep.subr.mxu0 0.0
  %1700 = vmatpush1.msra.mxu0 0.0
  %1701 = vmatprep.subr.mxu0 0.0
  %1702 = vmatpush1.msra.mxu0 0.0
  %1703 = vmatprep.subr.mxu0 0.0
  %1704 = vmatpush1.msra.mxu0 0.0
  %1705 = vmatprep.subr.mxu0 0.0
  %1706 = vmatpush1.msra.mxu0 0.0
  %1707 = vmatprep.subr.mxu0 0.0
  %1708 = vmatpush1.msra.mxu0 0.0
  %1709 = vmatprep.subr.mxu0 0.0
  %1710 = vmatpush1.msra.mxu0 0.0
  %1711 = vmatprep.mubr.f32.mxu0 0.0
  %v1712 = vand.u32 %v643, 4294901760
  %v1713 = vsub.f32 %v643, %v1712
  %v1714 = vand.u32 %v1713, 4294901760
  %v1715 = vsub.f32 %v1713, %v1714
  %v1716 = vand.u32 %v1715, 4294901760
  %1717 = vmatmul.mubr.f32.gmra.mrb[0].mxu0 %v1716
  %v1718 = vpop.f32.mrb[0].mxu0
  %v1719 = vadd.f32 0.0, %v1718
  %v1720 = vpop.f32.mrb[0].mxu0
  %1721 = vdwg.mxu0
  %1722 = vmatprep.subr.mxu0 0.0
  %v1723 = vand.u32 %v47, 4294901760
  %v1724 = vsub.f32 %v47, %v1723
  %v1725 = vand.u32 %v1724, 4294901760
  %v1726 = vsub.f32 %v1724, %v1725
  %v1727 = vand.u32 %v1726, 4294901760
  %1728 = vmatpush1.msra.mxu0 %v1727
  %1729 = vmatprep.subr.mxu0 0.0
  %v1730 = vand.u32 %v48, 4294901760
  %v1731 = vsub.f32 %v48, %v1730
  %v1732 = vand.u32 %v1731, 4294901760
  %v1733 = vsub.f32 %v1731, %v1732
  %v1734 = vand.u32 %v1733, 4294901760
  %1735 = vmatpush1.msra.mxu0 %v1734
  %1736 = vmatprep.subr.mxu0 0.0
  %v1737 = vand.u32 %v49, 4294901760
  %v1738 = vsub.f32 %v49, %v1737
  %v1739 = vand.u32 %v1738, 4294901760
  %v1740 = vsub.f32 %v1738, %v1739
  %v1741 = vand.u32 %v1740, 4294901760
  %1742 = vmatpush1.msra.mxu0 %v1741
  %1743 = vmatprep.subr.mxu0 0.0
  %v1744 = vand.u32 %v50, 4294901760
  %v1745 = vsub.f32 %v50, %v1744
  %v1746 = vand.u32 %v1745, 4294901760
  %v1747 = vsub.f32 %v1745, %v1746
  %v1748 = vand.u32 %v1747, 4294901760
  %1749 = vmatpush1.msra.mxu0 %v1748
  %1750 = vmatprep.subr.mxu0 0.0
  %1751 = vmatpush1.msra.mxu0 0.0
  %1752 = vmatprep.subr.mxu0 0.0
  %1753 = vmatpush1.msra.mxu0 0.0
  %1754 = vmatprep.subr.mxu0 0.0
  %1755 = vmatpush1.msra.mxu0 0.0
  %1756 = vmatprep.subr.mxu0 0.0
  %1757 = vmatpush1.msra.mxu0 0.0
  %1758 = vmatprep.subr.mxu0 0.0
  %1759 = vmatpush1.msra.mxu0 0.0
  %1760 = vmatprep.subr.mxu0 0.0
  %1761 = vmatpush1.msra.mxu0 0.0
  %1762 = vmatprep.subr.mxu0 0.0
  %1763 = vmatpush1.msra.mxu0 0.0
  %1764 = vmatprep.subr.mxu0 0.0
  %1765 = vmatpush1.msra.mxu0 0.0
  %1766 = vmatprep.subr.mxu0 0.0
  %1767 = vmatpush1.msra.mxu0 0.0
  %1768 = vmatprep.subr.mxu0 0.0
  %1769 = vmatpush1.msra.mxu0 0.0
  %1770 = vmatprep.subr.mxu0 0.0
  %1771 = vmatpush1.msra.mxu0 0.0
  %1772 = vmatprep.subr.mxu0 0.0
  %1773 = vmatpush1.msra.mxu0 0.0
  %1774 = vmatprep.subr.mxu0 0.0
  %1775 = vmatpush1.msra.mxu0 0.0
  %1776 = vmatprep.subr.mxu0 0.0
  %1777 = vmatpush1.msra.mxu0 0.0
  %1778 = vmatprep.subr.mxu0 0.0
  %1779 = vmatpush1.msra.mxu0 0.0
  %1780 = vmatprep.subr.mxu0 0.0
  %1781 = vmatpush1.msra.mxu0 0.0
  %1782 = vmatprep.subr.mxu0 0.0
  %1783 = vmatpush1.msra.mxu0 0.0
  %1784 = vmatprep.subr.mxu0 0.0
  %1785 = vmatpush1.msra.mxu0 0.0
  %1786 = vmatprep.subr.mxu0 0.0
  %1787 = vmatpush1.msra.mxu0 0.0
  %1788 = vmatprep.subr.mxu0 0.0
  %1789 = vmatpush1.msra.mxu0 0.0
  %1790 = vmatprep.subr.mxu0 0.0
  %1791 = vmatpush1.msra.mxu0 0.0
  %1792 = vmatprep.subr.mxu0 0.0
  %1793 = vmatpush1.msra.mxu0 0.0
  %1794 = vmatprep.subr.mxu0 0.0
  %1795 = vmatpush1.msra.mxu0 0.0
  %1796 = vmatprep.subr.mxu0 0.0
  %1797 = vmatpush1.msra.mxu0 0.0
  %1798 = vmatprep.subr.mxu0 0.0
  %1799 = vmatpush1.msra.mxu0 0.0
  %1800 = vmatprep.subr.mxu0 0.0
  %1801 = vmatpush1.msra.mxu0 0.0
  %1802 = vmatprep.subr.mxu0 0.0
  %1803 = vmatpush1.msra.mxu0 0.0
  %1804 = vmatprep.subr.mxu0 0.0
  %1805 = vmatpush1.msra.mxu0 0.0
  %1806 = vmatprep.mubr.f32.mxu0 0.0
  %v1807 = vand.u32 %v643, 4294901760
  %1808 = vmatmul.mubr.f32.gmra.mrb[0].mxu0 %v1807
  %v1809 = vpop.f32.mrb[0].mxu0
  %v1810 = vadd.f32 %v1719, %v1809
  %v1811 = vpop.f32.mrb[0].mxu0
  %1812 = vdwg.mxu0
  %1813 = vmatprep.subr.mxu0 0.0
  %v1814 = vand.u32 %v47, 4294901760
  %v1815 = vsub.f32 %v47, %v1814
  %1816 = vmatpush1.msra.mxu0 %v1815
  %1817 = vmatprep.subr.mxu0 0.0
  %v1818 = vand.u32 %v48, 4294901760
  %v1819 = vsub.f32 %v48, %v1818
  %1820 = vmatpush1.msra.mxu0 %v1819
  %1821 = vmatprep.subr.mxu0 0.0
  %v1822 = vand.u32 %v49, 4294901760
  %v1823 = vsub.f32 %v49, %v1822
  %1824 = vmatpush1.msra.mxu0 %v1823
  %1825 = vmatprep.subr.mxu0 0.0
  %v1826 = vand.u32 %v50, 4294901760
  %v1827 = vsub.f32 %v50, %v1826
  %1828 = vmatpush1.msra.mxu0 %v1827
  %1829 = vmatprep.subr.mxu0 0.0
  %1830 = vmatpush1.msra.mxu0 0.0
  %1831 = vmatprep.subr.mxu0 0.0
  %1832 = vmatpush1.msra.mxu0 0.0
  %1833 = vmatprep.subr.mxu0 0.0
  %1834 = vmatpush1.msra.mxu0 0.0
  %1835 = vmatprep.subr.mxu0 0.0
  %1836 = vmatpush1.msra.mxu0 0.0
  %1837 = vmatprep.subr.mxu0 0.0
  %1838 = vmatpush1.msra.mxu0 0.0
  %1839 = vmatprep.subr.mxu0 0.0
  %1840 = vmatpush1.msra.mxu0 0.0
  %1841 = vmatprep.subr.mxu0 0.0
  %1842 = vmatpush1.msra.mxu0 0.0
  %1843 = vmatprep.subr.mxu0 0.0
  %1844 = vmatpush1.msra.mxu0 0.0
  %1845 = vmatprep.subr.mxu0 0.0
  %1846 = vmatpush1.msra.mxu0 0.0
  %1847 = vmatprep.subr.mxu0 0.0
  %1848 = vmatpush1.msra.mxu0 0.0
  %1849 = vmatprep.subr.mxu0 0.0
  %1850 = vmatpush1.msra.mxu0 0.0
  %1851 = vmatprep.subr.mxu0 0.0
  %1852 = vmatpush1.msra.mxu0 0.0
  %1853 = vmatprep.subr.mxu0 0.0
  %1854 = vmatpush1.msra.mxu0 0.0
  %1855 = vmatprep.subr.mxu0 0.0
  %1856 = vmatpush1.msra.mxu0 0.0
  %1857 = vmatprep.subr.mxu0 0.0
  %1858 = vmatpush1.msra.mxu0 0.0
  %1859 = vmatprep.subr.mxu0 0.0
  %1860 = vmatpush1.msra.mxu0 0.0
  %1861 = vmatprep.subr.mxu0 0.0
  %1862 = vmatpush1.msra.mxu0 0.0
  %1863 = vmatprep.subr.mxu0 0.0
  %1864 = vmatpush1.msra.mxu0 0.0
  %1865 = vmatprep.subr.mxu0 0.0
  %1866 = vmatpush1.msra.mxu0 0.0
  %1867 = vmatprep.subr.mxu0 0.0
  %1868 = vmatpush1.msra.mxu0 0.0
  %1869 = vmatprep.subr.mxu0 0.0
  %1870 = vmatpush1.msra.mxu0 0.0
  %1871 = vmatprep.subr.mxu0 0.0
  %1872 = vmatpush1.msra.mxu0 0.0
  %1873 = vmatprep.subr.mxu0 0.0
  %1874 = vmatpush1.msra.mxu0 0.0
  %1875 = vmatprep.subr.mxu0 0.0
  %1876 = vmatpush1.msra.mxu0 0.0
  %1877 = vmatprep.subr.mxu0 0.0
  %1878 = vmatpush1.msra.mxu0 0.0
  %1879 = vmatprep.subr.mxu0 0.0
  %1880 = vmatpush1.msra.mxu0 0.0
  %1881 = vmatprep.subr.mxu0 0.0
  %1882 = vmatpush1.msra.mxu0 0.0
  %1883 = vmatprep.subr.mxu0 0.0
  %1884 = vmatpush1.msra.mxu0 0.0
  %1885 = vmatprep.mubr.f32.mxu0 0.0
  %v1886 = vand.u32 %v643, 4294901760
  %v1887 = vsub.f32 %v643, %v1886
  %1888 = vmatmul.mubr.f32.gmra.mrb[0].mxu0 %v1887
  %v1889 = vpop.f32.mrb[0].mxu0
  %v1890 = vadd.f32 %v1810, %v1889
  %v1891 = vpop.f32.mrb[0].mxu0
  %1892 = vdwg.mxu0
  %1893 = vmatprep.subr.mxu0 0.0
  %v1894 = vand.u32 %v47, 4294901760
  %1895 = vmatpush1.msra.mxu0 %v1894
  %1896 = vmatprep.subr.mxu0 0.0
  %v1897 = vand.u32 %v48, 4294901760
  %1898 = vmatpush1.msra.mxu0 %v1897
  %1899 = vmatprep.subr.mxu0 0.0
  %v1900 = vand.u32 %v49, 4294901760
  %1901 = vmatpush1.msra.mxu0 %v1900
  %1902 = vmatprep.subr.mxu0 0.0
  %v1903 = vand.u32 %v50, 4294901760
  %1904 = vmatpush1.msra.mxu0 %v1903
  %1905 = vmatprep.subr.mxu0 0.0
  %1906 = vmatpush1.msra.mxu0 0.0
  %1907 = vmatprep.subr.mxu0 0.0
  %1908 = vmatpush1.msra.mxu0 0.0
  %1909 = vmatprep.subr.mxu0 0.0
  %1910 = vmatpush1.msra.mxu0 0.0
  %1911 = vmatprep.subr.mxu0 0.0
  %1912 = vmatpush1.msra.mxu0 0.0
  %1913 = vmatprep.subr.mxu0 0.0
  %1914 = vmatpush1.msra.mxu0 0.0
  %1915 = vmatprep.subr.mxu0 0.0
  %1916 = vmatpush1.msra.mxu0 0.0
  %1917 = vmatprep.subr.mxu0 0.0
  %1918 = vmatpush1.msra.mxu0 0.0
  %1919 = vmatprep.subr.mxu0 0.0
  %1920 = vmatpush1.msra.mxu0 0.0
  %1921 = vmatprep.subr.mxu0 0.0
  %1922 = vmatpush1.msra.mxu0 0.0
  %1923 = vmatprep.subr.mxu0 0.0
  %1924 = vmatpush1.msra.mxu0 0.0
  %1925 = vmatprep.subr.mxu0 0.0
  %1926 = vmatpush1.msra.mxu0 0.0
  %1927 = vmatprep.subr.mxu0 0.0
  %1928 = vmatpush1.msra.mxu0 0.0
  %1929 = vmatprep.subr.mxu0 0.0
  %1930 = vmatpush1.msra.mxu0 0.0
  %1931 = vmatprep.subr.mxu0 0.0
  %1932 = vmatpush1.msra.mxu0 0.0
  %1933 = vmatprep.subr.mxu0 0.0
  %1934 = vmatpush1.msra.mxu0 0.0
  %1935 = vmatprep.subr.mxu0 0.0
  %1936 = vmatpush1.msra.mxu0 0.0
  %1937 = vmatprep.subr.mxu0 0.0
  %1938 = vmatpush1.msra.mxu0 0.0
  %1939 = vmatprep.subr.mxu0 0.0
  %1940 = vmatpush1.msra.mxu0 0.0
  %1941 = vmatprep.subr.mxu0 0.0
  %1942 = vmatpush1.msra.mxu0 0.0
  %1943 = vmatprep.subr.mxu0 0.0
  %1944 = vmatpush1.msra.mxu0 0.0
  %1945 = vmatprep.subr.mxu0 0.0
  %1946 = vmatpush1.msra.mxu0 0.0
  %1947 = vmatprep.subr.mxu0 0.0
  %1948 = vmatpush1.msra.mxu0 0.0
  %1949 = vmatprep.subr.mxu0 0.0
  %1950 = vmatpush1.msra.mxu0 0.0
  %1951 = vmatprep.subr.mxu0 0.0
  %1952 = vmatpush1.msra.mxu0 0.0
  %1953 = vmatprep.subr.mxu0 0.0
  %1954 = vmatpush1.msra.mxu0 0.0
  %1955 = vmatprep.subr.mxu0 0.0
  %1956 = vmatpush1.msra.mxu0 0.0
  %1957 = vmatprep.subr.mxu0 0.0
  %1958 = vmatpush1.msra.mxu0 0.0
  %1959 = vmatprep.subr.mxu0 0.0
  %1960 = vmatpush1.msra.mxu0 0.0
  %1961 = vmatprep.mubr.f32.mxu0 0.0
  %v1962 = vand.u32 %v643, 4294901760
  %v1963 = vsub.f32 %v643, %v1962
  %v1964 = vand.u32 %v1963, 4294901760
  %1965 = vmatmul.mubr.f32.gmra.mrb[0].mxu0 %v1964
  %v1966 = vpop.f32.mrb[0].mxu0
  %v1967 = vadd.f32 %v1890, %v1966
  %v1968 = vpop.f32.mrb[0].mxu0
  %1969 = vdwg.mxu0
  %1970 = vmatprep.subr.mxu0 0.0
  %v1971 = vand.u32 %v47, 4294901760
  %v1972 = vsub.f32 %v47, %v1971
  %v1973 = vand.u32 %v1972, 4294901760
  %1974 = vmatpush1.msra.mxu0 %v1973
  %1975 = vmatprep.subr.mxu0 0.0
  %v1976 = vand.u32 %v48, 4294901760
  %v1977 = vsub.f32 %v48, %v1976
  %v1978 = vand.u32 %v1977, 4294901760
  %1979 = vmatpush1.msra.mxu0 %v1978
  %1980 = vmatprep.subr.mxu0 0.0
  %v1981 = vand.u32 %v49, 4294901760
  %v1982 = vsub.f32 %v49, %v1981
  %v1983 = vand.u32 %v1982, 4294901760
  %1984 = vmatpush1.msra.mxu0 %v1983
  %1985 = vmatprep.subr.mxu0 0.0
  %v1986 = vand.u32 %v50, 4294901760
  %v1987 = vsub.f32 %v50, %v1986
  %v1988 = vand.u32 %v1987, 4294901760
  %1989 = vmatpush1.msra.mxu0 %v1988
  %1990 = vmatprep.subr.mxu0 0.0
  %1991 = vmatpush1.msra.mxu0 0.0
  %1992 = vmatprep.subr.mxu0 0.0
  %1993 = vmatpush1.msra.mxu0 0.0
  %1994 = vmatprep.subr.mxu0 0.0
  %1995 = vmatpush1.msra.mxu0 0.0
  %1996 = vmatprep.subr.mxu0 0.0
  %1997 = vmatpush1.msra.mxu0 0.0
  %1998 = vmatprep.subr.mxu0 0.0
  %1999 = vmatpush1.msra.mxu0 0.0
  %2000 = vmatprep.subr.mxu0 0.0
  %2001 = vmatpush1.msra.mxu0 0.0
  %2002 = vmatprep.subr.mxu0 0.0
  %2003 = vmatpush1.msra.mxu0 0.0
  %2004 = vmatprep.subr.mxu0 0.0
  %2005 = vmatpush1.msra.mxu0 0.0
  %2006 = vmatprep.subr.mxu0 0.0
  %2007 = vmatpush1.msra.mxu0 0.0
  %2008 = vmatprep.subr.mxu0 0.0
  %2009 = vmatpush1.msra.mxu0 0.0
  %2010 = vmatprep.subr.mxu0 0.0
  %2011 = vmatpush1.msra.mxu0 0.0
  %2012 = vmatprep.subr.mxu0 0.0
  %2013 = vmatpush1.msra.mxu0 0.0
  %2014 = vmatprep.subr.mxu0 0.0
  %2015 = vmatpush1.msra.mxu0 0.0
  %2016 = vmatprep.subr.mxu0 0.0
  %2017 = vmatpush1.msra.mxu0 0.0
  %2018 = vmatprep.subr.mxu0 0.0
  %2019 = vmatpush1.msra.mxu0 0.0
  %2020 = vmatprep.subr.mxu0 0.0
  %2021 = vmatpush1.msra.mxu0 0.0
  %2022 = vmatprep.subr.mxu0 0.0
  %2023 = vmatpush1.msra.mxu0 0.0
  %2024 = vmatprep.subr.mxu0 0.0
  %2025 = vmatpush1.msra.mxu0 0.0
  %2026 = vmatprep.subr.mxu0 0.0
  %2027 = vmatpush1.msra.mxu0 0.0
  %2028 = vmatprep.subr.mxu0 0.0
  %2029 = vmatpush1.msra.mxu0 0.0
  %2030 = vmatprep.subr.mxu0 0.0
  %2031 = vmatpush1.msra.mxu0 0.0
  %2032 = vmatprep.subr.mxu0 0.0
  %2033 = vmatpush1.msra.mxu0 0.0
  %2034 = vmatprep.subr.mxu0 0.0
  %2035 = vmatpush1.msra.mxu0 0.0
  %2036 = vmatprep.subr.mxu0 0.0
  %2037 = vmatpush1.msra.mxu0 0.0
  %2038 = vmatprep.subr.mxu0 0.0
  %2039 = vmatpush1.msra.mxu0 0.0
  %2040 = vmatprep.subr.mxu0 0.0
  %2041 = vmatpush1.msra.mxu0 0.0
  %2042 = vmatprep.subr.mxu0 0.0
  %2043 = vmatpush1.msra.mxu0 0.0
  %2044 = vmatprep.subr.mxu0 0.0
  %2045 = vmatpush1.msra.mxu0 0.0
  %2046 = vmatprep.mubr.f32.mxu0 0.0
  %v2047 = vand.u32 %v643, 4294901760
  %2048 = vmatmul.mubr.f32.gmra.mrb[0].mxu0 %v2047
  %v2049 = vpop.f32.mrb[0].mxu0
  %v2050 = vadd.f32 %v1967, %v2049
  %v2051 = vpop.f32.mrb[0].mxu0
  %2052 = vdwg.mxu0
  %2053 = vmatprep.subr.mxu0 0.0
  %v2054 = vand.u32 %v47, 4294901760
  %2055 = vmatpush1.msra.mxu0 %v2054
  %2056 = vmatprep.subr.mxu0 0.0
  %v2057 = vand.u32 %v48, 4294901760
  %2058 = vmatpush1.msra.mxu0 %v2057
  %2059 = vmatprep.subr.mxu0 0.0
  %v2060 = vand.u32 %v49, 4294901760
  %2061 = vmatpush1.msra.mxu0 %v2060
  %2062 = vmatprep.subr.mxu0 0.0
  %v2063 = vand.u32 %v50, 4294901760
  %2064 = vmatpush1.msra.mxu0 %v2063
  %2065 = vmatprep.subr.mxu0 0.0
  %2066 = vmatpush1.msra.mxu0 0.0
  %2067 = vmatprep.subr.mxu0 0.0
  %2068 = vmatpush1.msra.mxu0 0.0
  %2069 = vmatprep.subr.mxu0 0.0
  %2070 = vmatpush1.msra.mxu0 0.0
  %2071 = vmatprep.subr.mxu0 0.0
  %2072 = vmatpush1.msra.mxu0 0.0
  %2073 = vmatprep.subr.mxu0 0.0
  %2074 = vmatpush1.msra.mxu0 0.0
  %2075 = vmatprep.subr.mxu0 0.0
  %2076 = vmatpush1.msra.mxu0 0.0
  %2077 = vmatprep.subr.mxu0 0.0
  %2078 = vmatpush1.msra.mxu0 0.0
  %2079 = vmatprep.subr.mxu0 0.0
  %2080 = vmatpush1.msra.mxu0 0.0
  %2081 = vmatprep.subr.mxu0 0.0
  %2082 = vmatpush1.msra.mxu0 0.0
  %2083 = vmatprep.subr.mxu0 0.0
  %2084 = vmatpush1.msra.mxu0 0.0
  %2085 = vmatprep.subr.mxu0 0.0
  %2086 = vmatpush1.msra.mxu0 0.0
  %2087 = vmatprep.subr.mxu0 0.0
  %2088 = vmatpush1.msra.mxu0 0.0
  %2089 = vmatprep.subr.mxu0 0.0
  %2090 = vmatpush1.msra.mxu0 0.0
  %2091 = vmatprep.subr.mxu0 0.0
  %2092 = vmatpush1.msra.mxu0 0.0
  %2093 = vmatprep.subr.mxu0 0.0
  %2094 = vmatpush1.msra.mxu0 0.0
  %2095 = vmatprep.subr.mxu0 0.0
  %2096 = vmatpush1.msra.mxu0 0.0
  %2097 = vmatprep.subr.mxu0 0.0
  %2098 = vmatpush1.msra.mxu0 0.0
  %2099 = vmatprep.subr.mxu0 0.0
  %2100 = vmatpush1.msra.mxu0 0.0
  %2101 = vmatprep.subr.mxu0 0.0
  %2102 = vmatpush1.msra.mxu0 0.0
  %2103 = vmatprep.subr.mxu0 0.0
  %2104 = vmatpush1.msra.mxu0 0.0
  %2105 = vmatprep.subr.mxu0 0.0
  %2106 = vmatpush1.msra.mxu0 0.0
  %2107 = vmatprep.subr.mxu0 0.0
  %2108 = vmatpush1.msra.mxu0 0.0
  %2109 = vmatprep.subr.mxu0 0.0
  %2110 = vmatpush1.msra.mxu0 0.0
  %2111 = vmatprep.subr.mxu0 0.0
  %2112 = vmatpush1.msra.mxu0 0.0
  %2113 = vmatprep.subr.mxu0 0.0
  %2114 = vmatpush1.msra.mxu0 0.0
  %2115 = vmatprep.subr.mxu0 0.0
  %2116 = vmatpush1.msra.mxu0 0.0
  %2117 = vmatprep.subr.mxu0 0.0
  %2118 = vmatpush1.msra.mxu0 0.0
  %2119 = vmatprep.subr.mxu0 0.0
  %2120 = vmatpush1.msra.mxu0 0.0
  %2121 = vmatprep.mubr.f32.mxu0 0.0
  %v2122 = vand.u32 %v643, 4294901760
  %2123 = vmatmul.mubr.f32.gmra.mrb[0].mxu0 %v2122
  %v2124 = vpop.f32.mrb[0].mxu0
  %v2125 = vadd.f32 %v2050, %v2124
  %v2126 = vpop.f32.mrb[0].mxu0
  %2127 = vdwg.mxu0
  %v2129 = vrot.slane %v2125, 6
  %v2131 = vadd.f32 %v111, %v2129
  %v2132 = vmul.f32 %v2131, %v40
  %v2133 = vxor.u32 %v2132, 2147483648
  %v2134 = vmul.f32 %v2133, 1.442695
  %v2135 = vpow.pop %v2134
  %v2136 = vadd.f32 %v2135, 1.0
  %v2137 = vrcp.pop %v2136
  %v2138 = vmul.f32 1.0, %v2137
  %v2139 = vmul.f32 %v2138, 2.0
  %v2140 = vsub.f32 %v2139, 1.0
  %v2141 = vsel %vm39, %v2140, %v2138
  %v2143 = vrot.slane %v627, 6
  %v2145 = vmul.f32 %v2141, %v2143
  %2147 = vrot.lane.b32.xlu0 %v2141, 64
  %v2148 = vpop.permute.xlu0 %2147
  %v2150 = vmul.f32 %v2141, %v2148
  %2152 = vrot.lane.b32.xlu0 %v2150, 32
  %v2153 = vpop.permute.xlu0 %2152
  %v2155 = vadd.f32 %v2145, %v2153
  %v2156 = vtanh.pop %v2155
  %2158 = vrot.lane.b32.xlu0 %v2156, 64
  %v2159 = vpop.permute.xlu0 %2158
  %v2161 = vmul.f32 %v2141, %v2159
  %v2163 = vrot.slane %v2161, 2
  %2164 = vrot.lane.b32.xlu0 %v2163, 32
  %v2165 = vpop.permute.xlu0 %2164
  %v2166 = vsel %vm117, %v2165, 0
  %2168 = vmatprep.subr.mxu0 0.0
  %v2169 = vand.u32 %v43, 4294901760
  %2170 = vmatpush1.msra.mxu0 %v2169
  %2171 = vmatprep.subr.mxu0 0.0
  %v2172 = vand.u32 %v44, 4294901760
  %2173 = vmatpush1.msra.mxu0 %v2172
  %2174 = vmatprep.subr.mxu0 0.0
  %v2175 = vand.u32 %v45, 4294901760
  %2176 = vmatpush1.msra.mxu0 %v2175
  %2177 = vmatprep.subr.mxu0 0.0
  %v2178 = vand.u32 %v46, 4294901760
  %2179 = vmatpush1.msra.mxu0 %v2178
  %2180 = vmatprep.subr.mxu0 0.0
  %2181 = vmatpush1.msra.mxu0 0.0
  %2182 = vmatprep.subr.mxu0 0.0
  %2183 = vmatpush1.msra.mxu0 0.0
  %2184 = vmatprep.subr.mxu0 0.0
  %2185 = vmatpush1.msra.mxu0 0.0
  %2186 = vmatprep.subr.mxu0 0.0
  %2187 = vmatpush1.msra.mxu0 0.0
  %2188 = vmatprep.subr.mxu0 0.0
  %2189 = vmatpush1.msra.mxu0 0.0
  %2190 = vmatprep.subr.mxu0 0.0
  %2191 = vmatpush1.msra.mxu0 0.0
  %2192 = vmatprep.subr.mxu0 0.0
  %2193 = vmatpush1.msra.mxu0 0.0
  %2194 = vmatprep.subr.mxu0 0.0
  %2195 = vmatpush1.msra.mxu0 0.0
  %2196 = vmatprep.subr.mxu0 0.0
  %2197 = vmatpush1.msra.mxu0 0.0
  %2198 = vmatprep.subr.mxu0 0.0
  %2199 = vmatpush1.msra.mxu0 0.0
  %2200 = vmatprep.subr.mxu0 0.0
  %2201 = vmatpush1.msra.mxu0 0.0
  %2202 = vmatprep.subr.mxu0 0.0
  %2203 = vmatpush1.msra.mxu0 0.0
  %2204 = vmatprep.subr.mxu0 0.0
  %2205 = vmatpush1.msra.mxu0 0.0
  %2206 = vmatprep.subr.mxu0 0.0
  %2207 = vmatpush1.msra.mxu0 0.0
  %2208 = vmatprep.subr.mxu0 0.0
  %2209 = vmatpush1.msra.mxu0 0.0
  %2210 = vmatprep.subr.mxu0 0.0
  %2211 = vmatpush1.msra.mxu0 0.0
  %2212 = vmatprep.subr.mxu0 0.0
  %2213 = vmatpush1.msra.mxu0 0.0
  %2214 = vmatprep.subr.mxu0 0.0
  %2215 = vmatpush1.msra.mxu0 0.0
  %2216 = vmatprep.subr.mxu0 0.0
  %2217 = vmatpush1.msra.mxu0 0.0
  %2218 = vmatprep.subr.mxu0 0.0
  %2219 = vmatpush1.msra.mxu0 0.0
  %2220 = vmatprep.subr.mxu0 0.0
  %2221 = vmatpush1.msra.mxu0 0.0
  %2222 = vmatprep.subr.mxu0 0.0
  %2223 = vmatpush1.msra.mxu0 0.0
  %2224 = vmatprep.subr.mxu0 0.0
  %2225 = vmatpush1.msra.mxu0 0.0
  %2226 = vmatprep.subr.mxu0 0.0
  %2227 = vmatpush1.msra.mxu0 0.0
  %2228 = vmatprep.subr.mxu0 0.0
  %2229 = vmatpush1.msra.mxu0 0.0
  %2230 = vmatprep.subr.mxu0 0.0
  %2231 = vmatpush1.msra.mxu0 0.0
  %2232 = vmatprep.subr.mxu0 0.0
  %2233 = vmatpush1.msra.mxu0 0.0
  %2234 = vmatprep.subr.mxu0 0.0
  %2235 = vmatpush1.msra.mxu0 0.0
  %2236 = vmatprep.mubr.f32.mxu0 0.0
  %v2237 = vand.u32 %v2166, 4294901760
  %v2238 = vsub.f32 %v2166, %v2237
  %v2239 = vand.u32 %v2238, 4294901760
  %v2240 = vsub.f32 %v2238, %v2239
  %v2241 = vand.u32 %v2240, 4294901760
  %2242 = vmatmul.mubr.f32.gmra.mrb[0].mxu0 %v2241
  %v2243 = vpop.f32.mrb[0].mxu0
  %v2244 = vadd.f32 %v638, %v2243
  %v2245 = vpop.f32.mrb[0].mxu0
  %2246 = vdwg.mxu0
  %2247 = vmatprep.subr.mxu0 0.0
  %v2248 = vand.u32 %v43, 4294901760
  %v2249 = vsub.f32 %v43, %v2248
  %v2250 = vand.u32 %v2249, 4294901760
  %v2251 = vsub.f32 %v2249, %v2250
  %v2252 = vand.u32 %v2251, 4294901760
  %2253 = vmatpush1.msra.mxu0 %v2252
  %2254 = vmatprep.subr.mxu0 0.0
  %v2255 = vand.u32 %v44, 4294901760
  %v2256 = vsub.f32 %v44, %v2255
  %v2257 = vand.u32 %v2256, 4294901760
  %v2258 = vsub.f32 %v2256, %v2257
  %v2259 = vand.u32 %v2258, 4294901760
  %2260 = vmatpush1.msra.mxu0 %v2259
  %2261 = vmatprep.subr.mxu0 0.0
  %v2262 = vand.u32 %v45, 4294901760
  %v2263 = vsub.f32 %v45, %v2262
  %v2264 = vand.u32 %v2263, 4294901760
  %v2265 = vsub.f32 %v2263, %v2264
  %v2266 = vand.u32 %v2265, 4294901760
  %2267 = vmatpush1.msra.mxu0 %v2266
  %2268 = vmatprep.subr.mxu0 0.0
  %v2269 = vand.u32 %v46, 4294901760
  %v2270 = vsub.f32 %v46, %v2269
  %v2271 = vand.u32 %v2270, 4294901760
  %v2272 = vsub.f32 %v2270, %v2271
  %v2273 = vand.u32 %v2272, 4294901760
  %2274 = vmatpush1.msra.mxu0 %v2273
  %2275 = vmatprep.subr.mxu0 0.0
  %2276 = vmatpush1.msra.mxu0 0.0
  %2277 = vmatprep.subr.mxu0 0.0
  %2278 = vmatpush1.msra.mxu0 0.0
  %2279 = vmatprep.subr.mxu0 0.0
  %2280 = vmatpush1.msra.mxu0 0.0
  %2281 = vmatprep.subr.mxu0 0.0
  %2282 = vmatpush1.msra.mxu0 0.0
  %2283 = vmatprep.subr.mxu0 0.0
  %2284 = vmatpush1.msra.mxu0 0.0
  %2285 = vmatprep.subr.mxu0 0.0
  %2286 = vmatpush1.msra.mxu0 0.0
  %2287 = vmatprep.subr.mxu0 0.0
  %2288 = vmatpush1.msra.mxu0 0.0
  %2289 = vmatprep.subr.mxu0 0.0
  %2290 = vmatpush1.msra.mxu0 0.0
  %2291 = vmatprep.subr.mxu0 0.0
  %2292 = vmatpush1.msra.mxu0 0.0
  %2293 = vmatprep.subr.mxu0 0.0
  %2294 = vmatpush1.msra.mxu0 0.0
  %2295 = vmatprep.subr.mxu0 0.0
  %2296 = vmatpush1.msra.mxu0 0.0
  %2297 = vmatprep.subr.mxu0 0.0
  %2298 = vmatpush1.msra.mxu0 0.0
  %2299 = vmatprep.subr.mxu0 0.0
  %2300 = vmatpush1.msra.mxu0 0.0
  %2301 = vmatprep.subr.mxu0 0.0
  %2302 = vmatpush1.msra.mxu0 0.0
  %2303 = vmatprep.subr.mxu0 0.0
  %2304 = vmatpush1.msra.mxu0 0.0
  %2305 = vmatprep.subr.mxu0 0.0
  %2306 = vmatpush1.msra.mxu0 0.0
  %2307 = vmatprep.subr.mxu0 0.0
  %2308 = vmatpush1.msra.mxu0 0.0
  %2309 = vmatprep.subr.mxu0 0.0
  %2310 = vmatpush1.msra.mxu0 0.0
  %2311 = vmatprep.subr.mxu0 0.0
  %2312 = vmatpush1.msra.mxu0 0.0
  %2313 = vmatprep.subr.mxu0 0.0
  %2314 = vmatpush1.msra.mxu0 0.0
  %2315 = vmatprep.subr.mxu0 0.0
  %2316 = vmatpush1.msra.mxu0 0.0
  %2317 = vmatprep.subr.mxu0 0.0
  %2318 = vmatpush1.msra.mxu0 0.0
  %2319 = vmatprep.subr.mxu0 0.0
  %2320 = vmatpush1.msra.mxu0 0.0
  %2321 = vmatprep.subr.mxu0 0.0
  %2322 = vmatpush1.msra.mxu0 0.0
  %2323 = vmatprep.subr.mxu0 0.0
  %2324 = vmatpush1.msra.mxu0 0.0
  %2325 = vmatprep.subr.mxu0 0.0
  %2326 = vmatpush1.msra.mxu0 0.0
  %2327 = vmatprep.subr.mxu0 0.0
  %2328 = vmatpush1.msra.mxu0 0.0
  %2329 = vmatprep.subr.mxu0 0.0
  %2330 = vmatpush1.msra.mxu0 0.0
  %2331 = vmatprep.mubr.f32.mxu0 0.0
  %v2332 = vand.u32 %v2166, 4294901760
  %2333 = vmatmul.mubr.f32.gmra.mrb[0].mxu0 %v2332
  %v2334 = vpop.f32.mrb[0].mxu0
  %v2335 = vadd.f32 %v2244, %v2334
  %v2336 = vpop.f32.mrb[0].mxu0
  %2337 = vdwg.mxu0
  %2338 = vmatprep.subr.mxu0 0.0
  %v2339 = vand.u32 %v43, 4294901760
  %v2340 = vsub.f32 %v43, %v2339
  %2341 = vmatpush1.msra.mxu0 %v2340
  %2342 = vmatprep.subr.mxu0 0.0
  %v2343 = vand.u32 %v44, 4294901760
  %v2344 = vsub.f32 %v44, %v2343
  %2345 = vmatpush1.msra.mxu0 %v2344
  %2346 = vmatprep.subr.mxu0 0.0
  %v2347 = vand.u32 %v45, 4294901760
  %v2348 = vsub.f32 %v45, %v2347
  %2349 = vmatpush1.msra.mxu0 %v2348
  %2350 = vmatprep.subr.mxu0 0.0
  %v2351 = vand.u32 %v46, 4294901760
  %v2352 = vsub.f32 %v46, %v2351
  %2353 = vmatpush1.msra.mxu0 %v2352
  %2354 = vmatprep.subr.mxu0 0.0
  %2355 = vmatpush1.msra.mxu0 0.0
  %2356 = vmatprep.subr.mxu0 0.0
  %2357 = vmatpush1.msra.mxu0 0.0
  %2358 = vmatprep.subr.mxu0 0.0
  %2359 = vmatpush1.msra.mxu0 0.0
  %2360 = vmatprep.subr.mxu0 0.0
  %2361 = vmatpush1.msra.mxu0 0.0
  %2362 = vmatprep.subr.mxu0 0.0
  %2363 = vmatpush1.msra.mxu0 0.0
  %2364 = vmatprep.subr.mxu0 0.0
  %2365 = vmatpush1.msra.mxu0 0.0
  %2366 = vmatprep.subr.mxu0 0.0
  %2367 = vmatpush1.msra.mxu0 0.0
  %2368 = vmatprep.subr.mxu0 0.0
  %2369 = vmatpush1.msra.mxu0 0.0
  %2370 = vmatprep.subr.mxu0 0.0
  %2371 = vmatpush1.msra.mxu0 0.0
  %2372 = vmatprep.subr.mxu0 0.0
  %2373 = vmatpush1.msra.mxu0 0.0
  %2374 = vmatprep.subr.mxu0 0.0
  %2375 = vmatpush1.msra.mxu0 0.0
  %2376 = vmatprep.subr.mxu0 0.0
  %2377 = vmatpush1.msra.mxu0 0.0
  %2378 = vmatprep.subr.mxu0 0.0
  %2379 = vmatpush1.msra.mxu0 0.0
  %2380 = vmatprep.subr.mxu0 0.0
  %2381 = vmatpush1.msra.mxu0 0.0
  %2382 = vmatprep.subr.mxu0 0.0
  %2383 = vmatpush1.msra.mxu0 0.0
  %2384 = vmatprep.subr.mxu0 0.0
  %2385 = vmatpush1.msra.mxu0 0.0
  %2386 = vmatprep.subr.mxu0 0.0
  %2387 = vmatpush1.msra.mxu0 0.0
  %2388 = vmatprep.subr.mxu0 0.0
  %2389 = vmatpush1.msra.mxu0 0.0
  %2390 = vmatprep.subr.mxu0 0.0
  %2391 = vmatpush1.msra.mxu0 0.0
  %2392 = vmatprep.subr.mxu0 0.0
  %2393 = vmatpush1.msra.mxu0 0.0
  %2394 = vmatprep.subr.mxu0 0.0
  %2395 = vmatpush1.msra.mxu0 0.0
  %2396 = vmatprep.subr.mxu0 0.0
  %2397 = vmatpush1.msra.mxu0 0.0
  %2398 = vmatprep.subr.mxu0 0.0
  %2399 = vmatpush1.msra.mxu0 0.0
  %2400 = vmatprep.subr.mxu0 0.0
  %2401 = vmatpush1.msra.mxu0 0.0
  %2402 = vmatprep.subr.mxu0 0.0
  %2403 = vmatpush1.msra.mxu0 0.0
  %2404 = vmatprep.subr.mxu0 0.0
  %2405 = vmatpush1.msra.mxu0 0.0
  %2406 = vmatprep.subr.mxu0 0.0
  %2407 = vmatpush1.msra.mxu0 0.0
  %2408 = vmatprep.subr.mxu0 0.0
  %2409 = vmatpush1.msra.mxu0 0.0
  %2410 = vmatprep.mubr.f32.mxu0 0.0
  %v2411 = vand.u32 %v2166, 4294901760
  %v2412 = vsub.f32 %v2166, %v2411
  %2413 = vmatmul.mubr.f32.gmra.mrb[0].mxu0 %v2412
  %v2414 = vpop.f32.mrb[0].mxu0
  %v2415 = vadd.f32 %v2335, %v2414
  %v2416 = vpop.f32.mrb[0].mxu0
  %2417 = vdwg.mxu0
  %2418 = vmatprep.subr.mxu0 0.0
  %v2419 = vand.u32 %v43, 4294901760
  %2420 = vmatpush1.msra.mxu0 %v2419
  %2421 = vmatprep.subr.mxu0 0.0
  %v2422 = vand.u32 %v44, 4294901760
  %2423 = vmatpush1.msra.mxu0 %v2422
  %2424 = vmatprep.subr.mxu0 0.0
  %v2425 = vand.u32 %v45, 4294901760
  %2426 = vmatpush1.msra.mxu0 %v2425
  %2427 = vmatprep.subr.mxu0 0.0
  %v2428 = vand.u32 %v46, 4294901760
  %2429 = vmatpush1.msra.mxu0 %v2428
  %2430 = vmatprep.subr.mxu0 0.0
  %2431 = vmatpush1.msra.mxu0 0.0
  %2432 = vmatprep.subr.mxu0 0.0
  %2433 = vmatpush1.msra.mxu0 0.0
  %2434 = vmatprep.subr.mxu0 0.0
  %2435 = vmatpush1.msra.mxu0 0.0
  %2436 = vmatprep.subr.mxu0 0.0
  %2437 = vmatpush1.msra.mxu0 0.0
  %2438 = vmatprep.subr.mxu0 0.0
  %2439 = vmatpush1.msra.mxu0 0.0
  %2440 = vmatprep.subr.mxu0 0.0
  %2441 = vmatpush1.msra.mxu0 0.0
  %2442 = vmatprep.subr.mxu0 0.0
  %2443 = vmatpush1.msra.mxu0 0.0
  %2444 = vmatprep.subr.mxu0 0.0
  %2445 = vmatpush1.msra.mxu0 0.0
  %2446 = vmatprep.subr.mxu0 0.0
  %2447 = vmatpush1.msra.mxu0 0.0
  %2448 = vmatprep.subr.mxu0 0.0
  %2449 = vmatpush1.msra.mxu0 0.0
  %2450 = vmatprep.subr.mxu0 0.0
  %2451 = vmatpush1.msra.mxu0 0.0
  %2452 = vmatprep.subr.mxu0 0.0
  %2453 = vmatpush1.msra.mxu0 0.0
  %2454 = vmatprep.subr.mxu0 0.0
  %2455 = vmatpush1.msra.mxu0 0.0
  %2456 = vmatprep.subr.mxu0 0.0
  %2457 = vmatpush1.msra.mxu0 0.0
  %2458 = vmatprep.subr.mxu0 0.0
  %2459 = vmatpush1.msra.mxu0 0.0
  %2460 = vmatprep.subr.mxu0 0.0
  %2461 = vmatpush1.msra.mxu0 0.0
  %2462 = vmatprep.subr.mxu0 0.0
  %2463 = vmatpush1.msra.mxu0 0.0
  %2464 = vmatprep.subr.mxu0 0.0
  %2465 = vmatpush1.msra.mxu0 0.0
  %2466 = vmatprep.subr.mxu0 0.0
  %2467 = vmatpush1.msra.mxu0 0.0
  %2468 = vmatprep.subr.mxu0 0.0
  %2469 = vmatpush1.msra.mxu0 0.0
  %2470 = vmatprep.subr.mxu0 0.0
  %2471 = vmatpush1.msra.mxu0 0.0
  %2472 = vmatprep.subr.mxu0 0.0
  %2473 = vmatpush1.msra.mxu0 0.0
  %2474 = vmatprep.subr.mxu0 0.0
  %2475 = vmatpush1.msra.mxu0 0.0
  %2476 = vmatprep.subr.mxu0 0.0
  %2477 = vmatpush1.msra.mxu0 0.0
  %2478 = vmatprep.subr.mxu0 0.0
  %2479 = vmatpush1.msra.mxu0 0.0
  %2480 = vmatprep.subr.mxu0 0.0
  %2481 = vmatpush1.msra.mxu0 0.0
  %2482 = vmatprep.subr.mxu0 0.0
  %2483 = vmatpush1.msra.mxu0 0.0
  %2484 = vmatprep.subr.mxu0 0.0
  %2485 = vmatpush1.msra.mxu0 0.0
  %2486 = vmatprep.mubr.f32.mxu0 0.0
  %v2487 = vand.u32 %v2166, 4294901760
  %v2488 = vsub.f32 %v2166, %v2487
  %v2489 = vand.u32 %v2488, 4294901760
  %2490 = vmatmul.mubr.f32.gmra.mrb[0].mxu0 %v2489
  %v2491 = vpop.f32.mrb[0].mxu0
  %v2492 = vadd.f32 %v2415, %v2491
  %v2493 = vpop.f32.mrb[0].mxu0
  %2494 = vdwg.mxu0
  %2495 = vmatprep.subr.mxu0 0.0
  %v2496 = vand.u32 %v43, 4294901760
  %v2497 = vsub.f32 %v43, %v2496
  %v2498 = vand.u32 %v2497, 4294901760
  %2499 = vmatpush1.msra.mxu0 %v2498
  %2500 = vmatprep.subr.mxu0 0.0
  %v2501 = vand.u32 %v44, 4294901760
  %v2502 = vsub.f32 %v44, %v2501
  %v2503 = vand.u32 %v2502, 4294901760
  %2504 = vmatpush1.msra.mxu0 %v2503
  %2505 = vmatprep.subr.mxu0 0.0
  %v2506 = vand.u32 %v45, 4294901760
  %v2507 = vsub.f32 %v45, %v2506
  %v2508 = vand.u32 %v2507, 4294901760
  %2509 = vmatpush1.msra.mxu0 %v2508
  %2510 = vmatprep.subr.mxu0 0.0
  %v2511 = vand.u32 %v46, 4294901760
  %v2512 = vsub.f32 %v46, %v2511
  %v2513 = vand.u32 %v2512, 4294901760
  %2514 = vmatpush1.msra.mxu0 %v2513
  %2515 = vmatprep.subr.mxu0 0.0
  %2516 = vmatpush1.msra.mxu0 0.0
  %2517 = vmatprep.subr.mxu0 0.0
  %2518 = vmatpush1.msra.mxu0 0.0
  %2519 = vmatprep.subr.mxu0 0.0
  %2520 = vmatpush1.msra.mxu0 0.0
  %2521 = vmatprep.subr.mxu0 0.0
  %2522 = vmatpush1.msra.mxu0 0.0
  %2523 = vmatprep.subr.mxu0 0.0
  %2524 = vmatpush1.msra.mxu0 0.0
  %2525 = vmatprep.subr.mxu0 0.0
  %2526 = vmatpush1.msra.mxu0 0.0
  %2527 = vmatprep.subr.mxu0 0.0
  %2528 = vmatpush1.msra.mxu0 0.0
  %2529 = vmatprep.subr.mxu0 0.0
  %2530 = vmatpush1.msra.mxu0 0.0
  %2531 = vmatprep.subr.mxu0 0.0
  %2532 = vmatpush1.msra.mxu0 0.0
  %2533 = vmatprep.subr.mxu0 0.0
  %2534 = vmatpush1.msra.mxu0 0.0
  %2535 = vmatprep.subr.mxu0 0.0
  %2536 = vmatpush1.msra.mxu0 0.0
  %2537 = vmatprep.subr.mxu0 0.0
  %2538 = vmatpush1.msra.mxu0 0.0
  %2539 = vmatprep.subr.mxu0 0.0
  %2540 = vmatpush1.msra.mxu0 0.0
  %2541 = vmatprep.subr.mxu0 0.0
  %2542 = vmatpush1.msra.mxu0 0.0
  %2543 = vmatprep.subr.mxu0 0.0
  %2544 = vmatpush1.msra.mxu0 0.0
  %2545 = vmatprep.subr.mxu0 0.0
  %2546 = vmatpush1.msra.mxu0 0.0
  %2547 = vmatprep.subr.mxu0 0.0
  %2548 = vmatpush1.msra.mxu0 0.0
  %2549 = vmatprep.subr.mxu0 0.0
  %2550 = vmatpush1.msra.mxu0 0.0
  %2551 = vmatprep.subr.mxu0 0.0
  %2552 = vmatpush1.msra.mxu0 0.0
  %2553 = vmatprep.subr.mxu0 0.0
  %2554 = vmatpush1.msra.mxu0 0.0
  %2555 = vmatprep.subr.mxu0 0.0
  %2556 = vmatpush1.msra.mxu0 0.0
  %2557 = vmatprep.subr.mxu0 0.0
  %2558 = vmatpush1.msra.mxu0 0.0
  %2559 = vmatprep.subr.mxu0 0.0
  %2560 = vmatpush1.msra.mxu0 0.0
  %2561 = vmatprep.subr.mxu0 0.0
  %2562 = vmatpush1.msra.mxu0 0.0
  %2563 = vmatprep.subr.mxu0 0.0
  %2564 = vmatpush1.msra.mxu0 0.0
  %2565 = vmatprep.subr.mxu0 0.0
  %2566 = vmatpush1.msra.mxu0 0.0
  %2567 = vmatprep.subr.mxu0 0.0
  %2568 = vmatpush1.msra.mxu0 0.0
  %2569 = vmatprep.subr.mxu0 0.0
  %2570 = vmatpush1.msra.mxu0 0.0
  %2571 = vmatprep.mubr.f32.mxu0 0.0
  %v2572 = vand.u32 %v2166, 4294901760
  %2573 = vmatmul.mubr.f32.gmra.mrb[0].mxu0 %v2572
  %v2574 = vpop.f32.mrb[0].mxu0
  %v2575 = vadd.f32 %v2492, %v2574
  %v2576 = vpop.f32.mrb[0].mxu0
  %2577 = vdwg.mxu0
  %2578 = vmatprep.subr.mxu0 0.0
  %v2579 = vand.u32 %v43, 4294901760
  %2580 = vmatpush1.msra.mxu0 %v2579
  %2581 = vmatprep.subr.mxu0 0.0
  %v2582 = vand.u32 %v44, 4294901760
  %2583 = vmatpush1.msra.mxu0 %v2582
  %2584 = vmatprep.subr.mxu0 0.0
  %v2585 = vand.u32 %v45, 4294901760
  %2586 = vmatpush1.msra.mxu0 %v2585
  %2587 = vmatprep.subr.mxu0 0.0
  %v2588 = vand.u32 %v46, 4294901760
  %2589 = vmatpush1.msra.mxu0 %v2588
  %2590 = vmatprep.subr.mxu0 0.0
  %2591 = vmatpush1.msra.mxu0 0.0
  %2592 = vmatprep.subr.mxu0 0.0
  %2593 = vmatpush1.msra.mxu0 0.0
  %2594 = vmatprep.subr.mxu0 0.0
  %2595 = vmatpush1.msra.mxu0 0.0
  %2596 = vmatprep.subr.mxu0 0.0
  %2597 = vmatpush1.msra.mxu0 0.0
  %2598 = vmatprep.subr.mxu0 0.0
  %2599 = vmatpush1.msra.mxu0 0.0
  %2600 = vmatprep.subr.mxu0 0.0
  %2601 = vmatpush1.msra.mxu0 0.0
  %2602 = vmatprep.subr.mxu0 0.0
  %2603 = vmatpush1.msra.mxu0 0.0
  %2604 = vmatprep.subr.mxu0 0.0
  %2605 = vmatpush1.msra.mxu0 0.0
  %2606 = vmatprep.subr.mxu0 0.0
  %2607 = vmatpush1.msra.mxu0 0.0
  %2608 = vmatprep.subr.mxu0 0.0
  %2609 = vmatpush1.msra.mxu0 0.0
  %2610 = vmatprep.subr.mxu0 0.0
  %2611 = vmatpush1.msra.mxu0 0.0
  %2612 = vmatprep.subr.mxu0 0.0
  %2613 = vmatpush1.msra.mxu0 0.0
  %2614 = vmatprep.subr.mxu0 0.0
  %2615 = vmatpush1.msra.mxu0 0.0
  %2616 = vmatprep.subr.mxu0 0.0
  %2617 = vmatpush1.msra.mxu0 0.0
  %2618 = vmatprep.subr.mxu0 0.0
  %2619 = vmatpush1.msra.mxu0 0.0
  %2620 = vmatprep.subr.mxu0 0.0
  %2621 = vmatpush1.msra.mxu0 0.0
  %2622 = vmatprep.subr.mxu0 0.0
  %2623 = vmatpush1.msra.mxu0 0.0
  %2624 = vmatprep.subr.mxu0 0.0
  %2625 = vmatpush1.msra.mxu0 0.0
  %2626 = vmatprep.subr.mxu0 0.0
  %2627 = vmatpush1.msra.mxu0 0.0
  %2628 = vmatprep.subr.mxu0 0.0
  %2629 = vmatpush1.msra.mxu0 0.0
  %2630 = vmatprep.subr.mxu0 0.0
  %2631 = vmatpush1.msra.mxu0 0.0
  %2632 = vmatprep.subr.mxu0 0.0
  %2633 = vmatpush1.msra.mxu0 0.0
  %2634 = vmatprep.subr.mxu0 0.0
  %2635 = vmatpush1.msra.mxu0 0.0
  %2636 = vmatprep.subr.mxu0 0.0
  %2637 = vmatpush1.msra.mxu0 0.0
  %2638 = vmatprep.subr.mxu0 0.0
  %2639 = vmatpush1.msra.mxu0 0.0
  %2640 = vmatprep.subr.mxu0 0.0
  %2641 = vmatpush1.msra.mxu0 0.0
  %2642 = vmatprep.subr.mxu0 0.0
  %2643 = vmatpush1.msra.mxu0 0.0
  %2644 = vmatprep.subr.mxu0 0.0
  %2645 = vmatpush1.msra.mxu0 0.0
  %2646 = vmatprep.mubr.f32.mxu0 0.0
  %v2647 = vand.u32 %v2166, 4294901760
  %2648 = vmatmul.mubr.f32.gmra.mrb[0].mxu0 %v2647
  %v2649 = vpop.f32.mrb[0].mxu0
  %v2650 = vadd.f32 %v2575, %v2649
  %v2651 = vpop.f32.mrb[0].mxu0
  %2652 = vdwg.mxu0
  %2654 = vrot.lane.b32.xlu0 %v1642, 32
  %v2655 = vpop.permute.xlu0 %2654
  %v2656 = vsel %vm117, %v2655, 0
  %2658 = vmatprep.subr.mxu0 0.0
  %v2659 = vand.u32 %v51, 4294901760
  %2660 = vmatpush1.msra.mxu0 %v2659
  %2661 = vmatprep.subr.mxu0 0.0
  %v2662 = vand.u32 %v52, 4294901760
  %2663 = vmatpush1.msra.mxu0 %v2662
  %2664 = vmatprep.subr.mxu0 0.0
  %v2665 = vand.u32 %v53, 4294901760
  %2666 = vmatpush1.msra.mxu0 %v2665
  %2667 = vmatprep.subr.mxu0 0.0
  %v2668 = vand.u32 %v54, 4294901760
  %2669 = vmatpush1.msra.mxu0 %v2668
  %2670 = vmatprep.subr.mxu0 0.0
  %2671 = vmatpush1.msra.mxu0 0.0
  %2672 = vmatprep.subr.mxu0 0.0
  %2673 = vmatpush1.msra.mxu0 0.0
  %2674 = vmatprep.subr.mxu0 0.0
  %2675 = vmatpush1.msra.mxu0 0.0
  %2676 = vmatprep.subr.mxu0 0.0
  %2677 = vmatpush1.msra.mxu0 0.0
  %2678 = vmatprep.subr.mxu0 0.0
  %2679 = vmatpush1.msra.mxu0 0.0
  %2680 = vmatprep.subr.mxu0 0.0
  %2681 = vmatpush1.msra.mxu0 0.0
  %2682 = vmatprep.subr.mxu0 0.0
  %2683 = vmatpush1.msra.mxu0 0.0
  %2684 = vmatprep.subr.mxu0 0.0
  %2685 = vmatpush1.msra.mxu0 0.0
  %2686 = vmatprep.subr.mxu0 0.0
  %2687 = vmatpush1.msra.mxu0 0.0
  %2688 = vmatprep.subr.mxu0 0.0
  %2689 = vmatpush1.msra.mxu0 0.0
  %2690 = vmatprep.subr.mxu0 0.0
  %2691 = vmatpush1.msra.mxu0 0.0
  %2692 = vmatprep.subr.mxu0 0.0
  %2693 = vmatpush1.msra.mxu0 0.0
  %2694 = vmatprep.subr.mxu0 0.0
  %2695 = vmatpush1.msra.mxu0 0.0
  %2696 = vmatprep.subr.mxu0 0.0
  %2697 = vmatpush1.msra.mxu0 0.0
  %2698 = vmatprep.subr.mxu0 0.0
  %2699 = vmatpush1.msra.mxu0 0.0
  %2700 = vmatprep.subr.mxu0 0.0
  %2701 = vmatpush1.msra.mxu0 0.0
  %2702 = vmatprep.subr.mxu0 0.0
  %2703 = vmatpush1.msra.mxu0 0.0
  %2704 = vmatprep.subr.mxu0 0.0
  %2705 = vmatpush1.msra.mxu0 0.0
  %2706 = vmatprep.subr.mxu0 0.0
  %2707 = vmatpush1.msra.mxu0 0.0
  %2708 = vmatprep.subr.mxu0 0.0
  %2709 = vmatpush1.msra.mxu0 0.0
  %2710 = vmatprep.subr.mxu0 0.0
  %2711 = vmatpush1.msra.mxu0 0.0
  %2712 = vmatprep.subr.mxu0 0.0
  %2713 = vmatpush1.msra.mxu0 0.0
  %2714 = vmatprep.subr.mxu0 0.0
  %2715 = vmatpush1.msra.mxu0 0.0
  %2716 = vmatprep.subr.mxu0 0.0
  %2717 = vmatpush1.msra.mxu0 0.0
  %2718 = vmatprep.subr.mxu0 0.0
  %2719 = vmatpush1.msra.mxu0 0.0
  %2720 = vmatprep.subr.mxu0 0.0
  %2721 = vmatpush1.msra.mxu0 0.0
  %2722 = vmatprep.subr.mxu0 0.0
  %2723 = vmatpush1.msra.mxu0 0.0
  %2724 = vmatprep.subr.mxu0 0.0
  %2725 = vmatpush1.msra.mxu0 0.0
  %2726 = vmatprep.mubr.f32.mxu0 0.0
  %v2727 = vand.u32 %v2656, 4294901760
  %v2728 = vsub.f32 %v2656, %v2727
  %v2729 = vand.u32 %v2728, 4294901760
  %v2730 = vsub.f32 %v2728, %v2729
  %v2731 = vand.u32 %v2730, 4294901760
  %2732 = vmatmul.mubr.f32.gmra.mrb[0].mxu0 %v2731
  %v2733 = vpop.f32.mrb[0].mxu0
  %v2734 = vadd.f32 0.0, %v2733
  %v2735 = vpop.f32.mrb[0].mxu0
  %2736 = vdwg.mxu0
  %2737 = vmatprep.subr.mxu0 0.0
  %v2738 = vand.u32 %v51, 4294901760
  %v2739 = vsub.f32 %v51, %v2738
  %v2740 = vand.u32 %v2739, 4294901760
  %v2741 = vsub.f32 %v2739, %v2740
  %v2742 = vand.u32 %v2741, 4294901760
  %2743 = vmatpush1.msra.mxu0 %v2742
  %2744 = vmatprep.subr.mxu0 0.0
  %v2745 = vand.u32 %v52, 4294901760
  %v2746 = vsub.f32 %v52, %v2745
  %v2747 = vand.u32 %v2746, 4294901760
  %v2748 = vsub.f32 %v2746, %v2747
  %v2749 = vand.u32 %v2748, 4294901760
  %2750 = vmatpush1.msra.mxu0 %v2749
  %2751 = vmatprep.subr.mxu0 0.0
  %v2752 = vand.u32 %v53, 4294901760
  %v2753 = vsub.f32 %v53, %v2752
  %v2754 = vand.u32 %v2753, 4294901760
  %v2755 = vsub.f32 %v2753, %v2754
  %v2756 = vand.u32 %v2755, 4294901760
  %2757 = vmatpush1.msra.mxu0 %v2756
  %2758 = vmatprep.subr.mxu0 0.0
  %v2759 = vand.u32 %v54, 4294901760
  %v2760 = vsub.f32 %v54, %v2759
  %v2761 = vand.u32 %v2760, 4294901760
  %v2762 = vsub.f32 %v2760, %v2761
  %v2763 = vand.u32 %v2762, 4294901760
  %2764 = vmatpush1.msra.mxu0 %v2763
  %2765 = vmatprep.subr.mxu0 0.0
  %2766 = vmatpush1.msra.mxu0 0.0
  %2767 = vmatprep.subr.mxu0 0.0
  %2768 = vmatpush1.msra.mxu0 0.0
  %2769 = vmatprep.subr.mxu0 0.0
  %2770 = vmatpush1.msra.mxu0 0.0
  %2771 = vmatprep.subr.mxu0 0.0
  %2772 = vmatpush1.msra.mxu0 0.0
  %2773 = vmatprep.subr.mxu0 0.0
  %2774 = vmatpush1.msra.mxu0 0.0
  %2775 = vmatprep.subr.mxu0 0.0
  %2776 = vmatpush1.msra.mxu0 0.0
  %2777 = vmatprep.subr.mxu0 0.0
  %2778 = vmatpush1.msra.mxu0 0.0
  %2779 = vmatprep.subr.mxu0 0.0
  %2780 = vmatpush1.msra.mxu0 0.0
  %2781 = vmatprep.subr.mxu0 0.0
  %2782 = vmatpush1.msra.mxu0 0.0
  %2783 = vmatprep.subr.mxu0 0.0
  %2784 = vmatpush1.msra.mxu0 0.0
  %2785 = vmatprep.subr.mxu0 0.0
  %2786 = vmatpush1.msra.mxu0 0.0
  %2787 = vmatprep.subr.mxu0 0.0
  %2788 = vmatpush1.msra.mxu0 0.0
  %2789 = vmatprep.subr.mxu0 0.0
  %2790 = vmatpush1.msra.mxu0 0.0
  %2791 = vmatprep.subr.mxu0 0.0
  %2792 = vmatpush1.msra.mxu0 0.0
  %2793 = vmatprep.subr.mxu0 0.0
  %2794 = vmatpush1.msra.mxu0 0.0
  %2795 = vmatprep.subr.mxu0 0.0
  %2796 = vmatpush1.msra.mxu0 0.0
  %2797 = vmatprep.subr.mxu0 0.0
  %2798 = vmatpush1.msra.mxu0 0.0
  %2799 = vmatprep.subr.mxu0 0.0
  %2800 = vmatpush1.msra.mxu0 0.0
  %2801 = vmatprep.subr.mxu0 0.0
  %2802 = vmatpush1.msra.mxu0 0.0
  %2803 = vmatprep.subr.mxu0 0.0
  %2804 = vmatpush1.msra.mxu0 0.0
  %2805 = vmatprep.subr.mxu0 0.0
  %2806 = vmatpush1.msra.mxu0 0.0
  %2807 = vmatprep.subr.mxu0 0.0
  %2808 = vmatpush1.msra.mxu0 0.0
  %2809 = vmatprep.subr.mxu0 0.0
  %2810 = vmatpush1.msra.mxu0 0.0
  %2811 = vmatprep.subr.mxu0 0.0
  %2812 = vmatpush1.msra.mxu0 0.0
  %2813 = vmatprep.subr.mxu0 0.0
  %2814 = vmatpush1.msra.mxu0 0.0
  %2815 = vmatprep.subr.mxu0 0.0
  %2816 = vmatpush1.msra.mxu0 0.0
  %2817 = vmatprep.subr.mxu0 0.0
  %2818 = vmatpush1.msra.mxu0 0.0
  %2819 = vmatprep.subr.mxu0 0.0
  %2820 = vmatpush1.msra.mxu0 0.0
  %2821 = vmatprep.mubr.f32.mxu0 0.0
  %v2822 = vand.u32 %v2656, 4294901760
  %2823 = vmatmul.mubr.f32.gmra.mrb[0].mxu0 %v2822
  %v2824 = vpop.f32.mrb[0].mxu0
  %v2825 = vadd.f32 %v2734, %v2824
  %v2826 = vpop.f32.mrb[0].mxu0
  %2827 = vdwg.mxu0
  %2828 = vmatprep.subr.mxu0 0.0
  %v2829 = vand.u32 %v51, 4294901760
  %v2830 = vsub.f32 %v51, %v2829
  %2831 = vmatpush1.msra.mxu0 %v2830
  %2832 = vmatprep.subr.mxu0 0.0
  %v2833 = vand.u32 %v52, 4294901760
  %v2834 = vsub.f32 %v52, %v2833
  %2835 = vmatpush1.msra.mxu0 %v2834
  %2836 = vmatprep.subr.mxu0 0.0
  %v2837 = vand.u32 %v53, 4294901760
  %v2838 = vsub.f32 %v53, %v2837
  %2839 = vmatpush1.msra.mxu0 %v2838
  %2840 = vmatprep.subr.mxu0 0.0
  %v2841 = vand.u32 %v54, 4294901760
  %v2842 = vsub.f32 %v54, %v2841
  %2843 = vmatpush1.msra.mxu0 %v2842
  %2844 = vmatprep.subr.mxu0 0.0
  %2845 = vmatpush1.msra.mxu0 0.0
  %2846 = vmatprep.subr.mxu0 0.0
  %2847 = vmatpush1.msra.mxu0 0.0
  %2848 = vmatprep.subr.mxu0 0.0
  %2849 = vmatpush1.msra.mxu0 0.0
  %2850 = vmatprep.subr.mxu0 0.0
  %2851 = vmatpush1.msra.mxu0 0.0
  %2852 = vmatprep.subr.mxu0 0.0
  %2853 = vmatpush1.msra.mxu0 0.0
  %2854 = vmatprep.subr.mxu0 0.0
  %2855 = vmatpush1.msra.mxu0 0.0
  %2856 = vmatprep.subr.mxu0 0.0
  %2857 = vmatpush1.msra.mxu0 0.0
  %2858 = vmatprep.subr.mxu0 0.0
  %2859 = vmatpush1.msra.mxu0 0.0
  %2860 = vmatprep.subr.mxu0 0.0
  %2861 = vmatpush1.msra.mxu0 0.0
  %2862 = vmatprep.subr.mxu0 0.0
  %2863 = vmatpush1.msra.mxu0 0.0
  %2864 = vmatprep.subr.mxu0 0.0
  %2865 = vmatpush1.msra.mxu0 0.0
  %2866 = vmatprep.subr.mxu0 0.0
  %2867 = vmatpush1.msra.mxu0 0.0
  %2868 = vmatprep.subr.mxu0 0.0
  %2869 = vmatpush1.msra.mxu0 0.0
  %2870 = vmatprep.subr.mxu0 0.0
  %2871 = vmatpush1.msra.mxu0 0.0
  %2872 = vmatprep.subr.mxu0 0.0
  %2873 = vmatpush1.msra.mxu0 0.0
  %2874 = vmatprep.subr.mxu0 0.0
  %2875 = vmatpush1.msra.mxu0 0.0
  %2876 = vmatprep.subr.mxu0 0.0
  %2877 = vmatpush1.msra.mxu0 0.0
  %2878 = vmatprep.subr.mxu0 0.0
  %2879 = vmatpush1.msra.mxu0 0.0
  %2880 = vmatprep.subr.mxu0 0.0
  %2881 = vmatpush1.msra.mxu0 0.0
  %2882 = vmatprep.subr.mxu0 0.0
  %2883 = vmatpush1.msra.mxu0 0.0
  %2884 = vmatprep.subr.mxu0 0.0
  %2885 = vmatpush1.msra.mxu0 0.0
  %2886 = vmatprep.subr.mxu0 0.0
  %2887 = vmatpush1.msra.mxu0 0.0
  %2888 = vmatprep.subr.mxu0 0.0
  %2889 = vmatpush1.msra.mxu0 0.0
  %2890 = vmatprep.subr.mxu0 0.0
  %2891 = vmatpush1.msra.mxu0 0.0
  %2892 = vmatprep.subr.mxu0 0.0
  %2893 = vmatpush1.msra.mxu0 0.0
  %2894 = vmatprep.subr.mxu0 0.0
  %2895 = vmatpush1.msra.mxu0 0.0
  %2896 = vmatprep.subr.mxu0 0.0
  %2897 = vmatpush1.msra.mxu0 0.0
  %2898 = vmatprep.subr.mxu0 0.0
  %2899 = vmatpush1.msra.mxu0 0.0
  %2900 = vmatprep.mubr.f32.mxu0 0.0
  %v2901 = vand.u32 %v2656, 4294901760
  %v2902 = vsub.f32 %v2656, %v2901
  %2903 = vmatmul.mubr.f32.gmra.mrb[0].mxu0 %v2902
  %v2904 = vpop.f32.mrb[0].mxu0
  %v2905 = vadd.f32 %v2825, %v2904
  %v2906 = vpop.f32.mrb[0].mxu0
  %2907 = vdwg.mxu0
  %2908 = vmatprep.subr.mxu0 0.0
  %v2909 = vand.u32 %v51, 4294901760
  %2910 = vmatpush1.msra.mxu0 %v2909
  %2911 = vmatprep.subr.mxu0 0.0
  %v2912 = vand.u32 %v52, 4294901760
  %2913 = vmatpush1.msra.mxu0 %v2912
  %2914 = vmatprep.subr.mxu0 0.0
  %v2915 = vand.u32 %v53, 4294901760
  %2916 = vmatpush1.msra.mxu0 %v2915
  %2917 = vmatprep.subr.mxu0 0.0
  %v2918 = vand.u32 %v54, 4294901760
  %2919 = vmatpush1.msra.mxu0 %v2918
  %2920 = vmatprep.subr.mxu0 0.0
  %2921 = vmatpush1.msra.mxu0 0.0
  %2922 = vmatprep.subr.mxu0 0.0
  %2923 = vmatpush1.msra.mxu0 0.0
  %2924 = vmatprep.subr.mxu0 0.0
  %2925 = vmatpush1.msra.mxu0 0.0
  %2926 = vmatprep.subr.mxu0 0.0
  %2927 = vmatpush1.msra.mxu0 0.0
  %2928 = vmatprep.subr.mxu0 0.0
  %2929 = vmatpush1.msra.mxu0 0.0
  %2930 = vmatprep.subr.mxu0 0.0
  %2931 = vmatpush1.msra.mxu0 0.0
  %2932 = vmatprep.subr.mxu0 0.0
  %2933 = vmatpush1.msra.mxu0 0.0
  %2934 = vmatprep.subr.mxu0 0.0
  %2935 = vmatpush1.msra.mxu0 0.0
  %2936 = vmatprep.subr.mxu0 0.0
  %2937 = vmatpush1.msra.mxu0 0.0
  %2938 = vmatprep.subr.mxu0 0.0
  %2939 = vmatpush1.msra.mxu0 0.0
  %2940 = vmatprep.subr.mxu0 0.0
  %2941 = vmatpush1.msra.mxu0 0.0
  %2942 = vmatprep.subr.mxu0 0.0
  %2943 = vmatpush1.msra.mxu0 0.0
  %2944 = vmatprep.subr.mxu0 0.0
  %2945 = vmatpush1.msra.mxu0 0.0
  %2946 = vmatprep.subr.mxu0 0.0
  %2947 = vmatpush1.msra.mxu0 0.0
  %2948 = vmatprep.subr.mxu0 0.0
  %2949 = vmatpush1.msra.mxu0 0.0
  %2950 = vmatprep.subr.mxu0 0.0
  %2951 = vmatpush1.msra.mxu0 0.0
  %2952 = vmatprep.subr.mxu0 0.0
  %2953 = vmatpush1.msra.mxu0 0.0
  %2954 = vmatprep.subr.mxu0 0.0
  %2955 = vmatpush1.msra.mxu0 0.0
  %2956 = vmatprep.subr.mxu0 0.0
  %2957 = vmatpush1.msra.mxu0 0.0
  %2958 = vmatprep.subr.mxu0 0.0
  %2959 = vmatpush1.msra.mxu0 0.0
  %2960 = vmatprep.subr.mxu0 0.0
  %2961 = vmatpush1.msra.mxu0 0.0
  %2962 = vmatprep.subr.mxu0 0.0
  %2963 = vmatpush1.msra.mxu0 0.0
  %2964 = vmatprep.subr.mxu0 0.0
  %2965 = vmatpush1.msra.mxu0 0.0
  %2966 = vmatprep.subr.mxu0 0.0
  %2967 = vmatpush1.msra.mxu0 0.0
  %2968 = vmatprep.subr.mxu0 0.0
  %2969 = vmatpush1.msra.mxu0 0.0
  %2970 = vmatprep.subr.mxu0 0.0
  %2971 = vmatpush1.msra.mxu0 0.0
  %2972 = vmatprep.subr.mxu0 0.0
  %2973 = vmatpush1.msra.mxu0 0.0
  %2974 = vmatprep.subr.mxu0 0.0
  %2975 = vmatpush1.msra.mxu0 0.0
  %2976 = vmatprep.mubr.f32.mxu0 0.0
  %v2977 = vand.u32 %v2656, 4294901760
  %v2978 = vsub.f32 %v2656, %v2977
  %v2979 = vand.u32 %v2978, 4294901760
  %2980 = vmatmul.mubr.f32.gmra.mrb[0].mxu0 %v2979
  %v2981 = vpop.f32.mrb[0].mxu0
  %v2982 = vadd.f32 %v2905, %v2981
  %v2983 = vpop.f32.mrb[0].mxu0
  %2984 = vdwg.mxu0
  %2985 = vmatprep.subr.mxu0 0.0
  %v2986 = vand.u32 %v51, 4294901760
  %v2987 = vsub.f32 %v51, %v2986
  %v2988 = vand.u32 %v2987, 4294901760
  %2989 = vmatpush1.msra.mxu0 %v2988
  %2990 = vmatprep.subr.mxu0 0.0
  %v2991 = vand.u32 %v52, 4294901760
  %v2992 = vsub.f32 %v52, %v2991
  %v2993 = vand.u32 %v2992, 4294901760
  %2994 = vmatpush1.msra.mxu0 %v2993
  %2995 = vmatprep.subr.mxu0 0.0
  %v2996 = vand.u32 %v53, 4294901760
  %v2997 = vsub.f32 %v53, %v2996
  %v2998 = vand.u32 %v2997, 4294901760
  %2999 = vmatpush1.msra.mxu0 %v2998
  %3000 = vmatprep.subr.mxu0 0.0
  %v3001 = vand.u32 %v54, 4294901760
  %v3002 = vsub.f32 %v54, %v3001
  %v3003 = vand.u32 %v3002, 4294901760
  %3004 = vmatpush1.msra.mxu0 %v3003
  %3005 = vmatprep.subr.mxu0 0.0
  %3006 = vmatpush1.msra.mxu0 0.0
  %3007 = vmatprep.subr.mxu0 0.0
  %3008 = vmatpush1.msra.mxu0 0.0
  %3009 = vmatprep.subr.mxu0 0.0
  %3010 = vmatpush1.msra.mxu0 0.0
  %3011 = vmatprep.subr.mxu0 0.0
  %3012 = vmatpush1.msra.mxu0 0.0
  %3013 = vmatprep.subr.mxu0 0.0
  %3014 = vmatpush1.msra.mxu0 0.0
  %3015 = vmatprep.subr.mxu0 0.0
  %3016 = vmatpush1.msra.mxu0 0.0
  %3017 = vmatprep.subr.mxu0 0.0
  %3018 = vmatpush1.msra.mxu0 0.0
  %3019 = vmatprep.subr.mxu0 0.0
  %3020 = vmatpush1.msra.mxu0 0.0
  %3021 = vmatprep.subr.mxu0 0.0
  %3022 = vmatpush1.msra.mxu0 0.0
  %3023 = vmatprep.subr.mxu0 0.0
  %3024 = vmatpush1.msra.mxu0 0.0
  %3025 = vmatprep.subr.mxu0 0.0
  %3026 = vmatpush1.msra.mxu0 0.0
  %3027 = vmatprep.subr.mxu0 0.0
  %3028 = vmatpush1.msra.mxu0 0.0
  %3029 = vmatprep.subr.mxu0 0.0
  %3030 = vmatpush1.msra.mxu0 0.0
  %3031 = vmatprep.subr.mxu0 0.0
  %3032 = vmatpush1.msra.mxu0 0.0
  %3033 = vmatprep.subr.mxu0 0.0
  %3034 = vmatpush1.msra.mxu0 0.0
  %3035 = vmatprep.subr.mxu0 0.0
  %3036 = vmatpush1.msra.mxu0 0.0
  %3037 = vmatprep.subr.mxu0 0.0
  %3038 = vmatpush1.msra.mxu0 0.0
  %3039 = vmatprep.subr.mxu0 0.0
  %3040 = vmatpush1.msra.mxu0 0.0
  %3041 = vmatprep.subr.mxu0 0.0
  %3042 = vmatpush1.msra.mxu0 0.0
  %3043 = vmatprep.subr.mxu0 0.0
  %3044 = vmatpush1.msra.mxu0 0.0
  %3045 = vmatprep.subr.mxu0 0.0
  %3046 = vmatpush1.msra.mxu0 0.0
  %3047 = vmatprep.subr.mxu0 0.0
  %3048 = vmatpush1.msra.mxu0 0.0
  %3049 = vmatprep.subr.mxu0 0.0
  %3050 = vmatpush1.msra.mxu0 0.0
  %3051 = vmatprep.subr.mxu0 0.0
  %3052 = vmatpush1.msra.mxu0 0.0
  %3053 = vmatprep.subr.mxu0 0.0
  %3054 = vmatpush1.msra.mxu0 0.0
  %3055 = vmatprep.subr.mxu0 0.0
  %3056 = vmatpush1.msra.mxu0 0.0
  %3057 = vmatprep.subr.mxu0 0.0
  %3058 = vmatpush1.msra.mxu0 0.0
  %3059 = vmatprep.subr.mxu0 0.0
  %3060 = vmatpush1.msra.mxu0 0.0
  %3061 = vmatprep.mubr.f32.mxu0 0.0
  %v3062 = vand.u32 %v2656, 4294901760
  %3063 = vmatmul.mubr.f32.gmra.mrb[0].mxu0 %v3062
  %v3064 = vpop.f32.mrb[0].mxu0
  %v3065 = vadd.f32 %v2982, %v3064
  %v3066 = vpop.f32.mrb[0].mxu0
  %3067 = vdwg.mxu0
  %3068 = vmatprep.subr.mxu0 0.0
  %v3069 = vand.u32 %v51, 4294901760
  %3070 = vmatpush1.msra.mxu0 %v3069
  %3071 = vmatprep.subr.mxu0 0.0
  %v3072 = vand.u32 %v52, 4294901760
  %3073 = vmatpush1.msra.mxu0 %v3072
  %3074 = vmatprep.subr.mxu0 0.0
  %v3075 = vand.u32 %v53, 4294901760
  %3076 = vmatpush1.msra.mxu0 %v3075
  %3077 = vmatprep.subr.mxu0 0.0
  %v3078 = vand.u32 %v54, 4294901760
  %3079 = vmatpush1.msra.mxu0 %v3078
  %3080 = vmatprep.subr.mxu0 0.0
  %3081 = vmatpush1.msra.mxu0 0.0
  %3082 = vmatprep.subr.mxu0 0.0
  %3083 = vmatpush1.msra.mxu0 0.0
  %3084 = vmatprep.subr.mxu0 0.0
  %3085 = vmatpush1.msra.mxu0 0.0
  %3086 = vmatprep.subr.mxu0 0.0
  %3087 = vmatpush1.msra.mxu0 0.0
  %3088 = vmatprep.subr.mxu0 0.0
  %3089 = vmatpush1.msra.mxu0 0.0
  %3090 = vmatprep.subr.mxu0 0.0
  %3091 = vmatpush1.msra.mxu0 0.0
  %3092 = vmatprep.subr.mxu0 0.0
  %3093 = vmatpush1.msra.mxu0 0.0
  %3094 = vmatprep.subr.mxu0 0.0
  %3095 = vmatpush1.msra.mxu0 0.0
  %3096 = vmatprep.subr.mxu0 0.0
  %3097 = vmatpush1.msra.mxu0 0.0
  %3098 = vmatprep.subr.mxu0 0.0
  %3099 = vmatpush1.msra.mxu0 0.0
  %3100 = vmatprep.subr.mxu0 0.0
  %3101 = vmatpush1.msra.mxu0 0.0
  %3102 = vmatprep.subr.mxu0 0.0
  %3103 = vmatpush1.msra.mxu0 0.0
  %3104 = vmatprep.subr.mxu0 0.0
  %3105 = vmatpush1.msra.mxu0 0.0
  %3106 = vmatprep.subr.mxu0 0.0
  %3107 = vmatpush1.msra.mxu0 0.0
  %3108 = vmatprep.subr.mxu0 0.0
  %3109 = vmatpush1.msra.mxu0 0.0
  %3110 = vmatprep.subr.mxu0 0.0
  %3111 = vmatpush1.msra.mxu0 0.0
  %3112 = vmatprep.subr.mxu0 0.0
  %3113 = vmatpush1.msra.mxu0 0.0
  %3114 = vmatprep.subr.mxu0 0.0
  %3115 = vmatpush1.msra.mxu0 0.0
  %3116 = vmatprep.subr.mxu0 0.0
  %3117 = vmatpush1.msra.mxu0 0.0
  %3118 = vmatprep.subr.mxu0 0.0
  %3119 = vmatpush1.msra.mxu0 0.0
  %3120 = vmatprep.subr.mxu0 0.0
  %3121 = vmatpush1.msra.mxu0 0.0
  %3122 = vmatprep.subr.mxu0 0.0
  %3123 = vmatpush1.msra.mxu0 0.0
  %3124 = vmatprep.subr.mxu0 0.0
  %3125 = vmatpush1.msra.mxu0 0.0
  %3126 = vmatprep.subr.mxu0 0.0
  %3127 = vmatpush1.msra.mxu0 0.0
  %3128 = vmatprep.subr.mxu0 0.0
  %3129 = vmatpush1.msra.mxu0 0.0
  %3130 = vmatprep.subr.mxu0 0.0
  %3131 = vmatpush1.msra.mxu0 0.0
  %3132 = vmatprep.subr.mxu0 0.0
  %3133 = vmatpush1.msra.mxu0 0.0
  %3134 = vmatprep.subr.mxu0 0.0
  %3135 = vmatpush1.msra.mxu0 0.0
  %3136 = vmatprep.mubr.f32.mxu0 0.0
  %v3137 = vand.u32 %v2656, 4294901760
  %3138 = vmatmul.mubr.f32.gmra.mrb[0].mxu0 %v3137
  %v3139 = vpop.f32.mrb[0].mxu0
  %v3140 = vadd.f32 %v3065, %v3139
  %v3141 = vpop.f32.mrb[0].mxu0
  %3142 = vdwg.mxu0
  %v3143 = vadd.f32 %v2650, %v3140
  %v3144 = vmul.f32 %v3143, %v40
  %v3145 = vxor.u32 %v3144, 2147483648
  %v3146 = vmul.f32 %v3145, 1.442695
  %v3147 = vpow.pop %v3146
  %v3148 = vadd.f32 %v3147, 1.0
  %v3149 = vrcp.pop %v3148
  %v3150 = vmul.f32 1.0, %v3149
  %v3151 = vmul.f32 %v3150, 2.0
  %v3152 = vsub.f32 %v3151, 1.0
  %v3153 = vsel %vm39, %v3152, %v3150
  %v3154 = vmul.f32 %v3153, %v1636
  %3156 = vrot.lane.b32.xlu0 %v3153, 64
  %v3157 = vpop.permute.xlu0 %3156
  %v3159 = vmul.f32 %v3153, %v3157
  %3161 = vrot.lane.b32.xlu0 %v3159, 32
  %v3162 = vpop.permute.xlu0 %3161
  %v3164 = vadd.f32 %v3154, %v3162
  %v3165 = vtanh.pop %v3164
  %3167 = vrot.lane.b32.xlu0 %v3165, 64
  %v3168 = vpop.permute.xlu0 %3167
  %v3170 = vmul.f32 %v3153, %v3168
  %3171 = vmatprep.subr.mxu0 0.0
  %v3172 = vand.u32 %v47, 4294901760
  %3173 = vmatpush1.msra.mxu0 %v3172
  %3174 = vmatprep.subr.mxu0 0.0
  %v3175 = vand.u32 %v48, 4294901760
  %3176 = vmatpush1.msra.mxu0 %v3175
  %3177 = vmatprep.subr.mxu0 0.0
  %v3178 = vand.u32 %v49, 4294901760
  %3179 = vmatpush1.msra.mxu0 %v3178
  %3180 = vmatprep.subr.mxu0 0.0
  %v3181 = vand.u32 %v50, 4294901760
  %3182 = vmatpush1.msra.mxu0 %v3181
  %3183 = vmatprep.subr.mxu0 0.0
  %3184 = vmatpush1.msra.mxu0 0.0
  %3185 = vmatprep.subr.mxu0 0.0
  %3186 = vmatpush1.msra.mxu0 0.0
  %3187 = vmatprep.subr.mxu0 0.0
  %3188 = vmatpush1.msra.mxu0 0.0
  %3189 = vmatprep.subr.mxu0 0.0
  %3190 = vmatpush1.msra.mxu0 0.0
  %3191 = vmatprep.subr.mxu0 0.0
  %3192 = vmatpush1.msra.mxu0 0.0
  %3193 = vmatprep.subr.mxu0 0.0
  %3194 = vmatpush1.msra.mxu0 0.0
  %3195 = vmatprep.subr.mxu0 0.0
  %3196 = vmatpush1.msra.mxu0 0.0
  %3197 = vmatprep.subr.mxu0 0.0
  %3198 = vmatpush1.msra.mxu0 0.0
  %3199 = vmatprep.subr.mxu0 0.0
  %3200 = vmatpush1.msra.mxu0 0.0
  %3201 = vmatprep.subr.mxu0 0.0
  %3202 = vmatpush1.msra.mxu0 0.0
  %3203 = vmatprep.subr.mxu0 0.0
  %3204 = vmatpush1.msra.mxu0 0.0
  %3205 = vmatprep.subr.mxu0 0.0
  %3206 = vmatpush1.msra.mxu0 0.0
  %3207 = vmatprep.subr.mxu0 0.0
  %3208 = vmatpush1.msra.mxu0 0.0
  %3209 = vmatprep.subr.mxu0 0.0
  %3210 = vmatpush1.msra.mxu0 0.0
  %3211 = vmatprep.subr.mxu0 0.0
  %3212 = vmatpush1.msra.mxu0 0.0
  %3213 = vmatprep.subr.mxu0 0.0
  %3214 = vmatpush1.msra.mxu0 0.0
  %3215 = vmatprep.subr.mxu0 0.0
  %3216 = vmatpush1.msra.mxu0 0.0
  %3217 = vmatprep.subr.mxu0 0.0
  %3218 = vmatpush1.msra.mxu0 0.0
  %3219 = vmatprep.subr.mxu0 0.0
  %3220 = vmatpush1.msra.mxu0 0.0
  %3221 = vmatprep.subr.mxu0 0.0
  %3222 = vmatpush1.msra.mxu0 0.0
  %3223 = vmatprep.subr.mxu0 0.0
  %3224 = vmatpush1.msra.mxu0 0.0
  %3225 = vmatprep.subr.mxu0 0.0
  %3226 = vmatpush1.msra.mxu0 0.0
  %3227 = vmatprep.subr.mxu0 0.0
  %3228 = vmatpush1.msra.mxu0 0.0
  %3229 = vmatprep.subr.mxu0 0.0
  %3230 = vmatpush1.msra.mxu0 0.0
  %3231 = vmatprep.subr.mxu0 0.0
  %3232 = vmatpush1.msra.mxu0 0.0
  %3233 = vmatprep.subr.mxu0 0.0
  %3234 = vmatpush1.msra.mxu0 0.0
  %3235 = vmatprep.subr.mxu0 0.0
  %3236 = vmatpush1.msra.mxu0 0.0
  %3237 = vmatprep.subr.mxu0 0.0
  %3238 = vmatpush1.msra.mxu0 0.0
  %3239 = vmatprep.mubr.f32.mxu0 0.0
  %v3240 = vand.u32 %v2166, 4294901760
  %v3241 = vsub.f32 %v2166, %v3240
  %v3242 = vand.u32 %v3241, 4294901760
  %v3243 = vsub.f32 %v3241, %v3242
  %v3244 = vand.u32 %v3243, 4294901760
  %3245 = vmatmul.mubr.f32.gmra.mrb[0].mxu0 %v3244
  %v3246 = vpop.f32.mrb[0].mxu0
  %v3247 = vadd.f32 0.0, %v3246
  %v3248 = vpop.f32.mrb[0].mxu0
  %3249 = vdwg.mxu0
  %3250 = vmatprep.subr.mxu0 0.0
  %v3251 = vand.u32 %v47, 4294901760
  %v3252 = vsub.f32 %v47, %v3251
  %v3253 = vand.u32 %v3252, 4294901760
  %v3254 = vsub.f32 %v3252, %v3253
  %v3255 = vand.u32 %v3254, 4294901760
  %3256 = vmatpush1.msra.mxu0 %v3255
  %3257 = vmatprep.subr.mxu0 0.0
  %v3258 = vand.u32 %v48, 4294901760
  %v3259 = vsub.f32 %v48, %v3258
  %v3260 = vand.u32 %v3259, 4294901760
  %v3261 = vsub.f32 %v3259, %v3260
  %v3262 = vand.u32 %v3261, 4294901760
  %3263 = vmatpush1.msra.mxu0 %v3262
  %3264 = vmatprep.subr.mxu0 0.0
  %v3265 = vand.u32 %v49, 4294901760
  %v3266 = vsub.f32 %v49, %v3265
  %v3267 = vand.u32 %v3266, 4294901760
  %v3268 = vsub.f32 %v3266, %v3267
  %v3269 = vand.u32 %v3268, 4294901760
  %3270 = vmatpush1.msra.mxu0 %v3269
  %3271 = vmatprep.subr.mxu0 0.0
  %v3272 = vand.u32 %v50, 4294901760
  %v3273 = vsub.f32 %v50, %v3272
  %v3274 = vand.u32 %v3273, 4294901760
  %v3275 = vsub.f32 %v3273, %v3274
  %v3276 = vand.u32 %v3275, 4294901760
  %3277 = vmatpush1.msra.mxu0 %v3276
  %3278 = vmatprep.subr.mxu0 0.0
  %3279 = vmatpush1.msra.mxu0 0.0
  %3280 = vmatprep.subr.mxu0 0.0
  %3281 = vmatpush1.msra.mxu0 0.0
  %3282 = vmatprep.subr.mxu0 0.0
  %3283 = vmatpush1.msra.mxu0 0.0
  %3284 = vmatprep.subr.mxu0 0.0
  %3285 = vmatpush1.msra.mxu0 0.0
  %3286 = vmatprep.subr.mxu0 0.0
  %3287 = vmatpush1.msra.mxu0 0.0
  %3288 = vmatprep.subr.mxu0 0.0
  %3289 = vmatpush1.msra.mxu0 0.0
  %3290 = vmatprep.subr.mxu0 0.0
  %3291 = vmatpush1.msra.mxu0 0.0
  %3292 = vmatprep.subr.mxu0 0.0
  %3293 = vmatpush1.msra.mxu0 0.0
  %3294 = vmatprep.subr.mxu0 0.0
  %3295 = vmatpush1.msra.mxu0 0.0
  %3296 = vmatprep.subr.mxu0 0.0
  %3297 = vmatpush1.msra.mxu0 0.0
  %3298 = vmatprep.subr.mxu0 0.0
  %3299 = vmatpush1.msra.mxu0 0.0
  %3300 = vmatprep.subr.mxu0 0.0
  %3301 = vmatpush1.msra.mxu0 0.0
  %3302 = vmatprep.subr.mxu0 0.0
  %3303 = vmatpush1.msra.mxu0 0.0
  %3304 = vmatprep.subr.mxu0 0.0
  %3305 = vmatpush1.msra.mxu0 0.0
  %3306 = vmatprep.subr.mxu0 0.0
  %3307 = vmatpush1.msra.mxu0 0.0
  %3308 = vmatprep.subr.mxu0 0.0
  %3309 = vmatpush1.msra.mxu0 0.0
  %3310 = vmatprep.subr.mxu0 0.0
  %3311 = vmatpush1.msra.mxu0 0.0
  %3312 = vmatprep.subr.mxu0 0.0
  %3313 = vmatpush1.msra.mxu0 0.0
  %3314 = vmatprep.subr.mxu0 0.0
  %3315 = vmatpush1.msra.mxu0 0.0
  %3316 = vmatprep.subr.mxu0 0.0
  %3317 = vmatpush1.msra.mxu0 0.0
  %3318 = vmatprep.subr.mxu0 0.0
  %3319 = vmatpush1.msra.mxu0 0.0
  %3320 = vmatprep.subr.mxu0 0.0
  %3321 = vmatpush1.msra.mxu0 0.0
  %3322 = vmatprep.subr.mxu0 0.0
  %3323 = vmatpush1.msra.mxu0 0.0
  %3324 = vmatprep.subr.mxu0 0.0
  %3325 = vmatpush1.msra.mxu0 0.0
  %3326 = vmatprep.subr.mxu0 0.0
  %3327 = vmatpush1.msra.mxu0 0.0
  %3328 = vmatprep.subr.mxu0 0.0
  %3329 = vmatpush1.msra.mxu0 0.0
  %3330 = vmatprep.subr.mxu0 0.0
  %3331 = vmatpush1.msra.mxu0 0.0
  %3332 = vmatprep.subr.mxu0 0.0
  %3333 = vmatpush1.msra.mxu0 0.0
  %3334 = vmatprep.mubr.f32.mxu0 0.0
  %v3335 = vand.u32 %v2166, 4294901760
  %3336 = vmatmul.mubr.f32.gmra.mrb[0].mxu0 %v3335
  %v3337 = vpop.f32.mrb[0].mxu0
  %v3338 = vadd.f32 %v3247, %v3337
  %v3339 = vpop.f32.mrb[0].mxu0
  %3340 = vdwg.mxu0
  %3341 = vmatprep.subr.mxu0 0.0
  %v3342 = vand.u32 %v47, 4294901760
  %v3343 = vsub.f32 %v47, %v3342
  %3344 = vmatpush1.msra.mxu0 %v3343
  %3345 = vmatprep.subr.mxu0 0.0
  %v3346 = vand.u32 %v48, 4294901760
  %v3347 = vsub.f32 %v48, %v3346
  %3348 = vmatpush1.msra.mxu0 %v3347
  %3349 = vmatprep.subr.mxu0 0.0
  %v3350 = vand.u32 %v49, 4294901760
  %v3351 = vsub.f32 %v49, %v3350
  %3352 = vmatpush1.msra.mxu0 %v3351
  %3353 = vmatprep.subr.mxu0 0.0
  %v3354 = vand.u32 %v50, 4294901760
  %v3355 = vsub.f32 %v50, %v3354
  %3356 = vmatpush1.msra.mxu0 %v3355
  %3357 = vmatprep.subr.mxu0 0.0
  %3358 = vmatpush1.msra.mxu0 0.0
  %3359 = vmatprep.subr.mxu0 0.0
  %3360 = vmatpush1.msra.mxu0 0.0
  %3361 = vmatprep.subr.mxu0 0.0
  %3362 = vmatpush1.msra.mxu0 0.0
  %3363 = vmatprep.subr.mxu0 0.0
  %3364 = vmatpush1.msra.mxu0 0.0
  %3365 = vmatprep.subr.mxu0 0.0
  %3366 = vmatpush1.msra.mxu0 0.0
  %3367 = vmatprep.subr.mxu0 0.0
  %3368 = vmatpush1.msra.mxu0 0.0
  %3369 = vmatprep.subr.mxu0 0.0
  %3370 = vmatpush1.msra.mxu0 0.0
  %3371 = vmatprep.subr.mxu0 0.0
  %3372 = vmatpush1.msra.mxu0 0.0
  %3373 = vmatprep.subr.mxu0 0.0
  %3374 = vmatpush1.msra.mxu0 0.0
  %3375 = vmatprep.subr.mxu0 0.0
  %3376 = vmatpush1.msra.mxu0 0.0
  %3377 = vmatprep.subr.mxu0 0.0
  %3378 = vmatpush1.msra.mxu0 0.0
  %3379 = vmatprep.subr.mxu0 0.0
  %3380 = vmatpush1.msra.mxu0 0.0
  %3381 = vmatprep.subr.mxu0 0.0
  %3382 = vmatpush1.msra.mxu0 0.0
  %3383 = vmatprep.subr.mxu0 0.0
  %3384 = vmatpush1.msra.mxu0 0.0
  %3385 = vmatprep.subr.mxu0 0.0
  %3386 = vmatpush1.msra.mxu0 0.0
  %3387 = vmatprep.subr.mxu0 0.0
  %3388 = vmatpush1.msra.mxu0 0.0
  %3389 = vmatprep.subr.mxu0 0.0
  %3390 = vmatpush1.msra.mxu0 0.0
  %3391 = vmatprep.subr.mxu0 0.0
  %3392 = vmatpush1.msra.mxu0 0.0
  %3393 = vmatprep.subr.mxu0 0.0
  %3394 = vmatpush1.msra.mxu0 0.0
  %3395 = vmatprep.subr.mxu0 0.0
  %3396 = vmatpush1.msra.mxu0 0.0
  %3397 = vmatprep.subr.mxu0 0.0
  %3398 = vmatpush1.msra.mxu0 0.0
  %3399 = vmatprep.subr.mxu0 0.0
  %3400 = vmatpush1.msra.mxu0 0.0
  %3401 = vmatprep.subr.mxu0 0.0
  %3402 = vmatpush1.msra.mxu0 0.0
  %3403 = vmatprep.subr.mxu0 0.0
  %3404 = vmatpush1.msra.mxu0 0.0
  %3405 = vmatprep.subr.mxu0 0.0
  %3406 = vmatpush1.msra.mxu0 0.0
  %3407 = vmatprep.subr.mxu0 0.0
  %3408 = vmatpush1.msra.mxu0 0.0
  %3409 = vmatprep.subr.mxu0 0.0
  %3410 = vmatpush1.msra.mxu0 0.0
  %3411 = vmatprep.subr.mxu0 0.0
  %3412 = vmatpush1.msra.mxu0 0.0
  %3413 = vmatprep.mubr.f32.mxu0 0.0
  %v3414 = vand.u32 %v2166, 4294901760
  %v3415 = vsub.f32 %v2166, %v3414
  %3416 = vmatmul.mubr.f32.gmra.mrb[0].mxu0 %v3415
  %v3417 = vpop.f32.mrb[0].mxu0
  %v3418 = vadd.f32 %v3338, %v3417
  %v3419 = vpop.f32.mrb[0].mxu0
  %3420 = vdwg.mxu0
  %3421 = vmatprep.subr.mxu0 0.0
  %v3422 = vand.u32 %v47, 4294901760
  %3423 = vmatpush1.msra.mxu0 %v3422
  %3424 = vmatprep.subr.mxu0 0.0
  %v3425 = vand.u32 %v48, 4294901760
  %3426 = vmatpush1.msra.mxu0 %v3425
  %3427 = vmatprep.subr.mxu0 0.0
  %v3428 = vand.u32 %v49, 4294901760
  %3429 = vmatpush1.msra.mxu0 %v3428
  %3430 = vmatprep.subr.mxu0 0.0
  %v3431 = vand.u32 %v50, 4294901760
  %3432 = vmatpush1.msra.mxu0 %v3431
  %3433 = vmatprep.subr.mxu0 0.0
  %3434 = vmatpush1.msra.mxu0 0.0
  %3435 = vmatprep.subr.mxu0 0.0
  %3436 = vmatpush1.msra.mxu0 0.0
  %3437 = vmatprep.subr.mxu0 0.0
  %3438 = vmatpush1.msra.mxu0 0.0
  %3439 = vmatprep.subr.mxu0 0.0
  %3440 = vmatpush1.msra.mxu0 0.0
  %3441 = vmatprep.subr.mxu0 0.0
  %3442 = vmatpush1.msra.mxu0 0.0
  %3443 = vmatprep.subr.mxu0 0.0
  %3444 = vmatpush1.msra.mxu0 0.0
  %3445 = vmatprep.subr.mxu0 0.0
  %3446 = vmatpush1.msra.mxu0 0.0
  %3447 = vmatprep.subr.mxu0 0.0
  %3448 = vmatpush1.msra.mxu0 0.0
  %3449 = vmatprep.subr.mxu0 0.0
  %3450 = vmatpush1.msra.mxu0 0.0
  %3451 = vmatprep.subr.mxu0 0.0
  %3452 = vmatpush1.msra.mxu0 0.0
  %3453 = vmatprep.subr.mxu0 0.0
  %3454 = vmatpush1.msra.mxu0 0.0
  %3455 = vmatprep.subr.mxu0 0.0
  %3456 = vmatpush1.msra.mxu0 0.0
  %3457 = vmatprep.subr.mxu0 0.0
  %3458 = vmatpush1.msra.mxu0 0.0
  %3459 = vmatprep.subr.mxu0 0.0
  %3460 = vmatpush1.msra.mxu0 0.0
  %3461 = vmatprep.subr.mxu0 0.0
  %3462 = vmatpush1.msra.mxu0 0.0
  %3463 = vmatprep.subr.mxu0 0.0
  %3464 = vmatpush1.msra.mxu0 0.0
  %3465 = vmatprep.subr.mxu0 0.0
  %3466 = vmatpush1.msra.mxu0 0.0
  %3467 = vmatprep.subr.mxu0 0.0
  %3468 = vmatpush1.msra.mxu0 0.0
  %3469 = vmatprep.subr.mxu0 0.0
  %3470 = vmatpush1.msra.mxu0 0.0
  %3471 = vmatprep.subr.mxu0 0.0
  %3472 = vmatpush1.msra.mxu0 0.0
  %3473 = vmatprep.subr.mxu0 0.0
  %3474 = vmatpush1.msra.mxu0 0.0
  %3475 = vmatprep.subr.mxu0 0.0
  %3476 = vmatpush1.msra.mxu0 0.0
  %3477 = vmatprep.subr.mxu0 0.0
  %3478 = vmatpush1.msra.mxu0 0.0
  %3479 = vmatprep.subr.mxu0 0.0
  %3480 = vmatpush1.msra.mxu0 0.0
  %3481 = vmatprep.subr.mxu0 0.0
  %3482 = vmatpush1.msra.mxu0 0.0
  %3483 = vmatprep.subr.mxu0 0.0
  %3484 = vmatpush1.msra.mxu0 0.0
  %3485 = vmatprep.subr.mxu0 0.0
  %3486 = vmatpush1.msra.mxu0 0.0
  %3487 = vmatprep.subr.mxu0 0.0
  %3488 = vmatpush1.msra.mxu0 0.0
  %3489 = vmatprep.mubr.f32.mxu0 0.0
  %v3490 = vand.u32 %v2166, 4294901760
  %v3491 = vsub.f32 %v2166, %v3490
  %v3492 = vand.u32 %v3491, 4294901760
  %3493 = vmatmul.mubr.f32.gmra.mrb[0].mxu0 %v3492
  %v3494 = vpop.f32.mrb[0].mxu0
  %v3495 = vadd.f32 %v3418, %v3494
  %v3496 = vpop.f32.mrb[0].mxu0
  %3497 = vdwg.mxu0
  %3498 = vmatprep.subr.mxu0 0.0
  %v3499 = vand.u32 %v47, 4294901760
  %v3500 = vsub.f32 %v47, %v3499
  %v3501 = vand.u32 %v3500, 4294901760
  %3502 = vmatpush1.msra.mxu0 %v3501
  %3503 = vmatprep.subr.mxu0 0.0
  %v3504 = vand.u32 %v48, 4294901760
  %v3505 = vsub.f32 %v48, %v3504
  %v3506 = vand.u32 %v3505, 4294901760
  %3507 = vmatpush1.msra.mxu0 %v3506
  %3508 = vmatprep.subr.mxu0 0.0
  %v3509 = vand.u32 %v49, 4294901760
  %v3510 = vsub.f32 %v49, %v3509
  %v3511 = vand.u32 %v3510, 4294901760
  %3512 = vmatpush1.msra.mxu0 %v3511
  %3513 = vmatprep.subr.mxu0 0.0
  %v3514 = vand.u32 %v50, 4294901760
  %v3515 = vsub.f32 %v50, %v3514
  %v3516 = vand.u32 %v3515, 4294901760
  %3517 = vmatpush1.msra.mxu0 %v3516
  %3518 = vmatprep.subr.mxu0 0.0
  %3519 = vmatpush1.msra.mxu0 0.0
  %3520 = vmatprep.subr.mxu0 0.0
  %3521 = vmatpush1.msra.mxu0 0.0
  %3522 = vmatprep.subr.mxu0 0.0
  %3523 = vmatpush1.msra.mxu0 0.0
  %3524 = vmatprep.subr.mxu0 0.0
  %3525 = vmatpush1.msra.mxu0 0.0
  %3526 = vmatprep.subr.mxu0 0.0
  %3527 = vmatpush1.msra.mxu0 0.0
  %3528 = vmatprep.subr.mxu0 0.0
  %3529 = vmatpush1.msra.mxu0 0.0
  %3530 = vmatprep.subr.mxu0 0.0
  %3531 = vmatpush1.msra.mxu0 0.0
  %3532 = vmatprep.subr.mxu0 0.0
  %3533 = vmatpush1.msra.mxu0 0.0
  %3534 = vmatprep.subr.mxu0 0.0
  %3535 = vmatpush1.msra.mxu0 0.0
  %3536 = vmatprep.subr.mxu0 0.0
  %3537 = vmatpush1.msra.mxu0 0.0
  %3538 = vmatprep.subr.mxu0 0.0
  %3539 = vmatpush1.msra.mxu0 0.0
  %3540 = vmatprep.subr.mxu0 0.0
  %3541 = vmatpush1.msra.mxu0 0.0
  %3542 = vmatprep.subr.mxu0 0.0
  %3543 = vmatpush1.msra.mxu0 0.0
  %3544 = vmatprep.subr.mxu0 0.0
  %3545 = vmatpush1.msra.mxu0 0.0
  %3546 = vmatprep.subr.mxu0 0.0
  %3547 = vmatpush1.msra.mxu0 0.0
  %3548 = vmatprep.subr.mxu0 0.0
  %3549 = vmatpush1.msra.mxu0 0.0
  %3550 = vmatprep.subr.mxu0 0.0
  %3551 = vmatpush1.msra.mxu0 0.0
  %3552 = vmatprep.subr.mxu0 0.0
  %3553 = vmatpush1.msra.mxu0 0.0
  %3554 = vmatprep.subr.mxu0 0.0
  %3555 = vmatpush1.msra.mxu0 0.0
  %3556 = vmatprep.subr.mxu0 0.0
  %3557 = vmatpush1.msra.mxu0 0.0
  %3558 = vmatprep.subr.mxu0 0.0
  %3559 = vmatpush1.msra.mxu0 0.0
  %3560 = vmatprep.subr.mxu0 0.0
  %3561 = vmatpush1.msra.mxu0 0.0
  %3562 = vmatprep.subr.mxu0 0.0
  %3563 = vmatpush1.msra.mxu0 0.0
  %3564 = vmatprep.subr.mxu0 0.0
  %3565 = vmatpush1.msra.mxu0 0.0
  %3566 = vmatprep.subr.mxu0 0.0
  %3567 = vmatpush1.msra.mxu0 0.0
  %3568 = vmatprep.subr.mxu0 0.0
  %3569 = vmatpush1.msra.mxu0 0.0
  %3570 = vmatprep.subr.mxu0 0.0
  %3571 = vmatpush1.msra.mxu0 0.0
  %3572 = vmatprep.subr.mxu0 0.0
  %3573 = vmatpush1.msra.mxu0 0.0
  %3574 = vmatprep.mubr.f32.mxu0 0.0
  %v3575 = vand.u32 %v2166, 4294901760
  %3576 = vmatmul.mubr.f32.gmra.mrb[0].mxu0 %v3575
  %v3577 = vpop.f32.mrb[0].mxu0
  %v3578 = vadd.f32 %v3495, %v3577
  %v3579 = vpop.f32.mrb[0].mxu0
  %3580 = vdwg.mxu0
  %3581 = vmatprep.subr.mxu0 0.0
  %v3582 = vand.u32 %v47, 4294901760
  %3583 = vmatpush1.msra.mxu0 %v3582
  %3584 = vmatprep.subr.mxu0 0.0
  %v3585 = vand.u32 %v48, 4294901760
  %3586 = vmatpush1.msra.mxu0 %v3585
  %3587 = vmatprep.subr.mxu0 0.0
  %v3588 = vand.u32 %v49, 4294901760
  %3589 = vmatpush1.msra.mxu0 %v3588
  %3590 = vmatprep.subr.mxu0 0.0
  %v3591 = vand.u32 %v50, 4294901760
  %3592 = vmatpush1.msra.mxu0 %v3591
  %3593 = vmatprep.subr.mxu0 0.0
  %3594 = vmatpush1.msra.mxu0 0.0
  %3595 = vmatprep.subr.mxu0 0.0
  %3596 = vmatpush1.msra.mxu0 0.0
  %3597 = vmatprep.subr.mxu0 0.0
  %3598 = vmatpush1.msra.mxu0 0.0
  %3599 = vmatprep.subr.mxu0 0.0
  %3600 = vmatpush1.msra.mxu0 0.0
  %3601 = vmatprep.subr.mxu0 0.0
  %3602 = vmatpush1.msra.mxu0 0.0
  %3603 = vmatprep.subr.mxu0 0.0
  %3604 = vmatpush1.msra.mxu0 0.0
  %3605 = vmatprep.subr.mxu0 0.0
  %3606 = vmatpush1.msra.mxu0 0.0
  %3607 = vmatprep.subr.mxu0 0.0
  %3608 = vmatpush1.msra.mxu0 0.0
  %3609 = vmatprep.subr.mxu0 0.0
  %3610 = vmatpush1.msra.mxu0 0.0
  %3611 = vmatprep.subr.mxu0 0.0
  %3612 = vmatpush1.msra.mxu0 0.0
  %3613 = vmatprep.subr.mxu0 0.0
  %3614 = vmatpush1.msra.mxu0 0.0
  %3615 = vmatprep.subr.mxu0 0.0
  %3616 = vmatpush1.msra.mxu0 0.0
  %3617 = vmatprep.subr.mxu0 0.0
  %3618 = vmatpush1.msra.mxu0 0.0
  %3619 = vmatprep.subr.mxu0 0.0
  %3620 = vmatpush1.msra.mxu0 0.0
  %3621 = vmatprep.subr.mxu0 0.0
  %3622 = vmatpush1.msra.mxu0 0.0
  %3623 = vmatprep.subr.mxu0 0.0
  %3624 = vmatpush1.msra.mxu0 0.0
  %3625 = vmatprep.subr.mxu0 0.0
  %3626 = vmatpush1.msra.mxu0 0.0
  %3627 = vmatprep.subr.mxu0 0.0
  %3628 = vmatpush1.msra.mxu0 0.0
  %3629 = vmatprep.subr.mxu0 0.0
  %3630 = vmatpush1.msra.mxu0 0.0
  %3631 = vmatprep.subr.mxu0 0.0
  %3632 = vmatpush1.msra.mxu0 0.0
  %3633 = vmatprep.subr.mxu0 0.0
  %3634 = vmatpush1.msra.mxu0 0.0
  %3635 = vmatprep.subr.mxu0 0.0
  %3636 = vmatpush1.msra.mxu0 0.0
  %3637 = vmatprep.subr.mxu0 0.0
  %3638 = vmatpush1.msra.mxu0 0.0
  %3639 = vmatprep.subr.mxu0 0.0
  %3640 = vmatpush1.msra.mxu0 0.0
  %3641 = vmatprep.subr.mxu0 0.0
  %3642 = vmatpush1.msra.mxu0 0.0
  %3643 = vmatprep.subr.mxu0 0.0
  %3644 = vmatpush1.msra.mxu0 0.0
  %3645 = vmatprep.subr.mxu0 0.0
  %3646 = vmatpush1.msra.mxu0 0.0
  %3647 = vmatprep.subr.mxu0 0.0
  %3648 = vmatpush1.msra.mxu0 0.0
  %3649 = vmatprep.mubr.f32.mxu0 0.0
  %v3650 = vand.u32 %v2166, 4294901760
  %3651 = vmatmul.mubr.f32.gmra.mrb[0].mxu0 %v3650
  %v3652 = vpop.f32.mrb[0].mxu0
  %v3653 = vadd.f32 %v3578, %v3652
  %v3654 = vpop.f32.mrb[0].mxu0
  %3655 = vdwg.mxu0
  %v3657 = vrot.slane %v3653, 4
  %v3659 = vadd.f32 %v111, %v3657
  %v3660 = vmul.f32 %v3659, %v40
  %v3661 = vxor.u32 %v3660, 2147483648
  %v3662 = vmul.f32 %v3661, 1.442695
  %v3663 = vpow.pop %v3662
  %v3664 = vadd.f32 %v3663, 1.0
  %v3665 = vrcp.pop %v3664
  %v3666 = vmul.f32 1.0, %v3665
  %v3667 = vmul.f32 %v3666, 2.0
  %v3668 = vsub.f32 %v3667, 1.0
  %v3669 = vsel %vm39, %v3668, %v3666
  %v3671 = vrot.slane %v2155, 6
  %v3673 = vmul.f32 %v3669, %v3671
  %3675 = vrot.lane.b32.xlu0 %v3669, 64
  %v3676 = vpop.permute.xlu0 %3675
  %v3678 = vmul.f32 %v3669, %v3676
  %3680 = vrot.lane.b32.xlu0 %v3678, 32
  %v3681 = vpop.permute.xlu0 %3680
  %v3683 = vadd.f32 %v3673, %v3681
  %v3684 = vtanh.pop %v3683
  %3686 = vrot.lane.b32.xlu0 %v3684, 64
  %v3687 = vpop.permute.xlu0 %3686
  %v3689 = vmul.f32 %v3669, %v3687
  %v3691 = vrot.slane %v3689, 4
  %3692 = vrot.lane.b32.xlu0 %v3691, 32
  %v3693 = vpop.permute.xlu0 %3692
  %v3694 = vsel %vm117, %v3693, 0
  %3696 = vmatprep.subr.mxu0 0.0
  %v3697 = vand.u32 %v43, 4294901760
  %3698 = vmatpush1.msra.mxu0 %v3697
  %3699 = vmatprep.subr.mxu0 0.0
  %v3700 = vand.u32 %v44, 4294901760
  %3701 = vmatpush1.msra.mxu0 %v3700
  %3702 = vmatprep.subr.mxu0 0.0
  %v3703 = vand.u32 %v45, 4294901760
  %3704 = vmatpush1.msra.mxu0 %v3703
  %3705 = vmatprep.subr.mxu0 0.0
  %v3706 = vand.u32 %v46, 4294901760
  %3707 = vmatpush1.msra.mxu0 %v3706
  %3708 = vmatprep.subr.mxu0 0.0
  %3709 = vmatpush1.msra.mxu0 0.0
  %3710 = vmatprep.subr.mxu0 0.0
  %3711 = vmatpush1.msra.mxu0 0.0
  %3712 = vmatprep.subr.mxu0 0.0
  %3713 = vmatpush1.msra.mxu0 0.0
  %3714 = vmatprep.subr.mxu0 0.0
  %3715 = vmatpush1.msra.mxu0 0.0
  %3716 = vmatprep.subr.mxu0 0.0
  %3717 = vmatpush1.msra.mxu0 0.0
  %3718 = vmatprep.subr.mxu0 0.0
  %3719 = vmatpush1.msra.mxu0 0.0
  %3720 = vmatprep.subr.mxu0 0.0
  %3721 = vmatpush1.msra.mxu0 0.0
  %3722 = vmatprep.subr.mxu0 0.0
  %3723 = vmatpush1.msra.mxu0 0.0
  %3724 = vmatprep.subr.mxu0 0.0
  %3725 = vmatpush1.msra.mxu0 0.0
  %3726 = vmatprep.subr.mxu0 0.0
  %3727 = vmatpush1.msra.mxu0 0.0
  %3728 = vmatprep.subr.mxu0 0.0
  %3729 = vmatpush1.msra.mxu0 0.0
  %3730 = vmatprep.subr.mxu0 0.0
  %3731 = vmatpush1.msra.mxu0 0.0
  %3732 = vmatprep.subr.mxu0 0.0
  %3733 = vmatpush1.msra.mxu0 0.0
  %3734 = vmatprep.subr.mxu0 0.0
  %3735 = vmatpush1.msra.mxu0 0.0
  %3736 = vmatprep.subr.mxu0 0.0
  %3737 = vmatpush1.msra.mxu0 0.0
  %3738 = vmatprep.subr.mxu0 0.0
  %3739 = vmatpush1.msra.mxu0 0.0
  %3740 = vmatprep.subr.mxu0 0.0
  %3741 = vmatpush1.msra.mxu0 0.0
  %3742 = vmatprep.subr.mxu0 0.0
  %3743 = vmatpush1.msra.mxu0 0.0
  %3744 = vmatprep.subr.mxu0 0.0
  %3745 = vmatpush1.msra.mxu0 0.0
  %3746 = vmatprep.subr.mxu0 0.0
  %3747 = vmatpush1.msra.mxu0 0.0
  %3748 = vmatprep.subr.mxu0 0.0
  %3749 = vmatpush1.msra.mxu0 0.0
  %3750 = vmatprep.subr.mxu0 0.0
  %3751 = vmatpush1.msra.mxu0 0.0
  %3752 = vmatprep.subr.mxu0 0.0
  %3753 = vmatpush1.msra.mxu0 0.0
  %3754 = vmatprep.subr.mxu0 0.0
  %3755 = vmatpush1.msra.mxu0 0.0
  %3756 = vmatprep.subr.mxu0 0.0
  %3757 = vmatpush1.msra.mxu0 0.0
  %3758 = vmatprep.subr.mxu0 0.0
  %3759 = vmatpush1.msra.mxu0 0.0
  %3760 = vmatprep.subr.mxu0 0.0
  %3761 = vmatpush1.msra.mxu0 0.0
  %3762 = vmatprep.subr.mxu0 0.0
  %3763 = vmatpush1.msra.mxu0 0.0
  %3764 = vmatprep.mubr.f32.mxu0 0.0
  %v3765 = vand.u32 %v3694, 4294901760
  %v3766 = vsub.f32 %v3694, %v3765
  %v3767 = vand.u32 %v3766, 4294901760
  %v3768 = vsub.f32 %v3766, %v3767
  %v3769 = vand.u32 %v3768, 4294901760
  %3770 = vmatmul.mubr.f32.gmra.mrb[0].mxu0 %v3769
  %v3771 = vpop.f32.mrb[0].mxu0
  %v3772 = vadd.f32 %v638, %v3771
  %v3773 = vpop.f32.mrb[0].mxu0
  %3774 = vdwg.mxu0
  %3775 = vmatprep.subr.mxu0 0.0
  %v3776 = vand.u32 %v43, 4294901760
  %v3777 = vsub.f32 %v43, %v3776
  %v3778 = vand.u32 %v3777, 4294901760
  %v3779 = vsub.f32 %v3777, %v3778
  %v3780 = vand.u32 %v3779, 4294901760
  %3781 = vmatpush1.msra.mxu0 %v3780
  %3782 = vmatprep.subr.mxu0 0.0
  %v3783 = vand.u32 %v44, 4294901760
  %v3784 = vsub.f32 %v44, %v3783
  %v3785 = vand.u32 %v3784, 4294901760
  %v3786 = vsub.f32 %v3784, %v3785
  %v3787 = vand.u32 %v3786, 4294901760
  %3788 = vmatpush1.msra.mxu0 %v3787
  %3789 = vmatprep.subr.mxu0 0.0
  %v3790 = vand.u32 %v45, 4294901760
  %v3791 = vsub.f32 %v45, %v3790
  %v3792 = vand.u32 %v3791, 4294901760
  %v3793 = vsub.f32 %v3791, %v3792
  %v3794 = vand.u32 %v3793, 4294901760
  %3795 = vmatpush1.msra.mxu0 %v3794
  %3796 = vmatprep.subr.mxu0 0.0
  %v3797 = vand.u32 %v46, 4294901760
  %v3798 = vsub.f32 %v46, %v3797
  %v3799 = vand.u32 %v3798, 4294901760
  %v3800 = vsub.f32 %v3798, %v3799
  %v3801 = vand.u32 %v3800, 4294901760
  %3802 = vmatpush1.msra.mxu0 %v3801
  %3803 = vmatprep.subr.mxu0 0.0
  %3804 = vmatpush1.msra.mxu0 0.0
  %3805 = vmatprep.subr.mxu0 0.0
  %3806 = vmatpush1.msra.mxu0 0.0
  %3807 = vmatprep.subr.mxu0 0.0
  %3808 = vmatpush1.msra.mxu0 0.0
  %3809 = vmatprep.subr.mxu0 0.0
  %3810 = vmatpush1.msra.mxu0 0.0
  %3811 = vmatprep.subr.mxu0 0.0
  %3812 = vmatpush1.msra.mxu0 0.0
  %3813 = vmatprep.subr.mxu0 0.0
  %3814 = vmatpush1.msra.mxu0 0.0
  %3815 = vmatprep.subr.mxu0 0.0
  %3816 = vmatpush1.msra.mxu0 0.0
  %3817 = vmatprep.subr.mxu0 0.0
  %3818 = vmatpush1.msra.mxu0 0.0
  %3819 = vmatprep.subr.mxu0 0.0
  %3820 = vmatpush1.msra.mxu0 0.0
  %3821 = vmatprep.subr.mxu0 0.0
  %3822 = vmatpush1.msra.mxu0 0.0
  %3823 = vmatprep.subr.mxu0 0.0
  %3824 = vmatpush1.msra.mxu0 0.0
  %3825 = vmatprep.subr.mxu0 0.0
  %3826 = vmatpush1.msra.mxu0 0.0
  %3827 = vmatprep.subr.mxu0 0.0
  %3828 = vmatpush1.msra.mxu0 0.0
  %3829 = vmatprep.subr.mxu0 0.0
  %3830 = vmatpush1.msra.mxu0 0.0
  %3831 = vmatprep.subr.mxu0 0.0
  %3832 = vmatpush1.msra.mxu0 0.0
  %3833 = vmatprep.subr.mxu0 0.0
  %3834 = vmatpush1.msra.mxu0 0.0
  %3835 = vmatprep.subr.mxu0 0.0
  %3836 = vmatpush1.msra.mxu0 0.0
  %3837 = vmatprep.subr.mxu0 0.0
  %3838 = vmatpush1.msra.mxu0 0.0
  %3839 = vmatprep.subr.mxu0 0.0
  %3840 = vmatpush1.msra.mxu0 0.0
  %3841 = vmatprep.subr.mxu0 0.0
  %3842 = vmatpush1.msra.mxu0 0.0
  %3843 = vmatprep.subr.mxu0 0.0
  %3844 = vmatpush1.msra.mxu0 0.0
  %3845 = vmatprep.subr.mxu0 0.0
  %3846 = vmatpush1.msra.mxu0 0.0
  %3847 = vmatprep.subr.mxu0 0.0
  %3848 = vmatpush1.msra.mxu0 0.0
  %3849 = vmatprep.subr.mxu0 0.0
  %3850 = vmatpush1.msra.mxu0 0.0
  %3851 = vmatprep.subr.mxu0 0.0
  %3852 = vmatpush1.msra.mxu0 0.0
  %3853 = vmatprep.subr.mxu0 0.0
  %3854 = vmatpush1.msra.mxu0 0.0
  %3855 = vmatprep.subr.mxu0 0.0
  %3856 = vmatpush1.msra.mxu0 0.0
  %3857 = vmatprep.subr.mxu0 0.0
  %3858 = vmatpush1.msra.mxu0 0.0
  %3859 = vmatprep.mubr.f32.mxu0 0.0
  %v3860 = vand.u32 %v3694, 4294901760
  %3861 = vmatmul.mubr.f32.gmra.mrb[0].mxu0 %v3860
  %v3862 = vpop.f32.mrb[0].mxu0
  %v3863 = vadd.f32 %v3772, %v3862
  %v3864 = vpop.f32.mrb[0].mxu0
  %3865 = vdwg.mxu0
  %3866 = vmatprep.subr.mxu0 0.0
  %v3867 = vand.u32 %v43, 4294901760
  %v3868 = vsub.f32 %v43, %v3867
  %3869 = vmatpush1.msra.mxu0 %v3868
  %3870 = vmatprep.subr.mxu0 0.0
  %v3871 = vand.u32 %v44, 4294901760
  %v3872 = vsub.f32 %v44, %v3871
  %3873 = vmatpush1.msra.mxu0 %v3872
  %3874 = vmatprep.subr.mxu0 0.0
  %v3875 = vand.u32 %v45, 4294901760
  %v3876 = vsub.f32 %v45, %v3875
  %3877 = vmatpush1.msra.mxu0 %v3876
  %3878 = vmatprep.subr.mxu0 0.0
  %v3879 = vand.u32 %v46, 4294901760
  %v3880 = vsub.f32 %v46, %v3879
  %3881 = vmatpush1.msra.mxu0 %v3880
  %3882 = vmatprep.subr.mxu0 0.0
  %3883 = vmatpush1.msra.mxu0 0.0
  %3884 = vmatprep.subr.mxu0 0.0
  %3885 = vmatpush1.msra.mxu0 0.0
  %3886 = vmatprep.subr.mxu0 0.0
  %3887 = vmatpush1.msra.mxu0 0.0
  %3888 = vmatprep.subr.mxu0 0.0
  %3889 = vmatpush1.msra.mxu0 0.0
  %3890 = vmatprep.subr.mxu0 0.0
  %3891 = vmatpush1.msra.mxu0 0.0
  %3892 = vmatprep.subr.mxu0 0.0
  %3893 = vmatpush1.msra.mxu0 0.0
  %3894 = vmatprep.subr.mxu0 0.0
  %3895 = vmatpush1.msra.mxu0 0.0
  %3896 = vmatprep.subr.mxu0 0.0
  %3897 = vmatpush1.msra.mxu0 0.0
  %3898 = vmatprep.subr.mxu0 0.0
  %3899 = vmatpush1.msra.mxu0 0.0
  %3900 = vmatprep.subr.mxu0 0.0
  %3901 = vmatpush1.msra.mxu0 0.0
  %3902 = vmatprep.subr.mxu0 0.0
  %3903 = vmatpush1.msra.mxu0 0.0
  %3904 = vmatprep.subr.mxu0 0.0
  %3905 = vmatpush1.msra.mxu0 0.0
  %3906 = vmatprep.subr.mxu0 0.0
  %3907 = vmatpush1.msra.mxu0 0.0
  %3908 = vmatprep.subr.mxu0 0.0
  %3909 = vmatpush1.msra.mxu0 0.0
  %3910 = vmatprep.subr.mxu0 0.0
  %3911 = vmatpush1.msra.mxu0 0.0
  %3912 = vmatprep.subr.mxu0 0.0
  %3913 = vmatpush1.msra.mxu0 0.0
  %3914 = vmatprep.subr.mxu0 0.0
  %3915 = vmatpush1.msra.mxu0 0.0
  %3916 = vmatprep.subr.mxu0 0.0
  %3917 = vmatpush1.msra.mxu0 0.0
  %3918 = vmatprep.subr.mxu0 0.0
  %3919 = vmatpush1.msra.mxu0 0.0
  %3920 = vmatprep.subr.mxu0 0.0
  %3921 = vmatpush1.msra.mxu0 0.0
  %3922 = vmatprep.subr.mxu0 0.0
  %3923 = vmatpush1.msra.mxu0 0.0
  %3924 = vmatprep.subr.mxu0 0.0
  %3925 = vmatpush1.msra.mxu0 0.0
  %3926 = vmatprep.subr.mxu0 0.0
  %3927 = vmatpush1.msra.mxu0 0.0
  %3928 = vmatprep.subr.mxu0 0.0
  %3929 = vmatpush1.msra.mxu0 0.0
  %3930 = vmatprep.subr.mxu0 0.0
  %3931 = vmatpush1.msra.mxu0 0.0
  %3932 = vmatprep.subr.mxu0 0.0
  %3933 = vmatpush1.msra.mxu0 0.0
  %3934 = vmatprep.subr.mxu0 0.0
  %3935 = vmatpush1.msra.mxu0 0.0
  %3936 = vmatprep.subr.mxu0 0.0
  %3937 = vmatpush1.msra.mxu0 0.0
  %3938 = vmatprep.mubr.f32.mxu0 0.0
  %v3939 = vand.u32 %v3694, 4294901760
  %v3940 = vsub.f32 %v3694, %v3939
  %3941 = vmatmul.mubr.f32.gmra.mrb[0].mxu0 %v3940
  %v3942 = vpop.f32.mrb[0].mxu0
  %v3943 = vadd.f32 %v3863, %v3942
  %v3944 = vpop.f32.mrb[0].mxu0
  %3945 = vdwg.mxu0
  %3946 = vmatprep.subr.mxu0 0.0
  %v3947 = vand.u32 %v43, 4294901760
  %3948 = vmatpush1.msra.mxu0 %v3947
  %3949 = vmatprep.subr.mxu0 0.0
  %v3950 = vand.u32 %v44, 4294901760
  %3951 = vmatpush1.msra.mxu0 %v3950
  %3952 = vmatprep.subr.mxu0 0.0
  %v3953 = vand.u32 %v45, 4294901760
  %3954 = vmatpush1.msra.mxu0 %v3953
  %3955 = vmatprep.subr.mxu0 0.0
  %v3956 = vand.u32 %v46, 4294901760
  %3957 = vmatpush1.msra.mxu0 %v3956
  %3958 = vmatprep.subr.mxu0 0.0
  %3959 = vmatpush1.msra.mxu0 0.0
  %3960 = vmatprep.subr.mxu0 0.0
  %3961 = vmatpush1.msra.mxu0 0.0
  %3962 = vmatprep.subr.mxu0 0.0
  %3963 = vmatpush1.msra.mxu0 0.0
  %3964 = vmatprep.subr.mxu0 0.0
  %3965 = vmatpush1.msra.mxu0 0.0
  %3966 = vmatprep.subr.mxu0 0.0
  %3967 = vmatpush1.msra.mxu0 0.0
  %3968 = vmatprep.subr.mxu0 0.0
  %3969 = vmatpush1.msra.mxu0 0.0
  %3970 = vmatprep.subr.mxu0 0.0
  %3971 = vmatpush1.msra.mxu0 0.0
  %3972 = vmatprep.subr.mxu0 0.0
  %3973 = vmatpush1.msra.mxu0 0.0
  %3974 = vmatprep.subr.mxu0 0.0
  %3975 = vmatpush1.msra.mxu0 0.0
  %3976 = vmatprep.subr.mxu0 0.0
  %3977 = vmatpush1.msra.mxu0 0.0
  %3978 = vmatprep.subr.mxu0 0.0
  %3979 = vmatpush1.msra.mxu0 0.0
  %3980 = vmatprep.subr.mxu0 0.0
  %3981 = vmatpush1.msra.mxu0 0.0
  %3982 = vmatprep.subr.mxu0 0.0
  %3983 = vmatpush1.msra.mxu0 0.0
  %3984 = vmatprep.subr.mxu0 0.0
  %3985 = vmatpush1.msra.mxu0 0.0
  %3986 = vmatprep.subr.mxu0 0.0
  %3987 = vmatpush1.msra.mxu0 0.0
  %3988 = vmatprep.subr.mxu0 0.0
  %3989 = vmatpush1.msra.mxu0 0.0
  %3990 = vmatprep.subr.mxu0 0.0
  %3991 = vmatpush1.msra.mxu0 0.0
  %3992 = vmatprep.subr.mxu0 0.0
  %3993 = vmatpush1.msra.mxu0 0.0
  %3994 = vmatprep.subr.mxu0 0.0
  %3995 = vmatpush1.msra.mxu0 0.0
  %3996 = vmatprep.subr.mxu0 0.0
  %3997 = vmatpush1.msra.mxu0 0.0
  %3998 = vmatprep.subr.mxu0 0.0
  %3999 = vmatpush1.msra.mxu0 0.0
  %4000 = vmatprep.subr.mxu0 0.0
  %4001 = vmatpush1.msra.mxu0 0.0
  %4002 = vmatprep.subr.mxu0 0.0
  %4003 = vmatpush1.msra.mxu0 0.0
  %4004 = vmatprep.subr.mxu0 0.0
  %4005 = vmatpush1.msra.mxu0 0.0
  %4006 = vmatprep.subr.mxu0 0.0
  %4007 = vmatpush1.msra.mxu0 0.0
  %4008 = vmatprep.subr.mxu0 0.0
  %4009 = vmatpush1.msra.mxu0 0.0
  %4010 = vmatprep.subr.mxu0 0.0
  %4011 = vmatpush1.msra.mxu0 0.0
  %4012 = vmatprep.subr.mxu0 0.0
  %4013 = vmatpush1.msra.mxu0 0.0
  %4014 = vmatprep.mubr.f32.mxu0 0.0
  %v4015 = vand.u32 %v3694, 4294901760
  %v4016 = vsub.f32 %v3694, %v4015
  %v4017 = vand.u32 %v4016, 4294901760
  %4018 = vmatmul.mubr.f32.gmra.mrb[0].mxu0 %v4017
  %v4019 = vpop.f32.mrb[0].mxu0
  %v4020 = vadd.f32 %v3943, %v4019
  %v4021 = vpop.f32.mrb[0].mxu0
  %4022 = vdwg.mxu0
  %4023 = vmatprep.subr.mxu0 0.0
  %v4024 = vand.u32 %v43, 4294901760
  %v4025 = vsub.f32 %v43, %v4024
  %v4026 = vand.u32 %v4025, 4294901760
  %4027 = vmatpush1.msra.mxu0 %v4026
  %4028 = vmatprep.subr.mxu0 0.0
  %v4029 = vand.u32 %v44, 4294901760
  %v4030 = vsub.f32 %v44, %v4029
  %v4031 = vand.u32 %v4030, 4294901760
  %4032 = vmatpush1.msra.mxu0 %v4031
  %4033 = vmatprep.subr.mxu0 0.0
  %v4034 = vand.u32 %v45, 4294901760
  %v4035 = vsub.f32 %v45, %v4034
  %v4036 = vand.u32 %v4035, 4294901760
  %4037 = vmatpush1.msra.mxu0 %v4036
  %4038 = vmatprep.subr.mxu0 0.0
  %v4039 = vand.u32 %v46, 4294901760
  %v4040 = vsub.f32 %v46, %v4039
  %v4041 = vand.u32 %v4040, 4294901760
  %4042 = vmatpush1.msra.mxu0 %v4041
  %4043 = vmatprep.subr.mxu0 0.0
  %4044 = vmatpush1.msra.mxu0 0.0
  %4045 = vmatprep.subr.mxu0 0.0
  %4046 = vmatpush1.msra.mxu0 0.0
  %4047 = vmatprep.subr.mxu0 0.0
  %4048 = vmatpush1.msra.mxu0 0.0
  %4049 = vmatprep.subr.mxu0 0.0
  %4050 = vmatpush1.msra.mxu0 0.0
  %4051 = vmatprep.subr.mxu0 0.0
  %4052 = vmatpush1.msra.mxu0 0.0
  %4053 = vmatprep.subr.mxu0 0.0
  %4054 = vmatpush1.msra.mxu0 0.0
  %4055 = vmatprep.subr.mxu0 0.0
  %4056 = vmatpush1.msra.mxu0 0.0
  %4057 = vmatprep.subr.mxu0 0.0
  %4058 = vmatpush1.msra.mxu0 0.0
  %4059 = vmatprep.subr.mxu0 0.0
  %4060 = vmatpush1.msra.mxu0 0.0
  %4061 = vmatprep.subr.mxu0 0.0
  %4062 = vmatpush1.msra.mxu0 0.0
  %4063 = vmatprep.subr.mxu0 0.0
  %4064 = vmatpush1.msra.mxu0 0.0
  %4065 = vmatprep.subr.mxu0 0.0
  %4066 = vmatpush1.msra.mxu0 0.0
  %4067 = vmatprep.subr.mxu0 0.0
  %4068 = vmatpush1.msra.mxu0 0.0
  %4069 = vmatprep.subr.mxu0 0.0
  %4070 = vmatpush1.msra.mxu0 0.0
  %4071 = vmatprep.subr.mxu0 0.0
  %4072 = vmatpush1.msra.mxu0 0.0
  %4073 = vmatprep.subr.mxu0 0.0
  %4074 = vmatpush1.msra.mxu0 0.0
  %4075 = vmatprep.subr.mxu0 0.0
  %4076 = vmatpush1.msra.mxu0 0.0
  %4077 = vmatprep.subr.mxu0 0.0
  %4078 = vmatpush1.msra.mxu0 0.0
  %4079 = vmatprep.subr.mxu0 0.0
  %4080 = vmatpush1.msra.mxu0 0.0
  %4081 = vmatprep.subr.mxu0 0.0
  %4082 = vmatpush1.msra.mxu0 0.0
  %4083 = vmatprep.subr.mxu0 0.0
  %4084 = vmatpush1.msra.mxu0 0.0
  %4085 = vmatprep.subr.mxu0 0.0
  %4086 = vmatpush1.msra.mxu0 0.0
  %4087 = vmatprep.subr.mxu0 0.0
  %4088 = vmatpush1.msra.mxu0 0.0
  %4089 = vmatprep.subr.mxu0 0.0
  %4090 = vmatpush1.msra.mxu0 0.0
  %4091 = vmatprep.subr.mxu0 0.0
  %4092 = vmatpush1.msra.mxu0 0.0
  %4093 = vmatprep.subr.mxu0 0.0
  %4094 = vmatpush1.msra.mxu0 0.0
  %4095 = vmatprep.subr.mxu0 0.0
  %4096 = vmatpush1.msra.mxu0 0.0
  %4097 = vmatprep.subr.mxu0 0.0
  %4098 = vmatpush1.msra.mxu0 0.0
  %4099 = vmatprep.mubr.f32.mxu0 0.0
  %v4100 = vand.u32 %v3694, 4294901760
  %4101 = vmatmul.mubr.f32.gmra.mrb[0].mxu0 %v4100
  %v4102 = vpop.f32.mrb[0].mxu0
  %v4103 = vadd.f32 %v4020, %v4102
  %v4104 = vpop.f32.mrb[0].mxu0
  %4105 = vdwg.mxu0
  %4106 = vmatprep.subr.mxu0 0.0
  %v4107 = vand.u32 %v43, 4294901760
  %4108 = vmatpush1.msra.mxu0 %v4107
  %4109 = vmatprep.subr.mxu0 0.0
  %v4110 = vand.u32 %v44, 4294901760
  %4111 = vmatpush1.msra.mxu0 %v4110
  %4112 = vmatprep.subr.mxu0 0.0
  %v4113 = vand.u32 %v45, 4294901760
  %4114 = vmatpush1.msra.mxu0 %v4113
  %4115 = vmatprep.subr.mxu0 0.0
  %v4116 = vand.u32 %v46, 4294901760
  %4117 = vmatpush1.msra.mxu0 %v4116
  %4118 = vmatprep.subr.mxu0 0.0
  %4119 = vmatpush1.msra.mxu0 0.0
  %4120 = vmatprep.subr.mxu0 0.0
  %4121 = vmatpush1.msra.mxu0 0.0
  %4122 = vmatprep.subr.mxu0 0.0
  %4123 = vmatpush1.msra.mxu0 0.0
  %4124 = vmatprep.subr.mxu0 0.0
  %4125 = vmatpush1.msra.mxu0 0.0
  %4126 = vmatprep.subr.mxu0 0.0
  %4127 = vmatpush1.msra.mxu0 0.0
  %4128 = vmatprep.subr.mxu0 0.0
  %4129 = vmatpush1.msra.mxu0 0.0
  %4130 = vmatprep.subr.mxu0 0.0
  %4131 = vmatpush1.msra.mxu0 0.0
  %4132 = vmatprep.subr.mxu0 0.0
  %4133 = vmatpush1.msra.mxu0 0.0
  %4134 = vmatprep.subr.mxu0 0.0
  %4135 = vmatpush1.msra.mxu0 0.0
  %4136 = vmatprep.subr.mxu0 0.0
  %4137 = vmatpush1.msra.mxu0 0.0
  %4138 = vmatprep.subr.mxu0 0.0
  %4139 = vmatpush1.msra.mxu0 0.0
  %4140 = vmatprep.subr.mxu0 0.0
  %4141 = vmatpush1.msra.mxu0 0.0
  %4142 = vmatprep.subr.mxu0 0.0
  %4143 = vmatpush1.msra.mxu0 0.0
  %4144 = vmatprep.subr.mxu0 0.0
  %4145 = vmatpush1.msra.mxu0 0.0
  %4146 = vmatprep.subr.mxu0 0.0
  %4147 = vmatpush1.msra.mxu0 0.0
  %4148 = vmatprep.subr.mxu0 0.0
  %4149 = vmatpush1.msra.mxu0 0.0
  %4150 = vmatprep.subr.mxu0 0.0
  %4151 = vmatpush1.msra.mxu0 0.0
  %4152 = vmatprep.subr.mxu0 0.0
  %4153 = vmatpush1.msra.mxu0 0.0
  %4154 = vmatprep.subr.mxu0 0.0
  %4155 = vmatpush1.msra.mxu0 0.0
  %4156 = vmatprep.subr.mxu0 0.0
  %4157 = vmatpush1.msra.mxu0 0.0
  %4158 = vmatprep.subr.mxu0 0.0
  %4159 = vmatpush1.msra.mxu0 0.0
  %4160 = vmatprep.subr.mxu0 0.0
  %4161 = vmatpush1.msra.mxu0 0.0
  %4162 = vmatprep.subr.mxu0 0.0
  %4163 = vmatpush1.msra.mxu0 0.0
  %4164 = vmatprep.subr.mxu0 0.0
  %4165 = vmatpush1.msra.mxu0 0.0
  %4166 = vmatprep.subr.mxu0 0.0
  %4167 = vmatpush1.msra.mxu0 0.0
  %4168 = vmatprep.subr.mxu0 0.0
  %4169 = vmatpush1.msra.mxu0 0.0
  %4170 = vmatprep.subr.mxu0 0.0
  %4171 = vmatpush1.msra.mxu0 0.0
  %4172 = vmatprep.subr.mxu0 0.0
  %4173 = vmatpush1.msra.mxu0 0.0
  %4174 = vmatprep.mubr.f32.mxu0 0.0
  %v4175 = vand.u32 %v3694, 4294901760
  %4176 = vmatmul.mubr.f32.gmra.mrb[0].mxu0 %v4175
  %v4177 = vpop.f32.mrb[0].mxu0
  %v4178 = vadd.f32 %v4103, %v4177
  %v4179 = vpop.f32.mrb[0].mxu0
  %4180 = vdwg.mxu0
  %4182 = vrot.lane.b32.xlu0 %v3170, 32
  %v4183 = vpop.permute.xlu0 %4182
  %v4184 = vsel %vm117, %v4183, 0
  %4186 = vmatprep.subr.mxu0 0.0
  %v4187 = vand.u32 %v51, 4294901760
  %4188 = vmatpush1.msra.mxu0 %v4187
  %4189 = vmatprep.subr.mxu0 0.0
  %v4190 = vand.u32 %v52, 4294901760
  %4191 = vmatpush1.msra.mxu0 %v4190
  %4192 = vmatprep.subr.mxu0 0.0
  %v4193 = vand.u32 %v53, 4294901760
  %4194 = vmatpush1.msra.mxu0 %v4193
  %4195 = vmatprep.subr.mxu0 0.0
  %v4196 = vand.u32 %v54, 4294901760
  %4197 = vmatpush1.msra.mxu0 %v4196
  %4198 = vmatprep.subr.mxu0 0.0
  %4199 = vmatpush1.msra.mxu0 0.0
  %4200 = vmatprep.subr.mxu0 0.0
  %4201 = vmatpush1.msra.mxu0 0.0
  %4202 = vmatprep.subr.mxu0 0.0
  %4203 = vmatpush1.msra.mxu0 0.0
  %4204 = vmatprep.subr.mxu0 0.0
  %4205 = vmatpush1.msra.mxu0 0.0
  %4206 = vmatprep.subr.mxu0 0.0
  %4207 = vmatpush1.msra.mxu0 0.0
  %4208 = vmatprep.subr.mxu0 0.0
  %4209 = vmatpush1.msra.mxu0 0.0
  %4210 = vmatprep.subr.mxu0 0.0
  %4211 = vmatpush1.msra.mxu0 0.0
  %4212 = vmatprep.subr.mxu0 0.0
  %4213 = vmatpush1.msra.mxu0 0.0
  %4214 = vmatprep.subr.mxu0 0.0
  %4215 = vmatpush1.msra.mxu0 0.0
  %4216 = vmatprep.subr.mxu0 0.0
  %4217 = vmatpush1.msra.mxu0 0.0
  %4218 = vmatprep.subr.mxu0 0.0
  %4219 = vmatpush1.msra.mxu0 0.0
  %4220 = vmatprep.subr.mxu0 0.0
  %4221 = vmatpush1.msra.mxu0 0.0
  %4222 = vmatprep.subr.mxu0 0.0
  %4223 = vmatpush1.msra.mxu0 0.0
  %4224 = vmatprep.subr.mxu0 0.0
  %4225 = vmatpush1.msra.mxu0 0.0
  %4226 = vmatprep.subr.mxu0 0.0
  %4227 = vmatpush1.msra.mxu0 0.0
  %4228 = vmatprep.subr.mxu0 0.0
  %4229 = vmatpush1.msra.mxu0 0.0
  %4230 = vmatprep.subr.mxu0 0.0
  %4231 = vmatpush1.msra.mxu0 0.0
  %4232 = vmatprep.subr.mxu0 0.0
  %4233 = vmatpush1.msra.mxu0 0.0
  %4234 = vmatprep.subr.mxu0 0.0
  %4235 = vmatpush1.msra.mxu0 0.0
  %4236 = vmatprep.subr.mxu0 0.0
  %4237 = vmatpush1.msra.mxu0 0.0
  %4238 = vmatprep.subr.mxu0 0.0
  %4239 = vmatpush1.msra.mxu0 0.0
  %4240 = vmatprep.subr.mxu0 0.0
  %4241 = vmatpush1.msra.mxu0 0.0
  %4242 = vmatprep.subr.mxu0 0.0
  %4243 = vmatpush1.msra.mxu0 0.0
  %4244 = vmatprep.subr.mxu0 0.0
  %4245 = vmatpush1.msra.mxu0 0.0
  %4246 = vmatprep.subr.mxu0 0.0
  %4247 = vmatpush1.msra.mxu0 0.0
  %4248 = vmatprep.subr.mxu0 0.0
  %4249 = vmatpush1.msra.mxu0 0.0
  %4250 = vmatprep.subr.mxu0 0.0
  %4251 = vmatpush1.msra.mxu0 0.0
  %4252 = vmatprep.subr.mxu0 0.0
  %4253 = vmatpush1.msra.mxu0 0.0
  %4254 = vmatprep.mubr.f32.mxu0 0.0
  %v4255 = vand.u32 %v4184, 4294901760
  %v4256 = vsub.f32 %v4184, %v4255
  %v4257 = vand.u32 %v4256, 4294901760
  %v4258 = vsub.f32 %v4256, %v4257
  %v4259 = vand.u32 %v4258, 4294901760
  %4260 = vmatmul.mubr.f32.gmra.mrb[0].mxu0 %v4259
  %v4261 = vpop.f32.mrb[0].mxu0
  %v4262 = vadd.f32 0.0, %v4261
  %v4263 = vpop.f32.mrb[0].mxu0
  %4264 = vdwg.mxu0
  %4265 = vmatprep.subr.mxu0 0.0
  %v4266 = vand.u32 %v51, 4294901760
  %v4267 = vsub.f32 %v51, %v4266
  %v4268 = vand.u32 %v4267, 4294901760
  %v4269 = vsub.f32 %v4267, %v4268
  %v4270 = vand.u32 %v4269, 4294901760
  %4271 = vmatpush1.msra.mxu0 %v4270
  %4272 = vmatprep.subr.mxu0 0.0
  %v4273 = vand.u32 %v52, 4294901760
  %v4274 = vsub.f32 %v52, %v4273
  %v4275 = vand.u32 %v4274, 4294901760
  %v4276 = vsub.f32 %v4274, %v4275
  %v4277 = vand.u32 %v4276, 4294901760
  %4278 = vmatpush1.msra.mxu0 %v4277
  %4279 = vmatprep.subr.mxu0 0.0
  %v4280 = vand.u32 %v53, 4294901760
  %v4281 = vsub.f32 %v53, %v4280
  %v4282 = vand.u32 %v4281, 4294901760
  %v4283 = vsub.f32 %v4281, %v4282
  %v4284 = vand.u32 %v4283, 4294901760
  %4285 = vmatpush1.msra.mxu0 %v4284
  %4286 = vmatprep.subr.mxu0 0.0
  %v4287 = vand.u32 %v54, 4294901760
  %v4288 = vsub.f32 %v54, %v4287
  %v4289 = vand.u32 %v4288, 4294901760
  %v4290 = vsub.f32 %v4288, %v4289
  %v4291 = vand.u32 %v4290, 4294901760
  %4292 = vmatpush1.msra.mxu0 %v4291
  %4293 = vmatprep.subr.mxu0 0.0
  %4294 = vmatpush1.msra.mxu0 0.0
  %4295 = vmatprep.subr.mxu0 0.0
  %4296 = vmatpush1.msra.mxu0 0.0
  %4297 = vmatprep.subr.mxu0 0.0
  %4298 = vmatpush1.msra.mxu0 0.0
  %4299 = vmatprep.subr.mxu0 0.0
  %4300 = vmatpush1.msra.mxu0 0.0
  %4301 = vmatprep.subr.mxu0 0.0
  %4302 = vmatpush1.msra.mxu0 0.0
  %4303 = vmatprep.subr.mxu0 0.0
  %4304 = vmatpush1.msra.mxu0 0.0
  %4305 = vmatprep.subr.mxu0 0.0
  %4306 = vmatpush1.msra.mxu0 0.0
  %4307 = vmatprep.subr.mxu0 0.0
  %4308 = vmatpush1.msra.mxu0 0.0
  %4309 = vmatprep.subr.mxu0 0.0
  %4310 = vmatpush1.msra.mxu0 0.0
  %4311 = vmatprep.subr.mxu0 0.0
  %4312 = vmatpush1.msra.mxu0 0.0
  %4313 = vmatprep.subr.mxu0 0.0
  %4314 = vmatpush1.msra.mxu0 0.0
  %4315 = vmatprep.subr.mxu0 0.0
  %4316 = vmatpush1.msra.mxu0 0.0
  %4317 = vmatprep.subr.mxu0 0.0
  %4318 = vmatpush1.msra.mxu0 0.0
  %4319 = vmatprep.subr.mxu0 0.0
  %4320 = vmatpush1.msra.mxu0 0.0
  %4321 = vmatprep.subr.mxu0 0.0
  %4322 = vmatpush1.msra.mxu0 0.0
  %4323 = vmatprep.subr.mxu0 0.0
  %4324 = vmatpush1.msra.mxu0 0.0
  %4325 = vmatprep.subr.mxu0 0.0
  %4326 = vmatpush1.msra.mxu0 0.0
  %4327 = vmatprep.subr.mxu0 0.0
  %4328 = vmatpush1.msra.mxu0 0.0
  %4329 = vmatprep.subr.mxu0 0.0
  %4330 = vmatpush1.msra.mxu0 0.0
  %4331 = vmatprep.subr.mxu0 0.0
  %4332 = vmatpush1.msra.mxu0 0.0
  %4333 = vmatprep.subr.mxu0 0.0
  %4334 = vmatpush1.msra.mxu0 0.0
  %4335 = vmatprep.subr.mxu0 0.0
  %4336 = vmatpush1.msra.mxu0 0.0
  %4337 = vmatprep.subr.mxu0 0.0
  %4338 = vmatpush1.msra.mxu0 0.0
  %4339 = vmatprep.subr.mxu0 0.0
  %4340 = vmatpush1.msra.mxu0 0.0
  %4341 = vmatprep.subr.mxu0 0.0
  %4342 = vmatpush1.msra.mxu0 0.0
  %4343 = vmatprep.subr.mxu0 0.0
  %4344 = vmatpush1.msra.mxu0 0.0
  %4345 = vmatprep.subr.mxu0 0.0
  %4346 = vmatpush1.msra.mxu0 0.0
  %4347 = vmatprep.subr.mxu0 0.0
  %4348 = vmatpush1.msra.mxu0 0.0
  %4349 = vmatprep.mubr.f32.mxu0 0.0
  %v4350 = vand.u32 %v4184, 4294901760
  %4351 = vmatmul.mubr.f32.gmra.mrb[0].mxu0 %v4350
  %v4352 = vpop.f32.mrb[0].mxu0
  %v4353 = vadd.f32 %v4262, %v4352
  %v4354 = vpop.f32.mrb[0].mxu0
  %4355 = vdwg.mxu0
  %4356 = vmatprep.subr.mxu0 0.0
  %v4357 = vand.u32 %v51, 4294901760
  %v4358 = vsub.f32 %v51, %v4357
  %4359 = vmatpush1.msra.mxu0 %v4358
  %4360 = vmatprep.subr.mxu0 0.0
  %v4361 = vand.u32 %v52, 4294901760
  %v4362 = vsub.f32 %v52, %v4361
  %4363 = vmatpush1.msra.mxu0 %v4362
  %4364 = vmatprep.subr.mxu0 0.0
  %v4365 = vand.u32 %v53, 4294901760
  %v4366 = vsub.f32 %v53, %v4365
  %4367 = vmatpush1.msra.mxu0 %v4366
  %4368 = vmatprep.subr.mxu0 0.0
  %v4369 = vand.u32 %v54, 4294901760
  %v4370 = vsub.f32 %v54, %v4369
  %4371 = vmatpush1.msra.mxu0 %v4370
  %4372 = vmatprep.subr.mxu0 0.0
  %4373 = vmatpush1.msra.mxu0 0.0
  %4374 = vmatprep.subr.mxu0 0.0
  %4375 = vmatpush1.msra.mxu0 0.0
  %4376 = vmatprep.subr.mxu0 0.0
  %4377 = vmatpush1.msra.mxu0 0.0
  %4378 = vmatprep.subr.mxu0 0.0
  %4379 = vmatpush1.msra.mxu0 0.0
  %4380 = vmatprep.subr.mxu0 0.0
  %4381 = vmatpush1.msra.mxu0 0.0
  %4382 = vmatprep.subr.mxu0 0.0
  %4383 = vmatpush1.msra.mxu0 0.0
  %4384 = vmatprep.subr.mxu0 0.0
  %4385 = vmatpush1.msra.mxu0 0.0
  %4386 = vmatprep.subr.mxu0 0.0
  %4387 = vmatpush1.msra.mxu0 0.0
  %4388 = vmatprep.subr.mxu0 0.0
  %4389 = vmatpush1.msra.mxu0 0.0
  %4390 = vmatprep.subr.mxu0 0.0
  %4391 = vmatpush1.msra.mxu0 0.0
  %4392 = vmatprep.subr.mxu0 0.0
  %4393 = vmatpush1.msra.mxu0 0.0
  %4394 = vmatprep.subr.mxu0 0.0
  %4395 = vmatpush1.msra.mxu0 0.0
  %4396 = vmatprep.subr.mxu0 0.0
  %4397 = vmatpush1.msra.mxu0 0.0
  %4398 = vmatprep.subr.mxu0 0.0
  %4399 = vmatpush1.msra.mxu0 0.0
  %4400 = vmatprep.subr.mxu0 0.0
  %4401 = vmatpush1.msra.mxu0 0.0
  %4402 = vmatprep.subr.mxu0 0.0
  %4403 = vmatpush1.msra.mxu0 0.0
  %4404 = vmatprep.subr.mxu0 0.0
  %4405 = vmatpush1.msra.mxu0 0.0
  %4406 = vmatprep.subr.mxu0 0.0
  %4407 = vmatpush1.msra.mxu0 0.0
  %4408 = vmatprep.subr.mxu0 0.0
  %4409 = vmatpush1.msra.mxu0 0.0
  %4410 = vmatprep.subr.mxu0 0.0
  %4411 = vmatpush1.msra.mxu0 0.0
  %4412 = vmatprep.subr.mxu0 0.0
  %4413 = vmatpush1.msra.mxu0 0.0
  %4414 = vmatprep.subr.mxu0 0.0
  %4415 = vmatpush1.msra.mxu0 0.0
  %4416 = vmatprep.subr.mxu0 0.0
  %4417 = vmatpush1.msra.mxu0 0.0
  %4418 = vmatprep.subr.mxu0 0.0
  %4419 = vmatpush1.msra.mxu0 0.0
  %4420 = vmatprep.subr.mxu0 0.0
  %4421 = vmatpush1.msra.mxu0 0.0
  %4422 = vmatprep.subr.mxu0 0.0
  %4423 = vmatpush1.msra.mxu0 0.0
  %4424 = vmatprep.subr.mxu0 0.0
  %4425 = vmatpush1.msra.mxu0 0.0
  %4426 = vmatprep.subr.mxu0 0.0
  %4427 = vmatpush1.msra.mxu0 0.0
  %4428 = vmatprep.mubr.f32.mxu0 0.0
  %v4429 = vand.u32 %v4184, 4294901760
  %v4430 = vsub.f32 %v4184, %v4429
  %4431 = vmatmul.mubr.f32.gmra.mrb[0].mxu0 %v4430
  %v4432 = vpop.f32.mrb[0].mxu0
  %v4433 = vadd.f32 %v4353, %v4432
  %v4434 = vpop.f32.mrb[0].mxu0
  %4435 = vdwg.mxu0
  %4436 = vmatprep.subr.mxu0 0.0
  %v4437 = vand.u32 %v51, 4294901760
  %4438 = vmatpush1.msra.mxu0 %v4437
  %4439 = vmatprep.subr.mxu0 0.0
  %v4440 = vand.u32 %v52, 4294901760
  %4441 = vmatpush1.msra.mxu0 %v4440
  %4442 = vmatprep.subr.mxu0 0.0
  %v4443 = vand.u32 %v53, 4294901760
  %4444 = vmatpush1.msra.mxu0 %v4443
  %4445 = vmatprep.subr.mxu0 0.0
  %v4446 = vand.u32 %v54, 4294901760
  %4447 = vmatpush1.msra.mxu0 %v4446
  %4448 = vmatprep.subr.mxu0 0.0
  %4449 = vmatpush1.msra.mxu0 0.0
  %4450 = vmatprep.subr.mxu0 0.0
  %4451 = vmatpush1.msra.mxu0 0.0
  %4452 = vmatprep.subr.mxu0 0.0
  %4453 = vmatpush1.msra.mxu0 0.0
  %4454 = vmatprep.subr.mxu0 0.0
  %4455 = vmatpush1.msra.mxu0 0.0
  %4456 = vmatprep.subr.mxu0 0.0
  %4457 = vmatpush1.msra.mxu0 0.0
  %4458 = vmatprep.subr.mxu0 0.0
  %4459 = vmatpush1.msra.mxu0 0.0
  %4460 = vmatprep.subr.mxu0 0.0
  %4461 = vmatpush1.msra.mxu0 0.0
  %4462 = vmatprep.subr.mxu0 0.0
  %4463 = vmatpush1.msra.mxu0 0.0
  %4464 = vmatprep.subr.mxu0 0.0
  %4465 = vmatpush1.msra.mxu0 0.0
  %4466 = vmatprep.subr.mxu0 0.0
  %4467 = vmatpush1.msra.mxu0 0.0
  %4468 = vmatprep.subr.mxu0 0.0
  %4469 = vmatpush1.msra.mxu0 0.0
  %4470 = vmatprep.subr.mxu0 0.0
  %4471 = vmatpush1.msra.mxu0 0.0
  %4472 = vmatprep.subr.mxu0 0.0
  %4473 = vmatpush1.msra.mxu0 0.0
  %4474 = vmatprep.subr.mxu0 0.0
  %4475 = vmatpush1.msra.mxu0 0.0
  %4476 = vmatprep.subr.mxu0 0.0
  %4477 = vmatpush1.msra.mxu0 0.0
  %4478 = vmatprep.subr.mxu0 0.0
  %4479 = vmatpush1.msra.mxu0 0.0
  %4480 = vmatprep.subr.mxu0 0.0
  %4481 = vmatpush1.msra.mxu0 0.0
  %4482 = vmatprep.subr.mxu0 0.0
  %4483 = vmatpush1.msra.mxu0 0.0
  %4484 = vmatprep.subr.mxu0 0.0
  %4485 = vmatpush1.msra.mxu0 0.0
  %4486 = vmatprep.subr.mxu0 0.0
  %4487 = vmatpush1.msra.mxu0 0.0
  %4488 = vmatprep.subr.mxu0 0.0
  %4489 = vmatpush1.msra.mxu0 0.0
  %4490 = vmatprep.subr.mxu0 0.0
  %4491 = vmatpush1.msra.mxu0 0.0
  %4492 = vmatprep.subr.mxu0 0.0
  %4493 = vmatpush1.msra.mxu0 0.0
  %4494 = vmatprep.subr.mxu0 0.0
  %4495 = vmatpush1.msra.mxu0 0.0
  %4496 = vmatprep.subr.mxu0 0.0
  %4497 = vmatpush1.msra.mxu0 0.0
  %4498 = vmatprep.subr.mxu0 0.0
  %4499 = vmatpush1.msra.mxu0 0.0
  %4500 = vmatprep.subr.mxu0 0.0
  %4501 = vmatpush1.msra.mxu0 0.0
  %4502 = vmatprep.subr.mxu0 0.0
  %4503 = vmatpush1.msra.mxu0 0.0
  %4504 = vmatprep.mubr.f32.mxu0 0.0
  %v4505 = vand.u32 %v4184, 4294901760
  %v4506 = vsub.f32 %v4184, %v4505
  %v4507 = vand.u32 %v4506, 4294901760
  %4508 = vmatmul.mubr.f32.gmra.mrb[0].mxu0 %v4507
  %v4509 = vpop.f32.mrb[0].mxu0
  %v4510 = vadd.f32 %v4433, %v4509
  %v4511 = vpop.f32.mrb[0].mxu0
  %4512 = vdwg.mxu0
  %4513 = vmatprep.subr.mxu0 0.0
  %v4514 = vand.u32 %v51, 4294901760
  %v4515 = vsub.f32 %v51, %v4514
  %v4516 = vand.u32 %v4515, 4294901760
  %4517 = vmatpush1.msra.mxu0 %v4516
  %4518 = vmatprep.subr.mxu0 0.0
  %v4519 = vand.u32 %v52, 4294901760
  %v4520 = vsub.f32 %v52, %v4519
  %v4521 = vand.u32 %v4520, 4294901760
  %4522 = vmatpush1.msra.mxu0 %v4521
  %4523 = vmatprep.subr.mxu0 0.0
  %v4524 = vand.u32 %v53, 4294901760
  %v4525 = vsub.f32 %v53, %v4524
  %v4526 = vand.u32 %v4525, 4294901760
  %4527 = vmatpush1.msra.mxu0 %v4526
  %4528 = vmatprep.subr.mxu0 0.0
  %v4529 = vand.u32 %v54, 4294901760
  %v4530 = vsub.f32 %v54, %v4529
  %v4531 = vand.u32 %v4530, 4294901760
  %4532 = vmatpush1.msra.mxu0 %v4531
  %4533 = vmatprep.subr.mxu0 0.0
  %4534 = vmatpush1.msra.mxu0 0.0
  %4535 = vmatprep.subr.mxu0 0.0
  %4536 = vmatpush1.msra.mxu0 0.0
  %4537 = vmatprep.subr.mxu0 0.0
  %4538 = vmatpush1.msra.mxu0 0.0
  %4539 = vmatprep.subr.mxu0 0.0
  %4540 = vmatpush1.msra.mxu0 0.0
  %4541 = vmatprep.subr.mxu0 0.0
  %4542 = vmatpush1.msra.mxu0 0.0
  %4543 = vmatprep.subr.mxu0 0.0
  %4544 = vmatpush1.msra.mxu0 0.0
  %4545 = vmatprep.subr.mxu0 0.0
  %4546 = vmatpush1.msra.mxu0 0.0
  %4547 = vmatprep.subr.mxu0 0.0
  %4548 = vmatpush1.msra.mxu0 0.0
  %4549 = vmatprep.subr.mxu0 0.0
  %4550 = vmatpush1.msra.mxu0 0.0
  %4551 = vmatprep.subr.mxu0 0.0
  %4552 = vmatpush1.msra.mxu0 0.0
  %4553 = vmatprep.subr.mxu0 0.0
  %4554 = vmatpush1.msra.mxu0 0.0
  %4555 = vmatprep.subr.mxu0 0.0
  %4556 = vmatpush1.msra.mxu0 0.0
  %4557 = vmatprep.subr.mxu0 0.0
  %4558 = vmatpush1.msra.mxu0 0.0
  %4559 = vmatprep.subr.mxu0 0.0
  %4560 = vmatpush1.msra.mxu0 0.0
  %4561 = vmatprep.subr.mxu0 0.0
  %4562 = vmatpush1.msra.mxu0 0.0
  %4563 = vmatprep.subr.mxu0 0.0
  %4564 = vmatpush1.msra.mxu0 0.0
  %4565 = vmatprep.subr.mxu0 0.0
  %4566 = vmatpush1.msra.mxu0 0.0
  %4567 = vmatprep.subr.mxu0 0.0
  %4568 = vmatpush1.msra.mxu0 0.0
  %4569 = vmatprep.subr.mxu0 0.0
  %4570 = vmatpush1.msra.mxu0 0.0
  %4571 = vmatprep.subr.mxu0 0.0
  %4572 = vmatpush1.msra.mxu0 0.0
  %4573 = vmatprep.subr.mxu0 0.0
  %4574 = vmatpush1.msra.mxu0 0.0
  %4575 = vmatprep.subr.mxu0 0.0
  %4576 = vmatpush1.msra.mxu0 0.0
  %4577 = vmatprep.subr.mxu0 0.0
  %4578 = vmatpush1.msra.mxu0 0.0
  %4579 = vmatprep.subr.mxu0 0.0
  %4580 = vmatpush1.msra.mxu0 0.0
  %4581 = vmatprep.subr.mxu0 0.0
  %4582 = vmatpush1.msra.mxu0 0.0
  %4583 = vmatprep.subr.mxu0 0.0
  %4584 = vmatpush1.msra.mxu0 0.0
  %4585 = vmatprep.subr.mxu0 0.0
  %4586 = vmatpush1.msra.mxu0 0.0
  %4587 = vmatprep.subr.mxu0 0.0
  %4588 = vmatpush1.msra.mxu0 0.0
  %4589 = vmatprep.mubr.f32.mxu0 0.0
  %v4590 = vand.u32 %v4184, 4294901760
  %4591 = vmatmul.mubr.f32.gmra.mrb[0].mxu0 %v4590
  %v4592 = vpop.f32.mrb[0].mxu0
  %v4593 = vadd.f32 %v4510, %v4592
  %v4594 = vpop.f32.mrb[0].mxu0
  %4595 = vdwg.mxu0
  %4596 = vmatprep.subr.mxu0 0.0
  %v4597 = vand.u32 %v51, 4294901760
  %4598 = vmatpush1.msra.mxu0 %v4597
  %4599 = vmatprep.subr.mxu0 0.0
  %v4600 = vand.u32 %v52, 4294901760
  %4601 = vmatpush1.msra.mxu0 %v4600
  %4602 = vmatprep.subr.mxu0 0.0
  %v4603 = vand.u32 %v53, 4294901760
  %4604 = vmatpush1.msra.mxu0 %v4603
  %4605 = vmatprep.subr.mxu0 0.0
  %v4606 = vand.u32 %v54, 4294901760
  %4607 = vmatpush1.msra.mxu0 %v4606
  %4608 = vmatprep.subr.mxu0 0.0
  %4609 = vmatpush1.msra.mxu0 0.0
  %4610 = vmatprep.subr.mxu0 0.0
  %4611 = vmatpush1.msra.mxu0 0.0
  %4612 = vmatprep.subr.mxu0 0.0
  %4613 = vmatpush1.msra.mxu0 0.0
  %4614 = vmatprep.subr.mxu0 0.0
  %4615 = vmatpush1.msra.mxu0 0.0
  %4616 = vmatprep.subr.mxu0 0.0
  %4617 = vmatpush1.msra.mxu0 0.0
  %4618 = vmatprep.subr.mxu0 0.0
  %4619 = vmatpush1.msra.mxu0 0.0
  %4620 = vmatprep.subr.mxu0 0.0
  %4621 = vmatpush1.msra.mxu0 0.0
  %4622 = vmatprep.subr.mxu0 0.0
  %4623 = vmatpush1.msra.mxu0 0.0
  %4624 = vmatprep.subr.mxu0 0.0
  %4625 = vmatpush1.msra.mxu0 0.0
  %4626 = vmatprep.subr.mxu0 0.0
  %4627 = vmatpush1.msra.mxu0 0.0
  %4628 = vmatprep.subr.mxu0 0.0
  %4629 = vmatpush1.msra.mxu0 0.0
  %4630 = vmatprep.subr.mxu0 0.0
  %4631 = vmatpush1.msra.mxu0 0.0
  %4632 = vmatprep.subr.mxu0 0.0
  %4633 = vmatpush1.msra.mxu0 0.0
  %4634 = vmatprep.subr.mxu0 0.0
  %4635 = vmatpush1.msra.mxu0 0.0
  %4636 = vmatprep.subr.mxu0 0.0
  %4637 = vmatpush1.msra.mxu0 0.0
  %4638 = vmatprep.subr.mxu0 0.0
  %4639 = vmatpush1.msra.mxu0 0.0
  %4640 = vmatprep.subr.mxu0 0.0
  %4641 = vmatpush1.msra.mxu0 0.0
  %4642 = vmatprep.subr.mxu0 0.0
  %4643 = vmatpush1.msra.mxu0 0.0
  %4644 = vmatprep.subr.mxu0 0.0
  %4645 = vmatpush1.msra.mxu0 0.0
  %4646 = vmatprep.subr.mxu0 0.0
  %4647 = vmatpush1.msra.mxu0 0.0
  %4648 = vmatprep.subr.mxu0 0.0
  %4649 = vmatpush1.msra.mxu0 0.0
  %4650 = vmatprep.subr.mxu0 0.0
  %4651 = vmatpush1.msra.mxu0 0.0
  %4652 = vmatprep.subr.mxu0 0.0
  %4653 = vmatpush1.msra.mxu0 0.0
  %4654 = vmatprep.subr.mxu0 0.0
  %4655 = vmatpush1.msra.mxu0 0.0
  %4656 = vmatprep.subr.mxu0 0.0
  %4657 = vmatpush1.msra.mxu0 0.0
  %4658 = vmatprep.subr.mxu0 0.0
  %4659 = vmatpush1.msra.mxu0 0.0
  %4660 = vmatprep.subr.mxu0 0.0
  %4661 = vmatpush1.msra.mxu0 0.0
  %4662 = vmatprep.subr.mxu0 0.0
  %4663 = vmatpush1.msra.mxu0 0.0
  %4664 = vmatprep.mubr.f32.mxu0 0.0
  %v4665 = vand.u32 %v4184, 4294901760
  %4666 = vmatmul.mubr.f32.gmra.mrb[0].mxu0 %v4665
  %v4667 = vpop.f32.mrb[0].mxu0
  %v4668 = vadd.f32 %v4593, %v4667
  %v4669 = vpop.f32.mrb[0].mxu0
  %4670 = vdwg.mxu0
  %v4671 = vadd.f32 %v4178, %v4668
  %v4672 = vmul.f32 %v4671, %v40
  %v4673 = vxor.u32 %v4672, 2147483648
  %v4674 = vmul.f32 %v4673, 1.442695
  %v4675 = vpow.pop %v4674
  %v4676 = vadd.f32 %v4675, 1.0
  %v4677 = vrcp.pop %v4676
  %v4678 = vmul.f32 1.0, %v4677
  %v4679 = vmul.f32 %v4678, 2.0
  %v4680 = vsub.f32 %v4679, 1.0
  %v4681 = vsel %vm39, %v4680, %v4678
  %v4682 = vmul.f32 %v4681, %v3164
  %4684 = vrot.lane.b32.xlu0 %v4681, 64
  %v4685 = vpop.permute.xlu0 %4684
  %v4687 = vmul.f32 %v4681, %v4685
  %4689 = vrot.lane.b32.xlu0 %v4687, 32
  %v4690 = vpop.permute.xlu0 %4689
  %v4692 = vadd.f32 %v4682, %v4690
  %v4693 = vtanh.pop %v4692
  %4695 = vrot.lane.b32.xlu0 %v4693, 64
  %v4696 = vpop.permute.xlu0 %4695
  %v4698 = vmul.f32 %v4681, %v4696
  %4699 = vmatprep.subr.mxu0 0.0
  %v4700 = vand.u32 %v47, 4294901760
  %4701 = vmatpush1.msra.mxu0 %v4700
  %4702 = vmatprep.subr.mxu0 0.0
  %v4703 = vand.u32 %v48, 4294901760
  %4704 = vmatpush1.msra.mxu0 %v4703
  %4705 = vmatprep.subr.mxu0 0.0
  %v4706 = vand.u32 %v49, 4294901760
  %4707 = vmatpush1.msra.mxu0 %v4706
  %4708 = vmatprep.subr.mxu0 0.0
  %v4709 = vand.u32 %v50, 4294901760
  %4710 = vmatpush1.msra.mxu0 %v4709
  %4711 = vmatprep.subr.mxu0 0.0
  %4712 = vmatpush1.msra.mxu0 0.0
  %4713 = vmatprep.subr.mxu0 0.0
  %4714 = vmatpush1.msra.mxu0 0.0
  %4715 = vmatprep.subr.mxu0 0.0
  %4716 = vmatpush1.msra.mxu0 0.0
  %4717 = vmatprep.subr.mxu0 0.0
  %4718 = vmatpush1.msra.mxu0 0.0
  %4719 = vmatprep.subr.mxu0 0.0
  %4720 = vmatpush1.msra.mxu0 0.0
  %4721 = vmatprep.subr.mxu0 0.0
  %4722 = vmatpush1.msra.mxu0 0.0
  %4723 = vmatprep.subr.mxu0 0.0
  %4724 = vmatpush1.msra.mxu0 0.0
  %4725 = vmatprep.subr.mxu0 0.0
  %4726 = vmatpush1.msra.mxu0 0.0
  %4727 = vmatprep.subr.mxu0 0.0
  %4728 = vmatpush1.msra.mxu0 0.0
  %4729 = vmatprep.subr.mxu0 0.0
  %4730 = vmatpush1.msra.mxu0 0.0
  %4731 = vmatprep.subr.mxu0 0.0
  %4732 = vmatpush1.msra.mxu0 0.0
  %4733 = vmatprep.subr.mxu0 0.0
  %4734 = vmatpush1.msra.mxu0 0.0
  %4735 = vmatprep.subr.mxu0 0.0
  %4736 = vmatpush1.msra.mxu0 0.0
  %4737 = vmatprep.subr.mxu0 0.0
  %4738 = vmatpush1.msra.mxu0 0.0
  %4739 = vmatprep.subr.mxu0 0.0
  %4740 = vmatpush1.msra.mxu0 0.0
  %4741 = vmatprep.subr.mxu0 0.0
  %4742 = vmatpush1.msra.mxu0 0.0
  %4743 = vmatprep.subr.mxu0 0.0
  %4744 = vmatpush1.msra.mxu0 0.0
  %4745 = vmatprep.subr.mxu0 0.0
  %4746 = vmatpush1.msra.mxu0 0.0
  %4747 = vmatprep.subr.mxu0 0.0
  %4748 = vmatpush1.msra.mxu0 0.0
  %4749 = vmatprep.subr.mxu0 0.0
  %4750 = vmatpush1.msra.mxu0 0.0
  %4751 = vmatprep.subr.mxu0 0.0
  %4752 = vmatpush1.msra.mxu0 0.0
  %4753 = vmatprep.subr.mxu0 0.0
  %4754 = vmatpush1.msra.mxu0 0.0
  %4755 = vmatprep.subr.mxu0 0.0
  %4756 = vmatpush1.msra.mxu0 0.0
  %4757 = vmatprep.subr.mxu0 0.0
  %4758 = vmatpush1.msra.mxu0 0.0
  %4759 = vmatprep.subr.mxu0 0.0
  %4760 = vmatpush1.msra.mxu0 0.0
  %4761 = vmatprep.subr.mxu0 0.0
  %4762 = vmatpush1.msra.mxu0 0.0
  %4763 = vmatprep.subr.mxu0 0.0
  %4764 = vmatpush1.msra.mxu0 0.0
  %4765 = vmatprep.subr.mxu0 0.0
  %4766 = vmatpush1.msra.mxu0 0.0
  %4767 = vmatprep.mubr.f32.mxu0 0.0
  %v4768 = vand.u32 %v3694, 4294901760
  %v4769 = vsub.f32 %v3694, %v4768
  %v4770 = vand.u32 %v4769, 4294901760
  %v4771 = vsub.f32 %v4769, %v4770
  %v4772 = vand.u32 %v4771, 4294901760
  %4773 = vmatmul.mubr.f32.gmra.mrb[0].mxu0 %v4772
  %v4774 = vpop.f32.mrb[0].mxu0
  %v4775 = vadd.f32 0.0, %v4774
  %v4776 = vpop.f32.mrb[0].mxu0
  %4777 = vdwg.mxu0
  %4778 = vmatprep.subr.mxu0 0.0
  %v4779 = vand.u32 %v47, 4294901760
  %v4780 = vsub.f32 %v47, %v4779
  %v4781 = vand.u32 %v4780, 4294901760
  %v4782 = vsub.f32 %v4780, %v4781
  %v4783 = vand.u32 %v4782, 4294901760
  %4784 = vmatpush1.msra.mxu0 %v4783
  %4785 = vmatprep.subr.mxu0 0.0
  %v4786 = vand.u32 %v48, 4294901760
  %v4787 = vsub.f32 %v48, %v4786
  %v4788 = vand.u32 %v4787, 4294901760
  %v4789 = vsub.f32 %v4787, %v4788
  %v4790 = vand.u32 %v4789, 4294901760
  %4791 = vmatpush1.msra.mxu0 %v4790
  %4792 = vmatprep.subr.mxu0 0.0
  %v4793 = vand.u32 %v49, 4294901760
  %v4794 = vsub.f32 %v49, %v4793
  %v4795 = vand.u32 %v4794, 4294901760
  %v4796 = vsub.f32 %v4794, %v4795
  %v4797 = vand.u32 %v4796, 4294901760
  %4798 = vmatpush1.msra.mxu0 %v4797
  %4799 = vmatprep.subr.mxu0 0.0
  %v4800 = vand.u32 %v50, 4294901760
  %v4801 = vsub.f32 %v50, %v4800
  %v4802 = vand.u32 %v4801, 4294901760
  %v4803 = vsub.f32 %v4801, %v4802
  %v4804 = vand.u32 %v4803, 4294901760
  %4805 = vmatpush1.msra.mxu0 %v4804
  %4806 = vmatprep.subr.mxu0 0.0
  %4807 = vmatpush1.msra.mxu0 0.0
  %4808 = vmatprep.subr.mxu0 0.0
  %4809 = vmatpush1.msra.mxu0 0.0
  %4810 = vmatprep.subr.mxu0 0.0
  %4811 = vmatpush1.msra.mxu0 0.0
  %4812 = vmatprep.subr.mxu0 0.0
  %4813 = vmatpush1.msra.mxu0 0.0
  %4814 = vmatprep.subr.mxu0 0.0
  %4815 = vmatpush1.msra.mxu0 0.0
  %4816 = vmatprep.subr.mxu0 0.0
  %4817 = vmatpush1.msra.mxu0 0.0
  %4818 = vmatprep.subr.mxu0 0.0
  %4819 = vmatpush1.msra.mxu0 0.0
  %4820 = vmatprep.subr.mxu0 0.0
  %4821 = vmatpush1.msra.mxu0 0.0
  %4822 = vmatprep.subr.mxu0 0.0
  %4823 = vmatpush1.msra.mxu0 0.0
  %4824 = vmatprep.subr.mxu0 0.0
  %4825 = vmatpush1.msra.mxu0 0.0
  %4826 = vmatprep.subr.mxu0 0.0
  %4827 = vmatpush1.msra.mxu0 0.0
  %4828 = vmatprep.subr.mxu0 0.0
  %4829 = vmatpush1.msra.mxu0 0.0
  %4830 = vmatprep.subr.mxu0 0.0
  %4831 = vmatpush1.msra.mxu0 0.0
  %4832 = vmatprep.subr.mxu0 0.0
  %4833 = vmatpush1.msra.mxu0 0.0
  %4834 = vmatprep.subr.mxu0 0.0
  %4835 = vmatpush1.msra.mxu0 0.0
  %4836 = vmatprep.subr.mxu0 0.0
  %4837 = vmatpush1.msra.mxu0 0.0
  %4838 = vmatprep.subr.mxu0 0.0
  %4839 = vmatpush1.msra.mxu0 0.0
  %4840 = vmatprep.subr.mxu0 0.0
  %4841 = vmatpush1.msra.mxu0 0.0
  %4842 = vmatprep.subr.mxu0 0.0
  %4843 = vmatpush1.msra.mxu0 0.0
  %4844 = vmatprep.subr.mxu0 0.0
  %4845 = vmatpush1.msra.mxu0 0.0
  %4846 = vmatprep.subr.mxu0 0.0
  %4847 = vmatpush1.msra.mxu0 0.0
  %4848 = vmatprep.subr.mxu0 0.0
  %4849 = vmatpush1.msra.mxu0 0.0
  %4850 = vmatprep.subr.mxu0 0.0
  %4851 = vmatpush1.msra.mxu0 0.0
  %4852 = vmatprep.subr.mxu0 0.0
  %4853 = vmatpush1.msra.mxu0 0.0
  %4854 = vmatprep.subr.mxu0 0.0
  %4855 = vmatpush1.msra.mxu0 0.0
  %4856 = vmatprep.subr.mxu0 0.0
  %4857 = vmatpush1.msra.mxu0 0.0
  %4858 = vmatprep.subr.mxu0 0.0
  %4859 = vmatpush1.msra.mxu0 0.0
  %4860 = vmatprep.subr.mxu0 0.0
  %4861 = vmatpush1.msra.mxu0 0.0
  %4862 = vmatprep.mubr.f32.mxu0 0.0
  %v4863 = vand.u32 %v3694, 4294901760
  %4864 = vmatmul.mubr.f32.gmra.mrb[0].mxu0 %v4863
  %v4865 = vpop.f32.mrb[0].mxu0
  %v4866 = vadd.f32 %v4775, %v4865
  %v4867 = vpop.f32.mrb[0].mxu0
  %4868 = vdwg.mxu0
  %4869 = vmatprep.subr.mxu0 0.0
  %v4870 = vand.u32 %v47, 4294901760
  %v4871 = vsub.f32 %v47, %v4870
  %4872 = vmatpush1.msra.mxu0 %v4871
  %4873 = vmatprep.subr.mxu0 0.0
  %v4874 = vand.u32 %v48, 4294901760
  %v4875 = vsub.f32 %v48, %v4874
  %4876 = vmatpush1.msra.mxu0 %v4875
  %4877 = vmatprep.subr.mxu0 0.0
  %v4878 = vand.u32 %v49, 4294901760
  %v4879 = vsub.f32 %v49, %v4878
  %4880 = vmatpush1.msra.mxu0 %v4879
  %4881 = vmatprep.subr.mxu0 0.0
  %v4882 = vand.u32 %v50, 4294901760
  %v4883 = vsub.f32 %v50, %v4882
  %4884 = vmatpush1.msra.mxu0 %v4883
  %4885 = vmatprep.subr.mxu0 0.0
  %4886 = vmatpush1.msra.mxu0 0.0
  %4887 = vmatprep.subr.mxu0 0.0
  %4888 = vmatpush1.msra.mxu0 0.0
  %4889 = vmatprep.subr.mxu0 0.0
  %4890 = vmatpush1.msra.mxu0 0.0
  %4891 = vmatprep.subr.mxu0 0.0
  %4892 = vmatpush1.msra.mxu0 0.0
  %4893 = vmatprep.subr.mxu0 0.0
  %4894 = vmatpush1.msra.mxu0 0.0
  %4895 = vmatprep.subr.mxu0 0.0
  %4896 = vmatpush1.msra.mxu0 0.0
  %4897 = vmatprep.subr.mxu0 0.0
  %4898 = vmatpush1.msra.mxu0 0.0
  %4899 = vmatprep.subr.mxu0 0.0
  %4900 = vmatpush1.msra.mxu0 0.0
  %4901 = vmatprep.subr.mxu0 0.0
  %4902 = vmatpush1.msra.mxu0 0.0
  %4903 = vmatprep.subr.mxu0 0.0
  %4904 = vmatpush1.msra.mxu0 0.0
  %4905 = vmatprep.subr.mxu0 0.0
  %4906 = vmatpush1.msra.mxu0 0.0
  %4907 = vmatprep.subr.mxu0 0.0
  %4908 = vmatpush1.msra.mxu0 0.0
  %4909 = vmatprep.subr.mxu0 0.0
  %4910 = vmatpush1.msra.mxu0 0.0
  %4911 = vmatprep.subr.mxu0 0.0
  %4912 = vmatpush1.msra.mxu0 0.0
  %4913 = vmatprep.subr.mxu0 0.0
  %4914 = vmatpush1.msra.mxu0 0.0
  %4915 = vmatprep.subr.mxu0 0.0
  %4916 = vmatpush1.msra.mxu0 0.0
  %4917 = vmatprep.subr.mxu0 0.0
  %4918 = vmatpush1.msra.mxu0 0.0
  %4919 = vmatprep.subr.mxu0 0.0
  %4920 = vmatpush1.msra.mxu0 0.0
  %4921 = vmatprep.subr.mxu0 0.0
  %4922 = vmatpush1.msra.mxu0 0.0
  %4923 = vmatprep.subr.mxu0 0.0
  %4924 = vmatpush1.msra.mxu0 0.0
  %4925 = vmatprep.subr.mxu0 0.0
  %4926 = vmatpush1.msra.mxu0 0.0
  %4927 = vmatprep.subr.mxu0 0.0
  %4928 = vmatpush1.msra.mxu0 0.0
  %4929 = vmatprep.subr.mxu0 0.0
  %4930 = vmatpush1.msra.mxu0 0.0
  %4931 = vmatprep.subr.mxu0 0.0
  %4932 = vmatpush1.msra.mxu0 0.0
  %4933 = vmatprep.subr.mxu0 0.0
  %4934 = vmatpush1.msra.mxu0 0.0
  %4935 = vmatprep.subr.mxu0 0.0
  %4936 = vmatpush1.msra.mxu0 0.0
  %4937 = vmatprep.subr.mxu0 0.0
  %4938 = vmatpush1.msra.mxu0 0.0
  %4939 = vmatprep.subr.mxu0 0.0
  %4940 = vmatpush1.msra.mxu0 0.0
  %4941 = vmatprep.mubr.f32.mxu0 0.0
  %v4942 = vand.u32 %v3694, 4294901760
  %v4943 = vsub.f32 %v3694, %v4942
  %4944 = vmatmul.mubr.f32.gmra.mrb[0].mxu0 %v4943
  %v4945 = vpop.f32.mrb[0].mxu0
  %v4946 = vadd.f32 %v4866, %v4945
  %v4947 = vpop.f32.mrb[0].mxu0
  %4948 = vdwg.mxu0
  %4949 = vmatprep.subr.mxu0 0.0
  %v4950 = vand.u32 %v47, 4294901760
  %4951 = vmatpush1.msra.mxu0 %v4950
  %4952 = vmatprep.subr.mxu0 0.0
  %v4953 = vand.u32 %v48, 4294901760
  %4954 = vmatpush1.msra.mxu0 %v4953
  %4955 = vmatprep.subr.mxu0 0.0
  %v4956 = vand.u32 %v49, 4294901760
  %4957 = vmatpush1.msra.mxu0 %v4956
  %4958 = vmatprep.subr.mxu0 0.0
  %v4959 = vand.u32 %v50, 4294901760
  %4960 = vmatpush1.msra.mxu0 %v4959
  %4961 = vmatprep.subr.mxu0 0.0
  %4962 = vmatpush1.msra.mxu0 0.0
  %4963 = vmatprep.subr.mxu0 0.0
  %4964 = vmatpush1.msra.mxu0 0.0
  %4965 = vmatprep.subr.mxu0 0.0
  %4966 = vmatpush1.msra.mxu0 0.0
  %4967 = vmatprep.subr.mxu0 0.0
  %4968 = vmatpush1.msra.mxu0 0.0
  %4969 = vmatprep.subr.mxu0 0.0
  %4970 = vmatpush1.msra.mxu0 0.0
  %4971 = vmatprep.subr.mxu0 0.0
  %4972 = vmatpush1.msra.mxu0 0.0
  %4973 = vmatprep.subr.mxu0 0.0
  %4974 = vmatpush1.msra.mxu0 0.0
  %4975 = vmatprep.subr.mxu0 0.0
  %4976 = vmatpush1.msra.mxu0 0.0
  %4977 = vmatprep.subr.mxu0 0.0
  %4978 = vmatpush1.msra.mxu0 0.0
  %4979 = vmatprep.subr.mxu0 0.0
  %4980 = vmatpush1.msra.mxu0 0.0
  %4981 = vmatprep.subr.mxu0 0.0
  %4982 = vmatpush1.msra.mxu0 0.0
  %4983 = vmatprep.subr.mxu0 0.0
  %4984 = vmatpush1.msra.mxu0 0.0
  %4985 = vmatprep.subr.mxu0 0.0
  %4986 = vmatpush1.msra.mxu0 0.0
  %4987 = vmatprep.subr.mxu0 0.0
  %4988 = vmatpush1.msra.mxu0 0.0
  %4989 = vmatprep.subr.mxu0 0.0
  %4990 = vmatpush1.msra.mxu0 0.0
  %4991 = vmatprep.subr.mxu0 0.0
  %4992 = vmatpush1.msra.mxu0 0.0
  %4993 = vmatprep.subr.mxu0 0.0
  %4994 = vmatpush1.msra.mxu0 0.0
  %4995 = vmatprep.subr.mxu0 0.0
  %4996 = vmatpush1.msra.mxu0 0.0
  %4997 = vmatprep.subr.mxu0 0.0
  %4998 = vmatpush1.msra.mxu0 0.0
  %4999 = vmatprep.subr.mxu0 0.0
  %5000 = vmatpush1.msra.mxu0 0.0
  %5001 = vmatprep.subr.mxu0 0.0
  %5002 = vmatpush1.msra.mxu0 0.0
  %5003 = vmatprep.subr.mxu0 0.0
  %5004 = vmatpush1.msra.mxu0 0.0
  %5005 = vmatprep.subr.mxu0 0.0
  %5006 = vmatpush1.msra.mxu0 0.0
  %5007 = vmatprep.subr.mxu0 0.0
  %5008 = vmatpush1.msra.mxu0 0.0
  %5009 = vmatprep.subr.mxu0 0.0
  %5010 = vmatpush1.msra.mxu0 0.0
  %5011 = vmatprep.subr.mxu0 0.0
  %5012 = vmatpush1.msra.mxu0 0.0
  %5013 = vmatprep.subr.mxu0 0.0
  %5014 = vmatpush1.msra.mxu0 0.0
  %5015 = vmatprep.subr.mxu0 0.0
  %5016 = vmatpush1.msra.mxu0 0.0
  %5017 = vmatprep.mubr.f32.mxu0 0.0
  %v5018 = vand.u32 %v3694, 4294901760
  %v5019 = vsub.f32 %v3694, %v5018
  %v5020 = vand.u32 %v5019, 4294901760
  %5021 = vmatmul.mubr.f32.gmra.mrb[0].mxu0 %v5020
  %v5022 = vpop.f32.mrb[0].mxu0
  %v5023 = vadd.f32 %v4946, %v5022
  %v5024 = vpop.f32.mrb[0].mxu0
  %5025 = vdwg.mxu0
  %5026 = vmatprep.subr.mxu0 0.0
  %v5027 = vand.u32 %v47, 4294901760
  %v5028 = vsub.f32 %v47, %v5027
  %v5029 = vand.u32 %v5028, 4294901760
  %5030 = vmatpush1.msra.mxu0 %v5029
  %5031 = vmatprep.subr.mxu0 0.0
  %v5032 = vand.u32 %v48, 4294901760
  %v5033 = vsub.f32 %v48, %v5032
  %v5034 = vand.u32 %v5033, 4294901760
  %5035 = vmatpush1.msra.mxu0 %v5034
  %5036 = vmatprep.subr.mxu0 0.0
  %v5037 = vand.u32 %v49, 4294901760
  %v5038 = vsub.f32 %v49, %v5037
  %v5039 = vand.u32 %v5038, 4294901760
  %5040 = vmatpush1.msra.mxu0 %v5039
  %5041 = vmatprep.subr.mxu0 0.0
  %v5042 = vand.u32 %v50, 4294901760
  %v5043 = vsub.f32 %v50, %v5042
  %v5044 = vand.u32 %v5043, 4294901760
  %5045 = vmatpush1.msra.mxu0 %v5044
  %5046 = vmatprep.subr.mxu0 0.0
  %5047 = vmatpush1.msra.mxu0 0.0
  %5048 = vmatprep.subr.mxu0 0.0
  %5049 = vmatpush1.msra.mxu0 0.0
  %5050 = vmatprep.subr.mxu0 0.0
  %5051 = vmatpush1.msra.mxu0 0.0
  %5052 = vmatprep.subr.mxu0 0.0
  %5053 = vmatpush1.msra.mxu0 0.0
  %5054 = vmatprep.subr.mxu0 0.0
  %5055 = vmatpush1.msra.mxu0 0.0
  %5056 = vmatprep.subr.mxu0 0.0
  %5057 = vmatpush1.msra.mxu0 0.0
  %5058 = vmatprep.subr.mxu0 0.0
  %5059 = vmatpush1.msra.mxu0 0.0
  %5060 = vmatprep.subr.mxu0 0.0
  %5061 = vmatpush1.msra.mxu0 0.0
  %5062 = vmatprep.subr.mxu0 0.0
  %5063 = vmatpush1.msra.mxu0 0.0
  %5064 = vmatprep.subr.mxu0 0.0
  %5065 = vmatpush1.msra.mxu0 0.0
  %5066 = vmatprep.subr.mxu0 0.0
  %5067 = vmatpush1.msra.mxu0 0.0
  %5068 = vmatprep.subr.mxu0 0.0
  %5069 = vmatpush1.msra.mxu0 0.0
  %5070 = vmatprep.subr.mxu0 0.0
  %5071 = vmatpush1.msra.mxu0 0.0
  %5072 = vmatprep.subr.mxu0 0.0
  %5073 = vmatpush1.msra.mxu0 0.0
  %5074 = vmatprep.subr.mxu0 0.0
  %5075 = vmatpush1.msra.mxu0 0.0
  %5076 = vmatprep.subr.mxu0 0.0
  %5077 = vmatpush1.msra.mxu0 0.0
  %5078 = vmatprep.subr.mxu0 0.0
  %5079 = vmatpush1.msra.mxu0 0.0
  %5080 = vmatprep.subr.mxu0 0.0
  %5081 = vmatpush1.msra.mxu0 0.0
  %5082 = vmatprep.subr.mxu0 0.0
  %5083 = vmatpush1.msra.mxu0 0.0
  %5084 = vmatprep.subr.mxu0 0.0
  %5085 = vmatpush1.msra.mxu0 0.0
  %5086 = vmatprep.subr.mxu0 0.0
  %5087 = vmatpush1.msra.mxu0 0.0
  %5088 = vmatprep.subr.mxu0 0.0
  %5089 = vmatpush1.msra.mxu0 0.0
  %5090 = vmatprep.subr.mxu0 0.0
  %5091 = vmatpush1.msra.mxu0 0.0
  %5092 = vmatprep.subr.mxu0 0.0
  %5093 = vmatpush1.msra.mxu0 0.0
  %5094 = vmatprep.subr.mxu0 0.0
  %5095 = vmatpush1.msra.mxu0 0.0
  %5096 = vmatprep.subr.mxu0 0.0
  %5097 = vmatpush1.msra.mxu0 0.0
  %5098 = vmatprep.subr.mxu0 0.0
  %5099 = vmatpush1.msra.mxu0 0.0
  %5100 = vmatprep.subr.mxu0 0.0
  %5101 = vmatpush1.msra.mxu0 0.0
  %5102 = vmatprep.mubr.f32.mxu0 0.0
  %v5103 = vand.u32 %v3694, 4294901760
  %5104 = vmatmul.mubr.f32.gmra.mrb[0].mxu0 %v5103
  %v5105 = vpop.f32.mrb[0].mxu0
  %v5106 = vadd.f32 %v5023, %v5105
  %v5107 = vpop.f32.mrb[0].mxu0
  %5108 = vdwg.mxu0
  %5109 = vmatprep.subr.mxu0 0.0
  %v5110 = vand.u32 %v47, 4294901760
  %5111 = vmatpush1.msra.mxu0 %v5110
  %5112 = vmatprep.subr.mxu0 0.0
  %v5113 = vand.u32 %v48, 4294901760
  %5114 = vmatpush1.msra.mxu0 %v5113
  %5115 = vmatprep.subr.mxu0 0.0
  %v5116 = vand.u32 %v49, 4294901760
  %5117 = vmatpush1.msra.mxu0 %v5116
  %5118 = vmatprep.subr.mxu0 0.0
  %v5119 = vand.u32 %v50, 4294901760
  %5120 = vmatpush1.msra.mxu0 %v5119
  %5121 = vmatprep.subr.mxu0 0.0
  %5122 = vmatpush1.msra.mxu0 0.0
  %5123 = vmatprep.subr.mxu0 0.0
  %5124 = vmatpush1.msra.mxu0 0.0
  %5125 = vmatprep.subr.mxu0 0.0
  %5126 = vmatpush1.msra.mxu0 0.0
  %5127 = vmatprep.subr.mxu0 0.0
  %5128 = vmatpush1.msra.mxu0 0.0
  %5129 = vmatprep.subr.mxu0 0.0
  %5130 = vmatpush1.msra.mxu0 0.0
  %5131 = vmatprep.subr.mxu0 0.0
  %5132 = vmatpush1.msra.mxu0 0.0
  %5133 = vmatprep.subr.mxu0 0.0
  %5134 = vmatpush1.msra.mxu0 0.0
  %5135 = vmatprep.subr.mxu0 0.0
  %5136 = vmatpush1.msra.mxu0 0.0
  %5137 = vmatprep.subr.mxu0 0.0
  %5138 = vmatpush1.msra.mxu0 0.0
  %5139 = vmatprep.subr.mxu0 0.0
  %5140 = vmatpush1.msra.mxu0 0.0
  %5141 = vmatprep.subr.mxu0 0.0
  %5142 = vmatpush1.msra.mxu0 0.0
  %5143 = vmatprep.subr.mxu0 0.0
  %5144 = vmatpush1.msra.mxu0 0.0
  %5145 = vmatprep.subr.mxu0 0.0
  %5146 = vmatpush1.msra.mxu0 0.0
  %5147 = vmatprep.subr.mxu0 0.0
  %5148 = vmatpush1.msra.mxu0 0.0
  %5149 = vmatprep.subr.mxu0 0.0
  %5150 = vmatpush1.msra.mxu0 0.0
  %5151 = vmatprep.subr.mxu0 0.0
  %5152 = vmatpush1.msra.mxu0 0.0
  %5153 = vmatprep.subr.mxu0 0.0
  %5154 = vmatpush1.msra.mxu0 0.0
  %5155 = vmatprep.subr.mxu0 0.0
  %5156 = vmatpush1.msra.mxu0 0.0
  %5157 = vmatprep.subr.mxu0 0.0
  %5158 = vmatpush1.msra.mxu0 0.0
  %5159 = vmatprep.subr.mxu0 0.0
  %5160 = vmatpush1.msra.mxu0 0.0
  %5161 = vmatprep.subr.mxu0 0.0
  %5162 = vmatpush1.msra.mxu0 0.0
  %5163 = vmatprep.subr.mxu0 0.0
  %5164 = vmatpush1.msra.mxu0 0.0
  %5165 = vmatprep.subr.mxu0 0.0
  %5166 = vmatpush1.msra.mxu0 0.0
  %5167 = vmatprep.subr.mxu0 0.0
  %5168 = vmatpush1.msra.mxu0 0.0
  %5169 = vmatprep.subr.mxu0 0.0
  %5170 = vmatpush1.msra.mxu0 0.0
  %5171 = vmatprep.subr.mxu0 0.0
  %5172 = vmatpush1.msra.mxu0 0.0
  %5173 = vmatprep.subr.mxu0 0.0
  %5174 = vmatpush1.msra.mxu0 0.0
  %5175 = vmatprep.subr.mxu0 0.0
  %5176 = vmatpush1.msra.mxu0 0.0
  %5177 = vmatprep.mubr.f32.mxu0 0.0
  %v5178 = vand.u32 %v3694, 4294901760
  %5179 = vmatmul.mubr.f32.gmra.mrb[0].mxu0 %v5178
  %v5180 = vpop.f32.mrb[0].mxu0
  %v5181 = vadd.f32 %v5106, %v5180
  %v5182 = vpop.f32.mrb[0].mxu0
  %5183 = vdwg.mxu0
  %v5185 = vrot.slane %v5181, 2
  %v5187 = vadd.f32 %v111, %v5185
  %v5188 = vmul.f32 %v5187, %v40
  %v5189 = vxor.u32 %v5188, 2147483648
  %v5190 = vmul.f32 %v5189, 1.442695
  %v5191 = vpow.pop %v5190
  %v5192 = vadd.f32 %v5191, 1.0
  %v5193 = vrcp.pop %v5192
  %v5194 = vmul.f32 1.0, %v5193
  %v5195 = vmul.f32 %v5194, 2.0
  %v5196 = vsub.f32 %v5195, 1.0
  %v5197 = vsel %vm39, %v5196, %v5194
  %v5199 = vrot.slane %v3683, 6
  %v5201 = vmul.f32 %v5197, %v5199
  %5203 = vrot.lane.b32.xlu0 %v5197, 64
  %v5204 = vpop.permute.xlu0 %5203
  %v5206 = vmul.f32 %v5197, %v5204
  %5208 = vrot.lane.b32.xlu0 %v5206, 32
  %v5209 = vpop.permute.xlu0 %5208
  %v5211 = vadd.f32 %v5201, %v5209
  %v5212 = vtanh.pop %v5211
  %5214 = vrot.lane.b32.xlu0 %v5212, 64
  %v5215 = vpop.permute.xlu0 %5214
  %v5217 = vmul.f32 %v5197, %v5215
  %v5219 = vrot.slane %v5217, 6
  %5220 = vrot.lane.b32.xlu0 %v5219, 32
  %v5221 = vpop.permute.xlu0 %5220
  %v5222 = vsel %vm117, %v5221, 0
  %5224 = vmatprep.subr.mxu0 0.0
  %v5225 = vand.u32 %v43, 4294901760
  %5226 = vmatpush1.msra.mxu0 %v5225
  %5227 = vmatprep.subr.mxu0 0.0
  %v5228 = vand.u32 %v44, 4294901760
  %5229 = vmatpush1.msra.mxu0 %v5228
  %5230 = vmatprep.subr.mxu0 0.0
  %v5231 = vand.u32 %v45, 4294901760
  %5232 = vmatpush1.msra.mxu0 %v5231
  %5233 = vmatprep.subr.mxu0 0.0
  %v5234 = vand.u32 %v46, 4294901760
  %5235 = vmatpush1.msra.mxu0 %v5234
  %5236 = vmatprep.subr.mxu0 0.0
  %5237 = vmatpush1.msra.mxu0 0.0
  %5238 = vmatprep.subr.mxu0 0.0
  %5239 = vmatpush1.msra.mxu0 0.0
  %5240 = vmatprep.subr.mxu0 0.0
  %5241 = vmatpush1.msra.mxu0 0.0
  %5242 = vmatprep.subr.mxu0 0.0
  %5243 = vmatpush1.msra.mxu0 0.0
  %5244 = vmatprep.subr.mxu0 0.0
  %5245 = vmatpush1.msra.mxu0 0.0
  %5246 = vmatprep.subr.mxu0 0.0
  %5247 = vmatpush1.msra.mxu0 0.0
  %5248 = vmatprep.subr.mxu0 0.0
  %5249 = vmatpush1.msra.mxu0 0.0
  %5250 = vmatprep.subr.mxu0 0.0
  %5251 = vmatpush1.msra.mxu0 0.0
  %5252 = vmatprep.subr.mxu0 0.0
  %5253 = vmatpush1.msra.mxu0 0.0
  %5254 = vmatprep.subr.mxu0 0.0
  %5255 = vmatpush1.msra.mxu0 0.0
  %5256 = vmatprep.subr.mxu0 0.0
  %5257 = vmatpush1.msra.mxu0 0.0
  %5258 = vmatprep.subr.mxu0 0.0
  %5259 = vmatpush1.msra.mxu0 0.0
  %5260 = vmatprep.subr.mxu0 0.0
  %5261 = vmatpush1.msra.mxu0 0.0
  %5262 = vmatprep.subr.mxu0 0.0
  %5263 = vmatpush1.msra.mxu0 0.0
  %5264 = vmatprep.subr.mxu0 0.0
  %5265 = vmatpush1.msra.mxu0 0.0
  %5266 = vmatprep.subr.mxu0 0.0
  %5267 = vmatpush1.msra.mxu0 0.0
  %5268 = vmatprep.subr.mxu0 0.0
  %5269 = vmatpush1.msra.mxu0 0.0
  %5270 = vmatprep.subr.mxu0 0.0
  %5271 = vmatpush1.msra.mxu0 0.0
  %5272 = vmatprep.subr.mxu0 0.0
  %5273 = vmatpush1.msra.mxu0 0.0
  %5274 = vmatprep.subr.mxu0 0.0
  %5275 = vmatpush1.msra.mxu0 0.0
  %5276 = vmatprep.subr.mxu0 0.0
  %5277 = vmatpush1.msra.mxu0 0.0
  %5278 = vmatprep.subr.mxu0 0.0
  %5279 = vmatpush1.msra.mxu0 0.0
  %5280 = vmatprep.subr.mxu0 0.0
  %5281 = vmatpush1.msra.mxu0 0.0
  %5282 = vmatprep.subr.mxu0 0.0
  %5283 = vmatpush1.msra.mxu0 0.0
  %5284 = vmatprep.subr.mxu0 0.0
  %5285 = vmatpush1.msra.mxu0 0.0
  %5286 = vmatprep.subr.mxu0 0.0
  %5287 = vmatpush1.msra.mxu0 0.0
  %5288 = vmatprep.subr.mxu0 0.0
  %5289 = vmatpush1.msra.mxu0 0.0
  %5290 = vmatprep.subr.mxu0 0.0
  %5291 = vmatpush1.msra.mxu0 0.0
  %5292 = vmatprep.mubr.f32.mxu0 0.0
  %v5293 = vand.u32 %v5222, 4294901760
  %v5294 = vsub.f32 %v5222, %v5293
  %v5295 = vand.u32 %v5294, 4294901760
  %v5296 = vsub.f32 %v5294, %v5295
  %v5297 = vand.u32 %v5296, 4294901760
  %5298 = vmatmul.mubr.f32.gmra.mrb[0].mxu0 %v5297
  %v5299 = vpop.f32.mrb[0].mxu0
  %v5300 = vadd.f32 %v638, %v5299
  %v5301 = vpop.f32.mrb[0].mxu0
  %5302 = vdwg.mxu0
  %5303 = vmatprep.subr.mxu0 0.0
  %v5304 = vand.u32 %v43, 4294901760
  %v5305 = vsub.f32 %v43, %v5304
  %v5306 = vand.u32 %v5305, 4294901760
  %v5307 = vsub.f32 %v5305, %v5306
  %v5308 = vand.u32 %v5307, 4294901760
  %5309 = vmatpush1.msra.mxu0 %v5308
  %5310 = vmatprep.subr.mxu0 0.0
  %v5311 = vand.u32 %v44, 4294901760
  %v5312 = vsub.f32 %v44, %v5311
  %v5313 = vand.u32 %v5312, 4294901760
  %v5314 = vsub.f32 %v5312, %v5313
  %v5315 = vand.u32 %v5314, 4294901760
  %5316 = vmatpush1.msra.mxu0 %v5315
  %5317 = vmatprep.subr.mxu0 0.0
  %v5318 = vand.u32 %v45, 4294901760
  %v5319 = vsub.f32 %v45, %v5318
  %v5320 = vand.u32 %v5319, 4294901760
  %v5321 = vsub.f32 %v5319, %v5320
  %v5322 = vand.u32 %v5321, 4294901760
  %5323 = vmatpush1.msra.mxu0 %v5322
  %5324 = vmatprep.subr.mxu0 0.0
  %v5325 = vand.u32 %v46, 4294901760
  %v5326 = vsub.f32 %v46, %v5325
  %v5327 = vand.u32 %v5326, 4294901760
  %v5328 = vsub.f32 %v5326, %v5327
  %v5329 = vand.u32 %v5328, 4294901760
  %5330 = vmatpush1.msra.mxu0 %v5329
  %5331 = vmatprep.subr.mxu0 0.0
  %5332 = vmatpush1.msra.mxu0 0.0
  %5333 = vmatprep.subr.mxu0 0.0
  %5334 = vmatpush1.msra.mxu0 0.0
  %5335 = vmatprep.subr.mxu0 0.0
  %5336 = vmatpush1.msra.mxu0 0.0
  %5337 = vmatprep.subr.mxu0 0.0
  %5338 = vmatpush1.msra.mxu0 0.0
  %5339 = vmatprep.subr.mxu0 0.0
  %5340 = vmatpush1.msra.mxu0 0.0
  %5341 = vmatprep.subr.mxu0 0.0
  %5342 = vmatpush1.msra.mxu0 0.0
  %5343 = vmatprep.subr.mxu0 0.0
  %5344 = vmatpush1.msra.mxu0 0.0
  %5345 = vmatprep.subr.mxu0 0.0
  %5346 = vmatpush1.msra.mxu0 0.0
  %5347 = vmatprep.subr.mxu0 0.0
  %5348 = vmatpush1.msra.mxu0 0.0
  %5349 = vmatprep.subr.mxu0 0.0
  %5350 = vmatpush1.msra.mxu0 0.0
  %5351 = vmatprep.subr.mxu0 0.0
  %5352 = vmatpush1.msra.mxu0 0.0
  %5353 = vmatprep.subr.mxu0 0.0
  %5354 = vmatpush1.msra.mxu0 0.0
  %5355 = vmatprep.subr.mxu0 0.0
  %5356 = vmatpush1.msra.mxu0 0.0
  %5357 = vmatprep.subr.mxu0 0.0
  %5358 = vmatpush1.msra.mxu0 0.0
  %5359 = vmatprep.subr.mxu0 0.0
  %5360 = vmatpush1.msra.mxu0 0.0
  %5361 = vmatprep.subr.mxu0 0.0
  %5362 = vmatpush1.msra.mxu0 0.0
  %5363 = vmatprep.subr.mxu0 0.0
  %5364 = vmatpush1.msra.mxu0 0.0
  %5365 = vmatprep.subr.mxu0 0.0
  %5366 = vmatpush1.msra.mxu0 0.0
  %5367 = vmatprep.subr.mxu0 0.0
  %5368 = vmatpush1.msra.mxu0 0.0
  %5369 = vmatprep.subr.mxu0 0.0
  %5370 = vmatpush1.msra.mxu0 0.0
  %5371 = vmatprep.subr.mxu0 0.0
  %5372 = vmatpush1.msra.mxu0 0.0
  %5373 = vmatprep.subr.mxu0 0.0
  %5374 = vmatpush1.msra.mxu0 0.0
  %5375 = vmatprep.subr.mxu0 0.0
  %5376 = vmatpush1.msra.mxu0 0.0
  %5377 = vmatprep.subr.mxu0 0.0
  %5378 = vmatpush1.msra.mxu0 0.0
  %5379 = vmatprep.subr.mxu0 0.0
  %5380 = vmatpush1.msra.mxu0 0.0
  %5381 = vmatprep.subr.mxu0 0.0
  %5382 = vmatpush1.msra.mxu0 0.0
  %5383 = vmatprep.subr.mxu0 0.0
  %5384 = vmatpush1.msra.mxu0 0.0
  %5385 = vmatprep.subr.mxu0 0.0
  %5386 = vmatpush1.msra.mxu0 0.0
  %5387 = vmatprep.mubr.f32.mxu0 0.0
  %v5388 = vand.u32 %v5222, 4294901760
  %5389 = vmatmul.mubr.f32.gmra.mrb[0].mxu0 %v5388
  %v5390 = vpop.f32.mrb[0].mxu0
  %v5391 = vadd.f32 %v5300, %v5390
  %v5392 = vpop.f32.mrb[0].mxu0
  %5393 = vdwg.mxu0
  %5394 = vmatprep.subr.mxu0 0.0
  %v5395 = vand.u32 %v43, 4294901760
  %v5396 = vsub.f32 %v43, %v5395
  %5397 = vmatpush1.msra.mxu0 %v5396
  %5398 = vmatprep.subr.mxu0 0.0
  %v5399 = vand.u32 %v44, 4294901760
  %v5400 = vsub.f32 %v44, %v5399
  %5401 = vmatpush1.msra.mxu0 %v5400
  %5402 = vmatprep.subr.mxu0 0.0
  %v5403 = vand.u32 %v45, 4294901760
  %v5404 = vsub.f32 %v45, %v5403
  %5405 = vmatpush1.msra.mxu0 %v5404
  %5406 = vmatprep.subr.mxu0 0.0
  %v5407 = vand.u32 %v46, 4294901760
  %v5408 = vsub.f32 %v46, %v5407
  %5409 = vmatpush1.msra.mxu0 %v5408
  %5410 = vmatprep.subr.mxu0 0.0
  %5411 = vmatpush1.msra.mxu0 0.0
  %5412 = vmatprep.subr.mxu0 0.0
  %5413 = vmatpush1.msra.mxu0 0.0
  %5414 = vmatprep.subr.mxu0 0.0
  %5415 = vmatpush1.msra.mxu0 0.0
  %5416 = vmatprep.subr.mxu0 0.0
  %5417 = vmatpush1.msra.mxu0 0.0
  %5418 = vmatprep.subr.mxu0 0.0
  %5419 = vmatpush1.msra.mxu0 0.0
  %5420 = vmatprep.subr.mxu0 0.0
  %5421 = vmatpush1.msra.mxu0 0.0
  %5422 = vmatprep.subr.mxu0 0.0
  %5423 = vmatpush1.msra.mxu0 0.0
  %5424 = vmatprep.subr.mxu0 0.0
  %5425 = vmatpush1.msra.mxu0 0.0
  %5426 = vmatprep.subr.mxu0 0.0
  %5427 = vmatpush1.msra.mxu0 0.0
  %5428 = vmatprep.subr.mxu0 0.0
  %5429 = vmatpush1.msra.mxu0 0.0
  %5430 = vmatprep.subr.mxu0 0.0
  %5431 = vmatpush1.msra.mxu0 0.0
  %5432 = vmatprep.subr.mxu0 0.0
  %5433 = vmatpush1.msra.mxu0 0.0
  %5434 = vmatprep.subr.mxu0 0.0
  %5435 = vmatpush1.msra.mxu0 0.0
  %5436 = vmatprep.subr.mxu0 0.0
  %5437 = vmatpush1.msra.mxu0 0.0
  %5438 = vmatprep.subr.mxu0 0.0
  %5439 = vmatpush1.msra.mxu0 0.0
  %5440 = vmatprep.subr.mxu0 0.0
  %5441 = vmatpush1.msra.mxu0 0.0
  %5442 = vmatprep.subr.mxu0 0.0
  %5443 = vmatpush1.msra.mxu0 0.0
  %5444 = vmatprep.subr.mxu0 0.0
  %5445 = vmatpush1.msra.mxu0 0.0
  %5446 = vmatprep.subr.mxu0 0.0
  %5447 = vmatpush1.msra.mxu0 0.0
  %5448 = vmatprep.subr.mxu0 0.0
  %5449 = vmatpush1.msra.mxu0 0.0
  %5450 = vmatprep.subr.mxu0 0.0
  %5451 = vmatpush1.msra.mxu0 0.0
  %5452 = vmatprep.subr.mxu0 0.0
  %5453 = vmatpush1.msra.mxu0 0.0
  %5454 = vmatprep.subr.mxu0 0.0
  %5455 = vmatpush1.msra.mxu0 0.0
  %5456 = vmatprep.subr.mxu0 0.0
  %5457 = vmatpush1.msra.mxu0 0.0
  %5458 = vmatprep.subr.mxu0 0.0
  %5459 = vmatpush1.msra.mxu0 0.0
  %5460 = vmatprep.subr.mxu0 0.0
  %5461 = vmatpush1.msra.mxu0 0.0
  %5462 = vmatprep.subr.mxu0 0.0
  %5463 = vmatpush1.msra.mxu0 0.0
  %5464 = vmatprep.subr.mxu0 0.0
  %5465 = vmatpush1.msra.mxu0 0.0
  %5466 = vmatprep.mubr.f32.mxu0 0.0
  %v5467 = vand.u32 %v5222, 4294901760
  %v5468 = vsub.f32 %v5222, %v5467
  %5469 = vmatmul.mubr.f32.gmra.mrb[0].mxu0 %v5468
  %v5470 = vpop.f32.mrb[0].mxu0
  %v5471 = vadd.f32 %v5391, %v5470
  %v5472 = vpop.f32.mrb[0].mxu0
  %5473 = vdwg.mxu0
  %5474 = vmatprep.subr.mxu0 0.0
  %v5475 = vand.u32 %v43, 4294901760
  %5476 = vmatpush1.msra.mxu0 %v5475
  %5477 = vmatprep.subr.mxu0 0.0
  %v5478 = vand.u32 %v44, 4294901760
  %5479 = vmatpush1.msra.mxu0 %v5478
  %5480 = vmatprep.subr.mxu0 0.0
  %v5481 = vand.u32 %v45, 4294901760
  %5482 = vmatpush1.msra.mxu0 %v5481
  %5483 = vmatprep.subr.mxu0 0.0
  %v5484 = vand.u32 %v46, 4294901760
  %5485 = vmatpush1.msra.mxu0 %v5484
  %5486 = vmatprep.subr.mxu0 0.0
  %5487 = vmatpush1.msra.mxu0 0.0
  %5488 = vmatprep.subr.mxu0 0.0
  %5489 = vmatpush1.msra.mxu0 0.0
  %5490 = vmatprep.subr.mxu0 0.0
  %5491 = vmatpush1.msra.mxu0 0.0
  %5492 = vmatprep.subr.mxu0 0.0
  %5493 = vmatpush1.msra.mxu0 0.0
  %5494 = vmatprep.subr.mxu0 0.0
  %5495 = vmatpush1.msra.mxu0 0.0
  %5496 = vmatprep.subr.mxu0 0.0
  %5497 = vmatpush1.msra.mxu0 0.0
  %5498 = vmatprep.subr.mxu0 0.0
  %5499 = vmatpush1.msra.mxu0 0.0
  %5500 = vmatprep.subr.mxu0 0.0
  %5501 = vmatpush1.msra.mxu0 0.0
  %5502 = vmatprep.subr.mxu0 0.0
  %5503 = vmatpush1.msra.mxu0 0.0
  %5504 = vmatprep.subr.mxu0 0.0
  %5505 = vmatpush1.msra.mxu0 0.0
  %5506 = vmatprep.subr.mxu0 0.0
  %5507 = vmatpush1.msra.mxu0 0.0
  %5508 = vmatprep.subr.mxu0 0.0
  %5509 = vmatpush1.msra.mxu0 0.0
  %5510 = vmatprep.subr.mxu0 0.0
  %5511 = vmatpush1.msra.mxu0 0.0
  %5512 = vmatprep.subr.mxu0 0.0
  %5513 = vmatpush1.msra.mxu0 0.0
  %5514 = vmatprep.subr.mxu0 0.0
  %5515 = vmatpush1.msra.mxu0 0.0
  %5516 = vmatprep.subr.mxu0 0.0
  %5517 = vmatpush1.msra.mxu0 0.0
  %5518 = vmatprep.subr.mxu0 0.0
  %5519 = vmatpush1.msra.mxu0 0.0
  %5520 = vmatprep.subr.mxu0 0.0
  %5521 = vmatpush1.msra.mxu0 0.0
  %5522 = vmatprep.subr.mxu0 0.0
  %5523 = vmatpush1.msra.mxu0 0.0
  %5524 = vmatprep.subr.mxu0 0.0
  %5525 = vmatpush1.msra.mxu0 0.0
  %5526 = vmatprep.subr.mxu0 0.0
  %5527 = vmatpush1.msra.mxu0 0.0
  %5528 = vmatprep.subr.mxu0 0.0
  %5529 = vmatpush1.msra.mxu0 0.0
  %5530 = vmatprep.subr.mxu0 0.0
  %5531 = vmatpush1.msra.mxu0 0.0
  %5532 = vmatprep.subr.mxu0 0.0
  %5533 = vmatpush1.msra.mxu0 0.0
  %5534 = vmatprep.subr.mxu0 0.0
  %5535 = vmatpush1.msra.mxu0 0.0
  %5536 = vmatprep.subr.mxu0 0.0
  %5537 = vmatpush1.msra.mxu0 0.0
  %5538 = vmatprep.subr.mxu0 0.0
  %5539 = vmatpush1.msra.mxu0 0.0
  %5540 = vmatprep.subr.mxu0 0.0
  %5541 = vmatpush1.msra.mxu0 0.0
  %5542 = vmatprep.mubr.f32.mxu0 0.0
  %v5543 = vand.u32 %v5222, 4294901760
  %v5544 = vsub.f32 %v5222, %v5543
  %v5545 = vand.u32 %v5544, 4294901760
  %5546 = vmatmul.mubr.f32.gmra.mrb[0].mxu0 %v5545
  %v5547 = vpop.f32.mrb[0].mxu0
  %v5548 = vadd.f32 %v5471, %v5547
  %v5549 = vpop.f32.mrb[0].mxu0
  %5550 = vdwg.mxu0
  %5551 = vmatprep.subr.mxu0 0.0
  %v5552 = vand.u32 %v43, 4294901760
  %v5553 = vsub.f32 %v43, %v5552
  %v5554 = vand.u32 %v5553, 4294901760
  %5555 = vmatpush1.msra.mxu0 %v5554
  %5556 = vmatprep.subr.mxu0 0.0
  %v5557 = vand.u32 %v44, 4294901760
  %v5558 = vsub.f32 %v44, %v5557
  %v5559 = vand.u32 %v5558, 4294901760
  %5560 = vmatpush1.msra.mxu0 %v5559
  %5561 = vmatprep.subr.mxu0 0.0
  %v5562 = vand.u32 %v45, 4294901760
  %v5563 = vsub.f32 %v45, %v5562
  %v5564 = vand.u32 %v5563, 4294901760
  %5565 = vmatpush1.msra.mxu0 %v5564
  %5566 = vmatprep.subr.mxu0 0.0
  %v5567 = vand.u32 %v46, 4294901760
  %v5568 = vsub.f32 %v46, %v5567
  %v5569 = vand.u32 %v5568, 4294901760
  %5570 = vmatpush1.msra.mxu0 %v5569
  %5571 = vmatprep.subr.mxu0 0.0
  %5572 = vmatpush1.msra.mxu0 0.0
  %5573 = vmatprep.subr.mxu0 0.0
  %5574 = vmatpush1.msra.mxu0 0.0
  %5575 = vmatprep.subr.mxu0 0.0
  %5576 = vmatpush1.msra.mxu0 0.0
  %5577 = vmatprep.subr.mxu0 0.0
  %5578 = vmatpush1.msra.mxu0 0.0
  %5579 = vmatprep.subr.mxu0 0.0
  %5580 = vmatpush1.msra.mxu0 0.0
  %5581 = vmatprep.subr.mxu0 0.0
  %5582 = vmatpush1.msra.mxu0 0.0
  %5583 = vmatprep.subr.mxu0 0.0
  %5584 = vmatpush1.msra.mxu0 0.0
  %5585 = vmatprep.subr.mxu0 0.0
  %5586 = vmatpush1.msra.mxu0 0.0
  %5587 = vmatprep.subr.mxu0 0.0
  %5588 = vmatpush1.msra.mxu0 0.0
  %5589 = vmatprep.subr.mxu0 0.0
  %5590 = vmatpush1.msra.mxu0 0.0
  %5591 = vmatprep.subr.mxu0 0.0
  %5592 = vmatpush1.msra.mxu0 0.0
  %5593 = vmatprep.subr.mxu0 0.0
  %5594 = vmatpush1.msra.mxu0 0.0
  %5595 = vmatprep.subr.mxu0 0.0
  %5596 = vmatpush1.msra.mxu0 0.0
  %5597 = vmatprep.subr.mxu0 0.0
  %5598 = vmatpush1.msra.mxu0 0.0
  %5599 = vmatprep.subr.mxu0 0.0
  %5600 = vmatpush1.msra.mxu0 0.0
  %5601 = vmatprep.subr.mxu0 0.0
  %5602 = vmatpush1.msra.mxu0 0.0
  %5603 = vmatprep.subr.mxu0 0.0
  %5604 = vmatpush1.msra.mxu0 0.0
  %5605 = vmatprep.subr.mxu0 0.0
  %5606 = vmatpush1.msra.mxu0 0.0
  %5607 = vmatprep.subr.mxu0 0.0
  %5608 = vmatpush1.msra.mxu0 0.0
  %5609 = vmatprep.subr.mxu0 0.0
  %5610 = vmatpush1.msra.mxu0 0.0
  %5611 = vmatprep.subr.mxu0 0.0
  %5612 = vmatpush1.msra.mxu0 0.0
  %5613 = vmatprep.subr.mxu0 0.0
  %5614 = vmatpush1.msra.mxu0 0.0
  %5615 = vmatprep.subr.mxu0 0.0
  %5616 = vmatpush1.msra.mxu0 0.0
  %5617 = vmatprep.subr.mxu0 0.0
  %5618 = vmatpush1.msra.mxu0 0.0
  %5619 = vmatprep.subr.mxu0 0.0
  %5620 = vmatpush1.msra.mxu0 0.0
  %5621 = vmatprep.subr.mxu0 0.0
  %5622 = vmatpush1.msra.mxu0 0.0
  %5623 = vmatprep.subr.mxu0 0.0
  %5624 = vmatpush1.msra.mxu0 0.0
  %5625 = vmatprep.subr.mxu0 0.0
  %5626 = vmatpush1.msra.mxu0 0.0
  %5627 = vmatprep.mubr.f32.mxu0 0.0
  %v5628 = vand.u32 %v5222, 4294901760
  %5629 = vmatmul.mubr.f32.gmra.mrb[0].mxu0 %v5628
  %v5630 = vpop.f32.mrb[0].mxu0
  %v5631 = vadd.f32 %v5548, %v5630
  %v5632 = vpop.f32.mrb[0].mxu0
  %5633 = vdwg.mxu0
  %5634 = vmatprep.subr.mxu0 0.0
  %v5635 = vand.u32 %v43, 4294901760
  %5636 = vmatpush1.msra.mxu0 %v5635
  %5637 = vmatprep.subr.mxu0 0.0
  %v5638 = vand.u32 %v44, 4294901760
  %5639 = vmatpush1.msra.mxu0 %v5638
  %5640 = vmatprep.subr.mxu0 0.0
  %v5641 = vand.u32 %v45, 4294901760
  %5642 = vmatpush1.msra.mxu0 %v5641
  %5643 = vmatprep.subr.mxu0 0.0
  %v5644 = vand.u32 %v46, 4294901760
  %5645 = vmatpush1.msra.mxu0 %v5644
  %5646 = vmatprep.subr.mxu0 0.0
  %5647 = vmatpush1.msra.mxu0 0.0
  %5648 = vmatprep.subr.mxu0 0.0
  %5649 = vmatpush1.msra.mxu0 0.0
  %5650 = vmatprep.subr.mxu0 0.0
  %5651 = vmatpush1.msra.mxu0 0.0
  %5652 = vmatprep.subr.mxu0 0.0
  %5653 = vmatpush1.msra.mxu0 0.0
  %5654 = vmatprep.subr.mxu0 0.0
  %5655 = vmatpush1.msra.mxu0 0.0
  %5656 = vmatprep.subr.mxu0 0.0
  %5657 = vmatpush1.msra.mxu0 0.0
  %5658 = vmatprep.subr.mxu0 0.0
  %5659 = vmatpush1.msra.mxu0 0.0
  %5660 = vmatprep.subr.mxu0 0.0
  %5661 = vmatpush1.msra.mxu0 0.0
  %5662 = vmatprep.subr.mxu0 0.0
  %5663 = vmatpush1.msra.mxu0 0.0
  %5664 = vmatprep.subr.mxu0 0.0
  %5665 = vmatpush1.msra.mxu0 0.0
  %5666 = vmatprep.subr.mxu0 0.0
  %5667 = vmatpush1.msra.mxu0 0.0
  %5668 = vmatprep.subr.mxu0 0.0
  %5669 = vmatpush1.msra.mxu0 0.0
  %5670 = vmatprep.subr.mxu0 0.0
  %5671 = vmatpush1.msra.mxu0 0.0
  %5672 = vmatprep.subr.mxu0 0.0
  %5673 = vmatpush1.msra.mxu0 0.0
  %5674 = vmatprep.subr.mxu0 0.0
  %5675 = vmatpush1.msra.mxu0 0.0
  %5676 = vmatprep.subr.mxu0 0.0
  %5677 = vmatpush1.msra.mxu0 0.0
  %5678 = vmatprep.subr.mxu0 0.0
  %5679 = vmatpush1.msra.mxu0 0.0
  %5680 = vmatprep.subr.mxu0 0.0
  %5681 = vmatpush1.msra.mxu0 0.0
  %5682 = vmatprep.subr.mxu0 0.0
  %5683 = vmatpush1.msra.mxu0 0.0
  %5684 = vmatprep.subr.mxu0 0.0
  %5685 = vmatpush1.msra.mxu0 0.0
  %5686 = vmatprep.subr.mxu0 0.0
  %5687 = vmatpush1.msra.mxu0 0.0
  %5688 = vmatprep.subr.mxu0 0.0
  %5689 = vmatpush1.msra.mxu0 0.0
  %5690 = vmatprep.subr.mxu0 0.0
  %5691 = vmatpush1.msra.mxu0 0.0
  %5692 = vmatprep.subr.mxu0 0.0
  %5693 = vmatpush1.msra.mxu0 0.0
  %5694 = vmatprep.subr.mxu0 0.0
  %5695 = vmatpush1.msra.mxu0 0.0
  %5696 = vmatprep.subr.mxu0 0.0
  %5697 = vmatpush1.msra.mxu0 0.0
  %5698 = vmatprep.subr.mxu0 0.0
  %5699 = vmatpush1.msra.mxu0 0.0
  %5700 = vmatprep.subr.mxu0 0.0
  %5701 = vmatpush1.msra.mxu0 0.0
  %5702 = vmatprep.mubr.f32.mxu0 0.0
  %v5703 = vand.u32 %v5222, 4294901760
  %5704 = vmatmul.mubr.f32.gmra.mrb[0].mxu0 %v5703
  %v5705 = vpop.f32.mrb[0].mxu0
  %v5706 = vadd.f32 %v5631, %v5705
  %v5707 = vpop.f32.mrb[0].mxu0
  %5708 = vdwg.mxu0
  %5710 = vrot.lane.b32.xlu0 %v4698, 32
  %v5711 = vpop.permute.xlu0 %5710
  %v5712 = vsel %vm117, %v5711, 0
  %5714 = vmatprep.subr.mxu0 0.0
  %v5715 = vand.u32 %v51, 4294901760
  %5716 = vmatpush1.msra.mxu0 %v5715
  %5717 = vmatprep.subr.mxu0 0.0
  %v5718 = vand.u32 %v52, 4294901760
  %5719 = vmatpush1.msra.mxu0 %v5718
  %5720 = vmatprep.subr.mxu0 0.0
  %v5721 = vand.u32 %v53, 4294901760
  %5722 = vmatpush1.msra.mxu0 %v5721
  %5723 = vmatprep.subr.mxu0 0.0
  %v5724 = vand.u32 %v54, 4294901760
  %5725 = vmatpush1.msra.mxu0 %v5724
  %5726 = vmatprep.subr.mxu0 0.0
  %5727 = vmatpush1.msra.mxu0 0.0
  %5728 = vmatprep.subr.mxu0 0.0
  %5729 = vmatpush1.msra.mxu0 0.0
  %5730 = vmatprep.subr.mxu0 0.0
  %5731 = vmatpush1.msra.mxu0 0.0
  %5732 = vmatprep.subr.mxu0 0.0
  %5733 = vmatpush1.msra.mxu0 0.0
  %5734 = vmatprep.subr.mxu0 0.0
  %5735 = vmatpush1.msra.mxu0 0.0
  %5736 = vmatprep.subr.mxu0 0.0
  %5737 = vmatpush1.msra.mxu0 0.0
  %5738 = vmatprep.subr.mxu0 0.0
  %5739 = vmatpush1.msra.mxu0 0.0
  %5740 = vmatprep.subr.mxu0 0.0
  %5741 = vmatpush1.msra.mxu0 0.0
  %5742 = vmatprep.subr.mxu0 0.0
  %5743 = vmatpush1.msra.mxu0 0.0
  %5744 = vmatprep.subr.mxu0 0.0
  %5745 = vmatpush1.msra.mxu0 0.0
  %5746 = vmatprep.subr.mxu0 0.0
  %5747 = vmatpush1.msra.mxu0 0.0
  %5748 = vmatprep.subr.mxu0 0.0
  %5749 = vmatpush1.msra.mxu0 0.0
  %5750 = vmatprep.subr.mxu0 0.0
  %5751 = vmatpush1.msra.mxu0 0.0
  %5752 = vmatprep.subr.mxu0 0.0
  %5753 = vmatpush1.msra.mxu0 0.0
  %5754 = vmatprep.subr.mxu0 0.0
  %5755 = vmatpush1.msra.mxu0 0.0
  %5756 = vmatprep.subr.mxu0 0.0
  %5757 = vmatpush1.msra.mxu0 0.0
  %5758 = vmatprep.subr.mxu0 0.0
  %5759 = vmatpush1.msra.mxu0 0.0
  %5760 = vmatprep.subr.mxu0 0.0
  %5761 = vmatpush1.msra.mxu0 0.0
  %5762 = vmatprep.subr.mxu0 0.0
  %5763 = vmatpush1.msra.mxu0 0.0
  %5764 = vmatprep.subr.mxu0 0.0
  %5765 = vmatpush1.msra.mxu0 0.0
  %5766 = vmatprep.subr.mxu0 0.0
  %5767 = vmatpush1.msra.mxu0 0.0
  %5768 = vmatprep.subr.mxu0 0.0
  %5769 = vmatpush1.msra.mxu0 0.0
  %5770 = vmatprep.subr.mxu0 0.0
  %5771 = vmatpush1.msra.mxu0 0.0
  %5772 = vmatprep.subr.mxu0 0.0
  %5773 = vmatpush1.msra.mxu0 0.0
  %5774 = vmatprep.subr.mxu0 0.0
  %5775 = vmatpush1.msra.mxu0 0.0
  %5776 = vmatprep.subr.mxu0 0.0
  %5777 = vmatpush1.msra.mxu0 0.0
  %5778 = vmatprep.subr.mxu0 0.0
  %5779 = vmatpush1.msra.mxu0 0.0
  %5780 = vmatprep.subr.mxu0 0.0
  %5781 = vmatpush1.msra.mxu0 0.0
  %5782 = vmatprep.mubr.f32.mxu0 0.0
  %v5783 = vand.u32 %v5712, 4294901760
  %v5784 = vsub.f32 %v5712, %v5783
  %v5785 = vand.u32 %v5784, 4294901760
  %v5786 = vsub.f32 %v5784, %v5785
  %v5787 = vand.u32 %v5786, 4294901760
  %5788 = vmatmul.mubr.f32.gmra.mrb[0].mxu0 %v5787
  %v5789 = vpop.f32.mrb[0].mxu0
  %v5790 = vadd.f32 0.0, %v5789
  %v5791 = vpop.f32.mrb[0].mxu0
  %5792 = vdwg.mxu0
  %5793 = vmatprep.subr.mxu0 0.0
  %v5794 = vand.u32 %v51, 4294901760
  %v5795 = vsub.f32 %v51, %v5794
  %v5796 = vand.u32 %v5795, 4294901760
  %v5797 = vsub.f32 %v5795, %v5796
  %v5798 = vand.u32 %v5797, 4294901760
  %5799 = vmatpush1.msra.mxu0 %v5798
  %5800 = vmatprep.subr.mxu0 0.0
  %v5801 = vand.u32 %v52, 4294901760
  %v5802 = vsub.f32 %v52, %v5801
  %v5803 = vand.u32 %v5802, 4294901760
  %v5804 = vsub.f32 %v5802, %v5803
  %v5805 = vand.u32 %v5804, 4294901760
  %5806 = vmatpush1.msra.mxu0 %v5805
  %5807 = vmatprep.subr.mxu0 0.0
  %v5808 = vand.u32 %v53, 4294901760
  %v5809 = vsub.f32 %v53, %v5808
  %v5810 = vand.u32 %v5809, 4294901760
  %v5811 = vsub.f32 %v5809, %v5810
  %v5812 = vand.u32 %v5811, 4294901760
  %5813 = vmatpush1.msra.mxu0 %v5812
  %5814 = vmatprep.subr.mxu0 0.0
  %v5815 = vand.u32 %v54, 4294901760
  %v5816 = vsub.f32 %v54, %v5815
  %v5817 = vand.u32 %v5816, 4294901760
  %v5818 = vsub.f32 %v5816, %v5817
  %v5819 = vand.u32 %v5818, 4294901760
  %5820 = vmatpush1.msra.mxu0 %v5819
  %5821 = vmatprep.subr.mxu0 0.0
  %5822 = vmatpush1.msra.mxu0 0.0
  %5823 = vmatprep.subr.mxu0 0.0
  %5824 = vmatpush1.msra.mxu0 0.0
  %5825 = vmatprep.subr.mxu0 0.0
  %5826 = vmatpush1.msra.mxu0 0.0
  %5827 = vmatprep.subr.mxu0 0.0
  %5828 = vmatpush1.msra.mxu0 0.0
  %5829 = vmatprep.subr.mxu0 0.0
  %5830 = vmatpush1.msra.mxu0 0.0
  %5831 = vmatprep.subr.mxu0 0.0
  %5832 = vmatpush1.msra.mxu0 0.0
  %5833 = vmatprep.subr.mxu0 0.0
  %5834 = vmatpush1.msra.mxu0 0.0
  %5835 = vmatprep.subr.mxu0 0.0
  %5836 = vmatpush1.msra.mxu0 0.0
  %5837 = vmatprep.subr.mxu0 0.0
  %5838 = vmatpush1.msra.mxu0 0.0
  %5839 = vmatprep.subr.mxu0 0.0
  %5840 = vmatpush1.msra.mxu0 0.0
  %5841 = vmatprep.subr.mxu0 0.0
  %5842 = vmatpush1.msra.mxu0 0.0
  %5843 = vmatprep.subr.mxu0 0.0
  %5844 = vmatpush1.msra.mxu0 0.0
  %5845 = vmatprep.subr.mxu0 0.0
  %5846 = vmatpush1.msra.mxu0 0.0
  %5847 = vmatprep.subr.mxu0 0.0
  %5848 = vmatpush1.msra.mxu0 0.0
  %5849 = vmatprep.subr.mxu0 0.0
  %5850 = vmatpush1.msra.mxu0 0.0
  %5851 = vmatprep.subr.mxu0 0.0
  %5852 = vmatpush1.msra.mxu0 0.0
  %5853 = vmatprep.subr.mxu0 0.0
  %5854 = vmatpush1.msra.mxu0 0.0
  %5855 = vmatprep.subr.mxu0 0.0
  %5856 = vmatpush1.msra.mxu0 0.0
  %5857 = vmatprep.subr.mxu0 0.0
  %5858 = vmatpush1.msra.mxu0 0.0
  %5859 = vmatprep.subr.mxu0 0.0
  %5860 = vmatpush1.msra.mxu0 0.0
  %5861 = vmatprep.subr.mxu0 0.0
  %5862 = vmatpush1.msra.mxu0 0.0
  %5863 = vmatprep.subr.mxu0 0.0
  %5864 = vmatpush1.msra.mxu0 0.0
  %5865 = vmatprep.subr.mxu0 0.0
  %5866 = vmatpush1.msra.mxu0 0.0
  %5867 = vmatprep.subr.mxu0 0.0
  %5868 = vmatpush1.msra.mxu0 0.0
  %5869 = vmatprep.subr.mxu0 0.0
  %5870 = vmatpush1.msra.mxu0 0.0
  %5871 = vmatprep.subr.mxu0 0.0
  %5872 = vmatpush1.msra.mxu0 0.0
  %5873 = vmatprep.subr.mxu0 0.0
  %5874 = vmatpush1.msra.mxu0 0.0
  %5875 = vmatprep.subr.mxu0 0.0
  %5876 = vmatpush1.msra.mxu0 0.0
  %5877 = vmatprep.mubr.f32.mxu0 0.0
  %v5878 = vand.u32 %v5712, 4294901760
  %5879 = vmatmul.mubr.f32.gmra.mrb[0].mxu0 %v5878
  %v5880 = vpop.f32.mrb[0].mxu0
  %v5881 = vadd.f32 %v5790, %v5880
  %v5882 = vpop.f32.mrb[0].mxu0
  %5883 = vdwg.mxu0
  %5884 = vmatprep.subr.mxu0 0.0
  %v5885 = vand.u32 %v51, 4294901760
  %v5886 = vsub.f32 %v51, %v5885
  %5887 = vmatpush1.msra.mxu0 %v5886
  %5888 = vmatprep.subr.mxu0 0.0
  %v5889 = vand.u32 %v52, 4294901760
  %v5890 = vsub.f32 %v52, %v5889
  %5891 = vmatpush1.msra.mxu0 %v5890
  %5892 = vmatprep.subr.mxu0 0.0
  %v5893 = vand.u32 %v53, 4294901760
  %v5894 = vsub.f32 %v53, %v5893
  %5895 = vmatpush1.msra.mxu0 %v5894
  %5896 = vmatprep.subr.mxu0 0.0
  %v5897 = vand.u32 %v54, 4294901760
  %v5898 = vsub.f32 %v54, %v5897
  %5899 = vmatpush1.msra.mxu0 %v5898
  %5900 = vmatprep.subr.mxu0 0.0
  %5901 = vmatpush1.msra.mxu0 0.0
  %5902 = vmatprep.subr.mxu0 0.0
  %5903 = vmatpush1.msra.mxu0 0.0
  %5904 = vmatprep.subr.mxu0 0.0
  %5905 = vmatpush1.msra.mxu0 0.0
  %5906 = vmatprep.subr.mxu0 0.0
  %5907 = vmatpush1.msra.mxu0 0.0
  %5908 = vmatprep.subr.mxu0 0.0
  %5909 = vmatpush1.msra.mxu0 0.0
  %5910 = vmatprep.subr.mxu0 0.0
  %5911 = vmatpush1.msra.mxu0 0.0
  %5912 = vmatprep.subr.mxu0 0.0
  %5913 = vmatpush1.msra.mxu0 0.0
  %5914 = vmatprep.subr.mxu0 0.0
  %5915 = vmatpush1.msra.mxu0 0.0
  %5916 = vmatprep.subr.mxu0 0.0
  %5917 = vmatpush1.msra.mxu0 0.0
  %5918 = vmatprep.subr.mxu0 0.0
  %5919 = vmatpush1.msra.mxu0 0.0
  %5920 = vmatprep.subr.mxu0 0.0
  %5921 = vmatpush1.msra.mxu0 0.0
  %5922 = vmatprep.subr.mxu0 0.0
  %5923 = vmatpush1.msra.mxu0 0.0
  %5924 = vmatprep.subr.mxu0 0.0
  %5925 = vmatpush1.msra.mxu0 0.0
  %5926 = vmatprep.subr.mxu0 0.0
  %5927 = vmatpush1.msra.mxu0 0.0
  %5928 = vmatprep.subr.mxu0 0.0
  %5929 = vmatpush1.msra.mxu0 0.0
  %5930 = vmatprep.subr.mxu0 0.0
  %5931 = vmatpush1.msra.mxu0 0.0
  %5932 = vmatprep.subr.mxu0 0.0
  %5933 = vmatpush1.msra.mxu0 0.0
  %5934 = vmatprep.subr.mxu0 0.0
  %5935 = vmatpush1.msra.mxu0 0.0
  %5936 = vmatprep.subr.mxu0 0.0
  %5937 = vmatpush1.msra.mxu0 0.0
  %5938 = vmatprep.subr.mxu0 0.0
  %5939 = vmatpush1.msra.mxu0 0.0
  %5940 = vmatprep.subr.mxu0 0.0
  %5941 = vmatpush1.msra.mxu0 0.0
  %5942 = vmatprep.subr.mxu0 0.0
  %5943 = vmatpush1.msra.mxu0 0.0
  %5944 = vmatprep.subr.mxu0 0.0
  %5945 = vmatpush1.msra.mxu0 0.0
  %5946 = vmatprep.subr.mxu0 0.0
  %5947 = vmatpush1.msra.mxu0 0.0
  %5948 = vmatprep.subr.mxu0 0.0
  %5949 = vmatpush1.msra.mxu0 0.0
  %5950 = vmatprep.subr.mxu0 0.0
  %5951 = vmatpush1.msra.mxu0 0.0
  %5952 = vmatprep.subr.mxu0 0.0
  %5953 = vmatpush1.msra.mxu0 0.0
  %5954 = vmatprep.subr.mxu0 0.0
  %5955 = vmatpush1.msra.mxu0 0.0
  %5956 = vmatprep.mubr.f32.mxu0 0.0
  %v5957 = vand.u32 %v5712, 4294901760
  %v5958 = vsub.f32 %v5712, %v5957
  %5959 = vmatmul.mubr.f32.gmra.mrb[0].mxu0 %v5958
  %v5960 = vpop.f32.mrb[0].mxu0
  %v5961 = vadd.f32 %v5881, %v5960
  %v5962 = vpop.f32.mrb[0].mxu0
  %5963 = vdwg.mxu0
  %5964 = vmatprep.subr.mxu0 0.0
  %v5965 = vand.u32 %v51, 4294901760
  %5966 = vmatpush1.msra.mxu0 %v5965
  %5967 = vmatprep.subr.mxu0 0.0
  %v5968 = vand.u32 %v52, 4294901760
  %5969 = vmatpush1.msra.mxu0 %v5968
  %5970 = vmatprep.subr.mxu0 0.0
  %v5971 = vand.u32 %v53, 4294901760
  %5972 = vmatpush1.msra.mxu0 %v5971
  %5973 = vmatprep.subr.mxu0 0.0
  %v5974 = vand.u32 %v54, 4294901760
  %5975 = vmatpush1.msra.mxu0 %v5974
  %5976 = vmatprep.subr.mxu0 0.0
  %5977 = vmatpush1.msra.mxu0 0.0
  %5978 = vmatprep.subr.mxu0 0.0
  %5979 = vmatpush1.msra.mxu0 0.0
  %5980 = vmatprep.subr.mxu0 0.0
  %5981 = vmatpush1.msra.mxu0 0.0
  %5982 = vmatprep.subr.mxu0 0.0
  %5983 = vmatpush1.msra.mxu0 0.0
  %5984 = vmatprep.subr.mxu0 0.0
  %5985 = vmatpush1.msra.mxu0 0.0
  %5986 = vmatprep.subr.mxu0 0.0
  %5987 = vmatpush1.msra.mxu0 0.0
  %5988 = vmatprep.subr.mxu0 0.0
  %5989 = vmatpush1.msra.mxu0 0.0
  %5990 = vmatprep.subr.mxu0 0.0
  %5991 = vmatpush1.msra.mxu0 0.0
  %5992 = vmatprep.subr.mxu0 0.0
  %5993 = vmatpush1.msra.mxu0 0.0
  %5994 = vmatprep.subr.mxu0 0.0
  %5995 = vmatpush1.msra.mxu0 0.0
  %5996 = vmatprep.subr.mxu0 0.0
  %5997 = vmatpush1.msra.mxu0 0.0
  %5998 = vmatprep.subr.mxu0 0.0
  %5999 = vmatpush1.msra.mxu0 0.0
  %6000 = vmatprep.subr.mxu0 0.0
  %6001 = vmatpush1.msra.mxu0 0.0
  %6002 = vmatprep.subr.mxu0 0.0
  %6003 = vmatpush1.msra.mxu0 0.0
  %6004 = vmatprep.subr.mxu0 0.0
  %6005 = vmatpush1.msra.mxu0 0.0
  %6006 = vmatprep.subr.mxu0 0.0
  %6007 = vmatpush1.msra.mxu0 0.0
  %6008 = vmatprep.subr.mxu0 0.0
  %6009 = vmatpush1.msra.mxu0 0.0
  %6010 = vmatprep.subr.mxu0 0.0
  %6011 = vmatpush1.msra.mxu0 0.0
  %6012 = vmatprep.subr.mxu0 0.0
  %6013 = vmatpush1.msra.mxu0 0.0
  %6014 = vmatprep.subr.mxu0 0.0
  %6015 = vmatpush1.msra.mxu0 0.0
  %6016 = vmatprep.subr.mxu0 0.0
  %6017 = vmatpush1.msra.mxu0 0.0
  %6018 = vmatprep.subr.mxu0 0.0
  %6019 = vmatpush1.msra.mxu0 0.0
  %6020 = vmatprep.subr.mxu0 0.0
  %6021 = vmatpush1.msra.mxu0 0.0
  %6022 = vmatprep.subr.mxu0 0.0
  %6023 = vmatpush1.msra.mxu0 0.0
  %6024 = vmatprep.subr.mxu0 0.0
  %6025 = vmatpush1.msra.mxu0 0.0
  %6026 = vmatprep.subr.mxu0 0.0
  %6027 = vmatpush1.msra.mxu0 0.0
  %6028 = vmatprep.subr.mxu0 0.0
  %6029 = vmatpush1.msra.mxu0 0.0
  %6030 = vmatprep.subr.mxu0 0.0
  %6031 = vmatpush1.msra.mxu0 0.0
  %6032 = vmatprep.mubr.f32.mxu0 0.0
  %v6033 = vand.u32 %v5712, 4294901760
  %v6034 = vsub.f32 %v5712, %v6033
  %v6035 = vand.u32 %v6034, 4294901760
  %6036 = vmatmul.mubr.f32.gmra.mrb[0].mxu0 %v6035
  %v6037 = vpop.f32.mrb[0].mxu0
  %v6038 = vadd.f32 %v5961, %v6037
  %v6039 = vpop.f32.mrb[0].mxu0
  %6040 = vdwg.mxu0
  %6041 = vmatprep.subr.mxu0 0.0
  %v6042 = vand.u32 %v51, 4294901760
  %v6043 = vsub.f32 %v51, %v6042
  %v6044 = vand.u32 %v6043, 4294901760
  %6045 = vmatpush1.msra.mxu0 %v6044
  %6046 = vmatprep.subr.mxu0 0.0
  %v6047 = vand.u32 %v52, 4294901760
  %v6048 = vsub.f32 %v52, %v6047
  %v6049 = vand.u32 %v6048, 4294901760
  %6050 = vmatpush1.msra.mxu0 %v6049
  %6051 = vmatprep.subr.mxu0 0.0
  %v6052 = vand.u32 %v53, 4294901760
  %v6053 = vsub.f32 %v53, %v6052
  %v6054 = vand.u32 %v6053, 4294901760
  %6055 = vmatpush1.msra.mxu0 %v6054
  %6056 = vmatprep.subr.mxu0 0.0
  %v6057 = vand.u32 %v54, 4294901760
  %v6058 = vsub.f32 %v54, %v6057
  %v6059 = vand.u32 %v6058, 4294901760
  %6060 = vmatpush1.msra.mxu0 %v6059
  %6061 = vmatprep.subr.mxu0 0.0
  %6062 = vmatpush1.msra.mxu0 0.0
  %6063 = vmatprep.subr.mxu0 0.0
  %6064 = vmatpush1.msra.mxu0 0.0
  %6065 = vmatprep.subr.mxu0 0.0
  %6066 = vmatpush1.msra.mxu0 0.0
  %6067 = vmatprep.subr.mxu0 0.0
  %6068 = vmatpush1.msra.mxu0 0.0
  %6069 = vmatprep.subr.mxu0 0.0
  %6070 = vmatpush1.msra.mxu0 0.0
  %6071 = vmatprep.subr.mxu0 0.0
  %6072 = vmatpush1.msra.mxu0 0.0
  %6073 = vmatprep.subr.mxu0 0.0
  %6074 = vmatpush1.msra.mxu0 0.0
  %6075 = vmatprep.subr.mxu0 0.0
  %6076 = vmatpush1.msra.mxu0 0.0
  %6077 = vmatprep.subr.mxu0 0.0
  %6078 = vmatpush1.msra.mxu0 0.0
  %6079 = vmatprep.subr.mxu0 0.0
  %6080 = vmatpush1.msra.mxu0 0.0
  %6081 = vmatprep.subr.mxu0 0.0
  %6082 = vmatpush1.msra.mxu0 0.0
  %6083 = vmatprep.subr.mxu0 0.0
  %6084 = vmatpush1.msra.mxu0 0.0
  %6085 = vmatprep.subr.mxu0 0.0
  %6086 = vmatpush1.msra.mxu0 0.0
  %6087 = vmatprep.subr.mxu0 0.0
  %6088 = vmatpush1.msra.mxu0 0.0
  %6089 = vmatprep.subr.mxu0 0.0
  %6090 = vmatpush1.msra.mxu0 0.0
  %6091 = vmatprep.subr.mxu0 0.0
  %6092 = vmatpush1.msra.mxu0 0.0
  %6093 = vmatprep.subr.mxu0 0.0
  %6094 = vmatpush1.msra.mxu0 0.0
  %6095 = vmatprep.subr.mxu0 0.0
  %6096 = vmatpush1.msra.mxu0 0.0
  %6097 = vmatprep.subr.mxu0 0.0
  %6098 = vmatpush1.msra.mxu0 0.0
  %6099 = vmatprep.subr.mxu0 0.0
  %6100 = vmatpush1.msra.mxu0 0.0
  %6101 = vmatprep.subr.mxu0 0.0
  %6102 = vmatpush1.msra.mxu0 0.0
  %6103 = vmatprep.subr.mxu0 0.0
  %6104 = vmatpush1.msra.mxu0 0.0
  %6105 = vmatprep.subr.mxu0 0.0
  %6106 = vmatpush1.msra.mxu0 0.0
  %6107 = vmatprep.subr.mxu0 0.0
  %6108 = vmatpush1.msra.mxu0 0.0
  %6109 = vmatprep.subr.mxu0 0.0
  %6110 = vmatpush1.msra.mxu0 0.0
  %6111 = vmatprep.subr.mxu0 0.0
  %6112 = vmatpush1.msra.mxu0 0.0
  %6113 = vmatprep.subr.mxu0 0.0
  %6114 = vmatpush1.msra.mxu0 0.0
  %6115 = vmatprep.subr.mxu0 0.0
  %6116 = vmatpush1.msra.mxu0 0.0
  %6117 = vmatprep.mubr.f32.mxu0 0.0
  %v6118 = vand.u32 %v5712, 4294901760
  %6119 = vmatmul.mubr.f32.gmra.mrb[0].mxu0 %v6118
  %v6120 = vpop.f32.mrb[0].mxu0
  %v6121 = vadd.f32 %v6038, %v6120
  %v6122 = vpop.f32.mrb[0].mxu0
  %6123 = vdwg.mxu0
  %6124 = vmatprep.subr.mxu0 0.0
  %v6125 = vand.u32 %v51, 4294901760
  %6126 = vmatpush1.msra.mxu0 %v6125
  %6127 = vmatprep.subr.mxu0 0.0
  %v6128 = vand.u32 %v52, 4294901760
  %6129 = vmatpush1.msra.mxu0 %v6128
  %6130 = vmatprep.subr.mxu0 0.0
  %v6131 = vand.u32 %v53, 4294901760
  %6132 = vmatpush1.msra.mxu0 %v6131
  %6133 = vmatprep.subr.mxu0 0.0
  %v6134 = vand.u32 %v54, 4294901760
  %6135 = vmatpush1.msra.mxu0 %v6134
  %6136 = vmatprep.subr.mxu0 0.0
  %6137 = vmatpush1.msra.mxu0 0.0
  %6138 = vmatprep.subr.mxu0 0.0
  %6139 = vmatpush1.msra.mxu0 0.0
  %6140 = vmatprep.subr.mxu0 0.0
  %6141 = vmatpush1.msra.mxu0 0.0
  %6142 = vmatprep.subr.mxu0 0.0
  %6143 = vmatpush1.msra.mxu0 0.0
  %6144 = vmatprep.subr.mxu0 0.0
  %6145 = vmatpush1.msra.mxu0 0.0
  %6146 = vmatprep.subr.mxu0 0.0
  %6147 = vmatpush1.msra.mxu0 0.0
  %6148 = vmatprep.subr.mxu0 0.0
  %6149 = vmatpush1.msra.mxu0 0.0
  %6150 = vmatprep.subr.mxu0 0.0
  %6151 = vmatpush1.msra.mxu0 0.0
  %6152 = vmatprep.subr.mxu0 0.0
  %6153 = vmatpush1.msra.mxu0 0.0
  %6154 = vmatprep.subr.mxu0 0.0
  %6155 = vmatpush1.msra.mxu0 0.0
  %6156 = vmatprep.subr.mxu0 0.0
  %6157 = vmatpush1.msra.mxu0 0.0
  %6158 = vmatprep.subr.mxu0 0.0
  %6159 = vmatpush1.msra.mxu0 0.0
  %6160 = vmatprep.subr.mxu0 0.0
  %6161 = vmatpush1.msra.mxu0 0.0
  %6162 = vmatprep.subr.mxu0 0.0
  %6163 = vmatpush1.msra.mxu0 0.0
  %6164 = vmatprep.subr.mxu0 0.0
  %6165 = vmatpush1.msra.mxu0 0.0
  %6166 = vmatprep.subr.mxu0 0.0
  %6167 = vmatpush1.msra.mxu0 0.0
  %6168 = vmatprep.subr.mxu0 0.0
  %6169 = vmatpush1.msra.mxu0 0.0
  %6170 = vmatprep.subr.mxu0 0.0
  %6171 = vmatpush1.msra.mxu0 0.0
  %6172 = vmatprep.subr.mxu0 0.0
  %6173 = vmatpush1.msra.mxu0 0.0
  %6174 = vmatprep.subr.mxu0 0.0
  %6175 = vmatpush1.msra.mxu0 0.0
  %6176 = vmatprep.subr.mxu0 0.0
  %6177 = vmatpush1.msra.mxu0 0.0
  %6178 = vmatprep.subr.mxu0 0.0
  %6179 = vmatpush1.msra.mxu0 0.0
  %6180 = vmatprep.subr.mxu0 0.0
  %6181 = vmatpush1.msra.mxu0 0.0
  %6182 = vmatprep.subr.mxu0 0.0
  %6183 = vmatpush1.msra.mxu0 0.0
  %6184 = vmatprep.subr.mxu0 0.0
  %6185 = vmatpush1.msra.mxu0 0.0
  %6186 = vmatprep.subr.mxu0 0.0
  %6187 = vmatpush1.msra.mxu0 0.0
  %6188 = vmatprep.subr.mxu0 0.0
  %6189 = vmatpush1.msra.mxu0 0.0
  %6190 = vmatprep.subr.mxu0 0.0
  %6191 = vmatpush1.msra.mxu0 0.0
  %6192 = vmatprep.mubr.f32.mxu0 0.0
  %v6193 = vand.u32 %v5712, 4294901760
  %6194 = vmatmul.mubr.f32.gmra.mrb[0].mxu0 %v6193
  %v6195 = vpop.f32.mrb[0].mxu0
  %v6196 = vadd.f32 %v6121, %v6195
  %v6197 = vpop.f32.mrb[0].mxu0
  %6198 = vdwg.mxu0
  %v6199 = vadd.f32 %v5706, %v6196
  %v6200 = vmul.f32 %v6199, %v40
  %v6201 = vxor.u32 %v6200, 2147483648
  %v6202 = vmul.f32 %v6201, 1.442695
  %v6203 = vpow.pop %v6202
  %v6204 = vadd.f32 %v6203, 1.0
  %v6205 = vrcp.pop %v6204
  %v6206 = vmul.f32 1.0, %v6205
  %v6207 = vmul.f32 %v6206, 2.0
  %v6208 = vsub.f32 %v6207, 1.0
  %v6209 = vsel %vm39, %v6208, %v6206
  %v6210 = vmul.f32 %v6209, %v4692
  %6212 = vrot.lane.b32.xlu0 %v6209, 64
  %v6213 = vpop.permute.xlu0 %6212
  %v6215 = vmul.f32 %v6209, %v6213
  %6217 = vrot.lane.b32.xlu0 %v6215, 32
  %v6218 = vpop.permute.xlu0 %6217
  %v6220 = vadd.f32 %v6210, %v6218
  %v6221 = vtanh.pop %v6220
  %6223 = vrot.lane.b32.xlu0 %v6221, 64
  %v6224 = vpop.permute.xlu0 %6223
  %v6226 = vmul.f32 %v6209, %v6224
  %6227 = vmatprep.subr.mxu0 0.0
  %v6228 = vand.u32 %v47, 4294901760
  %6229 = vmatpush1.msra.mxu0 %v6228
  %6230 = vmatprep.subr.mxu0 0.0
  %v6231 = vand.u32 %v48, 4294901760
  %6232 = vmatpush1.msra.mxu0 %v6231
  %6233 = vmatprep.subr.mxu0 0.0
  %v6234 = vand.u32 %v49, 4294901760
  %6235 = vmatpush1.msra.mxu0 %v6234
  %6236 = vmatprep.subr.mxu0 0.0
  %v6237 = vand.u32 %v50, 4294901760
  %6238 = vmatpush1.msra.mxu0 %v6237
  %6239 = vmatprep.subr.mxu0 0.0
  %6240 = vmatpush1.msra.mxu0 0.0
  %6241 = vmatprep.subr.mxu0 0.0
  %6242 = vmatpush1.msra.mxu0 0.0
  %6243 = vmatprep.subr.mxu0 0.0
  %6244 = vmatpush1.msra.mxu0 0.0
  %6245 = vmatprep.subr.mxu0 0.0
  %6246 = vmatpush1.msra.mxu0 0.0
  %6247 = vmatprep.subr.mxu0 0.0
  %6248 = vmatpush1.msra.mxu0 0.0
  %6249 = vmatprep.subr.mxu0 0.0
  %6250 = vmatpush1.msra.mxu0 0.0
  %6251 = vmatprep.subr.mxu0 0.0
  %6252 = vmatpush1.msra.mxu0 0.0
  %6253 = vmatprep.subr.mxu0 0.0
  %6254 = vmatpush1.msra.mxu0 0.0
  %6255 = vmatprep.subr.mxu0 0.0
  %6256 = vmatpush1.msra.mxu0 0.0
  %6257 = vmatprep.subr.mxu0 0.0
  %6258 = vmatpush1.msra.mxu0 0.0
  %6259 = vmatprep.subr.mxu0 0.0
  %6260 = vmatpush1.msra.mxu0 0.0
  %6261 = vmatprep.subr.mxu0 0.0
  %6262 = vmatpush1.msra.mxu0 0.0
  %6263 = vmatprep.subr.mxu0 0.0
  %6264 = vmatpush1.msra.mxu0 0.0
  %6265 = vmatprep.subr.mxu0 0.0
  %6266 = vmatpush1.msra.mxu0 0.0
  %6267 = vmatprep.subr.mxu0 0.0
  %6268 = vmatpush1.msra.mxu0 0.0
  %6269 = vmatprep.subr.mxu0 0.0
  %6270 = vmatpush1.msra.mxu0 0.0
  %6271 = vmatprep.subr.mxu0 0.0
  %6272 = vmatpush1.msra.mxu0 0.0
  %6273 = vmatprep.subr.mxu0 0.0
  %6274 = vmatpush1.msra.mxu0 0.0
  %6275 = vmatprep.subr.mxu0 0.0
  %6276 = vmatpush1.msra.mxu0 0.0
  %6277 = vmatprep.subr.mxu0 0.0
  %6278 = vmatpush1.msra.mxu0 0.0
  %6279 = vmatprep.subr.mxu0 0.0
  %6280 = vmatpush1.msra.mxu0 0.0
  %6281 = vmatprep.subr.mxu0 0.0
  %6282 = vmatpush1.msra.mxu0 0.0
  %6283 = vmatprep.subr.mxu0 0.0
  %6284 = vmatpush1.msra.mxu0 0.0
  %6285 = vmatprep.subr.mxu0 0.0
  %6286 = vmatpush1.msra.mxu0 0.0
  %6287 = vmatprep.subr.mxu0 0.0
  %6288 = vmatpush1.msra.mxu0 0.0
  %6289 = vmatprep.subr.mxu0 0.0
  %6290 = vmatpush1.msra.mxu0 0.0
  %6291 = vmatprep.subr.mxu0 0.0
  %6292 = vmatpush1.msra.mxu0 0.0
  %6293 = vmatprep.subr.mxu0 0.0
  %6294 = vmatpush1.msra.mxu0 0.0
  %6295 = vmatprep.mubr.f32.mxu0 0.0
  %v6296 = vand.u32 %v5222, 4294901760
  %v6297 = vsub.f32 %v5222, %v6296
  %v6298 = vand.u32 %v6297, 4294901760
  %v6299 = vsub.f32 %v6297, %v6298
  %v6300 = vand.u32 %v6299, 4294901760
  %6301 = vmatmul.mubr.f32.gmra.mrb[0].mxu0 %v6300
  %v6302 = vpop.f32.mrb[0].mxu0
  %v6303 = vadd.f32 0.0, %v6302
  %v6304 = vpop.f32.mrb[0].mxu0
  %6305 = vdwg.mxu0
  %6306 = vmatprep.subr.mxu0 0.0
  %v6307 = vand.u32 %v47, 4294901760
  %v6308 = vsub.f32 %v47, %v6307
  %v6309 = vand.u32 %v6308, 4294901760
  %v6310 = vsub.f32 %v6308, %v6309
  %v6311 = vand.u32 %v6310, 4294901760
  %6312 = vmatpush1.msra.mxu0 %v6311
  %6313 = vmatprep.subr.mxu0 0.0
  %v6314 = vand.u32 %v48, 4294901760
  %v6315 = vsub.f32 %v48, %v6314
  %v6316 = vand.u32 %v6315, 4294901760
  %v6317 = vsub.f32 %v6315, %v6316
  %v6318 = vand.u32 %v6317, 4294901760
  %6319 = vmatpush1.msra.mxu0 %v6318
  %6320 = vmatprep.subr.mxu0 0.0
  %v6321 = vand.u32 %v49, 4294901760
  %v6322 = vsub.f32 %v49, %v6321
  %v6323 = vand.u32 %v6322, 4294901760
  %v6324 = vsub.f32 %v6322, %v6323
  %v6325 = vand.u32 %v6324, 4294901760
  %6326 = vmatpush1.msra.mxu0 %v6325
  %6327 = vmatprep.subr.mxu0 0.0
  %v6328 = vand.u32 %v50, 4294901760
  %v6329 = vsub.f32 %v50, %v6328
  %v6330 = vand.u32 %v6329, 4294901760
  %v6331 = vsub.f32 %v6329, %v6330
  %v6332 = vand.u32 %v6331, 4294901760
  %6333 = vmatpush1.msra.mxu0 %v6332
  %6334 = vmatprep.subr.mxu0 0.0
  %6335 = vmatpush1.msra.mxu0 0.0
  %6336 = vmatprep.subr.mxu0 0.0
  %6337 = vmatpush1.msra.mxu0 0.0
  %6338 = vmatprep.subr.mxu0 0.0
  %6339 = vmatpush1.msra.mxu0 0.0
  %6340 = vmatprep.subr.mxu0 0.0
  %6341 = vmatpush1.msra.mxu0 0.0
  %6342 = vmatprep.subr.mxu0 0.0
  %6343 = vmatpush1.msra.mxu0 0.0
  %6344 = vmatprep.subr.mxu0 0.0
  %6345 = vmatpush1.msra.mxu0 0.0
  %6346 = vmatprep.subr.mxu0 0.0
  %6347 = vmatpush1.msra.mxu0 0.0
  %6348 = vmatprep.subr.mxu0 0.0
  %6349 = vmatpush1.msra.mxu0 0.0
  %6350 = vmatprep.subr.mxu0 0.0
  %6351 = vmatpush1.msra.mxu0 0.0
  %6352 = vmatprep.subr.mxu0 0.0
  %6353 = vmatpush1.msra.mxu0 0.0
  %6354 = vmatprep.subr.mxu0 0.0
  %6355 = vmatpush1.msra.mxu0 0.0
  %6356 = vmatprep.subr.mxu0 0.0
  %6357 = vmatpush1.msra.mxu0 0.0
  %6358 = vmatprep.subr.mxu0 0.0
  %6359 = vmatpush1.msra.mxu0 0.0
  %6360 = vmatprep.subr.mxu0 0.0
  %6361 = vmatpush1.msra.mxu0 0.0
  %6362 = vmatprep.subr.mxu0 0.0
  %6363 = vmatpush1.msra.mxu0 0.0
  %6364 = vmatprep.subr.mxu0 0.0
  %6365 = vmatpush1.msra.mxu0 0.0
  %6366 = vmatprep.subr.mxu0 0.0
  %6367 = vmatpush1.msra.mxu0 0.0
  %6368 = vmatprep.subr.mxu0 0.0
  %6369 = vmatpush1.msra.mxu0 0.0
  %6370 = vmatprep.subr.mxu0 0.0
  %6371 = vmatpush1.msra.mxu0 0.0
  %6372 = vmatprep.subr.mxu0 0.0
  %6373 = vmatpush1.msra.mxu0 0.0
  %6374 = vmatprep.subr.mxu0 0.0
  %6375 = vmatpush1.msra.mxu0 0.0
  %6376 = vmatprep.subr.mxu0 0.0
  %6377 = vmatpush1.msra.mxu0 0.0
  %6378 = vmatprep.subr.mxu0 0.0
  %6379 = vmatpush1.msra.mxu0 0.0
  %6380 = vmatprep.subr.mxu0 0.0
  %6381 = vmatpush1.msra.mxu0 0.0
  %6382 = vmatprep.subr.mxu0 0.0
  %6383 = vmatpush1.msra.mxu0 0.0
  %6384 = vmatprep.subr.mxu0 0.0
  %6385 = vmatpush1.msra.mxu0 0.0
  %6386 = vmatprep.subr.mxu0 0.0
  %6387 = vmatpush1.msra.mxu0 0.0
  %6388 = vmatprep.subr.mxu0 0.0
  %6389 = vmatpush1.msra.mxu0 0.0
  %6390 = vmatprep.mubr.f32.mxu0 0.0
  %v6391 = vand.u32 %v5222, 4294901760
  %6392 = vmatmul.mubr.f32.gmra.mrb[0].mxu0 %v6391
  %v6393 = vpop.f32.mrb[0].mxu0
  %v6394 = vadd.f32 %v6303, %v6393
  %v6395 = vpop.f32.mrb[0].mxu0
  %6396 = vdwg.mxu0
  %6397 = vmatprep.subr.mxu0 0.0
  %v6398 = vand.u32 %v47, 4294901760
  %v6399 = vsub.f32 %v47, %v6398
  %6400 = vmatpush1.msra.mxu0 %v6399
  %6401 = vmatprep.subr.mxu0 0.0
  %v6402 = vand.u32 %v48, 4294901760
  %v6403 = vsub.f32 %v48, %v6402
  %6404 = vmatpush1.msra.mxu0 %v6403
  %6405 = vmatprep.subr.mxu0 0.0
  %v6406 = vand.u32 %v49, 4294901760
  %v6407 = vsub.f32 %v49, %v6406
  %6408 = vmatpush1.msra.mxu0 %v6407
  %6409 = vmatprep.subr.mxu0 0.0
  %v6410 = vand.u32 %v50, 4294901760
  %v6411 = vsub.f32 %v50, %v6410
  %6412 = vmatpush1.msra.mxu0 %v6411
  %6413 = vmatprep.subr.mxu0 0.0
  %6414 = vmatpush1.msra.mxu0 0.0
  %6415 = vmatprep.subr.mxu0 0.0
  %6416 = vmatpush1.msra.mxu0 0.0
  %6417 = vmatprep.subr.mxu0 0.0
  %6418 = vmatpush1.msra.mxu0 0.0
  %6419 = vmatprep.subr.mxu0 0.0
  %6420 = vmatpush1.msra.mxu0 0.0
  %6421 = vmatprep.subr.mxu0 0.0
  %6422 = vmatpush1.msra.mxu0 0.0
  %6423 = vmatprep.subr.mxu0 0.0
  %6424 = vmatpush1.msra.mxu0 0.0
  %6425 = vmatprep.subr.mxu0 0.0
  %6426 = vmatpush1.msra.mxu0 0.0
  %6427 = vmatprep.subr.mxu0 0.0
  %6428 = vmatpush1.msra.mxu0 0.0
  %6429 = vmatprep.subr.mxu0 0.0
  %6430 = vmatpush1.msra.mxu0 0.0
  %6431 = vmatprep.subr.mxu0 0.0
  %6432 = vmatpush1.msra.mxu0 0.0
  %6433 = vmatprep.subr.mxu0 0.0
  %6434 = vmatpush1.msra.mxu0 0.0
  %6435 = vmatprep.subr.mxu0 0.0
  %6436 = vmatpush1.msra.mxu0 0.0
  %6437 = vmatprep.subr.mxu0 0.0
  %6438 = vmatpush1.msra.mxu0 0.0
  %6439 = vmatprep.subr.mxu0 0.0
  %6440 = vmatpush1.msra.mxu0 0.0
  %6441 = vmatprep.subr.mxu0 0.0
  %6442 = vmatpush1.msra.mxu0 0.0
  %6443 = vmatprep.subr.mxu0 0.0
  %6444 = vmatpush1.msra.mxu0 0.0
  %6445 = vmatprep.subr.mxu0 0.0
  %6446 = vmatpush1.msra.mxu0 0.0
  %6447 = vmatprep.subr.mxu0 0.0
  %6448 = vmatpush1.msra.mxu0 0.0
  %6449 = vmatprep.subr.mxu0 0.0
  %6450 = vmatpush1.msra.mxu0 0.0
  %6451 = vmatprep.subr.mxu0 0.0
  %6452 = vmatpush1.msra.mxu0 0.0
  %6453 = vmatprep.subr.mxu0 0.0
  %6454 = vmatpush1.msra.mxu0 0.0
  %6455 = vmatprep.subr.mxu0 0.0
  %6456 = vmatpush1.msra.mxu0 0.0
  %6457 = vmatprep.subr.mxu0 0.0
  %6458 = vmatpush1.msra.mxu0 0.0
  %6459 = vmatprep.subr.mxu0 0.0
  %6460 = vmatpush1.msra.mxu0 0.0
  %6461 = vmatprep.subr.mxu0 0.0
  %6462 = vmatpush1.msra.mxu0 0.0
  %6463 = vmatprep.subr.mxu0 0.0
  %6464 = vmatpush1.msra.mxu0 0.0
  %6465 = vmatprep.subr.mxu0 0.0
  %6466 = vmatpush1.msra.mxu0 0.0
  %6467 = vmatprep.subr.mxu0 0.0
  %6468 = vmatpush1.msra.mxu0 0.0
  %6469 = vmatprep.mubr.f32.mxu0 0.0
  %v6470 = vand.u32 %v5222, 4294901760
  %v6471 = vsub.f32 %v5222, %v6470
  %6472 = vmatmul.mubr.f32.gmra.mrb[0].mxu0 %v6471
  %v6473 = vpop.f32.mrb[0].mxu0
  %v6474 = vadd.f32 %v6394, %v6473
  %v6475 = vpop.f32.mrb[0].mxu0
  %6476 = vdwg.mxu0
  %6477 = vmatprep.subr.mxu0 0.0
  %v6478 = vand.u32 %v47, 4294901760
  %6479 = vmatpush1.msra.mxu0 %v6478
  %6480 = vmatprep.subr.mxu0 0.0
  %v6481 = vand.u32 %v48, 4294901760
  %6482 = vmatpush1.msra.mxu0 %v6481
  %6483 = vmatprep.subr.mxu0 0.0
  %v6484 = vand.u32 %v49, 4294901760
  %6485 = vmatpush1.msra.mxu0 %v6484
  %6486 = vmatprep.subr.mxu0 0.0
  %v6487 = vand.u32 %v50, 4294901760
  %6488 = vmatpush1.msra.mxu0 %v6487
  %6489 = vmatprep.subr.mxu0 0.0
  %6490 = vmatpush1.msra.mxu0 0.0
  %6491 = vmatprep.subr.mxu0 0.0
  %6492 = vmatpush1.msra.mxu0 0.0
  %6493 = vmatprep.subr.mxu0 0.0
  %6494 = vmatpush1.msra.mxu0 0.0
  %6495 = vmatprep.subr.mxu0 0.0
  %6496 = vmatpush1.msra.mxu0 0.0
  %6497 = vmatprep.subr.mxu0 0.0
  %6498 = vmatpush1.msra.mxu0 0.0
  %6499 = vmatprep.subr.mxu0 0.0
  %6500 = vmatpush1.msra.mxu0 0.0
  %6501 = vmatprep.subr.mxu0 0.0
  %6502 = vmatpush1.msra.mxu0 0.0
  %6503 = vmatprep.subr.mxu0 0.0
  %6504 = vmatpush1.msra.mxu0 0.0
  %6505 = vmatprep.subr.mxu0 0.0
  %6506 = vmatpush1.msra.mxu0 0.0
  %6507 = vmatprep.subr.mxu0 0.0
  %6508 = vmatpush1.msra.mxu0 0.0
  %6509 = vmatprep.subr.mxu0 0.0
  %6510 = vmatpush1.msra.mxu0 0.0
  %6511 = vmatprep.subr.mxu0 0.0
  %6512 = vmatpush1.msra.mxu0 0.0
  %6513 = vmatprep.subr.mxu0 0.0
  %6514 = vmatpush1.msra.mxu0 0.0
  %6515 = vmatprep.subr.mxu0 0.0
  %6516 = vmatpush1.msra.mxu0 0.0
  %6517 = vmatprep.subr.mxu0 0.0
  %6518 = vmatpush1.msra.mxu0 0.0
  %6519 = vmatprep.subr.mxu0 0.0
  %6520 = vmatpush1.msra.mxu0 0.0
  %6521 = vmatprep.subr.mxu0 0.0
  %6522 = vmatpush1.msra.mxu0 0.0
  %6523 = vmatprep.subr.mxu0 0.0
  %6524 = vmatpush1.msra.mxu0 0.0
  %6525 = vmatprep.subr.mxu0 0.0
  %6526 = vmatpush1.msra.mxu0 0.0
  %6527 = vmatprep.subr.mxu0 0.0
  %6528 = vmatpush1.msra.mxu0 0.0
  %6529 = vmatprep.subr.mxu0 0.0
  %6530 = vmatpush1.msra.mxu0 0.0
  %6531 = vmatprep.subr.mxu0 0.0
  %6532 = vmatpush1.msra.mxu0 0.0
  %6533 = vmatprep.subr.mxu0 0.0
  %6534 = vmatpush1.msra.mxu0 0.0
  %6535 = vmatprep.subr.mxu0 0.0
  %6536 = vmatpush1.msra.mxu0 0.0
  %6537 = vmatprep.subr.mxu0 0.0
  %6538 = vmatpush1.msra.mxu0 0.0
  %6539 = vmatprep.subr.mxu0 0.0
  %6540 = vmatpush1.msra.mxu0 0.0
  %6541 = vmatprep.subr.mxu0 0.0
  %6542 = vmatpush1.msra.mxu0 0.0
  %6543 = vmatprep.subr.mxu0 0.0
  %6544 = vmatpush1.msra.mxu0 0.0
  %6545 = vmatprep.mubr.f32.mxu0 0.0
  %v6546 = vand.u32 %v5222, 4294901760
  %v6547 = vsub.f32 %v5222, %v6546
  %v6548 = vand.u32 %v6547, 4294901760
  %6549 = vmatmul.mubr.f32.gmra.mrb[0].mxu0 %v6548
  %v6550 = vpop.f32.mrb[0].mxu0
  %v6551 = vadd.f32 %v6474, %v6550
  %v6552 = vpop.f32.mrb[0].mxu0
  %6553 = vdwg.mxu0
  %6554 = vmatprep.subr.mxu0 0.0
  %v6555 = vand.u32 %v47, 4294901760
  %v6556 = vsub.f32 %v47, %v6555
  %v6557 = vand.u32 %v6556, 4294901760
  %6558 = vmatpush1.msra.mxu0 %v6557
  %6559 = vmatprep.subr.mxu0 0.0
  %v6560 = vand.u32 %v48, 4294901760
  %v6561 = vsub.f32 %v48, %v6560
  %v6562 = vand.u32 %v6561, 4294901760
  %6563 = vmatpush1.msra.mxu0 %v6562
  %6564 = vmatprep.subr.mxu0 0.0
  %v6565 = vand.u32 %v49, 4294901760
  %v6566 = vsub.f32 %v49, %v6565
  %v6567 = vand.u32 %v6566, 4294901760
  %6568 = vmatpush1.msra.mxu0 %v6567
  %6569 = vmatprep.subr.mxu0 0.0
  %v6570 = vand.u32 %v50, 4294901760
  %v6571 = vsub.f32 %v50, %v6570
  %v6572 = vand.u32 %v6571, 4294901760
  %6573 = vmatpush1.msra.mxu0 %v6572
  %6574 = vmatprep.subr.mxu0 0.0
  %6575 = vmatpush1.msra.mxu0 0.0
  %6576 = vmatprep.subr.mxu0 0.0
  %6577 = vmatpush1.msra.mxu0 0.0
  %6578 = vmatprep.subr.mxu0 0.0
  %6579 = vmatpush1.msra.mxu0 0.0
  %6580 = vmatprep.subr.mxu0 0.0
  %6581 = vmatpush1.msra.mxu0 0.0
  %6582 = vmatprep.subr.mxu0 0.0
  %6583 = vmatpush1.msra.mxu0 0.0
  %6584 = vmatprep.subr.mxu0 0.0
  %6585 = vmatpush1.msra.mxu0 0.0
  %6586 = vmatprep.subr.mxu0 0.0
  %6587 = vmatpush1.msra.mxu0 0.0
  %6588 = vmatprep.subr.mxu0 0.0
  %6589 = vmatpush1.msra.mxu0 0.0
  %6590 = vmatprep.subr.mxu0 0.0
  %6591 = vmatpush1.msra.mxu0 0.0
  %6592 = vmatprep.subr.mxu0 0.0
  %6593 = vmatpush1.msra.mxu0 0.0
  %6594 = vmatprep.subr.mxu0 0.0
  %6595 = vmatpush1.msra.mxu0 0.0
  %6596 = vmatprep.subr.mxu0 0.0
  %6597 = vmatpush1.msra.mxu0 0.0
  %6598 = vmatprep.subr.mxu0 0.0
  %6599 = vmatpush1.msra.mxu0 0.0
  %6600 = vmatprep.subr.mxu0 0.0
  %6601 = vmatpush1.msra.mxu0 0.0
  %6602 = vmatprep.subr.mxu0 0.0
  %6603 = vmatpush1.msra.mxu0 0.0
  %6604 = vmatprep.subr.mxu0 0.0
  %6605 = vmatpush1.msra.mxu0 0.0
  %6606 = vmatprep.subr.mxu0 0.0
  %6607 = vmatpush1.msra.mxu0 0.0
  %6608 = vmatprep.subr.mxu0 0.0
  %6609 = vmatpush1.msra.mxu0 0.0
  %6610 = vmatprep.subr.mxu0 0.0
  %6611 = vmatpush1.msra.mxu0 0.0
  %6612 = vmatprep.subr.mxu0 0.0
  %6613 = vmatpush1.msra.mxu0 0.0
  %6614 = vmatprep.subr.mxu0 0.0
  %6615 = vmatpush1.msra.mxu0 0.0
  %6616 = vmatprep.subr.mxu0 0.0
  %6617 = vmatpush1.msra.mxu0 0.0
  %6618 = vmatprep.subr.mxu0 0.0
  %6619 = vmatpush1.msra.mxu0 0.0
  %6620 = vmatprep.subr.mxu0 0.0
  %6621 = vmatpush1.msra.mxu0 0.0
  %6622 = vmatprep.subr.mxu0 0.0
  %6623 = vmatpush1.msra.mxu0 0.0
  %6624 = vmatprep.subr.mxu0 0.0
  %6625 = vmatpush1.msra.mxu0 0.0
  %6626 = vmatprep.subr.mxu0 0.0
  %6627 = vmatpush1.msra.mxu0 0.0
  %6628 = vmatprep.subr.mxu0 0.0
  %6629 = vmatpush1.msra.mxu0 0.0
  %6630 = vmatprep.mubr.f32.mxu0 0.0
  %v6631 = vand.u32 %v5222, 4294901760
  %6632 = vmatmul.mubr.f32.gmra.mrb[0].mxu0 %v6631
  %v6633 = vpop.f32.mrb[0].mxu0
  %v6634 = vadd.f32 %v6551, %v6633
  %v6635 = vpop.f32.mrb[0].mxu0
  %6636 = vdwg.mxu0
  %6637 = vmatprep.subr.mxu0 0.0
  %v6638 = vand.u32 %v47, 4294901760
  %6639 = vmatpush1.msra.mxu0 %v6638
  %6640 = vmatprep.subr.mxu0 0.0
  %v6641 = vand.u32 %v48, 4294901760
  %6642 = vmatpush1.msra.mxu0 %v6641
  %6643 = vmatprep.subr.mxu0 0.0
  %v6644 = vand.u32 %v49, 4294901760
  %6645 = vmatpush1.msra.mxu0 %v6644
  %6646 = vmatprep.subr.mxu0 0.0
  %v6647 = vand.u32 %v50, 4294901760
  %6648 = vmatpush1.msra.mxu0 %v6647
  %6649 = vmatprep.subr.mxu0 0.0
  %6650 = vmatpush1.msra.mxu0 0.0
  %6651 = vmatprep.subr.mxu0 0.0
  %6652 = vmatpush1.msra.mxu0 0.0
  %6653 = vmatprep.subr.mxu0 0.0
  %6654 = vmatpush1.msra.mxu0 0.0
  %6655 = vmatprep.subr.mxu0 0.0
  %6656 = vmatpush1.msra.mxu0 0.0
  %6657 = vmatprep.subr.mxu0 0.0
  %6658 = vmatpush1.msra.mxu0 0.0
  %6659 = vmatprep.subr.mxu0 0.0
  %6660 = vmatpush1.msra.mxu0 0.0
  %6661 = vmatprep.subr.mxu0 0.0
  %6662 = vmatpush1.msra.mxu0 0.0
  %6663 = vmatprep.subr.mxu0 0.0
  %6664 = vmatpush1.msra.mxu0 0.0
  %6665 = vmatprep.subr.mxu0 0.0
  %6666 = vmatpush1.msra.mxu0 0.0
  %6667 = vmatprep.subr.mxu0 0.0
  %6668 = vmatpush1.msra.mxu0 0.0
  %6669 = vmatprep.subr.mxu0 0.0
  %6670 = vmatpush1.msra.mxu0 0.0
  %6671 = vmatprep.subr.mxu0 0.0
  %6672 = vmatpush1.msra.mxu0 0.0
  %6673 = vmatprep.subr.mxu0 0.0
  %6674 = vmatpush1.msra.mxu0 0.0
  %6675 = vmatprep.subr.mxu0 0.0
  %6676 = vmatpush1.msra.mxu0 0.0
  %6677 = vmatprep.subr.mxu0 0.0
  %6678 = vmatpush1.msra.mxu0 0.0
  %6679 = vmatprep.subr.mxu0 0.0
  %6680 = vmatpush1.msra.mxu0 0.0
  %6681 = vmatprep.subr.mxu0 0.0
  %6682 = vmatpush1.msra.mxu0 0.0
  %6683 = vmatprep.subr.mxu0 0.0
  %6684 = vmatpush1.msra.mxu0 0.0
  %6685 = vmatprep.subr.mxu0 0.0
  %6686 = vmatpush1.msra.mxu0 0.0
  %6687 = vmatprep.subr.mxu0 0.0
  %6688 = vmatpush1.msra.mxu0 0.0
  %6689 = vmatprep.subr.mxu0 0.0
  %6690 = vmatpush1.msra.mxu0 0.0
  %6691 = vmatprep.subr.mxu0 0.0
  %6692 = vmatpush1.msra.mxu0 0.0
  %6693 = vmatprep.subr.mxu0 0.0
  %6694 = vmatpush1.msra.mxu0 0.0
  %6695 = vmatprep.subr.mxu0 0.0
  %6696 = vmatpush1.msra.mxu0 0.0
  %6697 = vmatprep.subr.mxu0 0.0
  %6698 = vmatpush1.msra.mxu0 0.0
  %6699 = vmatprep.subr.mxu0 0.0
  %6700 = vmatpush1.msra.mxu0 0.0
  %6701 = vmatprep.subr.mxu0 0.0
  %6702 = vmatpush1.msra.mxu0 0.0
  %6703 = vmatprep.subr.mxu0 0.0
  %6704 = vmatpush1.msra.mxu0 0.0
  %6705 = vmatprep.mubr.f32.mxu0 0.0
  %v6706 = vand.u32 %v5222, 4294901760
  %6707 = vmatmul.mubr.f32.gmra.mrb[0].mxu0 %v6706
  %v6708 = vpop.f32.mrb[0].mxu0
  %v6709 = vadd.f32 %v6634, %v6708
  %v6710 = vpop.f32.mrb[0].mxu0
  %6711 = vdwg.mxu0
  %v6712 = vadd.f32 %v114, %v6709
  %v6713 = vmul.f32 %v6712, %v40
  %v6714 = vxor.u32 %v6713, 2147483648
  %v6715 = vmul.f32 %v6714, 1.442695
  %v6716 = vpow.pop %v6715
  %v6717 = vadd.f32 %v6716, 1.0
  %v6718 = vrcp.pop %v6717
  %v6719 = vmul.f32 1.0, %v6718
  %v6720 = vmul.f32 %v6719, 2.0
  %v6721 = vsub.f32 %v6720, 1.0
  %v6722 = vsel %vm39, %v6721, %v6719
  %v6724 = vrot.slane %v5211, 6
  %v6726 = vmul.f32 %v6722, %v6724
  %6728 = vrot.lane.b32.xlu0 %v6722, 64
  %v6729 = vpop.permute.xlu0 %6728
  %v6731 = vmul.f32 %v6722, %v6729
  %6733 = vrot.lane.b32.xlu0 %v6731, 32
  %v6734 = vpop.permute.xlu0 %6733
  %v6736 = vadd.f32 %v6726, %v6734
  %v6737 = vtanh.pop %v6736
  %6739 = vrot.lane.b32.xlu0 %v6737, 64
  %v6740 = vpop.permute.xlu0 %6739
  %v6742 = vmul.f32 %v6722, %v6740
  %6744 = vrot.lane.b32.xlu0 %v6742, 32
  %v6745 = vpop.permute.xlu0 %6744
  %v6746 = vsel %vm117, %v6745, 0
  %6748 = vmatprep.subr.mxu0 0.0
  %v6749 = vand.u32 %v43, 4294901760
  %6750 = vmatpush1.msra.mxu0 %v6749
  %6751 = vmatprep.subr.mxu0 0.0
  %v6752 = vand.u32 %v44, 4294901760
  %6753 = vmatpush1.msra.mxu0 %v6752
  %6754 = vmatprep.subr.mxu0 0.0
  %v6755 = vand.u32 %v45, 4294901760
  %6756 = vmatpush1.msra.mxu0 %v6755
  %6757 = vmatprep.subr.mxu0 0.0
  %v6758 = vand.u32 %v46, 4294901760
  %6759 = vmatpush1.msra.mxu0 %v6758
  %6760 = vmatprep.subr.mxu0 0.0
  %6761 = vmatpush1.msra.mxu0 0.0
  %6762 = vmatprep.subr.mxu0 0.0
  %6763 = vmatpush1.msra.mxu0 0.0
  %6764 = vmatprep.subr.mxu0 0.0
  %6765 = vmatpush1.msra.mxu0 0.0
  %6766 = vmatprep.subr.mxu0 0.0
  %6767 = vmatpush1.msra.mxu0 0.0
  %6768 = vmatprep.subr.mxu0 0.0
  %6769 = vmatpush1.msra.mxu0 0.0
  %6770 = vmatprep.subr.mxu0 0.0
  %6771 = vmatpush1.msra.mxu0 0.0
  %6772 = vmatprep.subr.mxu0 0.0
  %6773 = vmatpush1.msra.mxu0 0.0
  %6774 = vmatprep.subr.mxu0 0.0
  %6775 = vmatpush1.msra.mxu0 0.0
  %6776 = vmatprep.subr.mxu0 0.0
  %6777 = vmatpush1.msra.mxu0 0.0
  %6778 = vmatprep.subr.mxu0 0.0
  %6779 = vmatpush1.msra.mxu0 0.0
  %6780 = vmatprep.subr.mxu0 0.0
  %6781 = vmatpush1.msra.mxu0 0.0
  %6782 = vmatprep.subr.mxu0 0.0
  %6783 = vmatpush1.msra.mxu0 0.0
  %6784 = vmatprep.subr.mxu0 0.0
  %6785 = vmatpush1.msra.mxu0 0.0
  %6786 = vmatprep.subr.mxu0 0.0
  %6787 = vmatpush1.msra.mxu0 0.0
  %6788 = vmatprep.subr.mxu0 0.0
  %6789 = vmatpush1.msra.mxu0 0.0
  %6790 = vmatprep.subr.mxu0 0.0
  %6791 = vmatpush1.msra.mxu0 0.0
  %6792 = vmatprep.subr.mxu0 0.0
  %6793 = vmatpush1.msra.mxu0 0.0
  %6794 = vmatprep.subr.mxu0 0.0
  %6795 = vmatpush1.msra.mxu0 0.0
  %6796 = vmatprep.subr.mxu0 0.0
  %6797 = vmatpush1.msra.mxu0 0.0
  %6798 = vmatprep.subr.mxu0 0.0
  %6799 = vmatpush1.msra.mxu0 0.0
  %6800 = vmatprep.subr.mxu0 0.0
  %6801 = vmatpush1.msra.mxu0 0.0
  %6802 = vmatprep.subr.mxu0 0.0
  %6803 = vmatpush1.msra.mxu0 0.0
  %6804 = vmatprep.subr.mxu0 0.0
  %6805 = vmatpush1.msra.mxu0 0.0
  %6806 = vmatprep.subr.mxu0 0.0
  %6807 = vmatpush1.msra.mxu0 0.0
  %6808 = vmatprep.subr.mxu0 0.0
  %6809 = vmatpush1.msra.mxu0 0.0
  %6810 = vmatprep.subr.mxu0 0.0
  %6811 = vmatpush1.msra.mxu0 0.0
  %6812 = vmatprep.subr.mxu0 0.0
  %6813 = vmatpush1.msra.mxu0 0.0
  %6814 = vmatprep.subr.mxu0 0.0
  %6815 = vmatpush1.msra.mxu0 0.0
  %6816 = vmatprep.mubr.f32.mxu0 0.0
  %v6817 = vand.u32 %v6746, 4294901760
  %v6818 = vsub.f32 %v6746, %v6817
  %v6819 = vand.u32 %v6818, 4294901760
  %v6820 = vsub.f32 %v6818, %v6819
  %v6821 = vand.u32 %v6820, 4294901760
  %6822 = vmatmul.mubr.f32.gmra.mrb[0].mxu0 %v6821
  %v6823 = vpop.f32.mrb[0].mxu0
  %v6824 = vadd.f32 %v638, %v6823
  %v6825 = vpop.f32.mrb[0].mxu0
  %6826 = vdwg.mxu0
  %6827 = vmatprep.subr.mxu0 0.0
  %v6828 = vand.u32 %v43, 4294901760
  %v6829 = vsub.f32 %v43, %v6828
  %v6830 = vand.u32 %v6829, 4294901760
  %v6831 = vsub.f32 %v6829, %v6830
  %v6832 = vand.u32 %v6831, 4294901760
  %6833 = vmatpush1.msra.mxu0 %v6832
  %6834 = vmatprep.subr.mxu0 0.0
  %v6835 = vand.u32 %v44, 4294901760
  %v6836 = vsub.f32 %v44, %v6835
  %v6837 = vand.u32 %v6836, 4294901760
  %v6838 = vsub.f32 %v6836, %v6837
  %v6839 = vand.u32 %v6838, 4294901760
  %6840 = vmatpush1.msra.mxu0 %v6839
  %6841 = vmatprep.subr.mxu0 0.0
  %v6842 = vand.u32 %v45, 4294901760
  %v6843 = vsub.f32 %v45, %v6842
  %v6844 = vand.u32 %v6843, 4294901760
  %v6845 = vsub.f32 %v6843, %v6844
  %v6846 = vand.u32 %v6845, 4294901760
  %6847 = vmatpush1.msra.mxu0 %v6846
  %6848 = vmatprep.subr.mxu0 0.0
  %v6849 = vand.u32 %v46, 4294901760
  %v6850 = vsub.f32 %v46, %v6849
  %v6851 = vand.u32 %v6850, 4294901760
  %v6852 = vsub.f32 %v6850, %v6851
  %v6853 = vand.u32 %v6852, 4294901760
  %6854 = vmatpush1.msra.mxu0 %v6853
  %6855 = vmatprep.subr.mxu0 0.0
  %6856 = vmatpush1.msra.mxu0 0.0
  %6857 = vmatprep.subr.mxu0 0.0
  %6858 = vmatpush1.msra.mxu0 0.0
  %6859 = vmatprep.subr.mxu0 0.0
  %6860 = vmatpush1.msra.mxu0 0.0
  %6861 = vmatprep.subr.mxu0 0.0
  %6862 = vmatpush1.msra.mxu0 0.0
  %6863 = vmatprep.subr.mxu0 0.0
  %6864 = vmatpush1.msra.mxu0 0.0
  %6865 = vmatprep.subr.mxu0 0.0
  %6866 = vmatpush1.msra.mxu0 0.0
  %6867 = vmatprep.subr.mxu0 0.0
  %6868 = vmatpush1.msra.mxu0 0.0
  %6869 = vmatprep.subr.mxu0 0.0
  %6870 = vmatpush1.msra.mxu0 0.0
  %6871 = vmatprep.subr.mxu0 0.0
  %6872 = vmatpush1.msra.mxu0 0.0
  %6873 = vmatprep.subr.mxu0 0.0
  %6874 = vmatpush1.msra.mxu0 0.0
  %6875 = vmatprep.subr.mxu0 0.0
  %6876 = vmatpush1.msra.mxu0 0.0
  %6877 = vmatprep.subr.mxu0 0.0
  %6878 = vmatpush1.msra.mxu0 0.0
  %6879 = vmatprep.subr.mxu0 0.0
  %6880 = vmatpush1.msra.mxu0 0.0
  %6881 = vmatprep.subr.mxu0 0.0
  %6882 = vmatpush1.msra.mxu0 0.0
  %6883 = vmatprep.subr.mxu0 0.0
  %6884 = vmatpush1.msra.mxu0 0.0
  %6885 = vmatprep.subr.mxu0 0.0
  %6886 = vmatpush1.msra.mxu0 0.0
  %6887 = vmatprep.subr.mxu0 0.0
  %6888 = vmatpush1.msra.mxu0 0.0
  %6889 = vmatprep.subr.mxu0 0.0
  %6890 = vmatpush1.msra.mxu0 0.0
  %6891 = vmatprep.subr.mxu0 0.0
  %6892 = vmatpush1.msra.mxu0 0.0
  %6893 = vmatprep.subr.mxu0 0.0
  %6894 = vmatpush1.msra.mxu0 0.0
  %6895 = vmatprep.subr.mxu0 0.0
  %6896 = vmatpush1.msra.mxu0 0.0
  %6897 = vmatprep.subr.mxu0 0.0
  %6898 = vmatpush1.msra.mxu0 0.0
  %6899 = vmatprep.subr.mxu0 0.0
  %6900 = vmatpush1.msra.mxu0 0.0
  %6901 = vmatprep.subr.mxu0 0.0
  %6902 = vmatpush1.msra.mxu0 0.0
  %6903 = vmatprep.subr.mxu0 0.0
  %6904 = vmatpush1.msra.mxu0 0.0
  %6905 = vmatprep.subr.mxu0 0.0
  %6906 = vmatpush1.msra.mxu0 0.0
  %6907 = vmatprep.subr.mxu0 0.0
  %6908 = vmatpush1.msra.mxu0 0.0
  %6909 = vmatprep.subr.mxu0 0.0
  %6910 = vmatpush1.msra.mxu0 0.0
  %6911 = vmatprep.mubr.f32.mxu0 0.0
  %v6912 = vand.u32 %v6746, 4294901760
  %6913 = vmatmul.mubr.f32.gmra.mrb[0].mxu0 %v6912
  %v6914 = vpop.f32.mrb[0].mxu0
  %v6915 = vadd.f32 %v6824, %v6914
  %v6916 = vpop.f32.mrb[0].mxu0
  %6917 = vdwg.mxu0
  %6918 = vmatprep.subr.mxu0 0.0
  %v6919 = vand.u32 %v43, 4294901760
  %v6920 = vsub.f32 %v43, %v6919
  %6921 = vmatpush1.msra.mxu0 %v6920
  %6922 = vmatprep.subr.mxu0 0.0
  %v6923 = vand.u32 %v44, 4294901760
  %v6924 = vsub.f32 %v44, %v6923
  %6925 = vmatpush1.msra.mxu0 %v6924
  %6926 = vmatprep.subr.mxu0 0.0
  %v6927 = vand.u32 %v45, 4294901760
  %v6928 = vsub.f32 %v45, %v6927
  %6929 = vmatpush1.msra.mxu0 %v6928
  %6930 = vmatprep.subr.mxu0 0.0
  %v6931 = vand.u32 %v46, 4294901760
  %v6932 = vsub.f32 %v46, %v6931
  %6933 = vmatpush1.msra.mxu0 %v6932
  %6934 = vmatprep.subr.mxu0 0.0
  %6935 = vmatpush1.msra.mxu0 0.0
  %6936 = vmatprep.subr.mxu0 0.0
  %6937 = vmatpush1.msra.mxu0 0.0
  %6938 = vmatprep.subr.mxu0 0.0
  %6939 = vmatpush1.msra.mxu0 0.0
  %6940 = vmatprep.subr.mxu0 0.0
  %6941 = vmatpush1.msra.mxu0 0.0
  %6942 = vmatprep.subr.mxu0 0.0
  %6943 = vmatpush1.msra.mxu0 0.0
  %6944 = vmatprep.subr.mxu0 0.0
  %6945 = vmatpush1.msra.mxu0 0.0
  %6946 = vmatprep.subr.mxu0 0.0
  %6947 = vmatpush1.msra.mxu0 0.0
  %6948 = vmatprep.subr.mxu0 0.0
  %6949 = vmatpush1.msra.mxu0 0.0
  %6950 = vmatprep.subr.mxu0 0.0
  %6951 = vmatpush1.msra.mxu0 0.0
  %6952 = vmatprep.subr.mxu0 0.0
  %6953 = vmatpush1.msra.mxu0 0.0
  %6954 = vmatprep.subr.mxu0 0.0
  %6955 = vmatpush1.msra.mxu0 0.0
  %6956 = vmatprep.subr.mxu0 0.0
  %6957 = vmatpush1.msra.mxu0 0.0
  %6958 = vmatprep.subr.mxu0 0.0
  %6959 = vmatpush1.msra.mxu0 0.0
  %6960 = vmatprep.subr.mxu0 0.0
  %6961 = vmatpush1.msra.mxu0 0.0
  %6962 = vmatprep.subr.mxu0 0.0
  %6963 = vmatpush1.msra.mxu0 0.0
  %6964 = vmatprep.subr.mxu0 0.0
  %6965 = vmatpush1.msra.mxu0 0.0
  %6966 = vmatprep.subr.mxu0 0.0
  %6967 = vmatpush1.msra.mxu0 0.0
  %6968 = vmatprep.subr.mxu0 0.0
  %6969 = vmatpush1.msra.mxu0 0.0
  %6970 = vmatprep.subr.mxu0 0.0
  %6971 = vmatpush1.msra.mxu0 0.0
  %6972 = vmatprep.subr.mxu0 0.0
  %6973 = vmatpush1.msra.mxu0 0.0
  %6974 = vmatprep.subr.mxu0 0.0
  %6975 = vmatpush1.msra.mxu0 0.0
  %6976 = vmatprep.subr.mxu0 0.0
  %6977 = vmatpush1.msra.mxu0 0.0
  %6978 = vmatprep.subr.mxu0 0.0
  %6979 = vmatpush1.msra.mxu0 0.0
  %6980 = vmatprep.subr.mxu0 0.0
  %6981 = vmatpush1.msra.mxu0 0.0
  %6982 = vmatprep.subr.mxu0 0.0
  %6983 = vmatpush1.msra.mxu0 0.0
  %6984 = vmatprep.subr.mxu0 0.0
  %6985 = vmatpush1.msra.mxu0 0.0
  %6986 = vmatprep.subr.mxu0 0.0
  %6987 = vmatpush1.msra.mxu0 0.0
  %6988 = vmatprep.subr.mxu0 0.0
  %6989 = vmatpush1.msra.mxu0 0.0
  %6990 = vmatprep.mubr.f32.mxu0 0.0
  %v6991 = vand.u32 %v6746, 4294901760
  %v6992 = vsub.f32 %v6746, %v6991
  %6993 = vmatmul.mubr.f32.gmra.mrb[0].mxu0 %v6992
  %v6994 = vpop.f32.mrb[0].mxu0
  %v6995 = vadd.f32 %v6915, %v6994
  %v6996 = vpop.f32.mrb[0].mxu0
  %6997 = vdwg.mxu0
  %6998 = vmatprep.subr.mxu0 0.0
  %v6999 = vand.u32 %v43, 4294901760
  %7000 = vmatpush1.msra.mxu0 %v6999
  %7001 = vmatprep.subr.mxu0 0.0
  %v7002 = vand.u32 %v44, 4294901760
  %7003 = vmatpush1.msra.mxu0 %v7002
  %7004 = vmatprep.subr.mxu0 0.0
  %v7005 = vand.u32 %v45, 4294901760
  %7006 = vmatpush1.msra.mxu0 %v7005
  %7007 = vmatprep.subr.mxu0 0.0
  %v7008 = vand.u32 %v46, 4294901760
  %7009 = vmatpush1.msra.mxu0 %v7008
  %7010 = vmatprep.subr.mxu0 0.0
  %7011 = vmatpush1.msra.mxu0 0.0
  %7012 = vmatprep.subr.mxu0 0.0
  %7013 = vmatpush1.msra.mxu0 0.0
  %7014 = vmatprep.subr.mxu0 0.0
  %7015 = vmatpush1.msra.mxu0 0.0
  %7016 = vmatprep.subr.mxu0 0.0
  %7017 = vmatpush1.msra.mxu0 0.0
  %7018 = vmatprep.subr.mxu0 0.0
  %7019 = vmatpush1.msra.mxu0 0.0
  %7020 = vmatprep.subr.mxu0 0.0
  %7021 = vmatpush1.msra.mxu0 0.0
  %7022 = vmatprep.subr.mxu0 0.0
  %7023 = vmatpush1.msra.mxu0 0.0
  %7024 = vmatprep.subr.mxu0 0.0
  %7025 = vmatpush1.msra.mxu0 0.0
  %7026 = vmatprep.subr.mxu0 0.0
  %7027 = vmatpush1.msra.mxu0 0.0
  %7028 = vmatprep.subr.mxu0 0.0
  %7029 = vmatpush1.msra.mxu0 0.0
  %7030 = vmatprep.subr.mxu0 0.0
  %7031 = vmatpush1.msra.mxu0 0.0
  %7032 = vmatprep.subr.mxu0 0.0
  %7033 = vmatpush1.msra.mxu0 0.0
  %7034 = vmatprep.subr.mxu0 0.0
  %7035 = vmatpush1.msra.mxu0 0.0
  %7036 = vmatprep.subr.mxu0 0.0
  %7037 = vmatpush1.msra.mxu0 0.0
  %7038 = vmatprep.subr.mxu0 0.0
  %7039 = vmatpush1.msra.mxu0 0.0
  %7040 = vmatprep.subr.mxu0 0.0
  %7041 = vmatpush1.msra.mxu0 0.0
  %7042 = vmatprep.subr.mxu0 0.0
  %7043 = vmatpush1.msra.mxu0 0.0
  %7044 = vmatprep.subr.mxu0 0.0
  %7045 = vmatpush1.msra.mxu0 0.0
  %7046 = vmatprep.subr.mxu0 0.0
  %7047 = vmatpush1.msra.mxu0 0.0
  %7048 = vmatprep.subr.mxu0 0.0
  %7049 = vmatpush1.msra.mxu0 0.0
  %7050 = vmatprep.subr.mxu0 0.0
  %7051 = vmatpush1.msra.mxu0 0.0
  %7052 = vmatprep.subr.mxu0 0.0
  %7053 = vmatpush1.msra.mxu0 0.0
  %7054 = vmatprep.subr.mxu0 0.0
  %7055 = vmatpush1.msra.mxu0 0.0
  %7056 = vmatprep.subr.mxu0 0.0
  %7057 = vmatpush1.msra.mxu0 0.0
  %7058 = vmatprep.subr.mxu0 0.0
  %7059 = vmatpush1.msra.mxu0 0.0
  %7060 = vmatprep.subr.mxu0 0.0
  %7061 = vmatpush1.msra.mxu0 0.0
  %7062 = vmatprep.subr.mxu0 0.0
  %7063 = vmatpush1.msra.mxu0 0.0
  %7064 = vmatprep.subr.mxu0 0.0
  %7065 = vmatpush1.msra.mxu0 0.0
  %7066 = vmatprep.mubr.f32.mxu0 0.0
  %v7067 = vand.u32 %v6746, 4294901760
  %v7068 = vsub.f32 %v6746, %v7067
  %v7069 = vand.u32 %v7068, 4294901760
  %7070 = vmatmul.mubr.f32.gmra.mrb[0].mxu0 %v7069
  %v7071 = vpop.f32.mrb[0].mxu0
  %v7072 = vadd.f32 %v6995, %v7071
  %v7073 = vpop.f32.mrb[0].mxu0
  %7074 = vdwg.mxu0
  %7075 = vmatprep.subr.mxu0 0.0
  %v7076 = vand.u32 %v43, 4294901760
  %v7077 = vsub.f32 %v43, %v7076
  %v7078 = vand.u32 %v7077, 4294901760
  %7079 = vmatpush1.msra.mxu0 %v7078
  %7080 = vmatprep.subr.mxu0 0.0
  %v7081 = vand.u32 %v44, 4294901760
  %v7082 = vsub.f32 %v44, %v7081
  %v7083 = vand.u32 %v7082, 4294901760
  %7084 = vmatpush1.msra.mxu0 %v7083
  %7085 = vmatprep.subr.mxu0 0.0
  %v7086 = vand.u32 %v45, 4294901760
  %v7087 = vsub.f32 %v45, %v7086
  %v7088 = vand.u32 %v7087, 4294901760
  %7089 = vmatpush1.msra.mxu0 %v7088
  %7090 = vmatprep.subr.mxu0 0.0
  %v7091 = vand.u32 %v46, 4294901760
  %v7092 = vsub.f32 %v46, %v7091
  %v7093 = vand.u32 %v7092, 4294901760
  %7094 = vmatpush1.msra.mxu0 %v7093
  %7095 = vmatprep.subr.mxu0 0.0
  %7096 = vmatpush1.msra.mxu0 0.0
  %7097 = vmatprep.subr.mxu0 0.0
  %7098 = vmatpush1.msra.mxu0 0.0
  %7099 = vmatprep.subr.mxu0 0.0
  %7100 = vmatpush1.msra.mxu0 0.0
  %7101 = vmatprep.subr.mxu0 0.0
  %7102 = vmatpush1.msra.mxu0 0.0
  %7103 = vmatprep.subr.mxu0 0.0
  %7104 = vmatpush1.msra.mxu0 0.0
  %7105 = vmatprep.subr.mxu0 0.0
  %7106 = vmatpush1.msra.mxu0 0.0
  %7107 = vmatprep.subr.mxu0 0.0
  %7108 = vmatpush1.msra.mxu0 0.0
  %7109 = vmatprep.subr.mxu0 0.0
  %7110 = vmatpush1.msra.mxu0 0.0
  %7111 = vmatprep.subr.mxu0 0.0
  %7112 = vmatpush1.msra.mxu0 0.0
  %7113 = vmatprep.subr.mxu0 0.0
  %7114 = vmatpush1.msra.mxu0 0.0
  %7115 = vmatprep.subr.mxu0 0.0
  %7116 = vmatpush1.msra.mxu0 0.0
  %7117 = vmatprep.subr.mxu0 0.0
  %7118 = vmatpush1.msra.mxu0 0.0
  %7119 = vmatprep.subr.mxu0 0.0
  %7120 = vmatpush1.msra.mxu0 0.0
  %7121 = vmatprep.subr.mxu0 0.0
  %7122 = vmatpush1.msra.mxu0 0.0
  %7123 = vmatprep.subr.mxu0 0.0
  %7124 = vmatpush1.msra.mxu0 0.0
  %7125 = vmatprep.subr.mxu0 0.0
  %7126 = vmatpush1.msra.mxu0 0.0
  %7127 = vmatprep.subr.mxu0 0.0
  %7128 = vmatpush1.msra.mxu0 0.0
  %7129 = vmatprep.subr.mxu0 0.0
  %7130 = vmatpush1.msra.mxu0 0.0
  %7131 = vmatprep.subr.mxu0 0.0
  %7132 = vmatpush1.msra.mxu0 0.0
  %7133 = vmatprep.subr.mxu0 0.0
  %7134 = vmatpush1.msra.mxu0 0.0
  %7135 = vmatprep.subr.mxu0 0.0
  %7136 = vmatpush1.msra.mxu0 0.0
  %7137 = vmatprep.subr.mxu0 0.0
  %7138 = vmatpush1.msra.mxu0 0.0
  %7139 = vmatprep.subr.mxu0 0.0
  %7140 = vmatpush1.msra.mxu0 0.0
  %7141 = vmatprep.subr.mxu0 0.0
  %7142 = vmatpush1.msra.mxu0 0.0
  %7143 = vmatprep.subr.mxu0 0.0
  %7144 = vmatpush1.msra.mxu0 0.0
  %7145 = vmatprep.subr.mxu0 0.0
  %7146 = vmatpush1.msra.mxu0 0.0
  %7147 = vmatprep.subr.mxu0 0.0
  %7148 = vmatpush1.msra.mxu0 0.0
  %7149 = vmatprep.subr.mxu0 0.0
  %7150 = vmatpush1.msra.mxu0 0.0
  %7151 = vmatprep.mubr.f32.mxu0 0.0
  %v7152 = vand.u32 %v6746, 4294901760
  %7153 = vmatmul.mubr.f32.gmra.mrb[0].mxu0 %v7152
  %v7154 = vpop.f32.mrb[0].mxu0
  %v7155 = vadd.f32 %v7072, %v7154
  %v7156 = vpop.f32.mrb[0].mxu0
  %7157 = vdwg.mxu0
  %7158 = vmatprep.subr.mxu0 0.0
  %v7159 = vand.u32 %v43, 4294901760
  %7160 = vmatpush1.msra.mxu0 %v7159
  %7161 = vmatprep.subr.mxu0 0.0
  %v7162 = vand.u32 %v44, 4294901760
  %7163 = vmatpush1.msra.mxu0 %v7162
  %7164 = vmatprep.subr.mxu0 0.0
  %v7165 = vand.u32 %v45, 4294901760
  %7166 = vmatpush1.msra.mxu0 %v7165
  %7167 = vmatprep.subr.mxu0 0.0
  %v7168 = vand.u32 %v46, 4294901760
  %7169 = vmatpush1.msra.mxu0 %v7168
  %7170 = vmatprep.subr.mxu0 0.0
  %7171 = vmatpush1.msra.mxu0 0.0
  %7172 = vmatprep.subr.mxu0 0.0
  %7173 = vmatpush1.msra.mxu0 0.0
  %7174 = vmatprep.subr.mxu0 0.0
  %7175 = vmatpush1.msra.mxu0 0.0
  %7176 = vmatprep.subr.mxu0 0.0
  %7177 = vmatpush1.msra.mxu0 0.0
  %7178 = vmatprep.subr.mxu0 0.0
  %7179 = vmatpush1.msra.mxu0 0.0
  %7180 = vmatprep.subr.mxu0 0.0
  %7181 = vmatpush1.msra.mxu0 0.0
  %7182 = vmatprep.subr.mxu0 0.0
  %7183 = vmatpush1.msra.mxu0 0.0
  %7184 = vmatprep.subr.mxu0 0.0
  %7185 = vmatpush1.msra.mxu0 0.0
  %7186 = vmatprep.subr.mxu0 0.0
  %7187 = vmatpush1.msra.mxu0 0.0
  %7188 = vmatprep.subr.mxu0 0.0
  %7189 = vmatpush1.msra.mxu0 0.0
  %7190 = vmatprep.subr.mxu0 0.0
  %7191 = vmatpush1.msra.mxu0 0.0
  %7192 = vmatprep.subr.mxu0 0.0
  %7193 = vmatpush1.msra.mxu0 0.0
  %7194 = vmatprep.subr.mxu0 0.0
  %7195 = vmatpush1.msra.mxu0 0.0
  %7196 = vmatprep.subr.mxu0 0.0
  %7197 = vmatpush1.msra.mxu0 0.0
  %7198 = vmatprep.subr.mxu0 0.0
  %7199 = vmatpush1.msra.mxu0 0.0
  %7200 = vmatprep.subr.mxu0 0.0
  %7201 = vmatpush1.msra.mxu0 0.0
  %7202 = vmatprep.subr.mxu0 0.0
  %7203 = vmatpush1.msra.mxu0 0.0
  %7204 = vmatprep.subr.mxu0 0.0
  %7205 = vmatpush1.msra.mxu0 0.0
  %7206 = vmatprep.subr.mxu0 0.0
  %7207 = vmatpush1.msra.mxu0 0.0
  %7208 = vmatprep.subr.mxu0 0.0
  %7209 = vmatpush1.msra.mxu0 0.0
  %7210 = vmatprep.subr.mxu0 0.0
  %7211 = vmatpush1.msra.mxu0 0.0
  %7212 = vmatprep.subr.mxu0 0.0
  %7213 = vmatpush1.msra.mxu0 0.0
  %7214 = vmatprep.subr.mxu0 0.0
  %7215 = vmatpush1.msra.mxu0 0.0
  %7216 = vmatprep.subr.mxu0 0.0
  %7217 = vmatpush1.msra.mxu0 0.0
  %7218 = vmatprep.subr.mxu0 0.0
  %7219 = vmatpush1.msra.mxu0 0.0
  %7220 = vmatprep.subr.mxu0 0.0
  %7221 = vmatpush1.msra.mxu0 0.0
  %7222 = vmatprep.subr.mxu0 0.0
  %7223 = vmatpush1.msra.mxu0 0.0
  %7224 = vmatprep.subr.mxu0 0.0
  %7225 = vmatpush1.msra.mxu0 0.0
  %7226 = vmatprep.mubr.f32.mxu0 0.0
  %v7227 = vand.u32 %v6746, 4294901760
  %7228 = vmatmul.mubr.f32.gmra.mrb[0].mxu0 %v7227
  %v7229 = vpop.f32.mrb[0].mxu0
  %v7230 = vadd.f32 %v7155, %v7229
  %v7231 = vpop.f32.mrb[0].mxu0
  %7232 = vdwg.mxu0
  %7234 = vrot.lane.b32.xlu0 %v6226, 32
  %v7235 = vpop.permute.xlu0 %7234
  %v7236 = vsel %vm117, %v7235, 0
  %7238 = vmatprep.subr.mxu0 0.0
  %v7239 = vand.u32 %v51, 4294901760
  %7240 = vmatpush1.msra.mxu0 %v7239
  %7241 = vmatprep.subr.mxu0 0.0
  %v7242 = vand.u32 %v52, 4294901760
  %7243 = vmatpush1.msra.mxu0 %v7242
  %7244 = vmatprep.subr.mxu0 0.0
  %v7245 = vand.u32 %v53, 4294901760
  %7246 = vmatpush1.msra.mxu0 %v7245
  %7247 = vmatprep.subr.mxu0 0.0
  %v7248 = vand.u32 %v54, 4294901760
  %7249 = vmatpush1.msra.mxu0 %v7248
  %7250 = vmatprep.subr.mxu0 0.0
  %7251 = vmatpush1.msra.mxu0 0.0
  %7252 = vmatprep.subr.mxu0 0.0
  %7253 = vmatpush1.msra.mxu0 0.0
  %7254 = vmatprep.subr.mxu0 0.0
  %7255 = vmatpush1.msra.mxu0 0.0
  %7256 = vmatprep.subr.mxu0 0.0
  %7257 = vmatpush1.msra.mxu0 0.0
  %7258 = vmatprep.subr.mxu0 0.0
  %7259 = vmatpush1.msra.mxu0 0.0
  %7260 = vmatprep.subr.mxu0 0.0
  %7261 = vmatpush1.msra.mxu0 0.0
  %7262 = vmatprep.subr.mxu0 0.0
  %7263 = vmatpush1.msra.mxu0 0.0
  %7264 = vmatprep.subr.mxu0 0.0
  %7265 = vmatpush1.msra.mxu0 0.0
  %7266 = vmatprep.subr.mxu0 0.0
  %7267 = vmatpush1.msra.mxu0 0.0
  %7268 = vmatprep.subr.mxu0 0.0
  %7269 = vmatpush1.msra.mxu0 0.0
  %7270 = vmatprep.subr.mxu0 0.0
  %7271 = vmatpush1.msra.mxu0 0.0
  %7272 = vmatprep.subr.mxu0 0.0
  %7273 = vmatpush1.msra.mxu0 0.0
  %7274 = vmatprep.subr.mxu0 0.0
  %7275 = vmatpush1.msra.mxu0 0.0
  %7276 = vmatprep.subr.mxu0 0.0
  %7277 = vmatpush1.msra.mxu0 0.0
  %7278 = vmatprep.subr.mxu0 0.0
  %7279 = vmatpush1.msra.mxu0 0.0
  %7280 = vmatprep.subr.mxu0 0.0
  %7281 = vmatpush1.msra.mxu0 0.0
  %7282 = vmatprep.subr.mxu0 0.0
  %7283 = vmatpush1.msra.mxu0 0.0
  %7284 = vmatprep.subr.mxu0 0.0
  %7285 = vmatpush1.msra.mxu0 0.0
  %7286 = vmatprep.subr.mxu0 0.0
  %7287 = vmatpush1.msra.mxu0 0.0
  %7288 = vmatprep.subr.mxu0 0.0
  %7289 = vmatpush1.msra.mxu0 0.0
  %7290 = vmatprep.subr.mxu0 0.0
  %7291 = vmatpush1.msra.mxu0 0.0
  %7292 = vmatprep.subr.mxu0 0.0
  %7293 = vmatpush1.msra.mxu0 0.0
  %7294 = vmatprep.subr.mxu0 0.0
  %7295 = vmatpush1.msra.mxu0 0.0
  %7296 = vmatprep.subr.mxu0 0.0
  %7297 = vmatpush1.msra.mxu0 0.0
  %7298 = vmatprep.subr.mxu0 0.0
  %7299 = vmatpush1.msra.mxu0 0.0
  %7300 = vmatprep.subr.mxu0 0.0
  %7301 = vmatpush1.msra.mxu0 0.0
  %7302 = vmatprep.subr.mxu0 0.0
  %7303 = vmatpush1.msra.mxu0 0.0
  %7304 = vmatprep.subr.mxu0 0.0
  %7305 = vmatpush1.msra.mxu0 0.0
  %7306 = vmatprep.mubr.f32.mxu0 0.0
  %v7307 = vand.u32 %v7236, 4294901760
  %v7308 = vsub.f32 %v7236, %v7307
  %v7309 = vand.u32 %v7308, 4294901760
  %v7310 = vsub.f32 %v7308, %v7309
  %v7311 = vand.u32 %v7310, 4294901760
  %7312 = vmatmul.mubr.f32.gmra.mrb[0].mxu0 %v7311
  %v7313 = vpop.f32.mrb[0].mxu0
  %v7314 = vadd.f32 0.0, %v7313
  %v7315 = vpop.f32.mrb[0].mxu0
  %7316 = vdwg.mxu0
  %7317 = vmatprep.subr.mxu0 0.0
  %v7318 = vand.u32 %v51, 4294901760
  %v7319 = vsub.f32 %v51, %v7318
  %v7320 = vand.u32 %v7319, 4294901760
  %v7321 = vsub.f32 %v7319, %v7320
  %v7322 = vand.u32 %v7321, 4294901760
  %7323 = vmatpush1.msra.mxu0 %v7322
  %7324 = vmatprep.subr.mxu0 0.0
  %v7325 = vand.u32 %v52, 4294901760
  %v7326 = vsub.f32 %v52, %v7325
  %v7327 = vand.u32 %v7326, 4294901760
  %v7328 = vsub.f32 %v7326, %v7327
  %v7329 = vand.u32 %v7328, 4294901760
  %7330 = vmatpush1.msra.mxu0 %v7329
  %7331 = vmatprep.subr.mxu0 0.0
  %v7332 = vand.u32 %v53, 4294901760
  %v7333 = vsub.f32 %v53, %v7332
  %v7334 = vand.u32 %v7333, 4294901760
  %v7335 = vsub.f32 %v7333, %v7334
  %v7336 = vand.u32 %v7335, 4294901760
  %7337 = vmatpush1.msra.mxu0 %v7336
  %7338 = vmatprep.subr.mxu0 0.0
  %v7339 = vand.u32 %v54, 4294901760
  %v7340 = vsub.f32 %v54, %v7339
  %v7341 = vand.u32 %v7340, 4294901760
  %v7342 = vsub.f32 %v7340, %v7341
  %v7343 = vand.u32 %v7342, 4294901760
  %7344 = vmatpush1.msra.mxu0 %v7343
  %7345 = vmatprep.subr.mxu0 0.0
  %7346 = vmatpush1.msra.mxu0 0.0
  %7347 = vmatprep.subr.mxu0 0.0
  %7348 = vmatpush1.msra.mxu0 0.0
  %7349 = vmatprep.subr.mxu0 0.0
  %7350 = vmatpush1.msra.mxu0 0.0
  %7351 = vmatprep.subr.mxu0 0.0
  %7352 = vmatpush1.msra.mxu0 0.0
  %7353 = vmatprep.subr.mxu0 0.0
  %7354 = vmatpush1.msra.mxu0 0.0
  %7355 = vmatprep.subr.mxu0 0.0
  %7356 = vmatpush1.msra.mxu0 0.0
  %7357 = vmatprep.subr.mxu0 0.0
  %7358 = vmatpush1.msra.mxu0 0.0
  %7359 = vmatprep.subr.mxu0 0.0
  %7360 = vmatpush1.msra.mxu0 0.0
  %7361 = vmatprep.subr.mxu0 0.0
  %7362 = vmatpush1.msra.mxu0 0.0
  %7363 = vmatprep.subr.mxu0 0.0
  %7364 = vmatpush1.msra.mxu0 0.0
  %7365 = vmatprep.subr.mxu0 0.0
  %7366 = vmatpush1.msra.mxu0 0.0
  %7367 = vmatprep.subr.mxu0 0.0
  %7368 = vmatpush1.msra.mxu0 0.0
  %7369 = vmatprep.subr.mxu0 0.0
  %7370 = vmatpush1.msra.mxu0 0.0
  %7371 = vmatprep.subr.mxu0 0.0
  %7372 = vmatpush1.msra.mxu0 0.0
  %7373 = vmatprep.subr.mxu0 0.0
  %7374 = vmatpush1.msra.mxu0 0.0
  %7375 = vmatprep.subr.mxu0 0.0
  %7376 = vmatpush1.msra.mxu0 0.0
  %7377 = vmatprep.subr.mxu0 0.0
  %7378 = vmatpush1.msra.mxu0 0.0
  %7379 = vmatprep.subr.mxu0 0.0
  %7380 = vmatpush1.msra.mxu0 0.0
  %7381 = vmatprep.subr.mxu0 0.0
  %7382 = vmatpush1.msra.mxu0 0.0
  %7383 = vmatprep.subr.mxu0 0.0
  %7384 = vmatpush1.msra.mxu0 0.0
  %7385 = vmatprep.subr.mxu0 0.0
  %7386 = vmatpush1.msra.mxu0 0.0
  %7387 = vmatprep.subr.mxu0 0.0
  %7388 = vmatpush1.msra.mxu0 0.0
  %7389 = vmatprep.subr.mxu0 0.0
  %7390 = vmatpush1.msra.mxu0 0.0
  %7391 = vmatprep.subr.mxu0 0.0
  %7392 = vmatpush1.msra.mxu0 0.0
  %7393 = vmatprep.subr.mxu0 0.0
  %7394 = vmatpush1.msra.mxu0 0.0
  %7395 = vmatprep.subr.mxu0 0.0
  %7396 = vmatpush1.msra.mxu0 0.0
  %7397 = vmatprep.subr.mxu0 0.0
  %7398 = vmatpush1.msra.mxu0 0.0
  %7399 = vmatprep.subr.mxu0 0.0
  %7400 = vmatpush1.msra.mxu0 0.0
  %7401 = vmatprep.mubr.f32.mxu0 0.0
  %v7402 = vand.u32 %v7236, 4294901760
  %7403 = vmatmul.mubr.f32.gmra.mrb[0].mxu0 %v7402
  %v7404 = vpop.f32.mrb[0].mxu0
  %v7405 = vadd.f32 %v7314, %v7404
  %v7406 = vpop.f32.mrb[0].mxu0
  %7407 = vdwg.mxu0
  %7408 = vmatprep.subr.mxu0 0.0
  %v7409 = vand.u32 %v51, 4294901760
  %v7410 = vsub.f32 %v51, %v7409
  %7411 = vmatpush1.msra.mxu0 %v7410
  %7412 = vmatprep.subr.mxu0 0.0
  %v7413 = vand.u32 %v52, 4294901760
  %v7414 = vsub.f32 %v52, %v7413
  %7415 = vmatpush1.msra.mxu0 %v7414
  %7416 = vmatprep.subr.mxu0 0.0
  %v7417 = vand.u32 %v53, 4294901760
  %v7418 = vsub.f32 %v53, %v7417
  %7419 = vmatpush1.msra.mxu0 %v7418
  %7420 = vmatprep.subr.mxu0 0.0
  %v7421 = vand.u32 %v54, 4294901760
  %v7422 = vsub.f32 %v54, %v7421
  %7423 = vmatpush1.msra.mxu0 %v7422
  %7424 = vmatprep.subr.mxu0 0.0
  %7425 = vmatpush1.msra.mxu0 0.0
  %7426 = vmatprep.subr.mxu0 0.0
  %7427 = vmatpush1.msra.mxu0 0.0
  %7428 = vmatprep.subr.mxu0 0.0
  %7429 = vmatpush1.msra.mxu0 0.0
  %7430 = vmatprep.subr.mxu0 0.0
  %7431 = vmatpush1.msra.mxu0 0.0
  %7432 = vmatprep.subr.mxu0 0.0
  %7433 = vmatpush1.msra.mxu0 0.0
  %7434 = vmatprep.subr.mxu0 0.0
  %7435 = vmatpush1.msra.mxu0 0.0
  %7436 = vmatprep.subr.mxu0 0.0
  %7437 = vmatpush1.msra.mxu0 0.0
  %7438 = vmatprep.subr.mxu0 0.0
  %7439 = vmatpush1.msra.mxu0 0.0
  %7440 = vmatprep.subr.mxu0 0.0
  %7441 = vmatpush1.msra.mxu0 0.0
  %7442 = vmatprep.subr.mxu0 0.0
  %7443 = vmatpush1.msra.mxu0 0.0
  %7444 = vmatprep.subr.mxu0 0.0
  %7445 = vmatpush1.msra.mxu0 0.0
  %7446 = vmatprep.subr.mxu0 0.0
  %7447 = vmatpush1.msra.mxu0 0.0
  %7448 = vmatprep.subr.mxu0 0.0
  %7449 = vmatpush1.msra.mxu0 0.0
  %7450 = vmatprep.subr.mxu0 0.0
  %7451 = vmatpush1.msra.mxu0 0.0
  %7452 = vmatprep.subr.mxu0 0.0
  %7453 = vmatpush1.msra.mxu0 0.0
  %7454 = vmatprep.subr.mxu0 0.0
  %7455 = vmatpush1.msra.mxu0 0.0
  %7456 = vmatprep.subr.mxu0 0.0
  %7457 = vmatpush1.msra.mxu0 0.0
  %7458 = vmatprep.subr.mxu0 0.0
  %7459 = vmatpush1.msra.mxu0 0.0
  %7460 = vmatprep.subr.mxu0 0.0
  %7461 = vmatpush1.msra.mxu0 0.0
  %7462 = vmatprep.subr.mxu0 0.0
  %7463 = vmatpush1.msra.mxu0 0.0
  %7464 = vmatprep.subr.mxu0 0.0
  %7465 = vmatpush1.msra.mxu0 0.0
  %7466 = vmatprep.subr.mxu0 0.0
  %7467 = vmatpush1.msra.mxu0 0.0
  %7468 = vmatprep.subr.mxu0 0.0
  %7469 = vmatpush1.msra.mxu0 0.0
  %7470 = vmatprep.subr.mxu0 0.0
  %7471 = vmatpush1.msra.mxu0 0.0
  %7472 = vmatprep.subr.mxu0 0.0
  %7473 = vmatpush1.msra.mxu0 0.0
  %7474 = vmatprep.subr.mxu0 0.0
  %7475 = vmatpush1.msra.mxu0 0.0
  %7476 = vmatprep.subr.mxu0 0.0
  %7477 = vmatpush1.msra.mxu0 0.0
  %7478 = vmatprep.subr.mxu0 0.0
  %7479 = vmatpush1.msra.mxu0 0.0
  %7480 = vmatprep.mubr.f32.mxu0 0.0
  %v7481 = vand.u32 %v7236, 4294901760
  %v7482 = vsub.f32 %v7236, %v7481
  %7483 = vmatmul.mubr.f32.gmra.mrb[0].mxu0 %v7482
  %v7484 = vpop.f32.mrb[0].mxu0
  %v7485 = vadd.f32 %v7405, %v7484
  %v7486 = vpop.f32.mrb[0].mxu0
  %7487 = vdwg.mxu0
  %7488 = vmatprep.subr.mxu0 0.0
  %v7489 = vand.u32 %v51, 4294901760
  %7490 = vmatpush1.msra.mxu0 %v7489
  %7491 = vmatprep.subr.mxu0 0.0
  %v7492 = vand.u32 %v52, 4294901760
  %7493 = vmatpush1.msra.mxu0 %v7492
  %7494 = vmatprep.subr.mxu0 0.0
  %v7495 = vand.u32 %v53, 4294901760
  %7496 = vmatpush1.msra.mxu0 %v7495
  %7497 = vmatprep.subr.mxu0 0.0
  %v7498 = vand.u32 %v54, 4294901760
  %7499 = vmatpush1.msra.mxu0 %v7498
  %7500 = vmatprep.subr.mxu0 0.0
  %7501 = vmatpush1.msra.mxu0 0.0
  %7502 = vmatprep.subr.mxu0 0.0
  %7503 = vmatpush1.msra.mxu0 0.0
  %7504 = vmatprep.subr.mxu0 0.0
  %7505 = vmatpush1.msra.mxu0 0.0
  %7506 = vmatprep.subr.mxu0 0.0
  %7507 = vmatpush1.msra.mxu0 0.0
  %7508 = vmatprep.subr.mxu0 0.0
  %7509 = vmatpush1.msra.mxu0 0.0
  %7510 = vmatprep.subr.mxu0 0.0
  %7511 = vmatpush1.msra.mxu0 0.0
  %7512 = vmatprep.subr.mxu0 0.0
  %7513 = vmatpush1.msra.mxu0 0.0
  %7514 = vmatprep.subr.mxu0 0.0
  %7515 = vmatpush1.msra.mxu0 0.0
  %7516 = vmatprep.subr.mxu0 0.0
  %7517 = vmatpush1.msra.mxu0 0.0
  %7518 = vmatprep.subr.mxu0 0.0
  %7519 = vmatpush1.msra.mxu0 0.0
  %7520 = vmatprep.subr.mxu0 0.0
  %7521 = vmatpush1.msra.mxu0 0.0
  %7522 = vmatprep.subr.mxu0 0.0
  %7523 = vmatpush1.msra.mxu0 0.0
  %7524 = vmatprep.subr.mxu0 0.0
  %7525 = vmatpush1.msra.mxu0 0.0
  %7526 = vmatprep.subr.mxu0 0.0
  %7527 = vmatpush1.msra.mxu0 0.0
  %7528 = vmatprep.subr.mxu0 0.0
  %7529 = vmatpush1.msra.mxu0 0.0
  %7530 = vmatprep.subr.mxu0 0.0
  %7531 = vmatpush1.msra.mxu0 0.0
  %7532 = vmatprep.subr.mxu0 0.0
  %7533 = vmatpush1.msra.mxu0 0.0
  %7534 = vmatprep.subr.mxu0 0.0
  %7535 = vmatpush1.msra.mxu0 0.0
  %7536 = vmatprep.subr.mxu0 0.0
  %7537 = vmatpush1.msra.mxu0 0.0
  %7538 = vmatprep.subr.mxu0 0.0
  %7539 = vmatpush1.msra.mxu0 0.0
  %7540 = vmatprep.subr.mxu0 0.0
  %7541 = vmatpush1.msra.mxu0 0.0
  %7542 = vmatprep.subr.mxu0 0.0
  %7543 = vmatpush1.msra.mxu0 0.0
  %7544 = vmatprep.subr.mxu0 0.0
  %7545 = vmatpush1.msra.mxu0 0.0
  %7546 = vmatprep.subr.mxu0 0.0
  %7547 = vmatpush1.msra.mxu0 0.0
  %7548 = vmatprep.subr.mxu0 0.0
  %7549 = vmatpush1.msra.mxu0 0.0
  %7550 = vmatprep.subr.mxu0 0.0
  %7551 = vmatpush1.msra.mxu0 0.0
  %7552 = vmatprep.subr.mxu0 0.0
  %7553 = vmatpush1.msra.mxu0 0.0
  %7554 = vmatprep.subr.mxu0 0.0
  %7555 = vmatpush1.msra.mxu0 0.0
  %7556 = vmatprep.mubr.f32.mxu0 0.0
  %v7557 = vand.u32 %v7236, 4294901760
  %v7558 = vsub.f32 %v7236, %v7557
  %v7559 = vand.u32 %v7558, 4294901760
  %7560 = vmatmul.mubr.f32.gmra.mrb[0].mxu0 %v7559
  %v7561 = vpop.f32.mrb[0].mxu0
  %v7562 = vadd.f32 %v7485, %v7561
  %v7563 = vpop.f32.mrb[0].mxu0
  %7564 = vdwg.mxu0
  %7565 = vmatprep.subr.mxu0 0.0
  %v7566 = vand.u32 %v51, 4294901760
  %v7567 = vsub.f32 %v51, %v7566
  %v7568 = vand.u32 %v7567, 4294901760
  %7569 = vmatpush1.msra.mxu0 %v7568
  %7570 = vmatprep.subr.mxu0 0.0
  %v7571 = vand.u32 %v52, 4294901760
  %v7572 = vsub.f32 %v52, %v7571
  %v7573 = vand.u32 %v7572, 4294901760
  %7574 = vmatpush1.msra.mxu0 %v7573
  %7575 = vmatprep.subr.mxu0 0.0
  %v7576 = vand.u32 %v53, 4294901760
  %v7577 = vsub.f32 %v53, %v7576
  %v7578 = vand.u32 %v7577, 4294901760
  %7579 = vmatpush1.msra.mxu0 %v7578
  %7580 = vmatprep.subr.mxu0 0.0
  %v7581 = vand.u32 %v54, 4294901760
  %v7582 = vsub.f32 %v54, %v7581
  %v7583 = vand.u32 %v7582, 4294901760
  %7584 = vmatpush1.msra.mxu0 %v7583
  %7585 = vmatprep.subr.mxu0 0.0
  %7586 = vmatpush1.msra.mxu0 0.0
  %7587 = vmatprep.subr.mxu0 0.0
  %7588 = vmatpush1.msra.mxu0 0.0
  %7589 = vmatprep.subr.mxu0 0.0
  %7590 = vmatpush1.msra.mxu0 0.0
  %7591 = vmatprep.subr.mxu0 0.0
  %7592 = vmatpush1.msra.mxu0 0.0
  %7593 = vmatprep.subr.mxu0 0.0
  %7594 = vmatpush1.msra.mxu0 0.0
  %7595 = vmatprep.subr.mxu0 0.0
  %7596 = vmatpush1.msra.mxu0 0.0
  %7597 = vmatprep.subr.mxu0 0.0
  %7598 = vmatpush1.msra.mxu0 0.0
  %7599 = vmatprep.subr.mxu0 0.0
  %7600 = vmatpush1.msra.mxu0 0.0
  %7601 = vmatprep.subr.mxu0 0.0
  %7602 = vmatpush1.msra.mxu0 0.0
  %7603 = vmatprep.subr.mxu0 0.0
  %7604 = vmatpush1.msra.mxu0 0.0
  %7605 = vmatprep.subr.mxu0 0.0
  %7606 = vmatpush1.msra.mxu0 0.0
  %7607 = vmatprep.subr.mxu0 0.0
  %7608 = vmatpush1.msra.mxu0 0.0
  %7609 = vmatprep.subr.mxu0 0.0
  %7610 = vmatpush1.msra.mxu0 0.0
  %7611 = vmatprep.subr.mxu0 0.0
  %7612 = vmatpush1.msra.mxu0 0.0
  %7613 = vmatprep.subr.mxu0 0.0
  %7614 = vmatpush1.msra.mxu0 0.0
  %7615 = vmatprep.subr.mxu0 0.0
  %7616 = vmatpush1.msra.mxu0 0.0
  %7617 = vmatprep.subr.mxu0 0.0
  %7618 = vmatpush1.msra.mxu0 0.0
  %7619 = vmatprep.subr.mxu0 0.0
  %7620 = vmatpush1.msra.mxu0 0.0
  %7621 = vmatprep.subr.mxu0 0.0
  %7622 = vmatpush1.msra.mxu0 0.0
  %7623 = vmatprep.subr.mxu0 0.0
  %7624 = vmatpush1.msra.mxu0 0.0
  %7625 = vmatprep.subr.mxu0 0.0
  %7626 = vmatpush1.msra.mxu0 0.0
  %7627 = vmatprep.subr.mxu0 0.0
  %7628 = vmatpush1.msra.mxu0 0.0
  %7629 = vmatprep.subr.mxu0 0.0
  %7630 = vmatpush1.msra.mxu0 0.0
  %7631 = vmatprep.subr.mxu0 0.0
  %7632 = vmatpush1.msra.mxu0 0.0
  %7633 = vmatprep.subr.mxu0 0.0
  %7634 = vmatpush1.msra.mxu0 0.0
  %7635 = vmatprep.subr.mxu0 0.0
  %7636 = vmatpush1.msra.mxu0 0.0
  %7637 = vmatprep.subr.mxu0 0.0
  %7638 = vmatpush1.msra.mxu0 0.0
  %7639 = vmatprep.subr.mxu0 0.0
  %7640 = vmatpush1.msra.mxu0 0.0
  %7641 = vmatprep.mubr.f32.mxu0 0.0
  %v7642 = vand.u32 %v7236, 4294901760
  %7643 = vmatmul.mubr.f32.gmra.mrb[0].mxu0 %v7642
  %v7644 = vpop.f32.mrb[0].mxu0
  %v7645 = vadd.f32 %v7562, %v7644
  %v7646 = vpop.f32.mrb[0].mxu0
  %7647 = vdwg.mxu0
  %7648 = vmatprep.subr.mxu0 0.0
  %v7649 = vand.u32 %v51, 4294901760
  %7650 = vmatpush1.msra.mxu0 %v7649
  %7651 = vmatprep.subr.mxu0 0.0
  %v7652 = vand.u32 %v52, 4294901760
  %7653 = vmatpush1.msra.mxu0 %v7652
  %7654 = vmatprep.subr.mxu0 0.0
  %v7655 = vand.u32 %v53, 4294901760
  %7656 = vmatpush1.msra.mxu0 %v7655
  %7657 = vmatprep.subr.mxu0 0.0
  %v7658 = vand.u32 %v54, 4294901760
  %7659 = vmatpush1.msra.mxu0 %v7658
  %7660 = vmatprep.subr.mxu0 0.0
  %7661 = vmatpush1.msra.mxu0 0.0
  %7662 = vmatprep.subr.mxu0 0.0
  %7663 = vmatpush1.msra.mxu0 0.0
  %7664 = vmatprep.subr.mxu0 0.0
  %7665 = vmatpush1.msra.mxu0 0.0
  %7666 = vmatprep.subr.mxu0 0.0
  %7667 = vmatpush1.msra.mxu0 0.0
  %7668 = vmatprep.subr.mxu0 0.0
  %7669 = vmatpush1.msra.mxu0 0.0
  %7670 = vmatprep.subr.mxu0 0.0
  %7671 = vmatpush1.msra.mxu0 0.0
  %7672 = vmatprep.subr.mxu0 0.0
  %7673 = vmatpush1.msra.mxu0 0.0
  %7674 = vmatprep.subr.mxu0 0.0
  %7675 = vmatpush1.msra.mxu0 0.0
  %7676 = vmatprep.subr.mxu0 0.0
  %7677 = vmatpush1.msra.mxu0 0.0
  %7678 = vmatprep.subr.mxu0 0.0
  %7679 = vmatpush1.msra.mxu0 0.0
  %7680 = vmatprep.subr.mxu0 0.0
  %7681 = vmatpush1.msra.mxu0 0.0
  %7682 = vmatprep.subr.mxu0 0.0
  %7683 = vmatpush1.msra.mxu0 0.0
  %7684 = vmatprep.subr.mxu0 0.0
  %7685 = vmatpush1.msra.mxu0 0.0
  %7686 = vmatprep.subr.mxu0 0.0
  %7687 = vmatpush1.msra.mxu0 0.0
  %7688 = vmatprep.subr.mxu0 0.0
  %7689 = vmatpush1.msra.mxu0 0.0
  %7690 = vmatprep.subr.mxu0 0.0
  %7691 = vmatpush1.msra.mxu0 0.0
  %7692 = vmatprep.subr.mxu0 0.0
  %7693 = vmatpush1.msra.mxu0 0.0
  %7694 = vmatprep.subr.mxu0 0.0
  %7695 = vmatpush1.msra.mxu0 0.0
  %7696 = vmatprep.subr.mxu0 0.0
  %7697 = vmatpush1.msra.mxu0 0.0
  %7698 = vmatprep.subr.mxu0 0.0
  %7699 = vmatpush1.msra.mxu0 0.0
  %7700 = vmatprep.subr.mxu0 0.0
  %7701 = vmatpush1.msra.mxu0 0.0
  %7702 = vmatprep.subr.mxu0 0.0
  %7703 = vmatpush1.msra.mxu0 0.0
  %7704 = vmatprep.subr.mxu0 0.0
  %7705 = vmatpush1.msra.mxu0 0.0
  %7706 = vmatprep.subr.mxu0 0.0
  %7707 = vmatpush1.msra.mxu0 0.0
  %7708 = vmatprep.subr.mxu0 0.0
  %7709 = vmatpush1.msra.mxu0 0.0
  %7710 = vmatprep.subr.mxu0 0.0
  %7711 = vmatpush1.msra.mxu0 0.0
  %7712 = vmatprep.subr.mxu0 0.0
  %7713 = vmatpush1.msra.mxu0 0.0
  %7714 = vmatprep.subr.mxu0 0.0
  %7715 = vmatpush1.msra.mxu0 0.0
  %7716 = vmatprep.mubr.f32.mxu0 0.0
  %v7717 = vand.u32 %v7236, 4294901760
  %7718 = vmatmul.mubr.f32.gmra.mrb[0].mxu0 %v7717
  %v7719 = vpop.f32.mrb[0].mxu0
  %v7720 = vadd.f32 %v7645, %v7719
  %v7721 = vpop.f32.mrb[0].mxu0
  %7722 = vdwg.mxu0
  %v7723 = vadd.f32 %v7230, %v7720
  %v7724 = vmul.f32 %v7723, %v40
  %v7725 = vxor.u32 %v7724, 2147483648
  %v7726 = vmul.f32 %v7725, 1.442695
  %v7727 = vpow.pop %v7726
  %v7728 = vadd.f32 %v7727, 1.0
  %v7729 = vrcp.pop %v7728
  %v7730 = vmul.f32 1.0, %v7729
  %v7731 = vmul.f32 %v7730, 2.0
  %v7732 = vsub.f32 %v7731, 1.0
  %v7733 = vsel %vm39, %v7732, %v7730
  %v7734 = vmul.f32 %v7733, %v6220
  %7736 = vrot.lane.b32.xlu0 %v7733, 64
  %v7737 = vpop.permute.xlu0 %7736
  %v7739 = vmul.f32 %v7733, %v7737
  %7741 = vrot.lane.b32.xlu0 %v7739, 32
  %v7742 = vpop.permute.xlu0 %7741
  %v7744 = vadd.f32 %v7734, %v7742
  %v7745 = vtanh.pop %v7744
  %7747 = vrot.lane.b32.xlu0 %v7745, 64
  %v7748 = vpop.permute.xlu0 %7747
  %v7750 = vmul.f32 %v7733, %v7748
  %7751 = vmatprep.subr.mxu0 0.0
  %v7752 = vand.u32 %v47, 4294901760
  %7753 = vmatpush1.msra.mxu0 %v7752
  %7754 = vmatprep.subr.mxu0 0.0
  %v7755 = vand.u32 %v48, 4294901760
  %7756 = vmatpush1.msra.mxu0 %v7755
  %7757 = vmatprep.subr.mxu0 0.0
  %v7758 = vand.u32 %v49, 4294901760
  %7759 = vmatpush1.msra.mxu0 %v7758
  %7760 = vmatprep.subr.mxu0 0.0
  %v7761 = vand.u32 %v50, 4294901760
  %7762 = vmatpush1.msra.mxu0 %v7761
  %7763 = vmatprep.subr.mxu0 0.0
  %7764 = vmatpush1.msra.mxu0 0.0
  %7765 = vmatprep.subr.mxu0 0.0
  %7766 = vmatpush1.msra.mxu0 0.0
  %7767 = vmatprep.subr.mxu0 0.0
  %7768 = vmatpush1.msra.mxu0 0.0
  %7769 = vmatprep.subr.mxu0 0.0
  %7770 = vmatpush1.msra.mxu0 0.0
  %7771 = vmatprep.subr.mxu0 0.0
  %7772 = vmatpush1.msra.mxu0 0.0
  %7773 = vmatprep.subr.mxu0 0.0
  %7774 = vmatpush1.msra.mxu0 0.0
  %7775 = vmatprep.subr.mxu0 0.0
  %7776 = vmatpush1.msra.mxu0 0.0
  %7777 = vmatprep.subr.mxu0 0.0
  %7778 = vmatpush1.msra.mxu0 0.0
  %7779 = vmatprep.subr.mxu0 0.0
  %7780 = vmatpush1.msra.mxu0 0.0
  %7781 = vmatprep.subr.mxu0 0.0
  %7782 = vmatpush1.msra.mxu0 0.0
  %7783 = vmatprep.subr.mxu0 0.0
  %7784 = vmatpush1.msra.mxu0 0.0
  %7785 = vmatprep.subr.mxu0 0.0
  %7786 = vmatpush1.msra.mxu0 0.0
  %7787 = vmatprep.subr.mxu0 0.0
  %7788 = vmatpush1.msra.mxu0 0.0
  %7789 = vmatprep.subr.mxu0 0.0
  %7790 = vmatpush1.msra.mxu0 0.0
  %7791 = vmatprep.subr.mxu0 0.0
  %7792 = vmatpush1.msra.mxu0 0.0
  %7793 = vmatprep.subr.mxu0 0.0
  %7794 = vmatpush1.msra.mxu0 0.0
  %7795 = vmatprep.subr.mxu0 0.0
  %7796 = vmatpush1.msra.mxu0 0.0
  %7797 = vmatprep.subr.mxu0 0.0
  %7798 = vmatpush1.msra.mxu0 0.0
  %7799 = vmatprep.subr.mxu0 0.0
  %7800 = vmatpush1.msra.mxu0 0.0
  %7801 = vmatprep.subr.mxu0 0.0
  %7802 = vmatpush1.msra.mxu0 0.0
  %7803 = vmatprep.subr.mxu0 0.0
  %7804 = vmatpush1.msra.mxu0 0.0
  %7805 = vmatprep.subr.mxu0 0.0
  %7806 = vmatpush1.msra.mxu0 0.0
  %7807 = vmatprep.subr.mxu0 0.0
  %7808 = vmatpush1.msra.mxu0 0.0
  %7809 = vmatprep.subr.mxu0 0.0
  %7810 = vmatpush1.msra.mxu0 0.0
  %7811 = vmatprep.subr.mxu0 0.0
  %7812 = vmatpush1.msra.mxu0 0.0
  %7813 = vmatprep.subr.mxu0 0.0
  %7814 = vmatpush1.msra.mxu0 0.0
  %7815 = vmatprep.subr.mxu0 0.0
  %7816 = vmatpush1.msra.mxu0 0.0
  %7817 = vmatprep.subr.mxu0 0.0
  %7818 = vmatpush1.msra.mxu0 0.0
  %7819 = vmatprep.mubr.f32.mxu0 0.0
  %v7820 = vand.u32 %v6746, 4294901760
  %v7821 = vsub.f32 %v6746, %v7820
  %v7822 = vand.u32 %v7821, 4294901760
  %v7823 = vsub.f32 %v7821, %v7822
  %v7824 = vand.u32 %v7823, 4294901760
  %7825 = vmatmul.mubr.f32.gmra.mrb[0].mxu0 %v7824
  %v7826 = vpop.f32.mrb[0].mxu0
  %v7827 = vadd.f32 0.0, %v7826
  %v7828 = vpop.f32.mrb[0].mxu0
  %7829 = vdwg.mxu0
  %7830 = vmatprep.subr.mxu0 0.0
  %v7831 = vand.u32 %v47, 4294901760
  %v7832 = vsub.f32 %v47, %v7831
  %v7833 = vand.u32 %v7832, 4294901760
  %v7834 = vsub.f32 %v7832, %v7833
  %v7835 = vand.u32 %v7834, 4294901760
  %7836 = vmatpush1.msra.mxu0 %v7835
  %7837 = vmatprep.subr.mxu0 0.0
  %v7838 = vand.u32 %v48, 4294901760
  %v7839 = vsub.f32 %v48, %v7838
  %v7840 = vand.u32 %v7839, 4294901760
  %v7841 = vsub.f32 %v7839, %v7840
  %v7842 = vand.u32 %v7841, 4294901760
  %7843 = vmatpush1.msra.mxu0 %v7842
  %7844 = vmatprep.subr.mxu0 0.0
  %v7845 = vand.u32 %v49, 4294901760
  %v7846 = vsub.f32 %v49, %v7845
  %v7847 = vand.u32 %v7846, 4294901760
  %v7848 = vsub.f32 %v7846, %v7847
  %v7849 = vand.u32 %v7848, 4294901760
  %7850 = vmatpush1.msra.mxu0 %v7849
  %7851 = vmatprep.subr.mxu0 0.0
  %v7852 = vand.u32 %v50, 4294901760
  %v7853 = vsub.f32 %v50, %v7852
  %v7854 = vand.u32 %v7853, 4294901760
  %v7855 = vsub.f32 %v7853, %v7854
  %v7856 = vand.u32 %v7855, 4294901760
  %7857 = vmatpush1.msra.mxu0 %v7856
  %7858 = vmatprep.subr.mxu0 0.0
  %7859 = vmatpush1.msra.mxu0 0.0
  %7860 = vmatprep.subr.mxu0 0.0
  %7861 = vmatpush1.msra.mxu0 0.0
  %7862 = vmatprep.subr.mxu0 0.0
  %7863 = vmatpush1.msra.mxu0 0.0
  %7864 = vmatprep.subr.mxu0 0.0
  %7865 = vmatpush1.msra.mxu0 0.0
  %7866 = vmatprep.subr.mxu0 0.0
  %7867 = vmatpush1.msra.mxu0 0.0
  %7868 = vmatprep.subr.mxu0 0.0
  %7869 = vmatpush1.msra.mxu0 0.0
  %7870 = vmatprep.subr.mxu0 0.0
  %7871 = vmatpush1.msra.mxu0 0.0
  %7872 = vmatprep.subr.mxu0 0.0
  %7873 = vmatpush1.msra.mxu0 0.0
  %7874 = vmatprep.subr.mxu0 0.0
  %7875 = vmatpush1.msra.mxu0 0.0
  %7876 = vmatprep.subr.mxu0 0.0
  %7877 = vmatpush1.msra.mxu0 0.0
  %7878 = vmatprep.subr.mxu0 0.0
  %7879 = vmatpush1.msra.mxu0 0.0
  %7880 = vmatprep.subr.mxu0 0.0
  %7881 = vmatpush1.msra.mxu0 0.0
  %7882 = vmatprep.subr.mxu0 0.0
  %7883 = vmatpush1.msra.mxu0 0.0
  %7884 = vmatprep.subr.mxu0 0.0
  %7885 = vmatpush1.msra.mxu0 0.0
  %7886 = vmatprep.subr.mxu0 0.0
  %7887 = vmatpush1.msra.mxu0 0.0
  %7888 = vmatprep.subr.mxu0 0.0
  %7889 = vmatpush1.msra.mxu0 0.0
  %7890 = vmatprep.subr.mxu0 0.0
  %7891 = vmatpush1.msra.mxu0 0.0
  %7892 = vmatprep.subr.mxu0 0.0
  %7893 = vmatpush1.msra.mxu0 0.0
  %7894 = vmatprep.subr.mxu0 0.0
  %7895 = vmatpush1.msra.mxu0 0.0
  %7896 = vmatprep.subr.mxu0 0.0
  %7897 = vmatpush1.msra.mxu0 0.0
  %7898 = vmatprep.subr.mxu0 0.0
  %7899 = vmatpush1.msra.mxu0 0.0
  %7900 = vmatprep.subr.mxu0 0.0
  %7901 = vmatpush1.msra.mxu0 0.0
  %7902 = vmatprep.subr.mxu0 0.0
  %7903 = vmatpush1.msra.mxu0 0.0
  %7904 = vmatprep.subr.mxu0 0.0
  %7905 = vmatpush1.msra.mxu0 0.0
  %7906 = vmatprep.subr.mxu0 0.0
  %7907 = vmatpush1.msra.mxu0 0.0
  %7908 = vmatprep.subr.mxu0 0.0
  %7909 = vmatpush1.msra.mxu0 0.0
  %7910 = vmatprep.subr.mxu0 0.0
  %7911 = vmatpush1.msra.mxu0 0.0
  %7912 = vmatprep.subr.mxu0 0.0
  %7913 = vmatpush1.msra.mxu0 0.0
  %7914 = vmatprep.mubr.f32.mxu0 0.0
  %v7915 = vand.u32 %v6746, 4294901760
  %7916 = vmatmul.mubr.f32.gmra.mrb[0].mxu0 %v7915
  %v7917 = vpop.f32.mrb[0].mxu0
  %v7918 = vadd.f32 %v7827, %v7917
  %v7919 = vpop.f32.mrb[0].mxu0
  %7920 = vdwg.mxu0
  %7921 = vmatprep.subr.mxu0 0.0
  %v7922 = vand.u32 %v47, 4294901760
  %v7923 = vsub.f32 %v47, %v7922
  %7924 = vmatpush1.msra.mxu0 %v7923
  %7925 = vmatprep.subr.mxu0 0.0
  %v7926 = vand.u32 %v48, 4294901760
  %v7927 = vsub.f32 %v48, %v7926
  %7928 = vmatpush1.msra.mxu0 %v7927
  %7929 = vmatprep.subr.mxu0 0.0
  %v7930 = vand.u32 %v49, 4294901760
  %v7931 = vsub.f32 %v49, %v7930
  %7932 = vmatpush1.msra.mxu0 %v7931
  %7933 = vmatprep.subr.mxu0 0.0
  %v7934 = vand.u32 %v50, 4294901760
  %v7935 = vsub.f32 %v50, %v7934
  %7936 = vmatpush1.msra.mxu0 %v7935
  %7937 = vmatprep.subr.mxu0 0.0
  %7938 = vmatpush1.msra.mxu0 0.0
  %7939 = vmatprep.subr.mxu0 0.0
  %7940 = vmatpush1.msra.mxu0 0.0
  %7941 = vmatprep.subr.mxu0 0.0
  %7942 = vmatpush1.msra.mxu0 0.0
  %7943 = vmatprep.subr.mxu0 0.0
  %7944 = vmatpush1.msra.mxu0 0.0
  %7945 = vmatprep.subr.mxu0 0.0
  %7946 = vmatpush1.msra.mxu0 0.0
  %7947 = vmatprep.subr.mxu0 0.0
  %7948 = vmatpush1.msra.mxu0 0.0
  %7949 = vmatprep.subr.mxu0 0.0
  %7950 = vmatpush1.msra.mxu0 0.0
  %7951 = vmatprep.subr.mxu0 0.0
  %7952 = vmatpush1.msra.mxu0 0.0
  %7953 = vmatprep.subr.mxu0 0.0
  %7954 = vmatpush1.msra.mxu0 0.0
  %7955 = vmatprep.subr.mxu0 0.0
  %7956 = vmatpush1.msra.mxu0 0.0
  %7957 = vmatprep.subr.mxu0 0.0
  %7958 = vmatpush1.msra.mxu0 0.0
  %7959 = vmatprep.subr.mxu0 0.0
  %7960 = vmatpush1.msra.mxu0 0.0
  %7961 = vmatprep.subr.mxu0 0.0
  %7962 = vmatpush1.msra.mxu0 0.0
  %7963 = vmatprep.subr.mxu0 0.0
  %7964 = vmatpush1.msra.mxu0 0.0
  %7965 = vmatprep.subr.mxu0 0.0
  %7966 = vmatpush1.msra.mxu0 0.0
  %7967 = vmatprep.subr.mxu0 0.0
  %7968 = vmatpush1.msra.mxu0 0.0
  %7969 = vmatprep.subr.mxu0 0.0
  %7970 = vmatpush1.msra.mxu0 0.0
  %7971 = vmatprep.subr.mxu0 0.0
  %7972 = vmatpush1.msra.mxu0 0.0
  %7973 = vmatprep.subr.mxu0 0.0
  %7974 = vmatpush1.msra.mxu0 0.0
  %7975 = vmatprep.subr.mxu0 0.0
  %7976 = vmatpush1.msra.mxu0 0.0
  %7977 = vmatprep.subr.mxu0 0.0
  %7978 = vmatpush1.msra.mxu0 0.0
  %7979 = vmatprep.subr.mxu0 0.0
  %7980 = vmatpush1.msra.mxu0 0.0
  %7981 = vmatprep.subr.mxu0 0.0
  %7982 = vmatpush1.msra.mxu0 0.0
  %7983 = vmatprep.subr.mxu0 0.0
  %7984 = vmatpush1.msra.mxu0 0.0
  %7985 = vmatprep.subr.mxu0 0.0
  %7986 = vmatpush1.msra.mxu0 0.0
  %7987 = vmatprep.subr.mxu0 0.0
  %7988 = vmatpush1.msra.mxu0 0.0
  %7989 = vmatprep.subr.mxu0 0.0
  %7990 = vmatpush1.msra.mxu0 0.0
  %7991 = vmatprep.subr.mxu0 0.0
  %7992 = vmatpush1.msra.mxu0 0.0
  %7993 = vmatprep.mubr.f32.mxu0 0.0
  %v7994 = vand.u32 %v6746, 4294901760
  %v7995 = vsub.f32 %v6746, %v7994
  %7996 = vmatmul.mubr.f32.gmra.mrb[0].mxu0 %v7995
  %v7997 = vpop.f32.mrb[0].mxu0
  %v7998 = vadd.f32 %v7918, %v7997
  %v7999 = vpop.f32.mrb[0].mxu0
  %8000 = vdwg.mxu0
  %8001 = vmatprep.subr.mxu0 0.0
  %v8002 = vand.u32 %v47, 4294901760
  %8003 = vmatpush1.msra.mxu0 %v8002
  %8004 = vmatprep.subr.mxu0 0.0
  %v8005 = vand.u32 %v48, 4294901760
  %8006 = vmatpush1.msra.mxu0 %v8005
  %8007 = vmatprep.subr.mxu0 0.0
  %v8008 = vand.u32 %v49, 4294901760
  %8009 = vmatpush1.msra.mxu0 %v8008
  %8010 = vmatprep.subr.mxu0 0.0
  %v8011 = vand.u32 %v50, 4294901760
  %8012 = vmatpush1.msra.mxu0 %v8011
  %8013 = vmatprep.subr.mxu0 0.0
  %8014 = vmatpush1.msra.mxu0 0.0
  %8015 = vmatprep.subr.mxu0 0.0
  %8016 = vmatpush1.msra.mxu0 0.0
  %8017 = vmatprep.subr.mxu0 0.0
  %8018 = vmatpush1.msra.mxu0 0.0
  %8019 = vmatprep.subr.mxu0 0.0
  %8020 = vmatpush1.msra.mxu0 0.0
  %8021 = vmatprep.subr.mxu0 0.0
  %8022 = vmatpush1.msra.mxu0 0.0
  %8023 = vmatprep.subr.mxu0 0.0
  %8024 = vmatpush1.msra.mxu0 0.0
  %8025 = vmatprep.subr.mxu0 0.0
  %8026 = vmatpush1.msra.mxu0 0.0
  %8027 = vmatprep.subr.mxu0 0.0
  %8028 = vmatpush1.msra.mxu0 0.0
  %8029 = vmatprep.subr.mxu0 0.0
  %8030 = vmatpush1.msra.mxu0 0.0
  %8031 = vmatprep.subr.mxu0 0.0
  %8032 = vmatpush1.msra.mxu0 0.0
  %8033 = vmatprep.subr.mxu0 0.0
  %8034 = vmatpush1.msra.mxu0 0.0
  %8035 = vmatprep.subr.mxu0 0.0
  %8036 = vmatpush1.msra.mxu0 0.0
  %8037 = vmatprep.subr.mxu0 0.0
  %8038 = vmatpush1.msra.mxu0 0.0
  %8039 = vmatprep.subr.mxu0 0.0
  %8040 = vmatpush1.msra.mxu0 0.0
  %8041 = vmatprep.subr.mxu0 0.0
  %8042 = vmatpush1.msra.mxu0 0.0
  %8043 = vmatprep.subr.mxu0 0.0
  %8044 = vmatpush1.msra.mxu0 0.0
  %8045 = vmatprep.subr.mxu0 0.0
  %8046 = vmatpush1.msra.mxu0 0.0
  %8047 = vmatprep.subr.mxu0 0.0
  %8048 = vmatpush1.msra.mxu0 0.0
  %8049 = vmatprep.subr.mxu0 0.0
  %8050 = vmatpush1.msra.mxu0 0.0
  %8051 = vmatprep.subr.mxu0 0.0
  %8052 = vmatpush1.msra.mxu0 0.0
  %8053 = vmatprep.subr.mxu0 0.0
  %8054 = vmatpush1.msra.mxu0 0.0
  %8055 = vmatprep.subr.mxu0 0.0
  %8056 = vmatpush1.msra.mxu0 0.0
  %8057 = vmatprep.subr.mxu0 0.0
  %8058 = vmatpush1.msra.mxu0 0.0
  %8059 = vmatprep.subr.mxu0 0.0
  %8060 = vmatpush1.msra.mxu0 0.0
  %8061 = vmatprep.subr.mxu0 0.0
  %8062 = vmatpush1.msra.mxu0 0.0
  %8063 = vmatprep.subr.mxu0 0.0
  %8064 = vmatpush1.msra.mxu0 0.0
  %8065 = vmatprep.subr.mxu0 0.0
  %8066 = vmatpush1.msra.mxu0 0.0
  %8067 = vmatprep.subr.mxu0 0.0
  %8068 = vmatpush1.msra.mxu0 0.0
  %8069 = vmatprep.mubr.f32.mxu0 0.0
  %v8070 = vand.u32 %v6746, 4294901760
  %v8071 = vsub.f32 %v6746, %v8070
  %v8072 = vand.u32 %v8071, 4294901760
  %8073 = vmatmul.mubr.f32.gmra.mrb[0].mxu0 %v8072
  %v8074 = vpop.f32.mrb[0].mxu0
  %v8075 = vadd.f32 %v7998, %v8074
  %v8076 = vpop.f32.mrb[0].mxu0
  %8077 = vdwg.mxu0
  %8078 = vmatprep.subr.mxu0 0.0
  %v8079 = vand.u32 %v47, 4294901760
  %v8080 = vsub.f32 %v47, %v8079
  %v8081 = vand.u32 %v8080, 4294901760
  %8082 = vmatpush1.msra.mxu0 %v8081
  %8083 = vmatprep.subr.mxu0 0.0
  %v8084 = vand.u32 %v48, 4294901760
  %v8085 = vsub.f32 %v48, %v8084
  %v8086 = vand.u32 %v8085, 4294901760
  %8087 = vmatpush1.msra.mxu0 %v8086
  %8088 = vmatprep.subr.mxu0 0.0
  %v8089 = vand.u32 %v49, 4294901760
  %v8090 = vsub.f32 %v49, %v8089
  %v8091 = vand.u32 %v8090, 4294901760
  %8092 = vmatpush1.msra.mxu0 %v8091
  %8093 = vmatprep.subr.mxu0 0.0
  %v8094 = vand.u32 %v50, 4294901760
  %v8095 = vsub.f32 %v50, %v8094
  %v8096 = vand.u32 %v8095, 4294901760
  %8097 = vmatpush1.msra.mxu0 %v8096
  %8098 = vmatprep.subr.mxu0 0.0
  %8099 = vmatpush1.msra.mxu0 0.0
  %8100 = vmatprep.subr.mxu0 0.0
  %8101 = vmatpush1.msra.mxu0 0.0
  %8102 = vmatprep.subr.mxu0 0.0
  %8103 = vmatpush1.msra.mxu0 0.0
  %8104 = vmatprep.subr.mxu0 0.0
  %8105 = vmatpush1.msra.mxu0 0.0
  %8106 = vmatprep.subr.mxu0 0.0
  %8107 = vmatpush1.msra.mxu0 0.0
  %8108 = vmatprep.subr.mxu0 0.0
  %8109 = vmatpush1.msra.mxu0 0.0
  %8110 = vmatprep.subr.mxu0 0.0
  %8111 = vmatpush1.msra.mxu0 0.0
  %8112 = vmatprep.subr.mxu0 0.0
  %8113 = vmatpush1.msra.mxu0 0.0
  %8114 = vmatprep.subr.mxu0 0.0
  %8115 = vmatpush1.msra.mxu0 0.0
  %8116 = vmatprep.subr.mxu0 0.0
  %8117 = vmatpush1.msra.mxu0 0.0
  %8118 = vmatprep.subr.mxu0 0.0
  %8119 = vmatpush1.msra.mxu0 0.0
  %8120 = vmatprep.subr.mxu0 0.0
  %8121 = vmatpush1.msra.mxu0 0.0
  %8122 = vmatprep.subr.mxu0 0.0
  %8123 = vmatpush1.msra.mxu0 0.0
  %8124 = vmatprep.subr.mxu0 0.0
  %8125 = vmatpush1.msra.mxu0 0.0
  %8126 = vmatprep.subr.mxu0 0.0
  %8127 = vmatpush1.msra.mxu0 0.0
  %8128 = vmatprep.subr.mxu0 0.0
  %8129 = vmatpush1.msra.mxu0 0.0
  %8130 = vmatprep.subr.mxu0 0.0
  %8131 = vmatpush1.msra.mxu0 0.0
  %8132 = vmatprep.subr.mxu0 0.0
  %8133 = vmatpush1.msra.mxu0 0.0
  %8134 = vmatprep.subr.mxu0 0.0
  %8135 = vmatpush1.msra.mxu0 0.0
  %8136 = vmatprep.subr.mxu0 0.0
  %8137 = vmatpush1.msra.mxu0 0.0
  %8138 = vmatprep.subr.mxu0 0.0
  %8139 = vmatpush1.msra.mxu0 0.0
  %8140 = vmatprep.subr.mxu0 0.0
  %8141 = vmatpush1.msra.mxu0 0.0
  %8142 = vmatprep.subr.mxu0 0.0
  %8143 = vmatpush1.msra.mxu0 0.0
  %8144 = vmatprep.subr.mxu0 0.0
  %8145 = vmatpush1.msra.mxu0 0.0
  %8146 = vmatprep.subr.mxu0 0.0
  %8147 = vmatpush1.msra.mxu0 0.0
  %8148 = vmatprep.subr.mxu0 0.0
  %8149 = vmatpush1.msra.mxu0 0.0
  %8150 = vmatprep.subr.mxu0 0.0
  %8151 = vmatpush1.msra.mxu0 0.0
  %8152 = vmatprep.subr.mxu0 0.0
  %8153 = vmatpush1.msra.mxu0 0.0
  %8154 = vmatprep.mubr.f32.mxu0 0.0
  %v8155 = vand.u32 %v6746, 4294901760
  %8156 = vmatmul.mubr.f32.gmra.mrb[0].mxu0 %v8155
  %v8157 = vpop.f32.mrb[0].mxu0
  %v8158 = vadd.f32 %v8075, %v8157
  %v8159 = vpop.f32.mrb[0].mxu0
  %8160 = vdwg.mxu0
  %8161 = vmatprep.subr.mxu0 0.0
  %v8162 = vand.u32 %v47, 4294901760
  %8163 = vmatpush1.msra.mxu0 %v8162
  %8164 = vmatprep.subr.mxu0 0.0
  %v8165 = vand.u32 %v48, 4294901760
  %8166 = vmatpush1.msra.mxu0 %v8165
  %8167 = vmatprep.subr.mxu0 0.0
  %v8168 = vand.u32 %v49, 4294901760
  %8169 = vmatpush1.msra.mxu0 %v8168
  %8170 = vmatprep.subr.mxu0 0.0
  %v8171 = vand.u32 %v50, 4294901760
  %8172 = vmatpush1.msra.mxu0 %v8171
  %8173 = vmatprep.subr.mxu0 0.0
  %8174 = vmatpush1.msra.mxu0 0.0
  %8175 = vmatprep.subr.mxu0 0.0
  %8176 = vmatpush1.msra.mxu0 0.0
  %8177 = vmatprep.subr.mxu0 0.0
  %8178 = vmatpush1.msra.mxu0 0.0
  %8179 = vmatprep.subr.mxu0 0.0
  %8180 = vmatpush1.msra.mxu0 0.0
  %8181 = vmatprep.subr.mxu0 0.0
  %8182 = vmatpush1.msra.mxu0 0.0
  %8183 = vmatprep.subr.mxu0 0.0
  %8184 = vmatpush1.msra.mxu0 0.0
  %8185 = vmatprep.subr.mxu0 0.0
  %8186 = vmatpush1.msra.mxu0 0.0
  %8187 = vmatprep.subr.mxu0 0.0
  %8188 = vmatpush1.msra.mxu0 0.0
  %8189 = vmatprep.subr.mxu0 0.0
  %8190 = vmatpush1.msra.mxu0 0.0
  %8191 = vmatprep.subr.mxu0 0.0
  %8192 = vmatpush1.msra.mxu0 0.0
  %8193 = vmatprep.subr.mxu0 0.0
  %8194 = vmatpush1.msra.mxu0 0.0
  %8195 = vmatprep.subr.mxu0 0.0
  %8196 = vmatpush1.msra.mxu0 0.0
  %8197 = vmatprep.subr.mxu0 0.0
  %8198 = vmatpush1.msra.mxu0 0.0
  %8199 = vmatprep.subr.mxu0 0.0
  %8200 = vmatpush1.msra.mxu0 0.0
  %8201 = vmatprep.subr.mxu0 0.0
  %8202 = vmatpush1.msra.mxu0 0.0
  %8203 = vmatprep.subr.mxu0 0.0
  %8204 = vmatpush1.msra.mxu0 0.0
  %8205 = vmatprep.subr.mxu0 0.0
  %8206 = vmatpush1.msra.mxu0 0.0
  %8207 = vmatprep.subr.mxu0 0.0
  %8208 = vmatpush1.msra.mxu0 0.0
  %8209 = vmatprep.subr.mxu0 0.0
  %8210 = vmatpush1.msra.mxu0 0.0
  %8211 = vmatprep.subr.mxu0 0.0
  %8212 = vmatpush1.msra.mxu0 0.0
  %8213 = vmatprep.subr.mxu0 0.0
  %8214 = vmatpush1.msra.mxu0 0.0
  %8215 = vmatprep.subr.mxu0 0.0
  %8216 = vmatpush1.msra.mxu0 0.0
  %8217 = vmatprep.subr.mxu0 0.0
  %8218 = vmatpush1.msra.mxu0 0.0
  %8219 = vmatprep.subr.mxu0 0.0
  %8220 = vmatpush1.msra.mxu0 0.0
  %8221 = vmatprep.subr.mxu0 0.0
  %8222 = vmatpush1.msra.mxu0 0.0
  %8223 = vmatprep.subr.mxu0 0.0
  %8224 = vmatpush1.msra.mxu0 0.0
  %8225 = vmatprep.subr.mxu0 0.0
  %8226 = vmatpush1.msra.mxu0 0.0
  %8227 = vmatprep.subr.mxu0 0.0
  %8228 = vmatpush1.msra.mxu0 0.0
  %8229 = vmatprep.mubr.f32.mxu0 0.0
  %v8230 = vand.u32 %v6746, 4294901760
  %8231 = vmatmul.mubr.f32.gmra.mrb[0].mxu0 %v8230
  %v8232 = vpop.f32.mrb[0].mxu0
  %v8233 = vadd.f32 %v8158, %v8232
  %v8234 = vpop.f32.mrb[0].mxu0
  %8235 = vdwg.mxu0
  %v8237 = vrot.slane %v8233, 6
  %v8239 = vadd.f32 %v114, %v8237
  %v8240 = vmul.f32 %v8239, %v40
  %v8241 = vxor.u32 %v8240, 2147483648
  %v8242 = vmul.f32 %v8241, 1.442695
  %v8243 = vpow.pop %v8242
  %v8244 = vadd.f32 %v8243, 1.0
  %v8245 = vrcp.pop %v8244
  %v8246 = vmul.f32 1.0, %v8245
  %v8247 = vmul.f32 %v8246, 2.0
  %v8248 = vsub.f32 %v8247, 1.0
  %v8249 = vsel %vm39, %v8248, %v8246
  %v8251 = vrot.slane %v6736, 6
  %v8253 = vmul.f32 %v8249, %v8251
  %8255 = vrot.lane.b32.xlu0 %v8249, 64
  %v8256 = vpop.permute.xlu0 %8255
  %v8258 = vmul.f32 %v8249, %v8256
  %8260 = vrot.lane.b32.xlu0 %v8258, 32
  %v8261 = vpop.permute.xlu0 %8260
  %v8263 = vadd.f32 %v8253, %v8261
  %v8264 = vtanh.pop %v8263
  %8266 = vrot.lane.b32.xlu0 %v8264, 64
  %v8267 = vpop.permute.xlu0 %8266
  %v8269 = vmul.f32 %v8249, %v8267
  %v8271 = vrot.slane %v8269, 2
  %8272 = vrot.lane.b32.xlu0 %v8271, 32
  %v8273 = vpop.permute.xlu0 %8272
  %v8274 = vsel %vm117, %v8273, 0
  %8276 = vmatprep.subr.mxu0 0.0
  %v8277 = vand.u32 %v43, 4294901760
  %8278 = vmatpush1.msra.mxu0 %v8277
  %8279 = vmatprep.subr.mxu0 0.0
  %v8280 = vand.u32 %v44, 4294901760
  %8281 = vmatpush1.msra.mxu0 %v8280
  %8282 = vmatprep.subr.mxu0 0.0
  %v8283 = vand.u32 %v45, 4294901760
  %8284 = vmatpush1.msra.mxu0 %v8283
  %8285 = vmatprep.subr.mxu0 0.0
  %v8286 = vand.u32 %v46, 4294901760
  %8287 = vmatpush1.msra.mxu0 %v8286
  %8288 = vmatprep.subr.mxu0 0.0
  %8289 = vmatpush1.msra.mxu0 0.0
  %8290 = vmatprep.subr.mxu0 0.0
  %8291 = vmatpush1.msra.mxu0 0.0
  %8292 = vmatprep.subr.mxu0 0.0
  %8293 = vmatpush1.msra.mxu0 0.0
  %8294 = vmatprep.subr.mxu0 0.0
  %8295 = vmatpush1.msra.mxu0 0.0
  %8296 = vmatprep.subr.mxu0 0.0
  %8297 = vmatpush1.msra.mxu0 0.0
  %8298 = vmatprep.subr.mxu0 0.0
  %8299 = vmatpush1.msra.mxu0 0.0
  %8300 = vmatprep.subr.mxu0 0.0
  %8301 = vmatpush1.msra.mxu0 0.0
  %8302 = vmatprep.subr.mxu0 0.0
  %8303 = vmatpush1.msra.mxu0 0.0
  %8304 = vmatprep.subr.mxu0 0.0
  %8305 = vmatpush1.msra.mxu0 0.0
  %8306 = vmatprep.subr.mxu0 0.0
  %8307 = vmatpush1.msra.mxu0 0.0
  %8308 = vmatprep.subr.mxu0 0.0
  %8309 = vmatpush1.msra.mxu0 0.0
  %8310 = vmatprep.subr.mxu0 0.0
  %8311 = vmatpush1.msra.mxu0 0.0
  %8312 = vmatprep.subr.mxu0 0.0
  %8313 = vmatpush1.msra.mxu0 0.0
  %8314 = vmatprep.subr.mxu0 0.0
  %8315 = vmatpush1.msra.mxu0 0.0
  %8316 = vmatprep.subr.mxu0 0.0
  %8317 = vmatpush1.msra.mxu0 0.0
  %8318 = vmatprep.subr.mxu0 0.0
  %8319 = vmatpush1.msra.mxu0 0.0
  %8320 = vmatprep.subr.mxu0 0.0
  %8321 = vmatpush1.msra.mxu0 0.0
  %8322 = vmatprep.subr.mxu0 0.0
  %8323 = vmatpush1.msra.mxu0 0.0
  %8324 = vmatprep.subr.mxu0 0.0
  %8325 = vmatpush1.msra.mxu0 0.0
  %8326 = vmatprep.subr.mxu0 0.0
  %8327 = vmatpush1.msra.mxu0 0.0
  %8328 = vmatprep.subr.mxu0 0.0
  %8329 = vmatpush1.msra.mxu0 0.0
  %8330 = vmatprep.subr.mxu0 0.0
  %8331 = vmatpush1.msra.mxu0 0.0
  %8332 = vmatprep.subr.mxu0 0.0
  %8333 = vmatpush1.msra.mxu0 0.0
  %8334 = vmatprep.subr.mxu0 0.0
  %8335 = vmatpush1.msra.mxu0 0.0
  %8336 = vmatprep.subr.mxu0 0.0
  %8337 = vmatpush1.msra.mxu0 0.0
  %8338 = vmatprep.subr.mxu0 0.0
  %8339 = vmatpush1.msra.mxu0 0.0
  %8340 = vmatprep.subr.mxu0 0.0
  %8341 = vmatpush1.msra.mxu0 0.0
  %8342 = vmatprep.subr.mxu0 0.0
  %8343 = vmatpush1.msra.mxu0 0.0
  %8344 = vmatprep.mubr.f32.mxu0 0.0
  %v8345 = vand.u32 %v8274, 4294901760
  %v8346 = vsub.f32 %v8274, %v8345
  %v8347 = vand.u32 %v8346, 4294901760
  %v8348 = vsub.f32 %v8346, %v8347
  %v8349 = vand.u32 %v8348, 4294901760
  %8350 = vmatmul.mubr.f32.gmra.mrb[0].mxu0 %v8349
  %v8351 = vpop.f32.mrb[0].mxu0
  %v8352 = vadd.f32 %v638, %v8351
  %v8353 = vpop.f32.mrb[0].mxu0
  %8354 = vdwg.mxu0
  %8355 = vmatprep.subr.mxu0 0.0
  %v8356 = vand.u32 %v43, 4294901760
  %v8357 = vsub.f32 %v43, %v8356
  %v8358 = vand.u32 %v8357, 4294901760
  %v8359 = vsub.f32 %v8357, %v8358
  %v8360 = vand.u32 %v8359, 4294901760
  %8361 = vmatpush1.msra.mxu0 %v8360
  %8362 = vmatprep.subr.mxu0 0.0
  %v8363 = vand.u32 %v44, 4294901760
  %v8364 = vsub.f32 %v44, %v8363
  %v8365 = vand.u32 %v8364, 4294901760
  %v8366 = vsub.f32 %v8364, %v8365
  %v8367 = vand.u32 %v8366, 4294901760
  %8368 = vmatpush1.msra.mxu0 %v8367
  %8369 = vmatprep.subr.mxu0 0.0
  %v8370 = vand.u32 %v45, 4294901760
  %v8371 = vsub.f32 %v45, %v8370
  %v8372 = vand.u32 %v8371, 4294901760
  %v8373 = vsub.f32 %v8371, %v8372
  %v8374 = vand.u32 %v8373, 4294901760
  %8375 = vmatpush1.msra.mxu0 %v8374
  %8376 = vmatprep.subr.mxu0 0.0
  %v8377 = vand.u32 %v46, 4294901760
  %v8378 = vsub.f32 %v46, %v8377
  %v8379 = vand.u32 %v8378, 4294901760
  %v8380 = vsub.f32 %v8378, %v8379
  %v8381 = vand.u32 %v8380, 4294901760
  %8382 = vmatpush1.msra.mxu0 %v8381
  %8383 = vmatprep.subr.mxu0 0.0
  %8384 = vmatpush1.msra.mxu0 0.0
  %8385 = vmatprep.subr.mxu0 0.0
  %8386 = vmatpush1.msra.mxu0 0.0
  %8387 = vmatprep.subr.mxu0 0.0
  %8388 = vmatpush1.msra.mxu0 0.0
  %8389 = vmatprep.subr.mxu0 0.0
  %8390 = vmatpush1.msra.mxu0 0.0
  %8391 = vmatprep.subr.mxu0 0.0
  %8392 = vmatpush1.msra.mxu0 0.0
  %8393 = vmatprep.subr.mxu0 0.0
  %8394 = vmatpush1.msra.mxu0 0.0
  %8395 = vmatprep.subr.mxu0 0.0
  %8396 = vmatpush1.msra.mxu0 0.0
  %8397 = vmatprep.subr.mxu0 0.0
  %8398 = vmatpush1.msra.mxu0 0.0
  %8399 = vmatprep.subr.mxu0 0.0
  %8400 = vmatpush1.msra.mxu0 0.0
  %8401 = vmatprep.subr.mxu0 0.0
  %8402 = vmatpush1.msra.mxu0 0.0
  %8403 = vmatprep.subr.mxu0 0.0
  %8404 = vmatpush1.msra.mxu0 0.0
  %8405 = vmatprep.subr.mxu0 0.0
  %8406 = vmatpush1.msra.mxu0 0.0
  %8407 = vmatprep.subr.mxu0 0.0
  %8408 = vmatpush1.msra.mxu0 0.0
  %8409 = vmatprep.subr.mxu0 0.0
  %8410 = vmatpush1.msra.mxu0 0.0
  %8411 = vmatprep.subr.mxu0 0.0
  %8412 = vmatpush1.msra.mxu0 0.0
  %8413 = vmatprep.subr.mxu0 0.0
  %8414 = vmatpush1.msra.mxu0 0.0
  %8415 = vmatprep.subr.mxu0 0.0
  %8416 = vmatpush1.msra.mxu0 0.0
  %8417 = vmatprep.subr.mxu0 0.0
  %8418 = vmatpush1.msra.mxu0 0.0
  %8419 = vmatprep.subr.mxu0 0.0
  %8420 = vmatpush1.msra.mxu0 0.0
  %8421 = vmatprep.subr.mxu0 0.0
  %8422 = vmatpush1.msra.mxu0 0.0
  %8423 = vmatprep.subr.mxu0 0.0
  %8424 = vmatpush1.msra.mxu0 0.0
  %8425 = vmatprep.subr.mxu0 0.0
  %8426 = vmatpush1.msra.mxu0 0.0
  %8427 = vmatprep.subr.mxu0 0.0
  %8428 = vmatpush1.msra.mxu0 0.0
  %8429 = vmatprep.subr.mxu0 0.0
  %8430 = vmatpush1.msra.mxu0 0.0
  %8431 = vmatprep.subr.mxu0 0.0
  %8432 = vmatpush1.msra.mxu0 0.0
  %8433 = vmatprep.subr.mxu0 0.0
  %8434 = vmatpush1.msra.mxu0 0.0
  %8435 = vmatprep.subr.mxu0 0.0
  %8436 = vmatpush1.msra.mxu0 0.0
  %8437 = vmatprep.subr.mxu0 0.0
  %8438 = vmatpush1.msra.mxu0 0.0
  %8439 = vmatprep.mubr.f32.mxu0 0.0
  %v8440 = vand.u32 %v8274, 4294901760
  %8441 = vmatmul.mubr.f32.gmra.mrb[0].mxu0 %v8440
  %v8442 = vpop.f32.mrb[0].mxu0
  %v8443 = vadd.f32 %v8352, %v8442
  %v8444 = vpop.f32.mrb[0].mxu0
  %8445 = vdwg.mxu0
  %8446 = vmatprep.subr.mxu0 0.0
  %v8447 = vand.u32 %v43, 4294901760
  %v8448 = vsub.f32 %v43, %v8447
  %8449 = vmatpush1.msra.mxu0 %v8448
  %8450 = vmatprep.subr.mxu0 0.0
  %v8451 = vand.u32 %v44, 4294901760
  %v8452 = vsub.f32 %v44, %v8451
  %8453 = vmatpush1.msra.mxu0 %v8452
  %8454 = vmatprep.subr.mxu0 0.0
  %v8455 = vand.u32 %v45, 4294901760
  %v8456 = vsub.f32 %v45, %v8455
  %8457 = vmatpush1.msra.mxu0 %v8456
  %8458 = vmatprep.subr.mxu0 0.0
  %v8459 = vand.u32 %v46, 4294901760
  %v8460 = vsub.f32 %v46, %v8459
  %8461 = vmatpush1.msra.mxu0 %v8460
  %8462 = vmatprep.subr.mxu0 0.0
  %8463 = vmatpush1.msra.mxu0 0.0
  %8464 = vmatprep.subr.mxu0 0.0
  %8465 = vmatpush1.msra.mxu0 0.0
  %8466 = vmatprep.subr.mxu0 0.0
  %8467 = vmatpush1.msra.mxu0 0.0
  %8468 = vmatprep.subr.mxu0 0.0
  %8469 = vmatpush1.msra.mxu0 0.0
  %8470 = vmatprep.subr.mxu0 0.0
  %8471 = vmatpush1.msra.mxu0 0.0
  %8472 = vmatprep.subr.mxu0 0.0
  %8473 = vmatpush1.msra.mxu0 0.0
  %8474 = vmatprep.subr.mxu0 0.0
  %8475 = vmatpush1.msra.mxu0 0.0
  %8476 = vmatprep.subr.mxu0 0.0
  %8477 = vmatpush1.msra.mxu0 0.0
  %8478 = vmatprep.subr.mxu0 0.0
  %8479 = vmatpush1.msra.mxu0 0.0
  %8480 = vmatprep.subr.mxu0 0.0
  %8481 = vmatpush1.msra.mxu0 0.0
  %8482 = vmatprep.subr.mxu0 0.0
  %8483 = vmatpush1.msra.mxu0 0.0
  %8484 = vmatprep.subr.mxu0 0.0
  %8485 = vmatpush1.msra.mxu0 0.0
  %8486 = vmatprep.subr.mxu0 0.0
  %8487 = vmatpush1.msra.mxu0 0.0
  %8488 = vmatprep.subr.mxu0 0.0
  %8489 = vmatpush1.msra.mxu0 0.0
  %8490 = vmatprep.subr.mxu0 0.0
  %8491 = vmatpush1.msra.mxu0 0.0
  %8492 = vmatprep.subr.mxu0 0.0
  %8493 = vmatpush1.msra.mxu0 0.0
  %8494 = vmatprep.subr.mxu0 0.0
  %8495 = vmatpush1.msra.mxu0 0.0
  %8496 = vmatprep.subr.mxu0 0.0
  %8497 = vmatpush1.msra.mxu0 0.0
  %8498 = vmatprep.subr.mxu0 0.0
  %8499 = vmatpush1.msra.mxu0 0.0
  %8500 = vmatprep.subr.mxu0 0.0
  %8501 = vmatpush1.msra.mxu0 0.0
  %8502 = vmatprep.subr.mxu0 0.0
  %8503 = vmatpush1.msra.mxu0 0.0
  %8504 = vmatprep.subr.mxu0 0.0
  %8505 = vmatpush1.msra.mxu0 0.0
  %8506 = vmatprep.subr.mxu0 0.0
  %8507 = vmatpush1.msra.mxu0 0.0
  %8508 = vmatprep.subr.mxu0 0.0
  %8509 = vmatpush1.msra.mxu0 0.0
  %8510 = vmatprep.subr.mxu0 0.0
  %8511 = vmatpush1.msra.mxu0 0.0
  %8512 = vmatprep.subr.mxu0 0.0
  %8513 = vmatpush1.msra.mxu0 0.0
  %8514 = vmatprep.subr.mxu0 0.0
  %8515 = vmatpush1.msra.mxu0 0.0
  %8516 = vmatprep.subr.mxu0 0.0
  %8517 = vmatpush1.msra.mxu0 0.0
  %8518 = vmatprep.mubr.f32.mxu0 0.0
  %v8519 = vand.u32 %v8274, 4294901760
  %v8520 = vsub.f32 %v8274, %v8519
  %8521 = vmatmul.mubr.f32.gmra.mrb[0].mxu0 %v8520
  %v8522 = vpop.f32.mrb[0].mxu0
  %v8523 = vadd.f32 %v8443, %v8522
  %v8524 = vpop.f32.mrb[0].mxu0
  %8525 = vdwg.mxu0
  %8526 = vmatprep.subr.mxu0 0.0
  %v8527 = vand.u32 %v43, 4294901760
  %8528 = vmatpush1.msra.mxu0 %v8527
  %8529 = vmatprep.subr.mxu0 0.0
  %v8530 = vand.u32 %v44, 4294901760
  %8531 = vmatpush1.msra.mxu0 %v8530
  %8532 = vmatprep.subr.mxu0 0.0
  %v8533 = vand.u32 %v45, 4294901760
  %8534 = vmatpush1.msra.mxu0 %v8533
  %8535 = vmatprep.subr.mxu0 0.0
  %v8536 = vand.u32 %v46, 4294901760
  %8537 = vmatpush1.msra.mxu0 %v8536
  %8538 = vmatprep.subr.mxu0 0.0
  %8539 = vmatpush1.msra.mxu0 0.0
  %8540 = vmatprep.subr.mxu0 0.0
  %8541 = vmatpush1.msra.mxu0 0.0
  %8542 = vmatprep.subr.mxu0 0.0
  %8543 = vmatpush1.msra.mxu0 0.0
  %8544 = vmatprep.subr.mxu0 0.0
  %8545 = vmatpush1.msra.mxu0 0.0
  %8546 = vmatprep.subr.mxu0 0.0
  %8547 = vmatpush1.msra.mxu0 0.0
  %8548 = vmatprep.subr.mxu0 0.0
  %8549 = vmatpush1.msra.mxu0 0.0
  %8550 = vmatprep.subr.mxu0 0.0
  %8551 = vmatpush1.msra.mxu0 0.0
  %8552 = vmatprep.subr.mxu0 0.0
  %8553 = vmatpush1.msra.mxu0 0.0
  %8554 = vmatprep.subr.mxu0 0.0
  %8555 = vmatpush1.msra.mxu0 0.0
  %8556 = vmatprep.subr.mxu0 0.0
  %8557 = vmatpush1.msra.mxu0 0.0
  %8558 = vmatprep.subr.mxu0 0.0
  %8559 = vmatpush1.msra.mxu0 0.0
  %8560 = vmatprep.subr.mxu0 0.0
  %8561 = vmatpush1.msra.mxu0 0.0
  %8562 = vmatprep.subr.mxu0 0.0
  %8563 = vmatpush1.msra.mxu0 0.0
  %8564 = vmatprep.subr.mxu0 0.0
  %8565 = vmatpush1.msra.mxu0 0.0
  %8566 = vmatprep.subr.mxu0 0.0
  %8567 = vmatpush1.msra.mxu0 0.0
  %8568 = vmatprep.subr.mxu0 0.0
  %8569 = vmatpush1.msra.mxu0 0.0
  %8570 = vmatprep.subr.mxu0 0.0
  %8571 = vmatpush1.msra.mxu0 0.0
  %8572 = vmatprep.subr.mxu0 0.0
  %8573 = vmatpush1.msra.mxu0 0.0
  %8574 = vmatprep.subr.mxu0 0.0
  %8575 = vmatpush1.msra.mxu0 0.0
  %8576 = vmatprep.subr.mxu0 0.0
  %8577 = vmatpush1.msra.mxu0 0.0
  %8578 = vmatprep.subr.mxu0 0.0
  %8579 = vmatpush1.msra.mxu0 0.0
  %8580 = vmatprep.subr.mxu0 0.0
  %8581 = vmatpush1.msra.mxu0 0.0
  %8582 = vmatprep.subr.mxu0 0.0
  %8583 = vmatpush1.msra.mxu0 0.0
  %8584 = vmatprep.subr.mxu0 0.0
  %8585 = vmatpush1.msra.mxu0 0.0
  %8586 = vmatprep.subr.mxu0 0.0
  %8587 = vmatpush1.msra.mxu0 0.0
  %8588 = vmatprep.subr.mxu0 0.0
  %8589 = vmatpush1.msra.mxu0 0.0
  %8590 = vmatprep.subr.mxu0 0.0
  %8591 = vmatpush1.msra.mxu0 0.0
  %8592 = vmatprep.subr.mxu0 0.0
  %8593 = vmatpush1.msra.mxu0 0.0
  %8594 = vmatprep.mubr.f32.mxu0 0.0
  %v8595 = vand.u32 %v8274, 4294901760
  %v8596 = vsub.f32 %v8274, %v8595
  %v8597 = vand.u32 %v8596, 4294901760
  %8598 = vmatmul.mubr.f32.gmra.mrb[0].mxu0 %v8597
  %v8599 = vpop.f32.mrb[0].mxu0
  %v8600 = vadd.f32 %v8523, %v8599
  %v8601 = vpop.f32.mrb[0].mxu0
  %8602 = vdwg.mxu0
  %8603 = vmatprep.subr.mxu0 0.0
  %v8604 = vand.u32 %v43, 4294901760
  %v8605 = vsub.f32 %v43, %v8604
  %v8606 = vand.u32 %v8605, 4294901760
  %8607 = vmatpush1.msra.mxu0 %v8606
  %8608 = vmatprep.subr.mxu0 0.0
  %v8609 = vand.u32 %v44, 4294901760
  %v8610 = vsub.f32 %v44, %v8609
  %v8611 = vand.u32 %v8610, 4294901760
  %8612 = vmatpush1.msra.mxu0 %v8611
  %8613 = vmatprep.subr.mxu0 0.0
  %v8614 = vand.u32 %v45, 4294901760
  %v8615 = vsub.f32 %v45, %v8614
  %v8616 = vand.u32 %v8615, 4294901760
  %8617 = vmatpush1.msra.mxu0 %v8616
  %8618 = vmatprep.subr.mxu0 0.0
  %v8619 = vand.u32 %v46, 4294901760
  %v8620 = vsub.f32 %v46, %v8619
  %v8621 = vand.u32 %v8620, 4294901760
  %8622 = vmatpush1.msra.mxu0 %v8621
  %8623 = vmatprep.subr.mxu0 0.0
  %8624 = vmatpush1.msra.mxu0 0.0
  %8625 = vmatprep.subr.mxu0 0.0
  %8626 = vmatpush1.msra.mxu0 0.0
  %8627 = vmatprep.subr.mxu0 0.0
  %8628 = vmatpush1.msra.mxu0 0.0
  %8629 = vmatprep.subr.mxu0 0.0
  %8630 = vmatpush1.msra.mxu0 0.0
  %8631 = vmatprep.subr.mxu0 0.0
  %8632 = vmatpush1.msra.mxu0 0.0
  %8633 = vmatprep.subr.mxu0 0.0
  %8634 = vmatpush1.msra.mxu0 0.0
  %8635 = vmatprep.subr.mxu0 0.0
  %8636 = vmatpush1.msra.mxu0 0.0
  %8637 = vmatprep.subr.mxu0 0.0
  %8638 = vmatpush1.msra.mxu0 0.0
  %8639 = vmatprep.subr.mxu0 0.0
  %8640 = vmatpush1.msra.mxu0 0.0
  %8641 = vmatprep.subr.mxu0 0.0
  %8642 = vmatpush1.msra.mxu0 0.0
  %8643 = vmatprep.subr.mxu0 0.0
  %8644 = vmatpush1.msra.mxu0 0.0
  %8645 = vmatprep.subr.mxu0 0.0
  %8646 = vmatpush1.msra.mxu0 0.0
  %8647 = vmatprep.subr.mxu0 0.0
  %8648 = vmatpush1.msra.mxu0 0.0
  %8649 = vmatprep.subr.mxu0 0.0
  %8650 = vmatpush1.msra.mxu0 0.0
  %8651 = vmatprep.subr.mxu0 0.0
  %8652 = vmatpush1.msra.mxu0 0.0
  %8653 = vmatprep.subr.mxu0 0.0
  %8654 = vmatpush1.msra.mxu0 0.0
  %8655 = vmatprep.subr.mxu0 0.0
  %8656 = vmatpush1.msra.mxu0 0.0
  %8657 = vmatprep.subr.mxu0 0.0
  %8658 = vmatpush1.msra.mxu0 0.0
  %8659 = vmatprep.subr.mxu0 0.0
  %8660 = vmatpush1.msra.mxu0 0.0
  %8661 = vmatprep.subr.mxu0 0.0
  %8662 = vmatpush1.msra.mxu0 0.0
  %8663 = vmatprep.subr.mxu0 0.0
  %8664 = vmatpush1.msra.mxu0 0.0
  %8665 = vmatprep.subr.mxu0 0.0
  %8666 = vmatpush1.msra.mxu0 0.0
  %8667 = vmatprep.subr.mxu0 0.0
  %8668 = vmatpush1.msra.mxu0 0.0
  %8669 = vmatprep.subr.mxu0 0.0
  %8670 = vmatpush1.msra.mxu0 0.0
  %8671 = vmatprep.subr.mxu0 0.0
  %8672 = vmatpush1.msra.mxu0 0.0
  %8673 = vmatprep.subr.mxu0 0.0
  %8674 = vmatpush1.msra.mxu0 0.0
  %8675 = vmatprep.subr.mxu0 0.0
  %8676 = vmatpush1.msra.mxu0 0.0
  %8677 = vmatprep.subr.mxu0 0.0
  %8678 = vmatpush1.msra.mxu0 0.0
  %8679 = vmatprep.mubr.f32.mxu0 0.0
  %v8680 = vand.u32 %v8274, 4294901760
  %8681 = vmatmul.mubr.f32.gmra.mrb[0].mxu0 %v8680
  %v8682 = vpop.f32.mrb[0].mxu0
  %v8683 = vadd.f32 %v8600, %v8682
  %v8684 = vpop.f32.mrb[0].mxu0
  %8685 = vdwg.mxu0
  %8686 = vmatprep.subr.mxu0 0.0
  %v8687 = vand.u32 %v43, 4294901760
  %8688 = vmatpush1.msra.mxu0 %v8687
  %8689 = vmatprep.subr.mxu0 0.0
  %v8690 = vand.u32 %v44, 4294901760
  %8691 = vmatpush1.msra.mxu0 %v8690
  %8692 = vmatprep.subr.mxu0 0.0
  %v8693 = vand.u32 %v45, 4294901760
  %8694 = vmatpush1.msra.mxu0 %v8693
  %8695 = vmatprep.subr.mxu0 0.0
  %v8696 = vand.u32 %v46, 4294901760
  %8697 = vmatpush1.msra.mxu0 %v8696
  %8698 = vmatprep.subr.mxu0 0.0
  %8699 = vmatpush1.msra.mxu0 0.0
  %8700 = vmatprep.subr.mxu0 0.0
  %8701 = vmatpush1.msra.mxu0 0.0
  %8702 = vmatprep.subr.mxu0 0.0
  %8703 = vmatpush1.msra.mxu0 0.0
  %8704 = vmatprep.subr.mxu0 0.0
  %8705 = vmatpush1.msra.mxu0 0.0
  %8706 = vmatprep.subr.mxu0 0.0
  %8707 = vmatpush1.msra.mxu0 0.0
  %8708 = vmatprep.subr.mxu0 0.0
  %8709 = vmatpush1.msra.mxu0 0.0
  %8710 = vmatprep.subr.mxu0 0.0
  %8711 = vmatpush1.msra.mxu0 0.0
  %8712 = vmatprep.subr.mxu0 0.0
  %8713 = vmatpush1.msra.mxu0 0.0
  %8714 = vmatprep.subr.mxu0 0.0
  %8715 = vmatpush1.msra.mxu0 0.0
  %8716 = vmatprep.subr.mxu0 0.0
  %8717 = vmatpush1.msra.mxu0 0.0
  %8718 = vmatprep.subr.mxu0 0.0
  %8719 = vmatpush1.msra.mxu0 0.0
  %8720 = vmatprep.subr.mxu0 0.0
  %8721 = vmatpush1.msra.mxu0 0.0
  %8722 = vmatprep.subr.mxu0 0.0
  %8723 = vmatpush1.msra.mxu0 0.0
  %8724 = vmatprep.subr.mxu0 0.0
  %8725 = vmatpush1.msra.mxu0 0.0
  %8726 = vmatprep.subr.mxu0 0.0
  %8727 = vmatpush1.msra.mxu0 0.0
  %8728 = vmatprep.subr.mxu0 0.0
  %8729 = vmatpush1.msra.mxu0 0.0
  %8730 = vmatprep.subr.mxu0 0.0
  %8731 = vmatpush1.msra.mxu0 0.0
  %8732 = vmatprep.subr.mxu0 0.0
  %8733 = vmatpush1.msra.mxu0 0.0
  %8734 = vmatprep.subr.mxu0 0.0
  %8735 = vmatpush1.msra.mxu0 0.0
  %8736 = vmatprep.subr.mxu0 0.0
  %8737 = vmatpush1.msra.mxu0 0.0
  %8738 = vmatprep.subr.mxu0 0.0
  %8739 = vmatpush1.msra.mxu0 0.0
  %8740 = vmatprep.subr.mxu0 0.0
  %8741 = vmatpush1.msra.mxu0 0.0
  %8742 = vmatprep.subr.mxu0 0.0
  %8743 = vmatpush1.msra.mxu0 0.0
  %8744 = vmatprep.subr.mxu0 0.0
  %8745 = vmatpush1.msra.mxu0 0.0
  %8746 = vmatprep.subr.mxu0 0.0
  %8747 = vmatpush1.msra.mxu0 0.0
  %8748 = vmatprep.subr.mxu0 0.0
  %8749 = vmatpush1.msra.mxu0 0.0
  %8750 = vmatprep.subr.mxu0 0.0
  %8751 = vmatpush1.msra.mxu0 0.0
  %8752 = vmatprep.subr.mxu0 0.0
  %8753 = vmatpush1.msra.mxu0 0.0
  %8754 = vmatprep.mubr.f32.mxu0 0.0
  %v8755 = vand.u32 %v8274, 4294901760
  %8756 = vmatmul.mubr.f32.gmra.mrb[0].mxu0 %v8755
  %v8757 = vpop.f32.mrb[0].mxu0
  %v8758 = vadd.f32 %v8683, %v8757
  %v8759 = vpop.f32.mrb[0].mxu0
  %8760 = vdwg.mxu0
  %8762 = vrot.lane.b32.xlu0 %v7750, 32
  %v8763 = vpop.permute.xlu0 %8762
  %v8764 = vsel %vm117, %v8763, 0
  %8766 = vmatprep.subr.mxu0 0.0
  %v8767 = vand.u32 %v51, 4294901760
  %8768 = vmatpush1.msra.mxu0 %v8767
  %8769 = vmatprep.subr.mxu0 0.0
  %v8770 = vand.u32 %v52, 4294901760
  %8771 = vmatpush1.msra.mxu0 %v8770
  %8772 = vmatprep.subr.mxu0 0.0
  %v8773 = vand.u32 %v53, 4294901760
  %8774 = vmatpush1.msra.mxu0 %v8773
  %8775 = vmatprep.subr.mxu0 0.0
  %v8776 = vand.u32 %v54, 4294901760
  %8777 = vmatpush1.msra.mxu0 %v8776
  %8778 = vmatprep.subr.mxu0 0.0
  %8779 = vmatpush1.msra.mxu0 0.0
  %8780 = vmatprep.subr.mxu0 0.0
  %8781 = vmatpush1.msra.mxu0 0.0
  %8782 = vmatprep.subr.mxu0 0.0
  %8783 = vmatpush1.msra.mxu0 0.0
  %8784 = vmatprep.subr.mxu0 0.0
  %8785 = vmatpush1.msra.mxu0 0.0
  %8786 = vmatprep.subr.mxu0 0.0
  %8787 = vmatpush1.msra.mxu0 0.0
  %8788 = vmatprep.subr.mxu0 0.0
  %8789 = vmatpush1.msra.mxu0 0.0
  %8790 = vmatprep.subr.mxu0 0.0
  %8791 = vmatpush1.msra.mxu0 0.0
  %8792 = vmatprep.subr.mxu0 0.0
  %8793 = vmatpush1.msra.mxu0 0.0
  %8794 = vmatprep.subr.mxu0 0.0
  %8795 = vmatpush1.msra.mxu0 0.0
  %8796 = vmatprep.subr.mxu0 0.0
  %8797 = vmatpush1.msra.mxu0 0.0
  %8798 = vmatprep.subr.mxu0 0.0
  %8799 = vmatpush1.msra.mxu0 0.0
  %8800 = vmatprep.subr.mxu0 0.0
  %8801 = vmatpush1.msra.mxu0 0.0
  %8802 = vmatprep.subr.mxu0 0.0
  %8803 = vmatpush1.msra.mxu0 0.0
  %8804 = vmatprep.subr.mxu0 0.0
  %8805 = vmatpush1.msra.mxu0 0.0
  %8806 = vmatprep.subr.mxu0 0.0
  %8807 = vmatpush1.msra.mxu0 0.0
  %8808 = vmatprep.subr.mxu0 0.0
  %8809 = vmatpush1.msra.mxu0 0.0
  %8810 = vmatprep.subr.mxu0 0.0
  %8811 = vmatpush1.msra.mxu0 0.0
  %8812 = vmatprep.subr.mxu0 0.0
  %8813 = vmatpush1.msra.mxu0 0.0
  %8814 = vmatprep.subr.mxu0 0.0
  %8815 = vmatpush1.msra.mxu0 0.0
  %8816 = vmatprep.subr.mxu0 0.0
  %8817 = vmatpush1.msra.mxu0 0.0
  %8818 = vmatprep.subr.mxu0 0.0
  %8819 = vmatpush1.msra.mxu0 0.0
  %8820 = vmatprep.subr.mxu0 0.0
  %8821 = vmatpush1.msra.mxu0 0.0
  %8822 = vmatprep.subr.mxu0 0.0
  %8823 = vmatpush1.msra.mxu0 0.0
  %8824 = vmatprep.subr.mxu0 0.0
  %8825 = vmatpush1.msra.mxu0 0.0
  %8826 = vmatprep.subr.mxu0 0.0
  %8827 = vmatpush1.msra.mxu0 0.0
  %8828 = vmatprep.subr.mxu0 0.0
  %8829 = vmatpush1.msra.mxu0 0.0
  %8830 = vmatprep.subr.mxu0 0.0
  %8831 = vmatpush1.msra.mxu0 0.0
  %8832 = vmatprep.subr.mxu0 0.0
  %8833 = vmatpush1.msra.mxu0 0.0
  %8834 = vmatprep.mubr.f32.mxu0 0.0
  %v8835 = vand.u32 %v8764, 4294901760
  %v8836 = vsub.f32 %v8764, %v8835
  %v8837 = vand.u32 %v8836, 4294901760
  %v8838 = vsub.f32 %v8836, %v8837
  %v8839 = vand.u32 %v8838, 4294901760
  %8840 = vmatmul.mubr.f32.gmra.mrb[0].mxu0 %v8839
  %v8841 = vpop.f32.mrb[0].mxu0
  %v8842 = vadd.f32 0.0, %v8841
  %v8843 = vpop.f32.mrb[0].mxu0
  %8844 = vdwg.mxu0
  %8845 = vmatprep.subr.mxu0 0.0
  %v8846 = vand.u32 %v51, 4294901760
  %v8847 = vsub.f32 %v51, %v8846
  %v8848 = vand.u32 %v8847, 4294901760
  %v8849 = vsub.f32 %v8847, %v8848
  %v8850 = vand.u32 %v8849, 4294901760
  %8851 = vmatpush1.msra.mxu0 %v8850
  %8852 = vmatprep.subr.mxu0 0.0
  %v8853 = vand.u32 %v52, 4294901760
  %v8854 = vsub.f32 %v52, %v8853
  %v8855 = vand.u32 %v8854, 4294901760
  %v8856 = vsub.f32 %v8854, %v8855
  %v8857 = vand.u32 %v8856, 4294901760
  %8858 = vmatpush1.msra.mxu0 %v8857
  %8859 = vmatprep.subr.mxu0 0.0
  %v8860 = vand.u32 %v53, 4294901760
  %v8861 = vsub.f32 %v53, %v8860
  %v8862 = vand.u32 %v8861, 4294901760
  %v8863 = vsub.f32 %v8861, %v8862
  %v8864 = vand.u32 %v8863, 4294901760
  %8865 = vmatpush1.msra.mxu0 %v8864
  %8866 = vmatprep.subr.mxu0 0.0
  %v8867 = vand.u32 %v54, 4294901760
  %v8868 = vsub.f32 %v54, %v8867
  %v8869 = vand.u32 %v8868, 4294901760
  %v8870 = vsub.f32 %v8868, %v8869
  %v8871 = vand.u32 %v8870, 4294901760
  %8872 = vmatpush1.msra.mxu0 %v8871
  %8873 = vmatprep.subr.mxu0 0.0
  %8874 = vmatpush1.msra.mxu0 0.0
  %8875 = vmatprep.subr.mxu0 0.0
  %8876 = vmatpush1.msra.mxu0 0.0
  %8877 = vmatprep.subr.mxu0 0.0
  %8878 = vmatpush1.msra.mxu0 0.0
  %8879 = vmatprep.subr.mxu0 0.0
  %8880 = vmatpush1.msra.mxu0 0.0
  %8881 = vmatprep.subr.mxu0 0.0
  %8882 = vmatpush1.msra.mxu0 0.0
  %8883 = vmatprep.subr.mxu0 0.0
  %8884 = vmatpush1.msra.mxu0 0.0
  %8885 = vmatprep.subr.mxu0 0.0
  %8886 = vmatpush1.msra.mxu0 0.0
  %8887 = vmatprep.subr.mxu0 0.0
  %8888 = vmatpush1.msra.mxu0 0.0
  %8889 = vmatprep.subr.mxu0 0.0
  %8890 = vmatpush1.msra.mxu0 0.0
  %8891 = vmatprep.subr.mxu0 0.0
  %8892 = vmatpush1.msra.mxu0 0.0
  %8893 = vmatprep.subr.mxu0 0.0
  %8894 = vmatpush1.msra.mxu0 0.0
  %8895 = vmatprep.subr.mxu0 0.0
  %8896 = vmatpush1.msra.mxu0 0.0
  %8897 = vmatprep.subr.mxu0 0.0
  %8898 = vmatpush1.msra.mxu0 0.0
  %8899 = vmatprep.subr.mxu0 0.0
  %8900 = vmatpush1.msra.mxu0 0.0
  %8901 = vmatprep.subr.mxu0 0.0
  %8902 = vmatpush1.msra.mxu0 0.0
  %8903 = vmatprep.subr.mxu0 0.0
  %8904 = vmatpush1.msra.mxu0 0.0
  %8905 = vmatprep.subr.mxu0 0.0
  %8906 = vmatpush1.msra.mxu0 0.0
  %8907 = vmatprep.subr.mxu0 0.0
  %8908 = vmatpush1.msra.mxu0 0.0
  %8909 = vmatprep.subr.mxu0 0.0
  %8910 = vmatpush1.msra.mxu0 0.0
  %8911 = vmatprep.subr.mxu0 0.0
  %8912 = vmatpush1.msra.mxu0 0.0
  %8913 = vmatprep.subr.mxu0 0.0
  %8914 = vmatpush1.msra.mxu0 0.0
  %8915 = vmatprep.subr.mxu0 0.0
  %8916 = vmatpush1.msra.mxu0 0.0
  %8917 = vmatprep.subr.mxu0 0.0
  %8918 = vmatpush1.msra.mxu0 0.0
  %8919 = vmatprep.subr.mxu0 0.0
  %8920 = vmatpush1.msra.mxu0 0.0
  %8921 = vmatprep.subr.mxu0 0.0
  %8922 = vmatpush1.msra.mxu0 0.0
  %8923 = vmatprep.subr.mxu0 0.0
  %8924 = vmatpush1.msra.mxu0 0.0
  %8925 = vmatprep.subr.mxu0 0.0
  %8926 = vmatpush1.msra.mxu0 0.0
  %8927 = vmatprep.subr.mxu0 0.0
  %8928 = vmatpush1.msra.mxu0 0.0
  %8929 = vmatprep.mubr.f32.mxu0 0.0
  %v8930 = vand.u32 %v8764, 4294901760
  %8931 = vmatmul.mubr.f32.gmra.mrb[0].mxu0 %v8930
  %v8932 = vpop.f32.mrb[0].mxu0
  %v8933 = vadd.f32 %v8842, %v8932
  %v8934 = vpop.f32.mrb[0].mxu0
  %8935 = vdwg.mxu0
  %8936 = vmatprep.subr.mxu0 0.0
  %v8937 = vand.u32 %v51, 4294901760
  %v8938 = vsub.f32 %v51, %v8937
  %8939 = vmatpush1.msra.mxu0 %v8938
  %8940 = vmatprep.subr.mxu0 0.0
  %v8941 = vand.u32 %v52, 4294901760
  %v8942 = vsub.f32 %v52, %v8941
  %8943 = vmatpush1.msra.mxu0 %v8942
  %8944 = vmatprep.subr.mxu0 0.0
  %v8945 = vand.u32 %v53, 4294901760
  %v8946 = vsub.f32 %v53, %v8945
  %8947 = vmatpush1.msra.mxu0 %v8946
  %8948 = vmatprep.subr.mxu0 0.0
  %v8949 = vand.u32 %v54, 4294901760
  %v8950 = vsub.f32 %v54, %v8949
  %8951 = vmatpush1.msra.mxu0 %v8950
  %8952 = vmatprep.subr.mxu0 0.0
  %8953 = vmatpush1.msra.mxu0 0.0
  %8954 = vmatprep.subr.mxu0 0.0
  %8955 = vmatpush1.msra.mxu0 0.0
  %8956 = vmatprep.subr.mxu0 0.0
  %8957 = vmatpush1.msra.mxu0 0.0
  %8958 = vmatprep.subr.mxu0 0.0
  %8959 = vmatpush1.msra.mxu0 0.0
  %8960 = vmatprep.subr.mxu0 0.0
  %8961 = vmatpush1.msra.mxu0 0.0
  %8962 = vmatprep.subr.mxu0 0.0
  %8963 = vmatpush1.msra.mxu0 0.0
  %8964 = vmatprep.subr.mxu0 0.0
  %8965 = vmatpush1.msra.mxu0 0.0
  %8966 = vmatprep.subr.mxu0 0.0
  %8967 = vmatpush1.msra.mxu0 0.0
  %8968 = vmatprep.subr.mxu0 0.0
  %8969 = vmatpush1.msra.mxu0 0.0
  %8970 = vmatprep.subr.mxu0 0.0
  %8971 = vmatpush1.msra.mxu0 0.0
  %8972 = vmatprep.subr.mxu0 0.0
  %8973 = vmatpush1.msra.mxu0 0.0
  %8974 = vmatprep.subr.mxu0 0.0
  %8975 = vmatpush1.msra.mxu0 0.0
  %8976 = vmatprep.subr.mxu0 0.0
  %8977 = vmatpush1.msra.mxu0 0.0
  %8978 = vmatprep.subr.mxu0 0.0
  %8979 = vmatpush1.msra.mxu0 0.0
  %8980 = vmatprep.subr.mxu0 0.0
  %8981 = vmatpush1.msra.mxu0 0.0
  %8982 = vmatprep.subr.mxu0 0.0
  %8983 = vmatpush1.msra.mxu0 0.0
  %8984 = vmatprep.subr.mxu0 0.0
  %8985 = vmatpush1.msra.mxu0 0.0
  %8986 = vmatprep.subr.mxu0 0.0
  %8987 = vmatpush1.msra.mxu0 0.0
  %8988 = vmatprep.subr.mxu0 0.0
  %8989 = vmatpush1.msra.mxu0 0.0
  %8990 = vmatprep.subr.mxu0 0.0
  %8991 = vmatpush1.msra.mxu0 0.0
  %8992 = vmatprep.subr.mxu0 0.0
  %8993 = vmatpush1.msra.mxu0 0.0
  %8994 = vmatprep.subr.mxu0 0.0
  %8995 = vmatpush1.msra.mxu0 0.0
  %8996 = vmatprep.subr.mxu0 0.0
  %8997 = vmatpush1.msra.mxu0 0.0
  %8998 = vmatprep.subr.mxu0 0.0
  %8999 = vmatpush1.msra.mxu0 0.0
  %9000 = vmatprep.subr.mxu0 0.0
  %9001 = vmatpush1.msra.mxu0 0.0
  %9002 = vmatprep.subr.mxu0 0.0
  %9003 = vmatpush1.msra.mxu0 0.0
  %9004 = vmatprep.subr.mxu0 0.0
  %9005 = vmatpush1.msra.mxu0 0.0
  %9006 = vmatprep.subr.mxu0 0.0
  %9007 = vmatpush1.msra.mxu0 0.0
  %9008 = vmatprep.mubr.f32.mxu0 0.0
  %v9009 = vand.u32 %v8764, 4294901760
  %v9010 = vsub.f32 %v8764, %v9009
  %9011 = vmatmul.mubr.f32.gmra.mrb[0].mxu0 %v9010
  %v9012 = vpop.f32.mrb[0].mxu0
  %v9013 = vadd.f32 %v8933, %v9012
  %v9014 = vpop.f32.mrb[0].mxu0
  %9015 = vdwg.mxu0
  %9016 = vmatprep.subr.mxu0 0.0
  %v9017 = vand.u32 %v51, 4294901760
  %9018 = vmatpush1.msra.mxu0 %v9017
  %9019 = vmatprep.subr.mxu0 0.0
  %v9020 = vand.u32 %v52, 4294901760
  %9021 = vmatpush1.msra.mxu0 %v9020
  %9022 = vmatprep.subr.mxu0 0.0
  %v9023 = vand.u32 %v53, 4294901760
  %9024 = vmatpush1.msra.mxu0 %v9023
  %9025 = vmatprep.subr.mxu0 0.0
  %v9026 = vand.u32 %v54, 4294901760
  %9027 = vmatpush1.msra.mxu0 %v9026
  %9028 = vmatprep.subr.mxu0 0.0
  %9029 = vmatpush1.msra.mxu0 0.0
  %9030 = vmatprep.subr.mxu0 0.0
  %9031 = vmatpush1.msra.mxu0 0.0
  %9032 = vmatprep.subr.mxu0 0.0
  %9033 = vmatpush1.msra.mxu0 0.0
  %9034 = vmatprep.subr.mxu0 0.0
  %9035 = vmatpush1.msra.mxu0 0.0
  %9036 = vmatprep.subr.mxu0 0.0
  %9037 = vmatpush1.msra.mxu0 0.0
  %9038 = vmatprep.subr.mxu0 0.0
  %9039 = vmatpush1.msra.mxu0 0.0
  %9040 = vmatprep.subr.mxu0 0.0
  %9041 = vmatpush1.msra.mxu0 0.0
  %9042 = vmatprep.subr.mxu0 0.0
  %9043 = vmatpush1.msra.mxu0 0.0
  %9044 = vmatprep.subr.mxu0 0.0
  %9045 = vmatpush1.msra.mxu0 0.0
  %9046 = vmatprep.subr.mxu0 0.0
  %9047 = vmatpush1.msra.mxu0 0.0
  %9048 = vmatprep.subr.mxu0 0.0
  %9049 = vmatpush1.msra.mxu0 0.0
  %9050 = vmatprep.subr.mxu0 0.0
  %9051 = vmatpush1.msra.mxu0 0.0
  %9052 = vmatprep.subr.mxu0 0.0
  %9053 = vmatpush1.msra.mxu0 0.0
  %9054 = vmatprep.subr.mxu0 0.0
  %9055 = vmatpush1.msra.mxu0 0.0
  %9056 = vmatprep.subr.mxu0 0.0
  %9057 = vmatpush1.msra.mxu0 0.0
  %9058 = vmatprep.subr.mxu0 0.0
  %9059 = vmatpush1.msra.mxu0 0.0
  %9060 = vmatprep.subr.mxu0 0.0
  %9061 = vmatpush1.msra.mxu0 0.0
  %9062 = vmatprep.subr.mxu0 0.0
  %9063 = vmatpush1.msra.mxu0 0.0
  %9064 = vmatprep.subr.mxu0 0.0
  %9065 = vmatpush1.msra.mxu0 0.0
  %9066 = vmatprep.subr.mxu0 0.0
  %9067 = vmatpush1.msra.mxu0 0.0
  %9068 = vmatprep.subr.mxu0 0.0
  %9069 = vmatpush1.msra.mxu0 0.0
  %9070 = vmatprep.subr.mxu0 0.0
  %9071 = vmatpush1.msra.mxu0 0.0
  %9072 = vmatprep.subr.mxu0 0.0
  %9073 = vmatpush1.msra.mxu0 0.0
  %9074 = vmatprep.subr.mxu0 0.0
  %9075 = vmatpush1.msra.mxu0 0.0
  %9076 = vmatprep.subr.mxu0 0.0
  %9077 = vmatpush1.msra.mxu0 0.0
  %9078 = vmatprep.subr.mxu0 0.0
  %9079 = vmatpush1.msra.mxu0 0.0
  %9080 = vmatprep.subr.mxu0 0.0
  %9081 = vmatpush1.msra.mxu0 0.0
  %9082 = vmatprep.subr.mxu0 0.0
  %9083 = vmatpush1.msra.mxu0 0.0
  %9084 = vmatprep.mubr.f32.mxu0 0.0
  %v9085 = vand.u32 %v8764, 4294901760
  %v9086 = vsub.f32 %v8764, %v9085
  %v9087 = vand.u32 %v9086, 4294901760
  %9088 = vmatmul.mubr.f32.gmra.mrb[0].mxu0 %v9087
  %v9089 = vpop.f32.mrb[0].mxu0
  %v9090 = vadd.f32 %v9013, %v9089
  %v9091 = vpop.f32.mrb[0].mxu0
  %9092 = vdwg.mxu0
  %9093 = vmatprep.subr.mxu0 0.0
  %v9094 = vand.u32 %v51, 4294901760
  %v9095 = vsub.f32 %v51, %v9094
  %v9096 = vand.u32 %v9095, 4294901760
  %9097 = vmatpush1.msra.mxu0 %v9096
  %9098 = vmatprep.subr.mxu0 0.0
  %v9099 = vand.u32 %v52, 4294901760
  %v9100 = vsub.f32 %v52, %v9099
  %v9101 = vand.u32 %v9100, 4294901760
  %9102 = vmatpush1.msra.mxu0 %v9101
  %9103 = vmatprep.subr.mxu0 0.0
  %v9104 = vand.u32 %v53, 4294901760
  %v9105 = vsub.f32 %v53, %v9104
  %v9106 = vand.u32 %v9105, 4294901760
  %9107 = vmatpush1.msra.mxu0 %v9106
  %9108 = vmatprep.subr.mxu0 0.0
  %v9109 = vand.u32 %v54, 4294901760
  %v9110 = vsub.f32 %v54, %v9109
  %v9111 = vand.u32 %v9110, 4294901760
  %9112 = vmatpush1.msra.mxu0 %v9111
  %9113 = vmatprep.subr.mxu0 0.0
  %9114 = vmatpush1.msra.mxu0 0.0
  %9115 = vmatprep.subr.mxu0 0.0
  %9116 = vmatpush1.msra.mxu0 0.0
  %9117 = vmatprep.subr.mxu0 0.0
  %9118 = vmatpush1.msra.mxu0 0.0
  %9119 = vmatprep.subr.mxu0 0.0
  %9120 = vmatpush1.msra.mxu0 0.0
  %9121 = vmatprep.subr.mxu0 0.0
  %9122 = vmatpush1.msra.mxu0 0.0
  %9123 = vmatprep.subr.mxu0 0.0
  %9124 = vmatpush1.msra.mxu0 0.0
  %9125 = vmatprep.subr.mxu0 0.0
  %9126 = vmatpush1.msra.mxu0 0.0
  %9127 = vmatprep.subr.mxu0 0.0
  %9128 = vmatpush1.msra.mxu0 0.0
  %9129 = vmatprep.subr.mxu0 0.0
  %9130 = vmatpush1.msra.mxu0 0.0
  %9131 = vmatprep.subr.mxu0 0.0
  %9132 = vmatpush1.msra.mxu0 0.0
  %9133 = vmatprep.subr.mxu0 0.0
  %9134 = vmatpush1.msra.mxu0 0.0
  %9135 = vmatprep.subr.mxu0 0.0
  %9136 = vmatpush1.msra.mxu0 0.0
  %9137 = vmatprep.subr.mxu0 0.0
  %9138 = vmatpush1.msra.mxu0 0.0
  %9139 = vmatprep.subr.mxu0 0.0
  %9140 = vmatpush1.msra.mxu0 0.0
  %9141 = vmatprep.subr.mxu0 0.0
  %9142 = vmatpush1.msra.mxu0 0.0
  %9143 = vmatprep.subr.mxu0 0.0
  %9144 = vmatpush1.msra.mxu0 0.0
  %9145 = vmatprep.subr.mxu0 0.0
  %9146 = vmatpush1.msra.mxu0 0.0
  %9147 = vmatprep.subr.mxu0 0.0
  %9148 = vmatpush1.msra.mxu0 0.0
  %9149 = vmatprep.subr.mxu0 0.0
  %9150 = vmatpush1.msra.mxu0 0.0
  %9151 = vmatprep.subr.mxu0 0.0
  %9152 = vmatpush1.msra.mxu0 0.0
  %9153 = vmatprep.subr.mxu0 0.0
  %9154 = vmatpush1.msra.mxu0 0.0
  %9155 = vmatprep.subr.mxu0 0.0
  %9156 = vmatpush1.msra.mxu0 0.0
  %9157 = vmatprep.subr.mxu0 0.0
  %9158 = vmatpush1.msra.mxu0 0.0
  %9159 = vmatprep.subr.mxu0 0.0
  %9160 = vmatpush1.msra.mxu0 0.0
  %9161 = vmatprep.subr.mxu0 0.0
  %9162 = vmatpush1.msra.mxu0 0.0
  %9163 = vmatprep.subr.mxu0 0.0
  %9164 = vmatpush1.msra.mxu0 0.0
  %9165 = vmatprep.subr.mxu0 0.0
  %9166 = vmatpush1.msra.mxu0 0.0
  %9167 = vmatprep.subr.mxu0 0.0
  %9168 = vmatpush1.msra.mxu0 0.0
  %9169 = vmatprep.mubr.f32.mxu0 0.0
  %v9170 = vand.u32 %v8764, 4294901760
  %9171 = vmatmul.mubr.f32.gmra.mrb[0].mxu0 %v9170
  %v9172 = vpop.f32.mrb[0].mxu0
  %v9173 = vadd.f32 %v9090, %v9172
  %v9174 = vpop.f32.mrb[0].mxu0
  %9175 = vdwg.mxu0
  %9176 = vmatprep.subr.mxu0 0.0
  %v9177 = vand.u32 %v51, 4294901760
  %9178 = vmatpush1.msra.mxu0 %v9177
  %9179 = vmatprep.subr.mxu0 0.0
  %v9180 = vand.u32 %v52, 4294901760
  %9181 = vmatpush1.msra.mxu0 %v9180
  %9182 = vmatprep.subr.mxu0 0.0
  %v9183 = vand.u32 %v53, 4294901760
  %9184 = vmatpush1.msra.mxu0 %v9183
  %9185 = vmatprep.subr.mxu0 0.0
  %v9186 = vand.u32 %v54, 4294901760
  %9187 = vmatpush1.msra.mxu0 %v9186
  %9188 = vmatprep.subr.mxu0 0.0
  %9189 = vmatpush1.msra.mxu0 0.0
  %9190 = vmatprep.subr.mxu0 0.0
  %9191 = vmatpush1.msra.mxu0 0.0
  %9192 = vmatprep.subr.mxu0 0.0
  %9193 = vmatpush1.msra.mxu0 0.0
  %9194 = vmatprep.subr.mxu0 0.0
  %9195 = vmatpush1.msra.mxu0 0.0
  %9196 = vmatprep.subr.mxu0 0.0
  %9197 = vmatpush1.msra.mxu0 0.0
  %9198 = vmatprep.subr.mxu0 0.0
  %9199 = vmatpush1.msra.mxu0 0.0
  %9200 = vmatprep.subr.mxu0 0.0
  %9201 = vmatpush1.msra.mxu0 0.0
  %9202 = vmatprep.subr.mxu0 0.0
  %9203 = vmatpush1.msra.mxu0 0.0
  %9204 = vmatprep.subr.mxu0 0.0
  %9205 = vmatpush1.msra.mxu0 0.0
  %9206 = vmatprep.subr.mxu0 0.0
  %9207 = vmatpush1.msra.mxu0 0.0
  %9208 = vmatprep.subr.mxu0 0.0
  %9209 = vmatpush1.msra.mxu0 0.0
  %9210 = vmatprep.subr.mxu0 0.0
  %9211 = vmatpush1.msra.mxu0 0.0
  %9212 = vmatprep.subr.mxu0 0.0
  %9213 = vmatpush1.msra.mxu0 0.0
  %9214 = vmatprep.subr.mxu0 0.0
  %9215 = vmatpush1.msra.mxu0 0.0
  %9216 = vmatprep.subr.mxu0 0.0
  %9217 = vmatpush1.msra.mxu0 0.0
  %9218 = vmatprep.subr.mxu0 0.0
  %9219 = vmatpush1.msra.mxu0 0.0
  %9220 = vmatprep.subr.mxu0 0.0
  %9221 = vmatpush1.msra.mxu0 0.0
  %9222 = vmatprep.subr.mxu0 0.0
  %9223 = vmatpush1.msra.mxu0 0.0
  %9224 = vmatprep.subr.mxu0 0.0
  %9225 = vmatpush1.msra.mxu0 0.0
  %9226 = vmatprep.subr.mxu0 0.0
  %9227 = vmatpush1.msra.mxu0 0.0
  %9228 = vmatprep.subr.mxu0 0.0
  %9229 = vmatpush1.msra.mxu0 0.0
  %9230 = vmatprep.subr.mxu0 0.0
  %9231 = vmatpush1.msra.mxu0 0.0
  %9232 = vmatprep.subr.mxu0 0.0
  %9233 = vmatpush1.msra.mxu0 0.0
  %9234 = vmatprep.subr.mxu0 0.0
  %9235 = vmatpush1.msra.mxu0 0.0
  %9236 = vmatprep.subr.mxu0 0.0
  %9237 = vmatpush1.msra.mxu0 0.0
  %9238 = vmatprep.subr.mxu0 0.0
  %9239 = vmatpush1.msra.mxu0 0.0
  %9240 = vmatprep.subr.mxu0 0.0
  %9241 = vmatpush1.msra.mxu0 0.0
  %9242 = vmatprep.subr.mxu0 0.0
  %9243 = vmatpush1.msra.mxu0 0.0
  %9244 = vmatprep.mubr.f32.mxu0 0.0
  %v9245 = vand.u32 %v8764, 4294901760
  %9246 = vmatmul.mubr.f32.gmra.mrb[0].mxu0 %v9245
  %v9247 = vpop.f32.mrb[0].mxu0
  %v9248 = vadd.f32 %v9173, %v9247
  %v9249 = vpop.f32.mrb[0].mxu0
  %9250 = vdwg.mxu0
  %v9251 = vadd.f32 %v8758, %v9248
  %v9252 = vmul.f32 %v9251, %v40
  %v9253 = vxor.u32 %v9252, 2147483648
  %v9254 = vmul.f32 %v9253, 1.442695
  %v9255 = vpow.pop %v9254
  %v9256 = vadd.f32 %v9255, 1.0
  %v9257 = vrcp.pop %v9256
  %v9258 = vmul.f32 1.0, %v9257
  %v9259 = vmul.f32 %v9258, 2.0
  %v9260 = vsub.f32 %v9259, 1.0
  %v9261 = vsel %vm39, %v9260, %v9258
  %v9262 = vmul.f32 %v9261, %v7744
  %9264 = vrot.lane.b32.xlu0 %v9261, 64
  %v9265 = vpop.permute.xlu0 %9264
  %v9267 = vmul.f32 %v9261, %v9265
  %9269 = vrot.lane.b32.xlu0 %v9267, 32
  %v9270 = vpop.permute.xlu0 %9269
  %v9272 = vadd.f32 %v9262, %v9270
  %v9273 = vtanh.pop %v9272
  %9275 = vrot.lane.b32.xlu0 %v9273, 64
  %v9276 = vpop.permute.xlu0 %9275
  %v9278 = vmul.f32 %v9261, %v9276
  %9279 = vmatprep.subr.mxu0 0.0
  %v9280 = vand.u32 %v47, 4294901760
  %9281 = vmatpush1.msra.mxu0 %v9280
  %9282 = vmatprep.subr.mxu0 0.0
  %v9283 = vand.u32 %v48, 4294901760
  %9284 = vmatpush1.msra.mxu0 %v9283
  %9285 = vmatprep.subr.mxu0 0.0
  %v9286 = vand.u32 %v49, 4294901760
  %9287 = vmatpush1.msra.mxu0 %v9286
  %9288 = vmatprep.subr.mxu0 0.0
  %v9289 = vand.u32 %v50, 4294901760
  %9290 = vmatpush1.msra.mxu0 %v9289
  %9291 = vmatprep.subr.mxu0 0.0
  %9292 = vmatpush1.msra.mxu0 0.0
  %9293 = vmatprep.subr.mxu0 0.0
  %9294 = vmatpush1.msra.mxu0 0.0
  %9295 = vmatprep.subr.mxu0 0.0
  %9296 = vmatpush1.msra.mxu0 0.0
  %9297 = vmatprep.subr.mxu0 0.0
  %9298 = vmatpush1.msra.mxu0 0.0
  %9299 = vmatprep.subr.mxu0 0.0
  %9300 = vmatpush1.msra.mxu0 0.0
  %9301 = vmatprep.subr.mxu0 0.0
  %9302 = vmatpush1.msra.mxu0 0.0
  %9303 = vmatprep.subr.mxu0 0.0
  %9304 = vmatpush1.msra.mxu0 0.0
  %9305 = vmatprep.subr.mxu0 0.0
  %9306 = vmatpush1.msra.mxu0 0.0
  %9307 = vmatprep.subr.mxu0 0.0
  %9308 = vmatpush1.msra.mxu0 0.0
  %9309 = vmatprep.subr.mxu0 0.0
  %9310 = vmatpush1.msra.mxu0 0.0
  %9311 = vmatprep.subr.mxu0 0.0
  %9312 = vmatpush1.msra.mxu0 0.0
  %9313 = vmatprep.subr.mxu0 0.0
  %9314 = vmatpush1.msra.mxu0 0.0
  %9315 = vmatprep.subr.mxu0 0.0
  %9316 = vmatpush1.msra.mxu0 0.0
  %9317 = vmatprep.subr.mxu0 0.0
  %9318 = vmatpush1.msra.mxu0 0.0
  %9319 = vmatprep.subr.mxu0 0.0
  %9320 = vmatpush1.msra.mxu0 0.0
  %9321 = vmatprep.subr.mxu0 0.0
  %9322 = vmatpush1.msra.mxu0 0.0
  %9323 = vmatprep.subr.mxu0 0.0
  %9324 = vmatpush1.msra.mxu0 0.0
  %9325 = vmatprep.subr.mxu0 0.0
  %9326 = vmatpush1.msra.mxu0 0.0
  %9327 = vmatprep.subr.mxu0 0.0
  %9328 = vmatpush1.msra.mxu0 0.0
  %9329 = vmatprep.subr.mxu0 0.0
  %9330 = vmatpush1.msra.mxu0 0.0
  %9331 = vmatprep.subr.mxu0 0.0
  %9332 = vmatpush1.msra.mxu0 0.0
  %9333 = vmatprep.subr.mxu0 0.0
  %9334 = vmatpush1.msra.mxu0 0.0
  %9335 = vmatprep.subr.mxu0 0.0
  %9336 = vmatpush1.msra.mxu0 0.0
  %9337 = vmatprep.subr.mxu0 0.0
  %9338 = vmatpush1.msra.mxu0 0.0
  %9339 = vmatprep.subr.mxu0 0.0
  %9340 = vmatpush1.msra.mxu0 0.0
  %9341 = vmatprep.subr.mxu0 0.0
  %9342 = vmatpush1.msra.mxu0 0.0
  %9343 = vmatprep.subr.mxu0 0.0
  %9344 = vmatpush1.msra.mxu0 0.0
  %9345 = vmatprep.subr.mxu0 0.0
  %9346 = vmatpush1.msra.mxu0 0.0
  %9347 = vmatprep.mubr.f32.mxu0 0.0
  %v9348 = vand.u32 %v8274, 4294901760
  %v9349 = vsub.f32 %v8274, %v9348
  %v9350 = vand.u32 %v9349, 4294901760
  %v9351 = vsub.f32 %v9349, %v9350
  %v9352 = vand.u32 %v9351, 4294901760
  %9353 = vmatmul.mubr.f32.gmra.mrb[0].mxu0 %v9352
  %v9354 = vpop.f32.mrb[0].mxu0
  %v9355 = vadd.f32 0.0, %v9354
  %v9356 = vpop.f32.mrb[0].mxu0
  %9357 = vdwg.mxu0
  %9358 = vmatprep.subr.mxu0 0.0
  %v9359 = vand.u32 %v47, 4294901760
  %v9360 = vsub.f32 %v47, %v9359
  %v9361 = vand.u32 %v9360, 4294901760
  %v9362 = vsub.f32 %v9360, %v9361
  %v9363 = vand.u32 %v9362, 4294901760
  %9364 = vmatpush1.msra.mxu0 %v9363
  %9365 = vmatprep.subr.mxu0 0.0
  %v9366 = vand.u32 %v48, 4294901760
  %v9367 = vsub.f32 %v48, %v9366
  %v9368 = vand.u32 %v9367, 4294901760
  %v9369 = vsub.f32 %v9367, %v9368
  %v9370 = vand.u32 %v9369, 4294901760
  %9371 = vmatpush1.msra.mxu0 %v9370
  %9372 = vmatprep.subr.mxu0 0.0
  %v9373 = vand.u32 %v49, 4294901760
  %v9374 = vsub.f32 %v49, %v9373
  %v9375 = vand.u32 %v9374, 4294901760
  %v9376 = vsub.f32 %v9374, %v9375
  %v9377 = vand.u32 %v9376, 4294901760
  %9378 = vmatpush1.msra.mxu0 %v9377
  %9379 = vmatprep.subr.mxu0 0.0
  %v9380 = vand.u32 %v50, 4294901760
  %v9381 = vsub.f32 %v50, %v9380
  %v9382 = vand.u32 %v9381, 4294901760
  %v9383 = vsub.f32 %v9381, %v9382
  %v9384 = vand.u32 %v9383, 4294901760
  %9385 = vmatpush1.msra.mxu0 %v9384
  %9386 = vmatprep.subr.mxu0 0.0
  %9387 = vmatpush1.msra.mxu0 0.0
  %9388 = vmatprep.subr.mxu0 0.0
  %9389 = vmatpush1.msra.mxu0 0.0
  %9390 = vmatprep.subr.mxu0 0.0
  %9391 = vmatpush1.msra.mxu0 0.0
  %9392 = vmatprep.subr.mxu0 0.0
  %9393 = vmatpush1.msra.mxu0 0.0
  %9394 = vmatprep.subr.mxu0 0.0
  %9395 = vmatpush1.msra.mxu0 0.0
  %9396 = vmatprep.subr.mxu0 0.0
  %9397 = vmatpush1.msra.mxu0 0.0
  %9398 = vmatprep.subr.mxu0 0.0
  %9399 = vmatpush1.msra.mxu0 0.0
  %9400 = vmatprep.subr.mxu0 0.0
  %9401 = vmatpush1.msra.mxu0 0.0
  %9402 = vmatprep.subr.mxu0 0.0
  %9403 = vmatpush1.msra.mxu0 0.0
  %9404 = vmatprep.subr.mxu0 0.0
  %9405 = vmatpush1.msra.mxu0 0.0
  %9406 = vmatprep.subr.mxu0 0.0
  %9407 = vmatpush1.msra.mxu0 0.0
  %9408 = vmatprep.subr.mxu0 0.0
  %9409 = vmatpush1.msra.mxu0 0.0
  %9410 = vmatprep.subr.mxu0 0.0
  %9411 = vmatpush1.msra.mxu0 0.0
  %9412 = vmatprep.subr.mxu0 0.0
  %9413 = vmatpush1.msra.mxu0 0.0
  %9414 = vmatprep.subr.mxu0 0.0
  %9415 = vmatpush1.msra.mxu0 0.0
  %9416 = vmatprep.subr.mxu0 0.0
  %9417 = vmatpush1.msra.mxu0 0.0
  %9418 = vmatprep.subr.mxu0 0.0
  %9419 = vmatpush1.msra.mxu0 0.0
  %9420 = vmatprep.subr.mxu0 0.0
  %9421 = vmatpush1.msra.mxu0 0.0
  %9422 = vmatprep.subr.mxu0 0.0
  %9423 = vmatpush1.msra.mxu0 0.0
  %9424 = vmatprep.subr.mxu0 0.0
  %9425 = vmatpush1.msra.mxu0 0.0
  %9426 = vmatprep.subr.mxu0 0.0
  %9427 = vmatpush1.msra.mxu0 0.0
  %9428 = vmatprep.subr.mxu0 0.0
  %9429 = vmatpush1.msra.mxu0 0.0
  %9430 = vmatprep.subr.mxu0 0.0
  %9431 = vmatpush1.msra.mxu0 0.0
  %9432 = vmatprep.subr.mxu0 0.0
  %9433 = vmatpush1.msra.mxu0 0.0
  %9434 = vmatprep.subr.mxu0 0.0
  %9435 = vmatpush1.msra.mxu0 0.0
  %9436 = vmatprep.subr.mxu0 0.0
  %9437 = vmatpush1.msra.mxu0 0.0
  %9438 = vmatprep.subr.mxu0 0.0
  %9439 = vmatpush1.msra.mxu0 0.0
  %9440 = vmatprep.subr.mxu0 0.0
  %9441 = vmatpush1.msra.mxu0 0.0
  %9442 = vmatprep.mubr.f32.mxu0 0.0
  %v9443 = vand.u32 %v8274, 4294901760
  %9444 = vmatmul.mubr.f32.gmra.mrb[0].mxu0 %v9443
  %v9445 = vpop.f32.mrb[0].mxu0
  %v9446 = vadd.f32 %v9355, %v9445
  %v9447 = vpop.f32.mrb[0].mxu0
  %9448 = vdwg.mxu0
  %9449 = vmatprep.subr.mxu0 0.0
  %v9450 = vand.u32 %v47, 4294901760
  %v9451 = vsub.f32 %v47, %v9450
  %9452 = vmatpush1.msra.mxu0 %v9451
  %9453 = vmatprep.subr.mxu0 0.0
  %v9454 = vand.u32 %v48, 4294901760
  %v9455 = vsub.f32 %v48, %v9454
  %9456 = vmatpush1.msra.mxu0 %v9455
  %9457 = vmatprep.subr.mxu0 0.0
  %v9458 = vand.u32 %v49, 4294901760
  %v9459 = vsub.f32 %v49, %v9458
  %9460 = vmatpush1.msra.mxu0 %v9459
  %9461 = vmatprep.subr.mxu0 0.0
  %v9462 = vand.u32 %v50, 4294901760
  %v9463 = vsub.f32 %v50, %v9462
  %9464 = vmatpush1.msra.mxu0 %v9463
  %9465 = vmatprep.subr.mxu0 0.0
  %9466 = vmatpush1.msra.mxu0 0.0
  %9467 = vmatprep.subr.mxu0 0.0
  %9468 = vmatpush1.msra.mxu0 0.0
  %9469 = vmatprep.subr.mxu0 0.0
  %9470 = vmatpush1.msra.mxu0 0.0
  %9471 = vmatprep.subr.mxu0 0.0
  %9472 = vmatpush1.msra.mxu0 0.0
  %9473 = vmatprep.subr.mxu0 0.0
  %9474 = vmatpush1.msra.mxu0 0.0
  %9475 = vmatprep.subr.mxu0 0.0
  %9476 = vmatpush1.msra.mxu0 0.0
  %9477 = vmatprep.subr.mxu0 0.0
  %9478 = vmatpush1.msra.mxu0 0.0
  %9479 = vmatprep.subr.mxu0 0.0
  %9480 = vmatpush1.msra.mxu0 0.0
  %9481 = vmatprep.subr.mxu0 0.0
  %9482 = vmatpush1.msra.mxu0 0.0
  %9483 = vmatprep.subr.mxu0 0.0
  %9484 = vmatpush1.msra.mxu0 0.0
  %9485 = vmatprep.subr.mxu0 0.0
  %9486 = vmatpush1.msra.mxu0 0.0
  %9487 = vmatprep.subr.mxu0 0.0
  %9488 = vmatpush1.msra.mxu0 0.0
  %9489 = vmatprep.subr.mxu0 0.0
  %9490 = vmatpush1.msra.mxu0 0.0
  %9491 = vmatprep.subr.mxu0 0.0
  %9492 = vmatpush1.msra.mxu0 0.0
  %9493 = vmatprep.subr.mxu0 0.0
  %9494 = vmatpush1.msra.mxu0 0.0
  %9495 = vmatprep.subr.mxu0 0.0
  %9496 = vmatpush1.msra.mxu0 0.0
  %9497 = vmatprep.subr.mxu0 0.0
  %9498 = vmatpush1.msra.mxu0 0.0
  %9499 = vmatprep.subr.mxu0 0.0
  %9500 = vmatpush1.msra.mxu0 0.0
  %9501 = vmatprep.subr.mxu0 0.0
  %9502 = vmatpush1.msra.mxu0 0.0
  %9503 = vmatprep.subr.mxu0 0.0
  %9504 = vmatpush1.msra.mxu0 0.0
  %9505 = vmatprep.subr.mxu0 0.0
  %9506 = vmatpush1.msra.mxu0 0.0
  %9507 = vmatprep.subr.mxu0 0.0
  %9508 = vmatpush1.msra.mxu0 0.0
  %9509 = vmatprep.subr.mxu0 0.0
  %9510 = vmatpush1.msra.mxu0 0.0
  %9511 = vmatprep.subr.mxu0 0.0
  %9512 = vmatpush1.msra.mxu0 0.0
  %9513 = vmatprep.subr.mxu0 0.0
  %9514 = vmatpush1.msra.mxu0 0.0
  %9515 = vmatprep.subr.mxu0 0.0
  %9516 = vmatpush1.msra.mxu0 0.0
  %9517 = vmatprep.subr.mxu0 0.0
  %9518 = vmatpush1.msra.mxu0 0.0
  %9519 = vmatprep.subr.mxu0 0.0
  %9520 = vmatpush1.msra.mxu0 0.0
  %9521 = vmatprep.mubr.f32.mxu0 0.0
  %v9522 = vand.u32 %v8274, 4294901760
  %v9523 = vsub.f32 %v8274, %v9522
  %9524 = vmatmul.mubr.f32.gmra.mrb[0].mxu0 %v9523
  %v9525 = vpop.f32.mrb[0].mxu0
  %v9526 = vadd.f32 %v9446, %v9525
  %v9527 = vpop.f32.mrb[0].mxu0
  %9528 = vdwg.mxu0
  %9529 = vmatprep.subr.mxu0 0.0
  %v9530 = vand.u32 %v47, 4294901760
  %9531 = vmatpush1.msra.mxu0 %v9530
  %9532 = vmatprep.subr.mxu0 0.0
  %v9533 = vand.u32 %v48, 4294901760
  %9534 = vmatpush1.msra.mxu0 %v9533
  %9535 = vmatprep.subr.mxu0 0.0
  %v9536 = vand.u32 %v49, 4294901760
  %9537 = vmatpush1.msra.mxu0 %v9536
  %9538 = vmatprep.subr.mxu0 0.0
  %v9539 = vand.u32 %v50, 4294901760
  %9540 = vmatpush1.msra.mxu0 %v9539
  %9541 = vmatprep.subr.mxu0 0.0
  %9542 = vmatpush1.msra.mxu0 0.0
  %9543 = vmatprep.subr.mxu0 0.0
  %9544 = vmatpush1.msra.mxu0 0.0
  %9545 = vmatprep.subr.mxu0 0.0
  %9546 = vmatpush1.msra.mxu0 0.0
  %9547 = vmatprep.subr.mxu0 0.0
  %9548 = vmatpush1.msra.mxu0 0.0
  %9549 = vmatprep.subr.mxu0 0.0
  %9550 = vmatpush1.msra.mxu0 0.0
  %9551 = vmatprep.subr.mxu0 0.0
  %9552 = vmatpush1.msra.mxu0 0.0
  %9553 = vmatprep.subr.mxu0 0.0
  %9554 = vmatpush1.msra.mxu0 0.0
  %9555 = vmatprep.subr.mxu0 0.0
  %9556 = vmatpush1.msra.mxu0 0.0
  %9557 = vmatprep.subr.mxu0 0.0
  %9558 = vmatpush1.msra.mxu0 0.0
  %9559 = vmatprep.subr.mxu0 0.0
  %9560 = vmatpush1.msra.mxu0 0.0
  %9561 = vmatprep.subr.mxu0 0.0
  %9562 = vmatpush1.msra.mxu0 0.0
  %9563 = vmatprep.subr.mxu0 0.0
  %9564 = vmatpush1.msra.mxu0 0.0
  %9565 = vmatprep.subr.mxu0 0.0
  %9566 = vmatpush1.msra.mxu0 0.0
  %9567 = vmatprep.subr.mxu0 0.0
  %9568 = vmatpush1.msra.mxu0 0.0
  %9569 = vmatprep.subr.mxu0 0.0
  %9570 = vmatpush1.msra.mxu0 0.0
  %9571 = vmatprep.subr.mxu0 0.0
  %9572 = vmatpush1.msra.mxu0 0.0
  %9573 = vmatprep.subr.mxu0 0.0
  %9574 = vmatpush1.msra.mxu0 0.0
  %9575 = vmatprep.subr.mxu0 0.0
  %9576 = vmatpush1.msra.mxu0 0.0
  %9577 = vmatprep.subr.mxu0 0.0
  %9578 = vmatpush1.msra.mxu0 0.0
  %9579 = vmatprep.subr.mxu0 0.0
  %9580 = vmatpush1.msra.mxu0 0.0
  %9581 = vmatprep.subr.mxu0 0.0
  %9582 = vmatpush1.msra.mxu0 0.0
  %9583 = vmatprep.subr.mxu0 0.0
  %9584 = vmatpush1.msra.mxu0 0.0
  %9585 = vmatprep.subr.mxu0 0.0
  %9586 = vmatpush1.msra.mxu0 0.0
  %9587 = vmatprep.subr.mxu0 0.0
  %9588 = vmatpush1.msra.mxu0 0.0
  %9589 = vmatprep.subr.mxu0 0.0
  %9590 = vmatpush1.msra.mxu0 0.0
  %9591 = vmatprep.subr.mxu0 0.0
  %9592 = vmatpush1.msra.mxu0 0.0
  %9593 = vmatprep.subr.mxu0 0.0
  %9594 = vmatpush1.msra.mxu0 0.0
  %9595 = vmatprep.subr.mxu0 0.0
  %9596 = vmatpush1.msra.mxu0 0.0
  %9597 = vmatprep.mubr.f32.mxu0 0.0
  %v9598 = vand.u32 %v8274, 4294901760
  %v9599 = vsub.f32 %v8274, %v9598
  %v9600 = vand.u32 %v9599, 4294901760
  %9601 = vmatmul.mubr.f32.gmra.mrb[0].mxu0 %v9600
  %v9602 = vpop.f32.mrb[0].mxu0
  %v9603 = vadd.f32 %v9526, %v9602
  %v9604 = vpop.f32.mrb[0].mxu0
  %9605 = vdwg.mxu0
  %9606 = vmatprep.subr.mxu0 0.0
  %v9607 = vand.u32 %v47, 4294901760
  %v9608 = vsub.f32 %v47, %v9607
  %v9609 = vand.u32 %v9608, 4294901760
  %9610 = vmatpush1.msra.mxu0 %v9609
  %9611 = vmatprep.subr.mxu0 0.0
  %v9612 = vand.u32 %v48, 4294901760
  %v9613 = vsub.f32 %v48, %v9612
  %v9614 = vand.u32 %v9613, 4294901760
  %9615 = vmatpush1.msra.mxu0 %v9614
  %9616 = vmatprep.subr.mxu0 0.0
  %v9617 = vand.u32 %v49, 4294901760
  %v9618 = vsub.f32 %v49, %v9617
  %v9619 = vand.u32 %v9618, 4294901760
  %9620 = vmatpush1.msra.mxu0 %v9619
  %9621 = vmatprep.subr.mxu0 0.0
  %v9622 = vand.u32 %v50, 4294901760
  %v9623 = vsub.f32 %v50, %v9622
  %v9624 = vand.u32 %v9623, 4294901760
  %9625 = vmatpush1.msra.mxu0 %v9624
  %9626 = vmatprep.subr.mxu0 0.0
  %9627 = vmatpush1.msra.mxu0 0.0
  %9628 = vmatprep.subr.mxu0 0.0
  %9629 = vmatpush1.msra.mxu0 0.0
  %9630 = vmatprep.subr.mxu0 0.0
  %9631 = vmatpush1.msra.mxu0 0.0
  %9632 = vmatprep.subr.mxu0 0.0
  %9633 = vmatpush1.msra.mxu0 0.0
  %9634 = vmatprep.subr.mxu0 0.0
  %9635 = vmatpush1.msra.mxu0 0.0
  %9636 = vmatprep.subr.mxu0 0.0
  %9637 = vmatpush1.msra.mxu0 0.0
  %9638 = vmatprep.subr.mxu0 0.0
  %9639 = vmatpush1.msra.mxu0 0.0
  %9640 = vmatprep.subr.mxu0 0.0
  %9641 = vmatpush1.msra.mxu0 0.0
  %9642 = vmatprep.subr.mxu0 0.0
  %9643 = vmatpush1.msra.mxu0 0.0
  %9644 = vmatprep.subr.mxu0 0.0
  %9645 = vmatpush1.msra.mxu0 0.0
  %9646 = vmatprep.subr.mxu0 0.0
  %9647 = vmatpush1.msra.mxu0 0.0
  %9648 = vmatprep.subr.mxu0 0.0
  %9649 = vmatpush1.msra.mxu0 0.0
  %9650 = vmatprep.subr.mxu0 0.0
  %9651 = vmatpush1.msra.mxu0 0.0
  %9652 = vmatprep.subr.mxu0 0.0
  %9653 = vmatpush1.msra.mxu0 0.0
  %9654 = vmatprep.subr.mxu0 0.0
  %9655 = vmatpush1.msra.mxu0 0.0
  %9656 = vmatprep.subr.mxu0 0.0
  %9657 = vmatpush1.msra.mxu0 0.0
  %9658 = vmatprep.subr.mxu0 0.0
  %9659 = vmatpush1.msra.mxu0 0.0
  %9660 = vmatprep.subr.mxu0 0.0
  %9661 = vmatpush1.msra.mxu0 0.0
  %9662 = vmatprep.subr.mxu0 0.0
  %9663 = vmatpush1.msra.mxu0 0.0
  %9664 = vmatprep.subr.mxu0 0.0
  %9665 = vmatpush1.msra.mxu0 0.0
  %9666 = vmatprep.subr.mxu0 0.0
  %9667 = vmatpush1.msra.mxu0 0.0
  %9668 = vmatprep.subr.mxu0 0.0
  %9669 = vmatpush1.msra.mxu0 0.0
  %9670 = vmatprep.subr.mxu0 0.0
  %9671 = vmatpush1.msra.mxu0 0.0
  %9672 = vmatprep.subr.mxu0 0.0
  %9673 = vmatpush1.msra.mxu0 0.0
  %9674 = vmatprep.subr.mxu0 0.0
  %9675 = vmatpush1.msra.mxu0 0.0
  %9676 = vmatprep.subr.mxu0 0.0
  %9677 = vmatpush1.msra.mxu0 0.0
  %9678 = vmatprep.subr.mxu0 0.0
  %9679 = vmatpush1.msra.mxu0 0.0
  %9680 = vmatprep.subr.mxu0 0.0
  %9681 = vmatpush1.msra.mxu0 0.0
  %9682 = vmatprep.mubr.f32.mxu0 0.0
  %v9683 = vand.u32 %v8274, 4294901760
  %9684 = vmatmul.mubr.f32.gmra.mrb[0].mxu0 %v9683
  %v9685 = vpop.f32.mrb[0].mxu0
  %v9686 = vadd.f32 %v9603, %v9685
  %v9687 = vpop.f32.mrb[0].mxu0
  %9688 = vdwg.mxu0
  %9689 = vmatprep.subr.mxu0 0.0
  %v9690 = vand.u32 %v47, 4294901760
  %9691 = vmatpush1.msra.mxu0 %v9690
  %9692 = vmatprep.subr.mxu0 0.0
  %v9693 = vand.u32 %v48, 4294901760
  %9694 = vmatpush1.msra.mxu0 %v9693
  %9695 = vmatprep.subr.mxu0 0.0
  %v9696 = vand.u32 %v49, 4294901760
  %9697 = vmatpush1.msra.mxu0 %v9696
  %9698 = vmatprep.subr.mxu0 0.0
  %v9699 = vand.u32 %v50, 4294901760
  %9700 = vmatpush1.msra.mxu0 %v9699
  %9701 = vmatprep.subr.mxu0 0.0
  %9702 = vmatpush1.msra.mxu0 0.0
  %9703 = vmatprep.subr.mxu0 0.0
  %9704 = vmatpush1.msra.mxu0 0.0
  %9705 = vmatprep.subr.mxu0 0.0
  %9706 = vmatpush1.msra.mxu0 0.0
  %9707 = vmatprep.subr.mxu0 0.0
  %9708 = vmatpush1.msra.mxu0 0.0
  %9709 = vmatprep.subr.mxu0 0.0
  %9710 = vmatpush1.msra.mxu0 0.0
  %9711 = vmatprep.subr.mxu0 0.0
  %9712 = vmatpush1.msra.mxu0 0.0
  %9713 = vmatprep.subr.mxu0 0.0
  %9714 = vmatpush1.msra.mxu0 0.0
  %9715 = vmatprep.subr.mxu0 0.0
  %9716 = vmatpush1.msra.mxu0 0.0
  %9717 = vmatprep.subr.mxu0 0.0
  %9718 = vmatpush1.msra.mxu0 0.0
  %9719 = vmatprep.subr.mxu0 0.0
  %9720 = vmatpush1.msra.mxu0 0.0
  %9721 = vmatprep.subr.mxu0 0.0
  %9722 = vmatpush1.msra.mxu0 0.0
  %9723 = vmatprep.subr.mxu0 0.0
  %9724 = vmatpush1.msra.mxu0 0.0
  %9725 = vmatprep.subr.mxu0 0.0
  %9726 = vmatpush1.msra.mxu0 0.0
  %9727 = vmatprep.subr.mxu0 0.0
  %9728 = vmatpush1.msra.mxu0 0.0
  %9729 = vmatprep.subr.mxu0 0.0
  %9730 = vmatpush1.msra.mxu0 0.0
  %9731 = vmatprep.subr.mxu0 0.0
  %9732 = vmatpush1.msra.mxu0 0.0
  %9733 = vmatprep.subr.mxu0 0.0
  %9734 = vmatpush1.msra.mxu0 0.0
  %9735 = vmatprep.subr.mxu0 0.0
  %9736 = vmatpush1.msra.mxu0 0.0
  %9737 = vmatprep.subr.mxu0 0.0
  %9738 = vmatpush1.msra.mxu0 0.0
  %9739 = vmatprep.subr.mxu0 0.0
  %9740 = vmatpush1.msra.mxu0 0.0
  %9741 = vmatprep.subr.mxu0 0.0
  %9742 = vmatpush1.msra.mxu0 0.0
  %9743 = vmatprep.subr.mxu0 0.0
  %9744 = vmatpush1.msra.mxu0 0.0
  %9745 = vmatprep.subr.mxu0 0.0
  %9746 = vmatpush1.msra.mxu0 0.0
  %9747 = vmatprep.subr.mxu0 0.0
  %9748 = vmatpush1.msra.mxu0 0.0
  %9749 = vmatprep.subr.mxu0 0.0
  %9750 = vmatpush1.msra.mxu0 0.0
  %9751 = vmatprep.subr.mxu0 0.0
  %9752 = vmatpush1.msra.mxu0 0.0
  %9753 = vmatprep.subr.mxu0 0.0
  %9754 = vmatpush1.msra.mxu0 0.0
  %9755 = vmatprep.subr.mxu0 0.0
  %9756 = vmatpush1.msra.mxu0 0.0
  %9757 = vmatprep.mubr.f32.mxu0 0.0
  %v9758 = vand.u32 %v8274, 4294901760
  %9759 = vmatmul.mubr.f32.gmra.mrb[0].mxu0 %v9758
  %v9760 = vpop.f32.mrb[0].mxu0
  %v9761 = vadd.f32 %v9686, %v9760
  %v9762 = vpop.f32.mrb[0].mxu0
  %9763 = vdwg.mxu0
  %v9765 = vrot.slane %v9761, 4
  %v9767 = vadd.f32 %v114, %v9765
  %v9768 = vmul.f32 %v9767, %v40
  %v9769 = vxor.u32 %v9768, 2147483648
  %v9770 = vmul.f32 %v9769, 1.442695
  %v9771 = vpow.pop %v9770
  %v9772 = vadd.f32 %v9771, 1.0
  %v9773 = vrcp.pop %v9772
  %v9774 = vmul.f32 1.0, %v9773
  %v9775 = vmul.f32 %v9774, 2.0
  %v9776 = vsub.f32 %v9775, 1.0
  %v9777 = vsel %vm39, %v9776, %v9774
  %v9779 = vrot.slane %v8263, 6
  %v9781 = vmul.f32 %v9777, %v9779
  %9783 = vrot.lane.b32.xlu0 %v9777, 64
  %v9784 = vpop.permute.xlu0 %9783
  %v9786 = vmul.f32 %v9777, %v9784
  %9788 = vrot.lane.b32.xlu0 %v9786, 32
  %v9789 = vpop.permute.xlu0 %9788
  %v9791 = vadd.f32 %v9781, %v9789
  %v9792 = vtanh.pop %v9791
  %9794 = vrot.lane.b32.xlu0 %v9792, 64
  %v9795 = vpop.permute.xlu0 %9794
  %v9797 = vmul.f32 %v9777, %v9795
  %v9799 = vrot.slane %v9797, 4
  %9800 = vrot.lane.b32.xlu0 %v9799, 32
  %v9801 = vpop.permute.xlu0 %9800
  %v9802 = vsel %vm117, %v9801, 0
  %9804 = vmatprep.subr.mxu0 0.0
  %v9805 = vand.u32 %v43, 4294901760
  %9806 = vmatpush1.msra.mxu0 %v9805
  %9807 = vmatprep.subr.mxu0 0.0
  %v9808 = vand.u32 %v44, 4294901760
  %9809 = vmatpush1.msra.mxu0 %v9808
  %9810 = vmatprep.subr.mxu0 0.0
  %v9811 = vand.u32 %v45, 4294901760
  %9812 = vmatpush1.msra.mxu0 %v9811
  %9813 = vmatprep.subr.mxu0 0.0
  %v9814 = vand.u32 %v46, 4294901760
  %9815 = vmatpush1.msra.mxu0 %v9814
  %9816 = vmatprep.subr.mxu0 0.0
  %9817 = vmatpush1.msra.mxu0 0.0
  %9818 = vmatprep.subr.mxu0 0.0
  %9819 = vmatpush1.msra.mxu0 0.0
  %9820 = vmatprep.subr.mxu0 0.0
  %9821 = vmatpush1.msra.mxu0 0.0
  %9822 = vmatprep.subr.mxu0 0.0
  %9823 = vmatpush1.msra.mxu0 0.0
  %9824 = vmatprep.subr.mxu0 0.0
  %9825 = vmatpush1.msra.mxu0 0.0
  %9826 = vmatprep.subr.mxu0 0.0
  %9827 = vmatpush1.msra.mxu0 0.0
  %9828 = vmatprep.subr.mxu0 0.0
  %9829 = vmatpush1.msra.mxu0 0.0
  %9830 = vmatprep.subr.mxu0 0.0
  %9831 = vmatpush1.msra.mxu0 0.0
  %9832 = vmatprep.subr.mxu0 0.0
  %9833 = vmatpush1.msra.mxu0 0.0
  %9834 = vmatprep.subr.mxu0 0.0
  %9835 = vmatpush1.msra.mxu0 0.0
  %9836 = vmatprep.subr.mxu0 0.0
  %9837 = vmatpush1.msra.mxu0 0.0
  %9838 = vmatprep.subr.mxu0 0.0
  %9839 = vmatpush1.msra.mxu0 0.0
  %9840 = vmatprep.subr.mxu0 0.0
  %9841 = vmatpush1.msra.mxu0 0.0
  %9842 = vmatprep.subr.mxu0 0.0
  %9843 = vmatpush1.msra.mxu0 0.0
  %9844 = vmatprep.subr.mxu0 0.0
  %9845 = vmatpush1.msra.mxu0 0.0
  %9846 = vmatprep.subr.mxu0 0.0
  %9847 = vmatpush1.msra.mxu0 0.0
  %9848 = vmatprep.subr.mxu0 0.0
  %9849 = vmatpush1.msra.mxu0 0.0
  %9850 = vmatprep.subr.mxu0 0.0
  %9851 = vmatpush1.msra.mxu0 0.0
  %9852 = vmatprep.subr.mxu0 0.0
  %9853 = vmatpush1.msra.mxu0 0.0
  %9854 = vmatprep.subr.mxu0 0.0
  %9855 = vmatpush1.msra.mxu0 0.0
  %9856 = vmatprep.subr.mxu0 0.0
  %9857 = vmatpush1.msra.mxu0 0.0
  %9858 = vmatprep.subr.mxu0 0.0
  %9859 = vmatpush1.msra.mxu0 0.0
  %9860 = vmatprep.subr.mxu0 0.0
  %9861 = vmatpush1.msra.mxu0 0.0
  %9862 = vmatprep.subr.mxu0 0.0
  %9863 = vmatpush1.msra.mxu0 0.0
  %9864 = vmatprep.subr.mxu0 0.0
  %9865 = vmatpush1.msra.mxu0 0.0
  %9866 = vmatprep.subr.mxu0 0.0
  %9867 = vmatpush1.msra.mxu0 0.0
  %9868 = vmatprep.subr.mxu0 0.0
  %9869 = vmatpush1.msra.mxu0 0.0
  %9870 = vmatprep.subr.mxu0 0.0
  %9871 = vmatpush1.msra.mxu0 0.0
  %9872 = vmatprep.mubr.f32.mxu0 0.0
  %v9873 = vand.u32 %v9802, 4294901760
  %v9874 = vsub.f32 %v9802, %v9873
  %v9875 = vand.u32 %v9874, 4294901760
  %v9876 = vsub.f32 %v9874, %v9875
  %v9877 = vand.u32 %v9876, 4294901760
  %9878 = vmatmul.mubr.f32.gmra.mrb[0].mxu0 %v9877
  %v9879 = vpop.f32.mrb[0].mxu0
  %v9880 = vadd.f32 %v638, %v9879
  %v9881 = vpop.f32.mrb[0].mxu0
  %9882 = vdwg.mxu0
  %9883 = vmatprep.subr.mxu0 0.0
  %v9884 = vand.u32 %v43, 4294901760
  %v9885 = vsub.f32 %v43, %v9884
  %v9886 = vand.u32 %v9885, 4294901760
  %v9887 = vsub.f32 %v9885, %v9886
  %v9888 = vand.u32 %v9887, 4294901760
  %9889 = vmatpush1.msra.mxu0 %v9888
  %9890 = vmatprep.subr.mxu0 0.0
  %v9891 = vand.u32 %v44, 4294901760
  %v9892 = vsub.f32 %v44, %v9891
  %v9893 = vand.u32 %v9892, 4294901760
  %v9894 = vsub.f32 %v9892, %v9893
  %v9895 = vand.u32 %v9894, 4294901760
  %9896 = vmatpush1.msra.mxu0 %v9895
  %9897 = vmatprep.subr.mxu0 0.0
  %v9898 = vand.u32 %v45, 4294901760
  %v9899 = vsub.f32 %v45, %v9898
  %v9900 = vand.u32 %v9899, 4294901760
  %v9901 = vsub.f32 %v9899, %v9900
  %v9902 = vand.u32 %v9901, 4294901760
  %9903 = vmatpush1.msra.mxu0 %v9902
  %9904 = vmatprep.subr.mxu0 0.0
  %v9905 = vand.u32 %v46, 4294901760
  %v9906 = vsub.f32 %v46, %v9905
  %v9907 = vand.u32 %v9906, 4294901760
  %v9908 = vsub.f32 %v9906, %v9907
  %v9909 = vand.u32 %v9908, 4294901760
  %9910 = vmatpush1.msra.mxu0 %v9909
  %9911 = vmatprep.subr.mxu0 0.0
  %9912 = vmatpush1.msra.mxu0 0.0
  %9913 = vmatprep.subr.mxu0 0.0
  %9914 = vmatpush1.msra.mxu0 0.0
  %9915 = vmatprep.subr.mxu0 0.0
  %9916 = vmatpush1.msra.mxu0 0.0
  %9917 = vmatprep.subr.mxu0 0.0
  %9918 = vmatpush1.msra.mxu0 0.0
  %9919 = vmatprep.subr.mxu0 0.0
  %9920 = vmatpush1.msra.mxu0 0.0
  %9921 = vmatprep.subr.mxu0 0.0
  %9922 = vmatpush1.msra.mxu0 0.0
  %9923 = vmatprep.subr.mxu0 0.0
  %9924 = vmatpush1.msra.mxu0 0.0
  %9925 = vmatprep.subr.mxu0 0.0
  %9926 = vmatpush1.msra.mxu0 0.0
  %9927 = vmatprep.subr.mxu0 0.0
  %9928 = vmatpush1.msra.mxu0 0.0
  %9929 = vmatprep.subr.mxu0 0.0
  %9930 = vmatpush1.msra.mxu0 0.0
  %9931 = vmatprep.subr.mxu0 0.0
  %9932 = vmatpush1.msra.mxu0 0.0
  %9933 = vmatprep.subr.mxu0 0.0
  %9934 = vmatpush1.msra.mxu0 0.0
  %9935 = vmatprep.subr.mxu0 0.0
  %9936 = vmatpush1.msra.mxu0 0.0
  %9937 = vmatprep.subr.mxu0 0.0
  %9938 = vmatpush1.msra.mxu0 0.0
  %9939 = vmatprep.subr.mxu0 0.0
  %9940 = vmatpush1.msra.mxu0 0.0
  %9941 = vmatprep.subr.mxu0 0.0
  %9942 = vmatpush1.msra.mxu0 0.0
  %9943 = vmatprep.subr.mxu0 0.0
  %9944 = vmatpush1.msra.mxu0 0.0
  %9945 = vmatprep.subr.mxu0 0.0
  %9946 = vmatpush1.msra.mxu0 0.0
  %9947 = vmatprep.subr.mxu0 0.0
  %9948 = vmatpush1.msra.mxu0 0.0
  %9949 = vmatprep.subr.mxu0 0.0
  %9950 = vmatpush1.msra.mxu0 0.0
  %9951 = vmatprep.subr.mxu0 0.0
  %9952 = vmatpush1.msra.mxu0 0.0
  %9953 = vmatprep.subr.mxu0 0.0
  %9954 = vmatpush1.msra.mxu0 0.0
  %9955 = vmatprep.subr.mxu0 0.0
  %9956 = vmatpush1.msra.mxu0 0.0
  %9957 = vmatprep.subr.mxu0 0.0
  %9958 = vmatpush1.msra.mxu0 0.0
  %9959 = vmatprep.subr.mxu0 0.0
  %9960 = vmatpush1.msra.mxu0 0.0
  %9961 = vmatprep.subr.mxu0 0.0
  %9962 = vmatpush1.msra.mxu0 0.0
  %9963 = vmatprep.subr.mxu0 0.0
  %9964 = vmatpush1.msra.mxu0 0.0
  %9965 = vmatprep.subr.mxu0 0.0
  %9966 = vmatpush1.msra.mxu0 0.0
  %9967 = vmatprep.mubr.f32.mxu0 0.0
  %v9968 = vand.u32 %v9802, 4294901760
  %9969 = vmatmul.mubr.f32.gmra.mrb[0].mxu0 %v9968
  %v9970 = vpop.f32.mrb[0].mxu0
  %v9971 = vadd.f32 %v9880, %v9970
  %v9972 = vpop.f32.mrb[0].mxu0
  %9973 = vdwg.mxu0
  %9974 = vmatprep.subr.mxu0 0.0
  %v9975 = vand.u32 %v43, 4294901760
  %v9976 = vsub.f32 %v43, %v9975
  %9977 = vmatpush1.msra.mxu0 %v9976
  %9978 = vmatprep.subr.mxu0 0.0
  %v9979 = vand.u32 %v44, 4294901760
  %v9980 = vsub.f32 %v44, %v9979
  %9981 = vmatpush1.msra.mxu0 %v9980
  %9982 = vmatprep.subr.mxu0 0.0
  %v9983 = vand.u32 %v45, 4294901760
  %v9984 = vsub.f32 %v45, %v9983
  %9985 = vmatpush1.msra.mxu0 %v9984
  %9986 = vmatprep.subr.mxu0 0.0
  %v9987 = vand.u32 %v46, 4294901760
  %v9988 = vsub.f32 %v46, %v9987
  %9989 = vmatpush1.msra.mxu0 %v9988
  %9990 = vmatprep.subr.mxu0 0.0
  %9991 = vmatpush1.msra.mxu0 0.0
  %9992 = vmatprep.subr.mxu0 0.0
  %9993 = vmatpush1.msra.mxu0 0.0
  %9994 = vmatprep.subr.mxu0 0.0
  %9995 = vmatpush1.msra.mxu0 0.0
  %9996 = vmatprep.subr.mxu0 0.0
  %9997 = vmatpush1.msra.mxu0 0.0
  %9998 = vmatprep.subr.mxu0 0.0
  %9999 = vmatpush1.msra.mxu0 0.0
  %10000 = vmatprep.subr.mxu0 0.0
  %10001 = vmatpush1.msra.mxu0 0.0
  %10002 = vmatprep.subr.mxu0 0.0
  %10003 = vmatpush1.msra.mxu0 0.0
  %10004 = vmatprep.subr.mxu0 0.0
  %10005 = vmatpush1.msra.mxu0 0.0
  %10006 = vmatprep.subr.mxu0 0.0
  %10007 = vmatpush1.msra.mxu0 0.0
  %10008 = vmatprep.subr.mxu0 0.0
  %10009 = vmatpush1.msra.mxu0 0.0
  %10010 = vmatprep.subr.mxu0 0.0
  %10011 = vmatpush1.msra.mxu0 0.0
  %10012 = vmatprep.subr.mxu0 0.0
  %10013 = vmatpush1.msra.mxu0 0.0
  %10014 = vmatprep.subr.mxu0 0.0
  %10015 = vmatpush1.msra.mxu0 0.0
  %10016 = vmatprep.subr.mxu0 0.0
  %10017 = vmatpush1.msra.mxu0 0.0
  %10018 = vmatprep.subr.mxu0 0.0
  %10019 = vmatpush1.msra.mxu0 0.0
  %10020 = vmatprep.subr.mxu0 0.0
  %10021 = vmatpush1.msra.mxu0 0.0
  %10022 = vmatprep.subr.mxu0 0.0
  %10023 = vmatpush1.msra.mxu0 0.0
  %10024 = vmatprep.subr.mxu0 0.0
  %10025 = vmatpush1.msra.mxu0 0.0
  %10026 = vmatprep.subr.mxu0 0.0
  %10027 = vmatpush1.msra.mxu0 0.0
  %10028 = vmatprep.subr.mxu0 0.0
  %10029 = vmatpush1.msra.mxu0 0.0
  %10030 = vmatprep.subr.mxu0 0.0
  %10031 = vmatpush1.msra.mxu0 0.0
  %10032 = vmatprep.subr.mxu0 0.0
  %10033 = vmatpush1.msra.mxu0 0.0
  %10034 = vmatprep.subr.mxu0 0.0
  %10035 = vmatpush1.msra.mxu0 0.0
  %10036 = vmatprep.subr.mxu0 0.0
  %10037 = vmatpush1.msra.mxu0 0.0
  %10038 = vmatprep.subr.mxu0 0.0
  %10039 = vmatpush1.msra.mxu0 0.0
  %10040 = vmatprep.subr.mxu0 0.0
  %10041 = vmatpush1.msra.mxu0 0.0
  %10042 = vmatprep.subr.mxu0 0.0
  %10043 = vmatpush1.msra.mxu0 0.0
  %10044 = vmatprep.subr.mxu0 0.0
  %10045 = vmatpush1.msra.mxu0 0.0
  %10046 = vmatprep.mubr.f32.mxu0 0.0
  %v10047 = vand.u32 %v9802, 4294901760
  %v10048 = vsub.f32 %v9802, %v10047
  %10049 = vmatmul.mubr.f32.gmra.mrb[0].mxu0 %v10048
  %v10050 = vpop.f32.mrb[0].mxu0
  %v10051 = vadd.f32 %v9971, %v10050
  %v10052 = vpop.f32.mrb[0].mxu0
  %10053 = vdwg.mxu0
  %10054 = vmatprep.subr.mxu0 0.0
  %v10055 = vand.u32 %v43, 4294901760
  %10056 = vmatpush1.msra.mxu0 %v10055
  %10057 = vmatprep.subr.mxu0 0.0
  %v10058 = vand.u32 %v44, 4294901760
  %10059 = vmatpush1.msra.mxu0 %v10058
  %10060 = vmatprep.subr.mxu0 0.0
  %v10061 = vand.u32 %v45, 4294901760
  %10062 = vmatpush1.msra.mxu0 %v10061
  %10063 = vmatprep.subr.mxu0 0.0
  %v10064 = vand.u32 %v46, 4294901760
  %10065 = vmatpush1.msra.mxu0 %v10064
  %10066 = vmatprep.subr.mxu0 0.0
  %10067 = vmatpush1.msra.mxu0 0.0
  %10068 = vmatprep.subr.mxu0 0.0
  %10069 = vmatpush1.msra.mxu0 0.0
  %10070 = vmatprep.subr.mxu0 0.0
  %10071 = vmatpush1.msra.mxu0 0.0
  %10072 = vmatprep.subr.mxu0 0.0
  %10073 = vmatpush1.msra.mxu0 0.0
  %10074 = vmatprep.subr.mxu0 0.0
  %10075 = vmatpush1.msra.mxu0 0.0
  %10076 = vmatprep.subr.mxu0 0.0
  %10077 = vmatpush1.msra.mxu0 0.0
  %10078 = vmatprep.subr.mxu0 0.0
  %10079 = vmatpush1.msra.mxu0 0.0
  %10080 = vmatprep.subr.mxu0 0.0
  %10081 = vmatpush1.msra.mxu0 0.0
  %10082 = vmatprep.subr.mxu0 0.0
  %10083 = vmatpush1.msra.mxu0 0.0
  %10084 = vmatprep.subr.mxu0 0.0
  %10085 = vmatpush1.msra.mxu0 0.0
  %10086 = vmatprep.subr.mxu0 0.0
  %10087 = vmatpush1.msra.mxu0 0.0
  %10088 = vmatprep.subr.mxu0 0.0
  %10089 = vmatpush1.msra.mxu0 0.0
  %10090 = vmatprep.subr.mxu0 0.0
  %10091 = vmatpush1.msra.mxu0 0.0
  %10092 = vmatprep.subr.mxu0 0.0
  %10093 = vmatpush1.msra.mxu0 0.0
  %10094 = vmatprep.subr.mxu0 0.0
  %10095 = vmatpush1.msra.mxu0 0.0
  %10096 = vmatprep.subr.mxu0 0.0
  %10097 = vmatpush1.msra.mxu0 0.0
  %10098 = vmatprep.subr.mxu0 0.0
  %10099 = vmatpush1.msra.mxu0 0.0
  %10100 = vmatprep.subr.mxu0 0.0
  %10101 = vmatpush1.msra.mxu0 0.0
  %10102 = vmatprep.subr.mxu0 0.0
  %10103 = vmatpush1.msra.mxu0 0.0
  %10104 = vmatprep.subr.mxu0 0.0
  %10105 = vmatpush1.msra.mxu0 0.0
  %10106 = vmatprep.subr.mxu0 0.0
  %10107 = vmatpush1.msra.mxu0 0.0
  %10108 = vmatprep.subr.mxu0 0.0
  %10109 = vmatpush1.msra.mxu0 0.0
  %10110 = vmatprep.subr.mxu0 0.0
  %10111 = vmatpush1.msra.mxu0 0.0
  %10112 = vmatprep.subr.mxu0 0.0
  %10113 = vmatpush1.msra.mxu0 0.0
  %10114 = vmatprep.subr.mxu0 0.0
  %10115 = vmatpush1.msra.mxu0 0.0
  %10116 = vmatprep.subr.mxu0 0.0
  %10117 = vmatpush1.msra.mxu0 0.0
  %10118 = vmatprep.subr.mxu0 0.0
  %10119 = vmatpush1.msra.mxu0 0.0
  %10120 = vmatprep.subr.mxu0 0.0
  %10121 = vmatpush1.msra.mxu0 0.0
  %10122 = vmatprep.mubr.f32.mxu0 0.0
  %v10123 = vand.u32 %v9802, 4294901760
  %v10124 = vsub.f32 %v9802, %v10123
  %v10125 = vand.u32 %v10124, 4294901760
  %10126 = vmatmul.mubr.f32.gmra.mrb[0].mxu0 %v10125
  %v10127 = vpop.f32.mrb[0].mxu0
  %v10128 = vadd.f32 %v10051, %v10127
  %v10129 = vpop.f32.mrb[0].mxu0
  %10130 = vdwg.mxu0
  %10131 = vmatprep.subr.mxu0 0.0
  %v10132 = vand.u32 %v43, 4294901760
  %v10133 = vsub.f32 %v43, %v10132
  %v10134 = vand.u32 %v10133, 4294901760
  %10135 = vmatpush1.msra.mxu0 %v10134
  %10136 = vmatprep.subr.mxu0 0.0
  %v10137 = vand.u32 %v44, 4294901760
  %v10138 = vsub.f32 %v44, %v10137
  %v10139 = vand.u32 %v10138, 4294901760
  %10140 = vmatpush1.msra.mxu0 %v10139
  %10141 = vmatprep.subr.mxu0 0.0
  %v10142 = vand.u32 %v45, 4294901760
  %v10143 = vsub.f32 %v45, %v10142
  %v10144 = vand.u32 %v10143, 4294901760
  %10145 = vmatpush1.msra.mxu0 %v10144
  %10146 = vmatprep.subr.mxu0 0.0
  %v10147 = vand.u32 %v46, 4294901760
  %v10148 = vsub.f32 %v46, %v10147
  %v10149 = vand.u32 %v10148, 4294901760
  %10150 = vmatpush1.msra.mxu0 %v10149
  %10151 = vmatprep.subr.mxu0 0.0
  %10152 = vmatpush1.msra.mxu0 0.0
  %10153 = vmatprep.subr.mxu0 0.0
  %10154 = vmatpush1.msra.mxu0 0.0
  %10155 = vmatprep.subr.mxu0 0.0
  %10156 = vmatpush1.msra.mxu0 0.0
  %10157 = vmatprep.subr.mxu0 0.0
  %10158 = vmatpush1.msra.mxu0 0.0
  %10159 = vmatprep.subr.mxu0 0.0
  %10160 = vmatpush1.msra.mxu0 0.0
  %10161 = vmatprep.subr.mxu0 0.0
  %10162 = vmatpush1.msra.mxu0 0.0
  %10163 = vmatprep.subr.mxu0 0.0
  %10164 = vmatpush1.msra.mxu0 0.0
  %10165 = vmatprep.subr.mxu0 0.0
  %10166 = vmatpush1.msra.mxu0 0.0
  %10167 = vmatprep.subr.mxu0 0.0
  %10168 = vmatpush1.msra.mxu0 0.0
  %10169 = vmatprep.subr.mxu0 0.0
  %10170 = vmatpush1.msra.mxu0 0.0
  %10171 = vmatprep.subr.mxu0 0.0
  %10172 = vmatpush1.msra.mxu0 0.0
  %10173 = vmatprep.subr.mxu0 0.0
  %10174 = vmatpush1.msra.mxu0 0.0
  %10175 = vmatprep.subr.mxu0 0.0
  %10176 = vmatpush1.msra.mxu0 0.0
  %10177 = vmatprep.subr.mxu0 0.0
  %10178 = vmatpush1.msra.mxu0 0.0
  %10179 = vmatprep.subr.mxu0 0.0
  %10180 = vmatpush1.msra.mxu0 0.0
  %10181 = vmatprep.subr.mxu0 0.0
  %10182 = vmatpush1.msra.mxu0 0.0
  %10183 = vmatprep.subr.mxu0 0.0
  %10184 = vmatpush1.msra.mxu0 0.0
  %10185 = vmatprep.subr.mxu0 0.0
  %10186 = vmatpush1.msra.mxu0 0.0
  %10187 = vmatprep.subr.mxu0 0.0
  %10188 = vmatpush1.msra.mxu0 0.0
  %10189 = vmatprep.subr.mxu0 0.0
  %10190 = vmatpush1.msra.mxu0 0.0
  %10191 = vmatprep.subr.mxu0 0.0
  %10192 = vmatpush1.msra.mxu0 0.0
  %10193 = vmatprep.subr.mxu0 0.0
  %10194 = vmatpush1.msra.mxu0 0.0
  %10195 = vmatprep.subr.mxu0 0.0
  %10196 = vmatpush1.msra.mxu0 0.0
  %10197 = vmatprep.subr.mxu0 0.0
  %10198 = vmatpush1.msra.mxu0 0.0
  %10199 = vmatprep.subr.mxu0 0.0
  %10200 = vmatpush1.msra.mxu0 0.0
  %10201 = vmatprep.subr.mxu0 0.0
  %10202 = vmatpush1.msra.mxu0 0.0
  %10203 = vmatprep.subr.mxu0 0.0
  %10204 = vmatpush1.msra.mxu0 0.0
  %10205 = vmatprep.subr.mxu0 0.0
  %10206 = vmatpush1.msra.mxu0 0.0
  %10207 = vmatprep.mubr.f32.mxu0 0.0
  %v10208 = vand.u32 %v9802, 4294901760
  %10209 = vmatmul.mubr.f32.gmra.mrb[0].mxu0 %v10208
  %v10210 = vpop.f32.mrb[0].mxu0
  %v10211 = vadd.f32 %v10128, %v10210
  %v10212 = vpop.f32.mrb[0].mxu0
  %10213 = vdwg.mxu0
  %10214 = vmatprep.subr.mxu0 0.0
  %v10215 = vand.u32 %v43, 4294901760
  %10216 = vmatpush1.msra.mxu0 %v10215
  %10217 = vmatprep.subr.mxu0 0.0
  %v10218 = vand.u32 %v44, 4294901760
  %10219 = vmatpush1.msra.mxu0 %v10218
  %10220 = vmatprep.subr.mxu0 0.0
  %v10221 = vand.u32 %v45, 4294901760
  %10222 = vmatpush1.msra.mxu0 %v10221
  %10223 = vmatprep.subr.mxu0 0.0
  %v10224 = vand.u32 %v46, 4294901760
  %10225 = vmatpush1.msra.mxu0 %v10224
  %10226 = vmatprep.subr.mxu0 0.0
  %10227 = vmatpush1.msra.mxu0 0.0
  %10228 = vmatprep.subr.mxu0 0.0
  %10229 = vmatpush1.msra.mxu0 0.0
  %10230 = vmatprep.subr.mxu0 0.0
  %10231 = vmatpush1.msra.mxu0 0.0
  %10232 = vmatprep.subr.mxu0 0.0
  %10233 = vmatpush1.msra.mxu0 0.0
  %10234 = vmatprep.subr.mxu0 0.0
  %10235 = vmatpush1.msra.mxu0 0.0
  %10236 = vmatprep.subr.mxu0 0.0
  %10237 = vmatpush1.msra.mxu0 0.0
  %10238 = vmatprep.subr.mxu0 0.0
  %10239 = vmatpush1.msra.mxu0 0.0
  %10240 = vmatprep.subr.mxu0 0.0
  %10241 = vmatpush1.msra.mxu0 0.0
  %10242 = vmatprep.subr.mxu0 0.0
  %10243 = vmatpush1.msra.mxu0 0.0
  %10244 = vmatprep.subr.mxu0 0.0
  %10245 = vmatpush1.msra.mxu0 0.0
  %10246 = vmatprep.subr.mxu0 0.0
  %10247 = vmatpush1.msra.mxu0 0.0
  %10248 = vmatprep.subr.mxu0 0.0
  %10249 = vmatpush1.msra.mxu0 0.0
  %10250 = vmatprep.subr.mxu0 0.0
  %10251 = vmatpush1.msra.mxu0 0.0
  %10252 = vmatprep.subr.mxu0 0.0
  %10253 = vmatpush1.msra.mxu0 0.0
  %10254 = vmatprep.subr.mxu0 0.0
  %10255 = vmatpush1.msra.mxu0 0.0
  %10256 = vmatprep.subr.mxu0 0.0
  %10257 = vmatpush1.msra.mxu0 0.0
  %10258 = vmatprep.subr.mxu0 0.0
  %10259 = vmatpush1.msra.mxu0 0.0
  %10260 = vmatprep.subr.mxu0 0.0
  %10261 = vmatpush1.msra.mxu0 0.0
  %10262 = vmatprep.subr.mxu0 0.0
  %10263 = vmatpush1.msra.mxu0 0.0
  %10264 = vmatprep.subr.mxu0 0.0
  %10265 = vmatpush1.msra.mxu0 0.0
  %10266 = vmatprep.subr.mxu0 0.0
  %10267 = vmatpush1.msra.mxu0 0.0
  %10268 = vmatprep.subr.mxu0 0.0
  %10269 = vmatpush1.msra.mxu0 0.0
  %10270 = vmatprep.subr.mxu0 0.0
  %10271 = vmatpush1.msra.mxu0 0.0
  %10272 = vmatprep.subr.mxu0 0.0
  %10273 = vmatpush1.msra.mxu0 0.0
  %10274 = vmatprep.subr.mxu0 0.0
  %10275 = vmatpush1.msra.mxu0 0.0
  %10276 = vmatprep.subr.mxu0 0.0
  %10277 = vmatpush1.msra.mxu0 0.0
  %10278 = vmatprep.subr.mxu0 0.0
  %10279 = vmatpush1.msra.mxu0 0.0
  %10280 = vmatprep.subr.mxu0 0.0
  %10281 = vmatpush1.msra.mxu0 0.0
  %10282 = vmatprep.mubr.f32.mxu0 0.0
  %v10283 = vand.u32 %v9802, 4294901760
  %10284 = vmatmul.mubr.f32.gmra.mrb[0].mxu0 %v10283
  %v10285 = vpop.f32.mrb[0].mxu0
  %v10286 = vadd.f32 %v10211, %v10285
  %v10287 = vpop.f32.mrb[0].mxu0
  %10288 = vdwg.mxu0
  %10290 = vrot.lane.b32.xlu0 %v9278, 32
  %v10291 = vpop.permute.xlu0 %10290
  %v10292 = vsel %vm117, %v10291, 0
  %10294 = vmatprep.subr.mxu0 0.0
  %v10295 = vand.u32 %v51, 4294901760
  %10296 = vmatpush1.msra.mxu0 %v10295
  %10297 = vmatprep.subr.mxu0 0.0
  %v10298 = vand.u32 %v52, 4294901760
  %10299 = vmatpush1.msra.mxu0 %v10298
  %10300 = vmatprep.subr.mxu0 0.0
  %v10301 = vand.u32 %v53, 4294901760
  %10302 = vmatpush1.msra.mxu0 %v10301
  %10303 = vmatprep.subr.mxu0 0.0
  %v10304 = vand.u32 %v54, 4294901760
  %10305 = vmatpush1.msra.mxu0 %v10304
  %10306 = vmatprep.subr.mxu0 0.0
  %10307 = vmatpush1.msra.mxu0 0.0
  %10308 = vmatprep.subr.mxu0 0.0
  %10309 = vmatpush1.msra.mxu0 0.0
  %10310 = vmatprep.subr.mxu0 0.0
  %10311 = vmatpush1.msra.mxu0 0.0
  %10312 = vmatprep.subr.mxu0 0.0
  %10313 = vmatpush1.msra.mxu0 0.0
  %10314 = vmatprep.subr.mxu0 0.0
  %10315 = vmatpush1.msra.mxu0 0.0
  %10316 = vmatprep.subr.mxu0 0.0
  %10317 = vmatpush1.msra.mxu0 0.0
  %10318 = vmatprep.subr.mxu0 0.0
  %10319 = vmatpush1.msra.mxu0 0.0
  %10320 = vmatprep.subr.mxu0 0.0
  %10321 = vmatpush1.msra.mxu0 0.0
  %10322 = vmatprep.subr.mxu0 0.0
  %10323 = vmatpush1.msra.mxu0 0.0
  %10324 = vmatprep.subr.mxu0 0.0
  %10325 = vmatpush1.msra.mxu0 0.0
  %10326 = vmatprep.subr.mxu0 0.0
  %10327 = vmatpush1.msra.mxu0 0.0
  %10328 = vmatprep.subr.mxu0 0.0
  %10329 = vmatpush1.msra.mxu0 0.0
  %10330 = vmatprep.subr.mxu0 0.0
  %10331 = vmatpush1.msra.mxu0 0.0
  %10332 = vmatprep.subr.mxu0 0.0
  %10333 = vmatpush1.msra.mxu0 0.0
  %10334 = vmatprep.subr.mxu0 0.0
  %10335 = vmatpush1.msra.mxu0 0.0
  %10336 = vmatprep.subr.mxu0 0.0
  %10337 = vmatpush1.msra.mxu0 0.0
  %10338 = vmatprep.subr.mxu0 0.0
  %10339 = vmatpush1.msra.mxu0 0.0
  %10340 = vmatprep.subr.mxu0 0.0
  %10341 = vmatpush1.msra.mxu0 0.0
  %10342 = vmatprep.subr.mxu0 0.0
  %10343 = vmatpush1.msra.mxu0 0.0
  %10344 = vmatprep.subr.mxu0 0.0
  %10345 = vmatpush1.msra.mxu0 0.0
  %10346 = vmatprep.subr.mxu0 0.0
  %10347 = vmatpush1.msra.mxu0 0.0
  %10348 = vmatprep.subr.mxu0 0.0
  %10349 = vmatpush1.msra.mxu0 0.0
  %10350 = vmatprep.subr.mxu0 0.0
  %10351 = vmatpush1.msra.mxu0 0.0
  %10352 = vmatprep.subr.mxu0 0.0
  %10353 = vmatpush1.msra.mxu0 0.0
  %10354 = vmatprep.subr.mxu0 0.0
  %10355 = vmatpush1.msra.mxu0 0.0
  %10356 = vmatprep.subr.mxu0 0.0
  %10357 = vmatpush1.msra.mxu0 0.0
  %10358 = vmatprep.subr.mxu0 0.0
  %10359 = vmatpush1.msra.mxu0 0.0
  %10360 = vmatprep.subr.mxu0 0.0
  %10361 = vmatpush1.msra.mxu0 0.0
  %10362 = vmatprep.mubr.f32.mxu0 0.0
  %v10363 = vand.u32 %v10292, 4294901760
  %v10364 = vsub.f32 %v10292, %v10363
  %v10365 = vand.u32 %v10364, 4294901760
  %v10366 = vsub.f32 %v10364, %v10365
  %v10367 = vand.u32 %v10366, 4294901760
  %10368 = vmatmul.mubr.f32.gmra.mrb[0].mxu0 %v10367
  %v10369 = vpop.f32.mrb[0].mxu0
  %v10370 = vadd.f32 0.0, %v10369
  %v10371 = vpop.f32.mrb[0].mxu0
  %10372 = vdwg.mxu0
  %10373 = vmatprep.subr.mxu0 0.0
  %v10374 = vand.u32 %v51, 4294901760
  %v10375 = vsub.f32 %v51, %v10374
  %v10376 = vand.u32 %v10375, 4294901760
  %v10377 = vsub.f32 %v10375, %v10376
  %v10378 = vand.u32 %v10377, 4294901760
  %10379 = vmatpush1.msra.mxu0 %v10378
  %10380 = vmatprep.subr.mxu0 0.0
  %v10381 = vand.u32 %v52, 4294901760
  %v10382 = vsub.f32 %v52, %v10381
  %v10383 = vand.u32 %v10382, 4294901760
  %v10384 = vsub.f32 %v10382, %v10383
  %v10385 = vand.u32 %v10384, 4294901760
  %10386 = vmatpush1.msra.mxu0 %v10385
  %10387 = vmatprep.subr.mxu0 0.0
  %v10388 = vand.u32 %v53, 4294901760
  %v10389 = vsub.f32 %v53, %v10388
  %v10390 = vand.u32 %v10389, 4294901760
  %v10391 = vsub.f32 %v10389, %v10390
  %v10392 = vand.u32 %v10391, 4294901760
  %10393 = vmatpush1.msra.mxu0 %v10392
  %10394 = vmatprep.subr.mxu0 0.0
  %v10395 = vand.u32 %v54, 4294901760
  %v10396 = vsub.f32 %v54, %v10395
  %v10397 = vand.u32 %v10396, 4294901760
  %v10398 = vsub.f32 %v10396, %v10397
  %v10399 = vand.u32 %v10398, 4294901760
  %10400 = vmatpush1.msra.mxu0 %v10399
  %10401 = vmatprep.subr.mxu0 0.0
  %10402 = vmatpush1.msra.mxu0 0.0
  %10403 = vmatprep.subr.mxu0 0.0
  %10404 = vmatpush1.msra.mxu0 0.0
  %10405 = vmatprep.subr.mxu0 0.0
  %10406 = vmatpush1.msra.mxu0 0.0
  %10407 = vmatprep.subr.mxu0 0.0
  %10408 = vmatpush1.msra.mxu0 0.0
  %10409 = vmatprep.subr.mxu0 0.0
  %10410 = vmatpush1.msra.mxu0 0.0
  %10411 = vmatprep.subr.mxu0 0.0
  %10412 = vmatpush1.msra.mxu0 0.0
  %10413 = vmatprep.subr.mxu0 0.0
  %10414 = vmatpush1.msra.mxu0 0.0
  %10415 = vmatprep.subr.mxu0 0.0
  %10416 = vmatpush1.msra.mxu0 0.0
  %10417 = vmatprep.subr.mxu0 0.0
  %10418 = vmatpush1.msra.mxu0 0.0
  %10419 = vmatprep.subr.mxu0 0.0
  %10420 = vmatpush1.msra.mxu0 0.0
  %10421 = vmatprep.subr.mxu0 0.0
  %10422 = vmatpush1.msra.mxu0 0.0
  %10423 = vmatprep.subr.mxu0 0.0
  %10424 = vmatpush1.msra.mxu0 0.0
  %10425 = vmatprep.subr.mxu0 0.0
  %10426 = vmatpush1.msra.mxu0 0.0
  %10427 = vmatprep.subr.mxu0 0.0
  %10428 = vmatpush1.msra.mxu0 0.0
  %10429 = vmatprep.subr.mxu0 0.0
  %10430 = vmatpush1.msra.mxu0 0.0
  %10431 = vmatprep.subr.mxu0 0.0
  %10432 = vmatpush1.msra.mxu0 0.0
  %10433 = vmatprep.subr.mxu0 0.0
  %10434 = vmatpush1.msra.mxu0 0.0
  %10435 = vmatprep.subr.mxu0 0.0
  %10436 = vmatpush1.msra.mxu0 0.0
  %10437 = vmatprep.subr.mxu0 0.0
  %10438 = vmatpush1.msra.mxu0 0.0
  %10439 = vmatprep.subr.mxu0 0.0
  %10440 = vmatpush1.msra.mxu0 0.0
  %10441 = vmatprep.subr.mxu0 0.0
  %10442 = vmatpush1.msra.mxu0 0.0
  %10443 = vmatprep.subr.mxu0 0.0
  %10444 = vmatpush1.msra.mxu0 0.0
  %10445 = vmatprep.subr.mxu0 0.0
  %10446 = vmatpush1.msra.mxu0 0.0
  %10447 = vmatprep.subr.mxu0 0.0
  %10448 = vmatpush1.msra.mxu0 0.0
  %10449 = vmatprep.subr.mxu0 0.0
  %10450 = vmatpush1.msra.mxu0 0.0
  %10451 = vmatprep.subr.mxu0 0.0
  %10452 = vmatpush1.msra.mxu0 0.0
  %10453 = vmatprep.subr.mxu0 0.0
  %10454 = vmatpush1.msra.mxu0 0.0
  %10455 = vmatprep.subr.mxu0 0.0
  %10456 = vmatpush1.msra.mxu0 0.0
  %10457 = vmatprep.mubr.f32.mxu0 0.0
  %v10458 = vand.u32 %v10292, 4294901760
  %10459 = vmatmul.mubr.f32.gmra.mrb[0].mxu0 %v10458
  %v10460 = vpop.f32.mrb[0].mxu0
  %v10461 = vadd.f32 %v10370, %v10460
  %v10462 = vpop.f32.mrb[0].mxu0
  %10463 = vdwg.mxu0
  %10464 = vmatprep.subr.mxu0 0.0
  %v10465 = vand.u32 %v51, 4294901760
  %v10466 = vsub.f32 %v51, %v10465
  %10467 = vmatpush1.msra.mxu0 %v10466
  %10468 = vmatprep.subr.mxu0 0.0
  %v10469 = vand.u32 %v52, 4294901760
  %v10470 = vsub.f32 %v52, %v10469
  %10471 = vmatpush1.msra.mxu0 %v10470
  %10472 = vmatprep.subr.mxu0 0.0
  %v10473 = vand.u32 %v53, 4294901760
  %v10474 = vsub.f32 %v53, %v10473
  %10475 = vmatpush1.msra.mxu0 %v10474
  %10476 = vmatprep.subr.mxu0 0.0
  %v10477 = vand.u32 %v54, 4294901760
  %v10478 = vsub.f32 %v54, %v10477
  %10479 = vmatpush1.msra.mxu0 %v10478
  %10480 = vmatprep.subr.mxu0 0.0
  %10481 = vmatpush1.msra.mxu0 0.0
  %10482 = vmatprep.subr.mxu0 0.0
  %10483 = vmatpush1.msra.mxu0 0.0
  %10484 = vmatprep.subr.mxu0 0.0
  %10485 = vmatpush1.msra.mxu0 0.0
  %10486 = vmatprep.subr.mxu0 0.0
  %10487 = vmatpush1.msra.mxu0 0.0
  %10488 = vmatprep.subr.mxu0 0.0
  %10489 = vmatpush1.msra.mxu0 0.0
  %10490 = vmatprep.subr.mxu0 0.0
  %10491 = vmatpush1.msra.mxu0 0.0
  %10492 = vmatprep.subr.mxu0 0.0
  %10493 = vmatpush1.msra.mxu0 0.0
  %10494 = vmatprep.subr.mxu0 0.0
  %10495 = vmatpush1.msra.mxu0 0.0
  %10496 = vmatprep.subr.mxu0 0.0
  %10497 = vmatpush1.msra.mxu0 0.0
  %10498 = vmatprep.subr.mxu0 0.0
  %10499 = vmatpush1.msra.mxu0 0.0
  %10500 = vmatprep.subr.mxu0 0.0
  %10501 = vmatpush1.msra.mxu0 0.0
  %10502 = vmatprep.subr.mxu0 0.0
  %10503 = vmatpush1.msra.mxu0 0.0
  %10504 = vmatprep.subr.mxu0 0.0
  %10505 = vmatpush1.msra.mxu0 0.0
  %10506 = vmatprep.subr.mxu0 0.0
  %10507 = vmatpush1.msra.mxu0 0.0
  %10508 = vmatprep.subr.mxu0 0.0
  %10509 = vmatpush1.msra.mxu0 0.0
  %10510 = vmatprep.subr.mxu0 0.0
  %10511 = vmatpush1.msra.mxu0 0.0
  %10512 = vmatprep.subr.mxu0 0.0
  %10513 = vmatpush1.msra.mxu0 0.0
  %10514 = vmatprep.subr.mxu0 0.0
  %10515 = vmatpush1.msra.mxu0 0.0
  %10516 = vmatprep.subr.mxu0 0.0
  %10517 = vmatpush1.msra.mxu0 0.0
  %10518 = vmatprep.subr.mxu0 0.0
  %10519 = vmatpush1.msra.mxu0 0.0
  %10520 = vmatprep.subr.mxu0 0.0
  %10521 = vmatpush1.msra.mxu0 0.0
  %10522 = vmatprep.subr.mxu0 0.0
  %10523 = vmatpush1.msra.mxu0 0.0
  %10524 = vmatprep.subr.mxu0 0.0
  %10525 = vmatpush1.msra.mxu0 0.0
  %10526 = vmatprep.subr.mxu0 0.0
  %10527 = vmatpush1.msra.mxu0 0.0
  %10528 = vmatprep.subr.mxu0 0.0
  %10529 = vmatpush1.msra.mxu0 0.0
  %10530 = vmatprep.subr.mxu0 0.0
  %10531 = vmatpush1.msra.mxu0 0.0
  %10532 = vmatprep.subr.mxu0 0.0
  %10533 = vmatpush1.msra.mxu0 0.0
  %10534 = vmatprep.subr.mxu0 0.0
  %10535 = vmatpush1.msra.mxu0 0.0
  %10536 = vmatprep.mubr.f32.mxu0 0.0
  %v10537 = vand.u32 %v10292, 4294901760
  %v10538 = vsub.f32 %v10292, %v10537
  %10539 = vmatmul.mubr.f32.gmra.mrb[0].mxu0 %v10538
  %v10540 = vpop.f32.mrb[0].mxu0
  %v10541 = vadd.f32 %v10461, %v10540
  %v10542 = vpop.f32.mrb[0].mxu0
  %10543 = vdwg.mxu0
  %10544 = vmatprep.subr.mxu0 0.0
  %v10545 = vand.u32 %v51, 4294901760
  %10546 = vmatpush1.msra.mxu0 %v10545
  %10547 = vmatprep.subr.mxu0 0.0
  %v10548 = vand.u32 %v52, 4294901760
  %10549 = vmatpush1.msra.mxu0 %v10548
  %10550 = vmatprep.subr.mxu0 0.0
  %v10551 = vand.u32 %v53, 4294901760
  %10552 = vmatpush1.msra.mxu0 %v10551
  %10553 = vmatprep.subr.mxu0 0.0
  %v10554 = vand.u32 %v54, 4294901760
  %10555 = vmatpush1.msra.mxu0 %v10554
  %10556 = vmatprep.subr.mxu0 0.0
  %10557 = vmatpush1.msra.mxu0 0.0
  %10558 = vmatprep.subr.mxu0 0.0
  %10559 = vmatpush1.msra.mxu0 0.0
  %10560 = vmatprep.subr.mxu0 0.0
  %10561 = vmatpush1.msra.mxu0 0.0
  %10562 = vmatprep.subr.mxu0 0.0
  %10563 = vmatpush1.msra.mxu0 0.0
  %10564 = vmatprep.subr.mxu0 0.0
  %10565 = vmatpush1.msra.mxu0 0.0
  %10566 = vmatprep.subr.mxu0 0.0
  %10567 = vmatpush1.msra.mxu0 0.0
  %10568 = vmatprep.subr.mxu0 0.0
  %10569 = vmatpush1.msra.mxu0 0.0
  %10570 = vmatprep.subr.mxu0 0.0
  %10571 = vmatpush1.msra.mxu0 0.0
  %10572 = vmatprep.subr.mxu0 0.0
  %10573 = vmatpush1.msra.mxu0 0.0
  %10574 = vmatprep.subr.mxu0 0.0
  %10575 = vmatpush1.msra.mxu0 0.0
  %10576 = vmatprep.subr.mxu0 0.0
  %10577 = vmatpush1.msra.mxu0 0.0
  %10578 = vmatprep.subr.mxu0 0.0
  %10579 = vmatpush1.msra.mxu0 0.0
  %10580 = vmatprep.subr.mxu0 0.0
  %10581 = vmatpush1.msra.mxu0 0.0
  %10582 = vmatprep.subr.mxu0 0.0
  %10583 = vmatpush1.msra.mxu0 0.0
  %10584 = vmatprep.subr.mxu0 0.0
  %10585 = vmatpush1.msra.mxu0 0.0
  %10586 = vmatprep.subr.mxu0 0.0
  %10587 = vmatpush1.msra.mxu0 0.0
  %10588 = vmatprep.subr.mxu0 0.0
  %10589 = vmatpush1.msra.mxu0 0.0
  %10590 = vmatprep.subr.mxu0 0.0
  %10591 = vmatpush1.msra.mxu0 0.0
  %10592 = vmatprep.subr.mxu0 0.0
  %10593 = vmatpush1.msra.mxu0 0.0
  %10594 = vmatprep.subr.mxu0 0.0
  %10595 = vmatpush1.msra.mxu0 0.0
  %10596 = vmatprep.subr.mxu0 0.0
  %10597 = vmatpush1.msra.mxu0 0.0
  %10598 = vmatprep.subr.mxu0 0.0
  %10599 = vmatpush1.msra.mxu0 0.0
  %10600 = vmatprep.subr.mxu0 0.0
  %10601 = vmatpush1.msra.mxu0 0.0
  %10602 = vmatprep.subr.mxu0 0.0
  %10603 = vmatpush1.msra.mxu0 0.0
  %10604 = vmatprep.subr.mxu0 0.0
  %10605 = vmatpush1.msra.mxu0 0.0
  %10606 = vmatprep.subr.mxu0 0.0
  %10607 = vmatpush1.msra.mxu0 0.0
  %10608 = vmatprep.subr.mxu0 0.0
  %10609 = vmatpush1.msra.mxu0 0.0
  %10610 = vmatprep.subr.mxu0 0.0
  %10611 = vmatpush1.msra.mxu0 0.0
  %10612 = vmatprep.mubr.f32.mxu0 0.0
  %v10613 = vand.u32 %v10292, 4294901760
  %v10614 = vsub.f32 %v10292, %v10613
  %v10615 = vand.u32 %v10614, 4294901760
  %10616 = vmatmul.mubr.f32.gmra.mrb[0].mxu0 %v10615
  %v10617 = vpop.f32.mrb[0].mxu0
  %v10618 = vadd.f32 %v10541, %v10617
  %v10619 = vpop.f32.mrb[0].mxu0
  %10620 = vdwg.mxu0
  %10621 = vmatprep.subr.mxu0 0.0
  %v10622 = vand.u32 %v51, 4294901760
  %v10623 = vsub.f32 %v51, %v10622
  %v10624 = vand.u32 %v10623, 4294901760
  %10625 = vmatpush1.msra.mxu0 %v10624
  %10626 = vmatprep.subr.mxu0 0.0
  %v10627 = vand.u32 %v52, 4294901760
  %v10628 = vsub.f32 %v52, %v10627
  %v10629 = vand.u32 %v10628, 4294901760
  %10630 = vmatpush1.msra.mxu0 %v10629
  %10631 = vmatprep.subr.mxu0 0.0
  %v10632 = vand.u32 %v53, 4294901760
  %v10633 = vsub.f32 %v53, %v10632
  %v10634 = vand.u32 %v10633, 4294901760
  %10635 = vmatpush1.msra.mxu0 %v10634
  %10636 = vmatprep.subr.mxu0 0.0
  %v10637 = vand.u32 %v54, 4294901760
  %v10638 = vsub.f32 %v54, %v10637
  %v10639 = vand.u32 %v10638, 4294901760
  %10640 = vmatpush1.msra.mxu0 %v10639
  %10641 = vmatprep.subr.mxu0 0.0
  %10642 = vmatpush1.msra.mxu0 0.0
  %10643 = vmatprep.subr.mxu0 0.0
  %10644 = vmatpush1.msra.mxu0 0.0
  %10645 = vmatprep.subr.mxu0 0.0
  %10646 = vmatpush1.msra.mxu0 0.0
  %10647 = vmatprep.subr.mxu0 0.0
  %10648 = vmatpush1.msra.mxu0 0.0
  %10649 = vmatprep.subr.mxu0 0.0
  %10650 = vmatpush1.msra.mxu0 0.0
  %10651 = vmatprep.subr.mxu0 0.0
  %10652 = vmatpush1.msra.mxu0 0.0
  %10653 = vmatprep.subr.mxu0 0.0
  %10654 = vmatpush1.msra.mxu0 0.0
  %10655 = vmatprep.subr.mxu0 0.0
  %10656 = vmatpush1.msra.mxu0 0.0
  %10657 = vmatprep.subr.mxu0 0.0
  %10658 = vmatpush1.msra.mxu0 0.0
  %10659 = vmatprep.subr.mxu0 0.0
  %10660 = vmatpush1.msra.mxu0 0.0
  %10661 = vmatprep.subr.mxu0 0.0
  %10662 = vmatpush1.msra.mxu0 0.0
  %10663 = vmatprep.subr.mxu0 0.0
  %10664 = vmatpush1.msra.mxu0 0.0
  %10665 = vmatprep.subr.mxu0 0.0
  %10666 = vmatpush1.msra.mxu0 0.0
  %10667 = vmatprep.subr.mxu0 0.0
  %10668 = vmatpush1.msra.mxu0 0.0
  %10669 = vmatprep.subr.mxu0 0.0
  %10670 = vmatpush1.msra.mxu0 0.0
  %10671 = vmatprep.subr.mxu0 0.0
  %10672 = vmatpush1.msra.mxu0 0.0
  %10673 = vmatprep.subr.mxu0 0.0
  %10674 = vmatpush1.msra.mxu0 0.0
  %10675 = vmatprep.subr.mxu0 0.0
  %10676 = vmatpush1.msra.mxu0 0.0
  %10677 = vmatprep.subr.mxu0 0.0
  %10678 = vmatpush1.msra.mxu0 0.0
  %10679 = vmatprep.subr.mxu0 0.0
  %10680 = vmatpush1.msra.mxu0 0.0
  %10681 = vmatprep.subr.mxu0 0.0
  %10682 = vmatpush1.msra.mxu0 0.0
  %10683 = vmatprep.subr.mxu0 0.0
  %10684 = vmatpush1.msra.mxu0 0.0
  %10685 = vmatprep.subr.mxu0 0.0
  %10686 = vmatpush1.msra.mxu0 0.0
  %10687 = vmatprep.subr.mxu0 0.0
  %10688 = vmatpush1.msra.mxu0 0.0
  %10689 = vmatprep.subr.mxu0 0.0
  %10690 = vmatpush1.msra.mxu0 0.0
  %10691 = vmatprep.subr.mxu0 0.0
  %10692 = vmatpush1.msra.mxu0 0.0
  %10693 = vmatprep.subr.mxu0 0.0
  %10694 = vmatpush1.msra.mxu0 0.0
  %10695 = vmatprep.subr.mxu0 0.0
  %10696 = vmatpush1.msra.mxu0 0.0
  %10697 = vmatprep.mubr.f32.mxu0 0.0
  %v10698 = vand.u32 %v10292, 4294901760
  %10699 = vmatmul.mubr.f32.gmra.mrb[0].mxu0 %v10698
  %v10700 = vpop.f32.mrb[0].mxu0
  %v10701 = vadd.f32 %v10618, %v10700
  %v10702 = vpop.f32.mrb[0].mxu0
  %10703 = vdwg.mxu0
  %10704 = vmatprep.subr.mxu0 0.0
  %v10705 = vand.u32 %v51, 4294901760
  %10706 = vmatpush1.msra.mxu0 %v10705
  %10707 = vmatprep.subr.mxu0 0.0
  %v10708 = vand.u32 %v52, 4294901760
  %10709 = vmatpush1.msra.mxu0 %v10708
  %10710 = vmatprep.subr.mxu0 0.0
  %v10711 = vand.u32 %v53, 4294901760
  %10712 = vmatpush1.msra.mxu0 %v10711
  %10713 = vmatprep.subr.mxu0 0.0
  %v10714 = vand.u32 %v54, 4294901760
  %10715 = vmatpush1.msra.mxu0 %v10714
  %10716 = vmatprep.subr.mxu0 0.0
  %10717 = vmatpush1.msra.mxu0 0.0
  %10718 = vmatprep.subr.mxu0 0.0
  %10719 = vmatpush1.msra.mxu0 0.0
  %10720 = vmatprep.subr.mxu0 0.0
  %10721 = vmatpush1.msra.mxu0 0.0
  %10722 = vmatprep.subr.mxu0 0.0
  %10723 = vmatpush1.msra.mxu0 0.0
  %10724 = vmatprep.subr.mxu0 0.0
  %10725 = vmatpush1.msra.mxu0 0.0
  %10726 = vmatprep.subr.mxu0 0.0
  %10727 = vmatpush1.msra.mxu0 0.0
  %10728 = vmatprep.subr.mxu0 0.0
  %10729 = vmatpush1.msra.mxu0 0.0
  %10730 = vmatprep.subr.mxu0 0.0
  %10731 = vmatpush1.msra.mxu0 0.0
  %10732 = vmatprep.subr.mxu0 0.0
  %10733 = vmatpush1.msra.mxu0 0.0
  %10734 = vmatprep.subr.mxu0 0.0
  %10735 = vmatpush1.msra.mxu0 0.0
  %10736 = vmatprep.subr.mxu0 0.0
  %10737 = vmatpush1.msra.mxu0 0.0
  %10738 = vmatprep.subr.mxu0 0.0
  %10739 = vmatpush1.msra.mxu0 0.0
  %10740 = vmatprep.subr.mxu0 0.0
  %10741 = vmatpush1.msra.mxu0 0.0
  %10742 = vmatprep.subr.mxu0 0.0
  %10743 = vmatpush1.msra.mxu0 0.0
  %10744 = vmatprep.subr.mxu0 0.0
  %10745 = vmatpush1.msra.mxu0 0.0
  %10746 = vmatprep.subr.mxu0 0.0
  %10747 = vmatpush1.msra.mxu0 0.0
  %10748 = vmatprep.subr.mxu0 0.0
  %10749 = vmatpush1.msra.mxu0 0.0
  %10750 = vmatprep.subr.mxu0 0.0
  %10751 = vmatpush1.msra.mxu0 0.0
  %10752 = vmatprep.subr.mxu0 0.0
  %10753 = vmatpush1.msra.mxu0 0.0
  %10754 = vmatprep.subr.mxu0 0.0
  %10755 = vmatpush1.msra.mxu0 0.0
  %10756 = vmatprep.subr.mxu0 0.0
  %10757 = vmatpush1.msra.mxu0 0.0
  %10758 = vmatprep.subr.mxu0 0.0
  %10759 = vmatpush1.msra.mxu0 0.0
  %10760 = vmatprep.subr.mxu0 0.0
  %10761 = vmatpush1.msra.mxu0 0.0
  %10762 = vmatprep.subr.mxu0 0.0
  %10763 = vmatpush1.msra.mxu0 0.0
  %10764 = vmatprep.subr.mxu0 0.0
  %10765 = vmatpush1.msra.mxu0 0.0
  %10766 = vmatprep.subr.mxu0 0.0
  %10767 = vmatpush1.msra.mxu0 0.0
  %10768 = vmatprep.subr.mxu0 0.0
  %10769 = vmatpush1.msra.mxu0 0.0
  %10770 = vmatprep.subr.mxu0 0.0
  %10771 = vmatpush1.msra.mxu0 0.0
  %10772 = vmatprep.mubr.f32.mxu0 0.0
  %v10773 = vand.u32 %v10292, 4294901760
  %10774 = vmatmul.mubr.f32.gmra.mrb[0].mxu0 %v10773
  %v10775 = vpop.f32.mrb[0].mxu0
  %v10776 = vadd.f32 %v10701, %v10775
  %v10777 = vpop.f32.mrb[0].mxu0
  %10778 = vdwg.mxu0
  %v10779 = vadd.f32 %v10286, %v10776
  %v10780 = vmul.f32 %v10779, %v40
  %v10781 = vxor.u32 %v10780, 2147483648
  %v10782 = vmul.f32 %v10781, 1.442695
  %v10783 = vpow.pop %v10782
  %v10784 = vadd.f32 %v10783, 1.0
  %v10785 = vrcp.pop %v10784
  %v10786 = vmul.f32 1.0, %v10785
  %v10787 = vmul.f32 %v10786, 2.0
  %v10788 = vsub.f32 %v10787, 1.0
  %v10789 = vsel %vm39, %v10788, %v10786
  %v10790 = vmul.f32 %v10789, %v9272
  %10792 = vrot.lane.b32.xlu0 %v10789, 64
  %v10793 = vpop.permute.xlu0 %10792
  %v10795 = vmul.f32 %v10789, %v10793
  %10797 = vrot.lane.b32.xlu0 %v10795, 32
  %v10798 = vpop.permute.xlu0 %10797
  %v10800 = vadd.f32 %v10790, %v10798
  %v10801 = vtanh.pop %v10800
  %10803 = vrot.lane.b32.xlu0 %v10801, 64
  %v10804 = vpop.permute.xlu0 %10803
  %v10806 = vmul.f32 %v10789, %v10804
  %10807 = vmatprep.subr.mxu0 0.0
  %v10808 = vand.u32 %v47, 4294901760
  %10809 = vmatpush1.msra.mxu0 %v10808
  %10810 = vmatprep.subr.mxu0 0.0
  %v10811 = vand.u32 %v48, 4294901760
  %10812 = vmatpush1.msra.mxu0 %v10811
  %10813 = vmatprep.subr.mxu0 0.0
  %v10814 = vand.u32 %v49, 4294901760
  %10815 = vmatpush1.msra.mxu0 %v10814
  %10816 = vmatprep.subr.mxu0 0.0
  %v10817 = vand.u32 %v50, 4294901760
  %10818 = vmatpush1.msra.mxu0 %v10817
  %10819 = vmatprep.subr.mxu0 0.0
  %10820 = vmatpush1.msra.mxu0 0.0
  %10821 = vmatprep.subr.mxu0 0.0
  %10822 = vmatpush1.msra.mxu0 0.0
  %10823 = vmatprep.subr.mxu0 0.0
  %10824 = vmatpush1.msra.mxu0 0.0
  %10825 = vmatprep.subr.mxu0 0.0
  %10826 = vmatpush1.msra.mxu0 0.0
  %10827 = vmatprep.subr.mxu0 0.0
  %10828 = vmatpush1.msra.mxu0 0.0
  %10829 = vmatprep.subr.mxu0 0.0
  %10830 = vmatpush1.msra.mxu0 0.0
  %10831 = vmatprep.subr.mxu0 0.0
  %10832 = vmatpush1.msra.mxu0 0.0
  %10833 = vmatprep.subr.mxu0 0.0
  %10834 = vmatpush1.msra.mxu0 0.0
  %10835 = vmatprep.subr.mxu0 0.0
  %10836 = vmatpush1.msra.mxu0 0.0
  %10837 = vmatprep.subr.mxu0 0.0
  %10838 = vmatpush1.msra.mxu0 0.0
  %10839 = vmatprep.subr.mxu0 0.0
  %10840 = vmatpush1.msra.mxu0 0.0
  %10841 = vmatprep.subr.mxu0 0.0
  %10842 = vmatpush1.msra.mxu0 0.0
  %10843 = vmatprep.subr.mxu0 0.0
  %10844 = vmatpush1.msra.mxu0 0.0
  %10845 = vmatprep.subr.mxu0 0.0
  %10846 = vmatpush1.msra.mxu0 0.0
  %10847 = vmatprep.subr.mxu0 0.0
  %10848 = vmatpush1.msra.mxu0 0.0
  %10849 = vmatprep.subr.mxu0 0.0
  %10850 = vmatpush1.msra.mxu0 0.0
  %10851 = vmatprep.subr.mxu0 0.0
  %10852 = vmatpush1.msra.mxu0 0.0
  %10853 = vmatprep.subr.mxu0 0.0
  %10854 = vmatpush1.msra.mxu0 0.0
  %10855 = vmatprep.subr.mxu0 0.0
  %10856 = vmatpush1.msra.mxu0 0.0
  %10857 = vmatprep.subr.mxu0 0.0
  %10858 = vmatpush1.msra.mxu0 0.0
  %10859 = vmatprep.subr.mxu0 0.0
  %10860 = vmatpush1.msra.mxu0 0.0
  %10861 = vmatprep.subr.mxu0 0.0
  %10862 = vmatpush1.msra.mxu0 0.0
  %10863 = vmatprep.subr.mxu0 0.0
  %10864 = vmatpush1.msra.mxu0 0.0
  %10865 = vmatprep.subr.mxu0 0.0
  %10866 = vmatpush1.msra.mxu0 0.0
  %10867 = vmatprep.subr.mxu0 0.0
  %10868 = vmatpush1.msra.mxu0 0.0
  %10869 = vmatprep.subr.mxu0 0.0
  %10870 = vmatpush1.msra.mxu0 0.0
  %10871 = vmatprep.subr.mxu0 0.0
  %10872 = vmatpush1.msra.mxu0 0.0
  %10873 = vmatprep.subr.mxu0 0.0
  %10874 = vmatpush1.msra.mxu0 0.0
  %10875 = vmatprep.mubr.f32.mxu0 0.0
  %v10876 = vand.u32 %v9802, 4294901760
  %v10877 = vsub.f32 %v9802, %v10876
  %v10878 = vand.u32 %v10877, 4294901760
  %v10879 = vsub.f32 %v10877, %v10878
  %v10880 = vand.u32 %v10879, 4294901760
  %10881 = vmatmul.mubr.f32.gmra.mrb[0].mxu0 %v10880
  %v10882 = vpop.f32.mrb[0].mxu0
  %v10883 = vadd.f32 0.0, %v10882
  %v10884 = vpop.f32.mrb[0].mxu0
  %10885 = vdwg.mxu0
  %10886 = vmatprep.subr.mxu0 0.0
  %v10887 = vand.u32 %v47, 4294901760
  %v10888 = vsub.f32 %v47, %v10887
  %v10889 = vand.u32 %v10888, 4294901760
  %v10890 = vsub.f32 %v10888, %v10889
  %v10891 = vand.u32 %v10890, 4294901760
  %10892 = vmatpush1.msra.mxu0 %v10891
  %10893 = vmatprep.subr.mxu0 0.0
  %v10894 = vand.u32 %v48, 4294901760
  %v10895 = vsub.f32 %v48, %v10894
  %v10896 = vand.u32 %v10895, 4294901760
  %v10897 = vsub.f32 %v10895, %v10896
  %v10898 = vand.u32 %v10897, 4294901760
  %10899 = vmatpush1.msra.mxu0 %v10898
  %10900 = vmatprep.subr.mxu0 0.0
  %v10901 = vand.u32 %v49, 4294901760
  %v10902 = vsub.f32 %v49, %v10901
  %v10903 = vand.u32 %v10902, 4294901760
  %v10904 = vsub.f32 %v10902, %v10903
  %v10905 = vand.u32 %v10904, 4294901760
  %10906 = vmatpush1.msra.mxu0 %v10905
  %10907 = vmatprep.subr.mxu0 0.0
  %v10908 = vand.u32 %v50, 4294901760
  %v10909 = vsub.f32 %v50, %v10908
  %v10910 = vand.u32 %v10909, 4294901760
  %v10911 = vsub.f32 %v10909, %v10910
  %v10912 = vand.u32 %v10911, 4294901760
  %10913 = vmatpush1.msra.mxu0 %v10912
  %10914 = vmatprep.subr.mxu0 0.0
  %10915 = vmatpush1.msra.mxu0 0.0
  %10916 = vmatprep.subr.mxu0 0.0
  %10917 = vmatpush1.msra.mxu0 0.0
  %10918 = vmatprep.subr.mxu0 0.0
  %10919 = vmatpush1.msra.mxu0 0.0
  %10920 = vmatprep.subr.mxu0 0.0
  %10921 = vmatpush1.msra.mxu0 0.0
  %10922 = vmatprep.subr.mxu0 0.0
  %10923 = vmatpush1.msra.mxu0 0.0
  %10924 = vmatprep.subr.mxu0 0.0
  %10925 = vmatpush1.msra.mxu0 0.0
  %10926 = vmatprep.subr.mxu0 0.0
  %10927 = vmatpush1.msra.mxu0 0.0
  %10928 = vmatprep.subr.mxu0 0.0
  %10929 = vmatpush1.msra.mxu0 0.0
  %10930 = vmatprep.subr.mxu0 0.0
  %10931 = vmatpush1.msra.mxu0 0.0
  %10932 = vmatprep.subr.mxu0 0.0
  %10933 = vmatpush1.msra.mxu0 0.0
  %10934 = vmatprep.subr.mxu0 0.0
  %10935 = vmatpush1.msra.mxu0 0.0
  %10936 = vmatprep.subr.mxu0 0.0
  %10937 = vmatpush1.msra.mxu0 0.0
  %10938 = vmatprep.subr.mxu0 0.0
  %10939 = vmatpush1.msra.mxu0 0.0
  %10940 = vmatprep.subr.mxu0 0.0
  %10941 = vmatpush1.msra.mxu0 0.0
  %10942 = vmatprep.subr.mxu0 0.0
  %10943 = vmatpush1.msra.mxu0 0.0
  %10944 = vmatprep.subr.mxu0 0.0
  %10945 = vmatpush1.msra.mxu0 0.0
  %10946 = vmatprep.subr.mxu0 0.0
  %10947 = vmatpush1.msra.mxu0 0.0
  %10948 = vmatprep.subr.mxu0 0.0
  %10949 = vmatpush1.msra.mxu0 0.0
  %10950 = vmatprep.subr.mxu0 0.0
  %10951 = vmatpush1.msra.mxu0 0.0
  %10952 = vmatprep.subr.mxu0 0.0
  %10953 = vmatpush1.msra.mxu0 0.0
  %10954 = vmatprep.subr.mxu0 0.0
  %10955 = vmatpush1.msra.mxu0 0.0
  %10956 = vmatprep.subr.mxu0 0.0
  %10957 = vmatpush1.msra.mxu0 0.0
  %10958 = vmatprep.subr.mxu0 0.0
  %10959 = vmatpush1.msra.mxu0 0.0
  %10960 = vmatprep.subr.mxu0 0.0
  %10961 = vmatpush1.msra.mxu0 0.0
  %10962 = vmatprep.subr.mxu0 0.0
  %10963 = vmatpush1.msra.mxu0 0.0
  %10964 = vmatprep.subr.mxu0 0.0
  %10965 = vmatpush1.msra.mxu0 0.0
  %10966 = vmatprep.subr.mxu0 0.0
  %10967 = vmatpush1.msra.mxu0 0.0
  %10968 = vmatprep.subr.mxu0 0.0
  %10969 = vmatpush1.msra.mxu0 0.0
  %10970 = vmatprep.mubr.f32.mxu0 0.0
  %v10971 = vand.u32 %v9802, 4294901760
  %10972 = vmatmul.mubr.f32.gmra.mrb[0].mxu0 %v10971
  %v10973 = vpop.f32.mrb[0].mxu0
  %v10974 = vadd.f32 %v10883, %v10973
  %v10975 = vpop.f32.mrb[0].mxu0
  %10976 = vdwg.mxu0
  %10977 = vmatprep.subr.mxu0 0.0
  %v10978 = vand.u32 %v47, 4294901760
  %v10979 = vsub.f32 %v47, %v10978
  %10980 = vmatpush1.msra.mxu0 %v10979
  %10981 = vmatprep.subr.mxu0 0.0
  %v10982 = vand.u32 %v48, 4294901760
  %v10983 = vsub.f32 %v48, %v10982
  %10984 = vmatpush1.msra.mxu0 %v10983
  %10985 = vmatprep.subr.mxu0 0.0
  %v10986 = vand.u32 %v49, 4294901760
  %v10987 = vsub.f32 %v49, %v10986
  %10988 = vmatpush1.msra.mxu0 %v10987
  %10989 = vmatprep.subr.mxu0 0.0
  %v10990 = vand.u32 %v50, 4294901760
  %v10991 = vsub.f32 %v50, %v10990
  %10992 = vmatpush1.msra.mxu0 %v10991
  %10993 = vmatprep.subr.mxu0 0.0
  %10994 = vmatpush1.msra.mxu0 0.0
  %10995 = vmatprep.subr.mxu0 0.0
  %10996 = vmatpush1.msra.mxu0 0.0
  %10997 = vmatprep.subr.mxu0 0.0
  %10998 = vmatpush1.msra.mxu0 0.0
  %10999 = vmatprep.subr.mxu0 0.0
  %11000 = vmatpush1.msra.mxu0 0.0
  %11001 = vmatprep.subr.mxu0 0.0
  %11002 = vmatpush1.msra.mxu0 0.0
  %11003 = vmatprep.subr.mxu0 0.0
  %11004 = vmatpush1.msra.mxu0 0.0
  %11005 = vmatprep.subr.mxu0 0.0
  %11006 = vmatpush1.msra.mxu0 0.0
  %11007 = vmatprep.subr.mxu0 0.0
  %11008 = vmatpush1.msra.mxu0 0.0
  %11009 = vmatprep.subr.mxu0 0.0
  %11010 = vmatpush1.msra.mxu0 0.0
  %11011 = vmatprep.subr.mxu0 0.0
  %11012 = vmatpush1.msra.mxu0 0.0
  %11013 = vmatprep.subr.mxu0 0.0
  %11014 = vmatpush1.msra.mxu0 0.0
  %11015 = vmatprep.subr.mxu0 0.0
  %11016 = vmatpush1.msra.mxu0 0.0
  %11017 = vmatprep.subr.mxu0 0.0
  %11018 = vmatpush1.msra.mxu0 0.0
  %11019 = vmatprep.subr.mxu0 0.0
  %11020 = vmatpush1.msra.mxu0 0.0
  %11021 = vmatprep.subr.mxu0 0.0
  %11022 = vmatpush1.msra.mxu0 0.0
  %11023 = vmatprep.subr.mxu0 0.0
  %11024 = vmatpush1.msra.mxu0 0.0
  %11025 = vmatprep.subr.mxu0 0.0
  %11026 = vmatpush1.msra.mxu0 0.0
  %11027 = vmatprep.subr.mxu0 0.0
  %11028 = vmatpush1.msra.mxu0 0.0
  %11029 = vmatprep.subr.mxu0 0.0
  %11030 = vmatpush1.msra.mxu0 0.0
  %11031 = vmatprep.subr.mxu0 0.0
  %11032 = vmatpush1.msra.mxu0 0.0
  %11033 = vmatprep.subr.mxu0 0.0
  %11034 = vmatpush1.msra.mxu0 0.0
  %11035 = vmatprep.subr.mxu0 0.0
  %11036 = vmatpush1.msra.mxu0 0.0
  %11037 = vmatprep.subr.mxu0 0.0
  %11038 = vmatpush1.msra.mxu0 0.0
  %11039 = vmatprep.subr.mxu0 0.0
  %11040 = vmatpush1.msra.mxu0 0.0
  %11041 = vmatprep.subr.mxu0 0.0
  %11042 = vmatpush1.msra.mxu0 0.0
  %11043 = vmatprep.subr.mxu0 0.0
  %11044 = vmatpush1.msra.mxu0 0.0
  %11045 = vmatprep.subr.mxu0 0.0
  %11046 = vmatpush1.msra.mxu0 0.0
  %11047 = vmatprep.subr.mxu0 0.0
  %11048 = vmatpush1.msra.mxu0 0.0
  %11049 = vmatprep.mubr.f32.mxu0 0.0
  %v11050 = vand.u32 %v9802, 4294901760
  %v11051 = vsub.f32 %v9802, %v11050
  %11052 = vmatmul.mubr.f32.gmra.mrb[0].mxu0 %v11051
  %v11053 = vpop.f32.mrb[0].mxu0
  %v11054 = vadd.f32 %v10974, %v11053
  %v11055 = vpop.f32.mrb[0].mxu0
  %11056 = vdwg.mxu0
  %11057 = vmatprep.subr.mxu0 0.0
  %v11058 = vand.u32 %v47, 4294901760
  %11059 = vmatpush1.msra.mxu0 %v11058
  %11060 = vmatprep.subr.mxu0 0.0
  %v11061 = vand.u32 %v48, 4294901760
  %11062 = vmatpush1.msra.mxu0 %v11061
  %11063 = vmatprep.subr.mxu0 0.0
  %v11064 = vand.u32 %v49, 4294901760
  %11065 = vmatpush1.msra.mxu0 %v11064
  %11066 = vmatprep.subr.mxu0 0.0
  %v11067 = vand.u32 %v50, 4294901760
  %11068 = vmatpush1.msra.mxu0 %v11067
  %11069 = vmatprep.subr.mxu0 0.0
  %11070 = vmatpush1.msra.mxu0 0.0
  %11071 = vmatprep.subr.mxu0 0.0
  %11072 = vmatpush1.msra.mxu0 0.0
  %11073 = vmatprep.subr.mxu0 0.0
  %11074 = vmatpush1.msra.mxu0 0.0
  %11075 = vmatprep.subr.mxu0 0.0
  %11076 = vmatpush1.msra.mxu0 0.0
  %11077 = vmatprep.subr.mxu0 0.0
  %11078 = vmatpush1.msra.mxu0 0.0
  %11079 = vmatprep.subr.mxu0 0.0
  %11080 = vmatpush1.msra.mxu0 0.0
  %11081 = vmatprep.subr.mxu0 0.0
  %11082 = vmatpush1.msra.mxu0 0.0
  %11083 = vmatprep.subr.mxu0 0.0
  %11084 = vmatpush1.msra.mxu0 0.0
  %11085 = vmatprep.subr.mxu0 0.0
  %11086 = vmatpush1.msra.mxu0 0.0
  %11087 = vmatprep.subr.mxu0 0.0
  %11088 = vmatpush1.msra.mxu0 0.0
  %11089 = vmatprep.subr.mxu0 0.0
  %11090 = vmatpush1.msra.mxu0 0.0
  %11091 = vmatprep.subr.mxu0 0.0
  %11092 = vmatpush1.msra.mxu0 0.0
  %11093 = vmatprep.subr.mxu0 0.0
  %11094 = vmatpush1.msra.mxu0 0.0
  %11095 = vmatprep.subr.mxu0 0.0
  %11096 = vmatpush1.msra.mxu0 0.0
  %11097 = vmatprep.subr.mxu0 0.0
  %11098 = vmatpush1.msra.mxu0 0.0
  %11099 = vmatprep.subr.mxu0 0.0
  %11100 = vmatpush1.msra.mxu0 0.0
  %11101 = vmatprep.subr.mxu0 0.0
  %11102 = vmatpush1.msra.mxu0 0.0
  %11103 = vmatprep.subr.mxu0 0.0
  %11104 = vmatpush1.msra.mxu0 0.0
  %11105 = vmatprep.subr.mxu0 0.0
  %11106 = vmatpush1.msra.mxu0 0.0
  %11107 = vmatprep.subr.mxu0 0.0
  %11108 = vmatpush1.msra.mxu0 0.0
  %11109 = vmatprep.subr.mxu0 0.0
  %11110 = vmatpush1.msra.mxu0 0.0
  %11111 = vmatprep.subr.mxu0 0.0
  %11112 = vmatpush1.msra.mxu0 0.0
  %11113 = vmatprep.subr.mxu0 0.0
  %11114 = vmatpush1.msra.mxu0 0.0
  %11115 = vmatprep.subr.mxu0 0.0
  %11116 = vmatpush1.msra.mxu0 0.0
  %11117 = vmatprep.subr.mxu0 0.0
  %11118 = vmatpush1.msra.mxu0 0.0
  %11119 = vmatprep.subr.mxu0 0.0
  %11120 = vmatpush1.msra.mxu0 0.0
  %11121 = vmatprep.subr.mxu0 0.0
  %11122 = vmatpush1.msra.mxu0 0.0
  %11123 = vmatprep.subr.mxu0 0.0
  %11124 = vmatpush1.msra.mxu0 0.0
  %11125 = vmatprep.mubr.f32.mxu0 0.0
  %v11126 = vand.u32 %v9802, 4294901760
  %v11127 = vsub.f32 %v9802, %v11126
  %v11128 = vand.u32 %v11127, 4294901760
  %11129 = vmatmul.mubr.f32.gmra.mrb[0].mxu0 %v11128
  %v11130 = vpop.f32.mrb[0].mxu0
  %v11131 = vadd.f32 %v11054, %v11130
  %v11132 = vpop.f32.mrb[0].mxu0
  %11133 = vdwg.mxu0
  %11134 = vmatprep.subr.mxu0 0.0
  %v11135 = vand.u32 %v47, 4294901760
  %v11136 = vsub.f32 %v47, %v11135
  %v11137 = vand.u32 %v11136, 4294901760
  %11138 = vmatpush1.msra.mxu0 %v11137
  %11139 = vmatprep.subr.mxu0 0.0
  %v11140 = vand.u32 %v48, 4294901760
  %v11141 = vsub.f32 %v48, %v11140
  %v11142 = vand.u32 %v11141, 4294901760
  %11143 = vmatpush1.msra.mxu0 %v11142
  %11144 = vmatprep.subr.mxu0 0.0
  %v11145 = vand.u32 %v49, 4294901760
  %v11146 = vsub.f32 %v49, %v11145
  %v11147 = vand.u32 %v11146, 4294901760
  %11148 = vmatpush1.msra.mxu0 %v11147
  %11149 = vmatprep.subr.mxu0 0.0
  %v11150 = vand.u32 %v50, 4294901760
  %v11151 = vsub.f32 %v50, %v11150
  %v11152 = vand.u32 %v11151, 4294901760
  %11153 = vmatpush1.msra.mxu0 %v11152
  %11154 = vmatprep.subr.mxu0 0.0
  %11155 = vmatpush1.msra.mxu0 0.0
  %11156 = vmatprep.subr.mxu0 0.0
  %11157 = vmatpush1.msra.mxu0 0.0
  %11158 = vmatprep.subr.mxu0 0.0
  %11159 = vmatpush1.msra.mxu0 0.0
  %11160 = vmatprep.subr.mxu0 0.0
  %11161 = vmatpush1.msra.mxu0 0.0
  %11162 = vmatprep.subr.mxu0 0.0
  %11163 = vmatpush1.msra.mxu0 0.0
  %11164 = vmatprep.subr.mxu0 0.0
  %11165 = vmatpush1.msra.mxu0 0.0
  %11166 = vmatprep.subr.mxu0 0.0
  %11167 = vmatpush1.msra.mxu0 0.0
  %11168 = vmatprep.subr.mxu0 0.0
  %11169 = vmatpush1.msra.mxu0 0.0
  %11170 = vmatprep.subr.mxu0 0.0
  %11171 = vmatpush1.msra.mxu0 0.0
  %11172 = vmatprep.subr.mxu0 0.0
  %11173 = vmatpush1.msra.mxu0 0.0
  %11174 = vmatprep.subr.mxu0 0.0
  %11175 = vmatpush1.msra.mxu0 0.0
  %11176 = vmatprep.subr.mxu0 0.0
  %11177 = vmatpush1.msra.mxu0 0.0
  %11178 = vmatprep.subr.mxu0 0.0
  %11179 = vmatpush1.msra.mxu0 0.0
  %11180 = vmatprep.subr.mxu0 0.0
  %11181 = vmatpush1.msra.mxu0 0.0
  %11182 = vmatprep.subr.mxu0 0.0
  %11183 = vmatpush1.msra.mxu0 0.0
  %11184 = vmatprep.subr.mxu0 0.0
  %11185 = vmatpush1.msra.mxu0 0.0
  %11186 = vmatprep.subr.mxu0 0.0
  %11187 = vmatpush1.msra.mxu0 0.0
  %11188 = vmatprep.subr.mxu0 0.0
  %11189 = vmatpush1.msra.mxu0 0.0
  %11190 = vmatprep.subr.mxu0 0.0
  %11191 = vmatpush1.msra.mxu0 0.0
  %11192 = vmatprep.subr.mxu0 0.0
  %11193 = vmatpush1.msra.mxu0 0.0
  %11194 = vmatprep.subr.mxu0 0.0
  %11195 = vmatpush1.msra.mxu0 0.0
  %11196 = vmatprep.subr.mxu0 0.0
  %11197 = vmatpush1.msra.mxu0 0.0
  %11198 = vmatprep.subr.mxu0 0.0
  %11199 = vmatpush1.msra.mxu0 0.0
  %11200 = vmatprep.subr.mxu0 0.0
  %11201 = vmatpush1.msra.mxu0 0.0
  %11202 = vmatprep.subr.mxu0 0.0
  %11203 = vmatpush1.msra.mxu0 0.0
  %11204 = vmatprep.subr.mxu0 0.0
  %11205 = vmatpush1.msra.mxu0 0.0
  %11206 = vmatprep.subr.mxu0 0.0
  %11207 = vmatpush1.msra.mxu0 0.0
  %11208 = vmatprep.subr.mxu0 0.0
  %11209 = vmatpush1.msra.mxu0 0.0
  %11210 = vmatprep.mubr.f32.mxu0 0.0
  %v11211 = vand.u32 %v9802, 4294901760
  %11212 = vmatmul.mubr.f32.gmra.mrb[0].mxu0 %v11211
  %v11213 = vpop.f32.mrb[0].mxu0
  %v11214 = vadd.f32 %v11131, %v11213
  %v11215 = vpop.f32.mrb[0].mxu0
  %11216 = vdwg.mxu0
  %11217 = vmatprep.subr.mxu0 0.0
  %v11218 = vand.u32 %v47, 4294901760
  %11219 = vmatpush1.msra.mxu0 %v11218
  %11220 = vmatprep.subr.mxu0 0.0
  %v11221 = vand.u32 %v48, 4294901760
  %11222 = vmatpush1.msra.mxu0 %v11221
  %11223 = vmatprep.subr.mxu0 0.0
  %v11224 = vand.u32 %v49, 4294901760
  %11225 = vmatpush1.msra.mxu0 %v11224
  %11226 = vmatprep.subr.mxu0 0.0
  %v11227 = vand.u32 %v50, 4294901760
  %11228 = vmatpush1.msra.mxu0 %v11227
  %11229 = vmatprep.subr.mxu0 0.0
  %11230 = vmatpush1.msra.mxu0 0.0
  %11231 = vmatprep.subr.mxu0 0.0
  %11232 = vmatpush1.msra.mxu0 0.0
  %11233 = vmatprep.subr.mxu0 0.0
  %11234 = vmatpush1.msra.mxu0 0.0
  %11235 = vmatprep.subr.mxu0 0.0
  %11236 = vmatpush1.msra.mxu0 0.0
  %11237 = vmatprep.subr.mxu0 0.0
  %11238 = vmatpush1.msra.mxu0 0.0
  %11239 = vmatprep.subr.mxu0 0.0
  %11240 = vmatpush1.msra.mxu0 0.0
  %11241 = vmatprep.subr.mxu0 0.0
  %11242 = vmatpush1.msra.mxu0 0.0
  %11243 = vmatprep.subr.mxu0 0.0
  %11244 = vmatpush1.msra.mxu0 0.0
  %11245 = vmatprep.subr.mxu0 0.0
  %11246 = vmatpush1.msra.mxu0 0.0
  %11247 = vmatprep.subr.mxu0 0.0
  %11248 = vmatpush1.msra.mxu0 0.0
  %11249 = vmatprep.subr.mxu0 0.0
  %11250 = vmatpush1.msra.mxu0 0.0
  %11251 = vmatprep.subr.mxu0 0.0
  %11252 = vmatpush1.msra.mxu0 0.0
  %11253 = vmatprep.subr.mxu0 0.0
  %11254 = vmatpush1.msra.mxu0 0.0
  %11255 = vmatprep.subr.mxu0 0.0
  %11256 = vmatpush1.msra.mxu0 0.0
  %11257 = vmatprep.subr.mxu0 0.0
  %11258 = vmatpush1.msra.mxu0 0.0
  %11259 = vmatprep.subr.mxu0 0.0
  %11260 = vmatpush1.msra.mxu0 0.0
  %11261 = vmatprep.subr.mxu0 0.0
  %11262 = vmatpush1.msra.mxu0 0.0
  %11263 = vmatprep.subr.mxu0 0.0
  %11264 = vmatpush1.msra.mxu0 0.0
  %11265 = vmatprep.subr.mxu0 0.0
  %11266 = vmatpush1.msra.mxu0 0.0
  %11267 = vmatprep.subr.mxu0 0.0
  %11268 = vmatpush1.msra.mxu0 0.0
  %11269 = vmatprep.subr.mxu0 0.0
  %11270 = vmatpush1.msra.mxu0 0.0
  %11271 = vmatprep.subr.mxu0 0.0
  %11272 = vmatpush1.msra.mxu0 0.0
  %11273 = vmatprep.subr.mxu0 0.0
  %11274 = vmatpush1.msra.mxu0 0.0
  %11275 = vmatprep.subr.mxu0 0.0
  %11276 = vmatpush1.msra.mxu0 0.0
  %11277 = vmatprep.subr.mxu0 0.0
  %11278 = vmatpush1.msra.mxu0 0.0
  %11279 = vmatprep.subr.mxu0 0.0
  %11280 = vmatpush1.msra.mxu0 0.0
  %11281 = vmatprep.subr.mxu0 0.0
  %11282 = vmatpush1.msra.mxu0 0.0
  %11283 = vmatprep.subr.mxu0 0.0
  %11284 = vmatpush1.msra.mxu0 0.0
  %11285 = vmatprep.mubr.f32.mxu0 0.0
  %v11286 = vand.u32 %v9802, 4294901760
  %11287 = vmatmul.mubr.f32.gmra.mrb[0].mxu0 %v11286
  %v11288 = vpop.f32.mrb[0].mxu0
  %v11289 = vadd.f32 %v11214, %v11288
  %v11290 = vpop.f32.mrb[0].mxu0
  %11291 = vdwg.mxu0
  %v11293 = vrot.slane %v11289, 2
  %v11295 = vadd.f32 %v114, %v11293
  %v11296 = vmul.f32 %v11295, %v40
  %v11297 = vxor.u32 %v11296, 2147483648
  %v11298 = vmul.f32 %v11297, 1.442695
  %v11299 = vpow.pop %v11298
  %v11300 = vadd.f32 %v11299, 1.0
  %v11301 = vrcp.pop %v11300
  %v11302 = vmul.f32 1.0, %v11301
  %v11303 = vmul.f32 %v11302, 2.0
  %v11304 = vsub.f32 %v11303, 1.0
  %v11305 = vsel %vm39, %v11304, %v11302
  %v11307 = vrot.slane %v9791, 6
  %v11309 = vmul.f32 %v11305, %v11307
  %11311 = vrot.lane.b32.xlu0 %v11305, 64
  %v11312 = vpop.permute.xlu0 %11311
  %v11314 = vmul.f32 %v11305, %v11312
  %11316 = vrot.lane.b32.xlu0 %v11314, 32
  %v11317 = vpop.permute.xlu0 %11316
  %v11319 = vadd.f32 %v11309, %v11317
  %v11320 = vtanh.pop %v11319
  %11322 = vrot.lane.b32.xlu0 %v11320, 64
  %v11323 = vpop.permute.xlu0 %11322
  %v11325 = vmul.f32 %v11305, %v11323
  %v11327 = vrot.slane %v11325, 6
  %11328 = vrot.lane.b32.xlu0 %v11327, 32
  %v11329 = vpop.permute.xlu0 %11328
  %v11330 = vsel %vm117, %v11329, 0
  %11332 = vmatprep.subr.mxu0 0.0
  %v11333 = vand.u32 %v43, 4294901760
  %11334 = vmatpush1.msra.mxu0 %v11333
  %11335 = vmatprep.subr.mxu0 0.0
  %v11336 = vand.u32 %v44, 4294901760
  %11337 = vmatpush1.msra.mxu0 %v11336
  %11338 = vmatprep.subr.mxu0 0.0
  %v11339 = vand.u32 %v45, 4294901760
  %11340 = vmatpush1.msra.mxu0 %v11339
  %11341 = vmatprep.subr.mxu0 0.0
  %v11342 = vand.u32 %v46, 4294901760
  %11343 = vmatpush1.msra.mxu0 %v11342
  %11344 = vmatprep.subr.mxu0 0.0
  %11345 = vmatpush1.msra.mxu0 0.0
  %11346 = vmatprep.subr.mxu0 0.0
  %11347 = vmatpush1.msra.mxu0 0.0
  %11348 = vmatprep.subr.mxu0 0.0
  %11349 = vmatpush1.msra.mxu0 0.0
  %11350 = vmatprep.subr.mxu0 0.0
  %11351 = vmatpush1.msra.mxu0 0.0
  %11352 = vmatprep.subr.mxu0 0.0
  %11353 = vmatpush1.msra.mxu0 0.0
  %11354 = vmatprep.subr.mxu0 0.0
  %11355 = vmatpush1.msra.mxu0 0.0
  %11356 = vmatprep.subr.mxu0 0.0
  %11357 = vmatpush1.msra.mxu0 0.0
  %11358 = vmatprep.subr.mxu0 0.0
  %11359 = vmatpush1.msra.mxu0 0.0
  %11360 = vmatprep.subr.mxu0 0.0
  %11361 = vmatpush1.msra.mxu0 0.0
  %11362 = vmatprep.subr.mxu0 0.0
  %11363 = vmatpush1.msra.mxu0 0.0
  %11364 = vmatprep.subr.mxu0 0.0
  %11365 = vmatpush1.msra.mxu0 0.0
  %11366 = vmatprep.subr.mxu0 0.0
  %11367 = vmatpush1.msra.mxu0 0.0
  %11368 = vmatprep.subr.mxu0 0.0
  %11369 = vmatpush1.msra.mxu0 0.0
  %11370 = vmatprep.subr.mxu0 0.0
  %11371 = vmatpush1.msra.mxu0 0.0
  %11372 = vmatprep.subr.mxu0 0.0
  %11373 = vmatpush1.msra.mxu0 0.0
  %11374 = vmatprep.subr.mxu0 0.0
  %11375 = vmatpush1.msra.mxu0 0.0
  %11376 = vmatprep.subr.mxu0 0.0
  %11377 = vmatpush1.msra.mxu0 0.0
  %11378 = vmatprep.subr.mxu0 0.0
  %11379 = vmatpush1.msra.mxu0 0.0
  %11380 = vmatprep.subr.mxu0 0.0
  %11381 = vmatpush1.msra.mxu0 0.0
  %11382 = vmatprep.subr.mxu0 0.0
  %11383 = vmatpush1.msra.mxu0 0.0
  %11384 = vmatprep.subr.mxu0 0.0
  %11385 = vmatpush1.msra.mxu0 0.0
  %11386 = vmatprep.subr.mxu0 0.0
  %11387 = vmatpush1.msra.mxu0 0.0
  %11388 = vmatprep.subr.mxu0 0.0
  %11389 = vmatpush1.msra.mxu0 0.0
  %11390 = vmatprep.subr.mxu0 0.0
  %11391 = vmatpush1.msra.mxu0 0.0
  %11392 = vmatprep.subr.mxu0 0.0
  %11393 = vmatpush1.msra.mxu0 0.0
  %11394 = vmatprep.subr.mxu0 0.0
  %11395 = vmatpush1.msra.mxu0 0.0
  %11396 = vmatprep.subr.mxu0 0.0
  %11397 = vmatpush1.msra.mxu0 0.0
  %11398 = vmatprep.subr.mxu0 0.0
  %11399 = vmatpush1.msra.mxu0 0.0
  %11400 = vmatprep.mubr.f32.mxu0 0.0
  %v11401 = vand.u32 %v11330, 4294901760
  %v11402 = vsub.f32 %v11330, %v11401
  %v11403 = vand.u32 %v11402, 4294901760
  %v11404 = vsub.f32 %v11402, %v11403
  %v11405 = vand.u32 %v11404, 4294901760
  %11406 = vmatmul.mubr.f32.gmra.mrb[0].mxu0 %v11405
  %v11407 = vpop.f32.mrb[0].mxu0
  %v11408 = vadd.f32 %v638, %v11407
  %v11409 = vpop.f32.mrb[0].mxu0
  %11410 = vdwg.mxu0
  %11411 = vmatprep.subr.mxu0 0.0
  %v11412 = vand.u32 %v43, 4294901760
  %v11413 = vsub.f32 %v43, %v11412
  %v11414 = vand.u32 %v11413, 4294901760
  %v11415 = vsub.f32 %v11413, %v11414
  %v11416 = vand.u32 %v11415, 4294901760
  %11417 = vmatpush1.msra.mxu0 %v11416
  %11418 = vmatprep.subr.mxu0 0.0
  %v11419 = vand.u32 %v44, 4294901760
  %v11420 = vsub.f32 %v44, %v11419
  %v11421 = vand.u32 %v11420, 4294901760
  %v11422 = vsub.f32 %v11420, %v11421
  %v11423 = vand.u32 %v11422, 4294901760
  %11424 = vmatpush1.msra.mxu0 %v11423
  %11425 = vmatprep.subr.mxu0 0.0
  %v11426 = vand.u32 %v45, 4294901760
  %v11427 = vsub.f32 %v45, %v11426
  %v11428 = vand.u32 %v11427, 4294901760
  %v11429 = vsub.f32 %v11427, %v11428
  %v11430 = vand.u32 %v11429, 4294901760
  %11431 = vmatpush1.msra.mxu0 %v11430
  %11432 = vmatprep.subr.mxu0 0.0
  %v11433 = vand.u32 %v46, 4294901760
  %v11434 = vsub.f32 %v46, %v11433
  %v11435 = vand.u32 %v11434, 4294901760
  %v11436 = vsub.f32 %v11434, %v11435
  %v11437 = vand.u32 %v11436, 4294901760
  %11438 = vmatpush1.msra.mxu0 %v11437
  %11439 = vmatprep.subr.mxu0 0.0
  %11440 = vmatpush1.msra.mxu0 0.0
  %11441 = vmatprep.subr.mxu0 0.0
  %11442 = vmatpush1.msra.mxu0 0.0
  %11443 = vmatprep.subr.mxu0 0.0
  %11444 = vmatpush1.msra.mxu0 0.0
  %11445 = vmatprep.subr.mxu0 0.0
  %11446 = vmatpush1.msra.mxu0 0.0
  %11447 = vmatprep.subr.mxu0 0.0
  %11448 = vmatpush1.msra.mxu0 0.0
  %11449 = vmatprep.subr.mxu0 0.0
  %11450 = vmatpush1.msra.mxu0 0.0
  %11451 = vmatprep.subr.mxu0 0.0
  %11452 = vmatpush1.msra.mxu0 0.0
  %11453 = vmatprep.subr.mxu0 0.0
  %11454 = vmatpush1.msra.mxu0 0.0
  %11455 = vmatprep.subr.mxu0 0.0
  %11456 = vmatpush1.msra.mxu0 0.0
  %11457 = vmatprep.subr.mxu0 0.0
  %11458 = vmatpush1.msra.mxu0 0.0
  %11459 = vmatprep.subr.mxu0 0.0
  %11460 = vmatpush1.msra.mxu0 0.0
  %11461 = vmatprep.subr.mxu0 0.0
  %11462 = vmatpush1.msra.mxu0 0.0
  %11463 = vmatprep.subr.mxu0 0.0
  %11464 = vmatpush1.msra.mxu0 0.0
  %11465 = vmatprep.subr.mxu0 0.0
  %11466 = vmatpush1.msra.mxu0 0.0
  %11467 = vmatprep.subr.mxu0 0.0
  %11468 = vmatpush1.msra.mxu0 0.0
  %11469 = vmatprep.subr.mxu0 0.0
  %11470 = vmatpush1.msra.mxu0 0.0
  %11471 = vmatprep.subr.mxu0 0.0
  %11472 = vmatpush1.msra.mxu0 0.0
  %11473 = vmatprep.subr.mxu0 0.0
  %11474 = vmatpush1.msra.mxu0 0.0
  %11475 = vmatprep.subr.mxu0 0.0
  %11476 = vmatpush1.msra.mxu0 0.0
  %11477 = vmatprep.subr.mxu0 0.0
  %11478 = vmatpush1.msra.mxu0 0.0
  %11479 = vmatprep.subr.mxu0 0.0
  %11480 = vmatpush1.msra.mxu0 0.0
  %11481 = vmatprep.subr.mxu0 0.0
  %11482 = vmatpush1.msra.mxu0 0.0
  %11483 = vmatprep.subr.mxu0 0.0
  %11484 = vmatpush1.msra.mxu0 0.0
  %11485 = vmatprep.subr.mxu0 0.0
  %11486 = vmatpush1.msra.mxu0 0.0
  %11487 = vmatprep.subr.mxu0 0.0
  %11488 = vmatpush1.msra.mxu0 0.0
  %11489 = vmatprep.subr.mxu0 0.0
  %11490 = vmatpush1.msra.mxu0 0.0
  %11491 = vmatprep.subr.mxu0 0.0
  %11492 = vmatpush1.msra.mxu0 0.0
  %11493 = vmatprep.subr.mxu0 0.0
  %11494 = vmatpush1.msra.mxu0 0.0
  %11495 = vmatprep.mubr.f32.mxu0 0.0
  %v11496 = vand.u32 %v11330, 4294901760
  %11497 = vmatmul.mubr.f32.gmra.mrb[0].mxu0 %v11496
  %v11498 = vpop.f32.mrb[0].mxu0
  %v11499 = vadd.f32 %v11408, %v11498
  %v11500 = vpop.f32.mrb[0].mxu0
  %11501 = vdwg.mxu0
  %11502 = vmatprep.subr.mxu0 0.0
  %v11503 = vand.u32 %v43, 4294901760
  %v11504 = vsub.f32 %v43, %v11503
  %11505 = vmatpush1.msra.mxu0 %v11504
  %11506 = vmatprep.subr.mxu0 0.0
  %v11507 = vand.u32 %v44, 4294901760
  %v11508 = vsub.f32 %v44, %v11507
  %11509 = vmatpush1.msra.mxu0 %v11508
  %11510 = vmatprep.subr.mxu0 0.0
  %v11511 = vand.u32 %v45, 4294901760
  %v11512 = vsub.f32 %v45, %v11511
  %11513 = vmatpush1.msra.mxu0 %v11512
  %11514 = vmatprep.subr.mxu0 0.0
  %v11515 = vand.u32 %v46, 4294901760
  %v11516 = vsub.f32 %v46, %v11515
  %11517 = vmatpush1.msra.mxu0 %v11516
  %11518 = vmatprep.subr.mxu0 0.0
  %11519 = vmatpush1.msra.mxu0 0.0
  %11520 = vmatprep.subr.mxu0 0.0
  %11521 = vmatpush1.msra.mxu0 0.0
  %11522 = vmatprep.subr.mxu0 0.0
  %11523 = vmatpush1.msra.mxu0 0.0
  %11524 = vmatprep.subr.mxu0 0.0
  %11525 = vmatpush1.msra.mxu0 0.0
  %11526 = vmatprep.subr.mxu0 0.0
  %11527 = vmatpush1.msra.mxu0 0.0
  %11528 = vmatprep.subr.mxu0 0.0
  %11529 = vmatpush1.msra.mxu0 0.0
  %11530 = vmatprep.subr.mxu0 0.0
  %11531 = vmatpush1.msra.mxu0 0.0
  %11532 = vmatprep.subr.mxu0 0.0
  %11533 = vmatpush1.msra.mxu0 0.0
  %11534 = vmatprep.subr.mxu0 0.0
  %11535 = vmatpush1.msra.mxu0 0.0
  %11536 = vmatprep.subr.mxu0 0.0
  %11537 = vmatpush1.msra.mxu0 0.0
  %11538 = vmatprep.subr.mxu0 0.0
  %11539 = vmatpush1.msra.mxu0 0.0
  %11540 = vmatprep.subr.mxu0 0.0
  %11541 = vmatpush1.msra.mxu0 0.0
  %11542 = vmatprep.subr.mxu0 0.0
  %11543 = vmatpush1.msra.mxu0 0.0
  %11544 = vmatprep.subr.mxu0 0.0
  %11545 = vmatpush1.msra.mxu0 0.0
  %11546 = vmatprep.subr.mxu0 0.0
  %11547 = vmatpush1.msra.mxu0 0.0
  %11548 = vmatprep.subr.mxu0 0.0
  %11549 = vmatpush1.msra.mxu0 0.0
  %11550 = vmatprep.subr.mxu0 0.0
  %11551 = vmatpush1.msra.mxu0 0.0
  %11552 = vmatprep.subr.mxu0 0.0
  %11553 = vmatpush1.msra.mxu0 0.0
  %11554 = vmatprep.subr.mxu0 0.0
  %11555 = vmatpush1.msra.mxu0 0.0
  %11556 = vmatprep.subr.mxu0 0.0
  %11557 = vmatpush1.msra.mxu0 0.0
  %11558 = vmatprep.subr.mxu0 0.0
  %11559 = vmatpush1.msra.mxu0 0.0
  %11560 = vmatprep.subr.mxu0 0.0
  %11561 = vmatpush1.msra.mxu0 0.0
  %11562 = vmatprep.subr.mxu0 0.0
  %11563 = vmatpush1.msra.mxu0 0.0
  %11564 = vmatprep.subr.mxu0 0.0
  %11565 = vmatpush1.msra.mxu0 0.0
  %11566 = vmatprep.subr.mxu0 0.0
  %11567 = vmatpush1.msra.mxu0 0.0
  %11568 = vmatprep.subr.mxu0 0.0
  %11569 = vmatpush1.msra.mxu0 0.0
  %11570 = vmatprep.subr.mxu0 0.0
  %11571 = vmatpush1.msra.mxu0 0.0
  %11572 = vmatprep.subr.mxu0 0.0
  %11573 = vmatpush1.msra.mxu0 0.0
  %11574 = vmatprep.mubr.f32.mxu0 0.0
  %v11575 = vand.u32 %v11330, 4294901760
  %v11576 = vsub.f32 %v11330, %v11575
  %11577 = vmatmul.mubr.f32.gmra.mrb[0].mxu0 %v11576
  %v11578 = vpop.f32.mrb[0].mxu0
  %v11579 = vadd.f32 %v11499, %v11578
  %v11580 = vpop.f32.mrb[0].mxu0
  %11581 = vdwg.mxu0
  %11582 = vmatprep.subr.mxu0 0.0
  %v11583 = vand.u32 %v43, 4294901760
  %11584 = vmatpush1.msra.mxu0 %v11583
  %11585 = vmatprep.subr.mxu0 0.0
  %v11586 = vand.u32 %v44, 4294901760
  %11587 = vmatpush1.msra.mxu0 %v11586
  %11588 = vmatprep.subr.mxu0 0.0
  %v11589 = vand.u32 %v45, 4294901760
  %11590 = vmatpush1.msra.mxu0 %v11589
  %11591 = vmatprep.subr.mxu0 0.0
  %v11592 = vand.u32 %v46, 4294901760
  %11593 = vmatpush1.msra.mxu0 %v11592
  %11594 = vmatprep.subr.mxu0 0.0
  %11595 = vmatpush1.msra.mxu0 0.0
  %11596 = vmatprep.subr.mxu0 0.0
  %11597 = vmatpush1.msra.mxu0 0.0
  %11598 = vmatprep.subr.mxu0 0.0
  %11599 = vmatpush1.msra.mxu0 0.0
  %11600 = vmatprep.subr.mxu0 0.0
  %11601 = vmatpush1.msra.mxu0 0.0
  %11602 = vmatprep.subr.mxu0 0.0
  %11603 = vmatpush1.msra.mxu0 0.0
  %11604 = vmatprep.subr.mxu0 0.0
  %11605 = vmatpush1.msra.mxu0 0.0
  %11606 = vmatprep.subr.mxu0 0.0
  %11607 = vmatpush1.msra.mxu0 0.0
  %11608 = vmatprep.subr.mxu0 0.0
  %11609 = vmatpush1.msra.mxu0 0.0
  %11610 = vmatprep.subr.mxu0 0.0
  %11611 = vmatpush1.msra.mxu0 0.0
  %11612 = vmatprep.subr.mxu0 0.0
  %11613 = vmatpush1.msra.mxu0 0.0
  %11614 = vmatprep.subr.mxu0 0.0
  %11615 = vmatpush1.msra.mxu0 0.0
  %11616 = vmatprep.subr.mxu0 0.0
  %11617 = vmatpush1.msra.mxu0 0.0
  %11618 = vmatprep.subr.mxu0 0.0
  %11619 = vmatpush1.msra.mxu0 0.0
  %11620 = vmatprep.subr.mxu0 0.0
  %11621 = vmatpush1.msra.mxu0 0.0
  %11622 = vmatprep.subr.mxu0 0.0
  %11623 = vmatpush1.msra.mxu0 0.0
  %11624 = vmatprep.subr.mxu0 0.0
  %11625 = vmatpush1.msra.mxu0 0.0
  %11626 = vmatprep.subr.mxu0 0.0
  %11627 = vmatpush1.msra.mxu0 0.0
  %11628 = vmatprep.subr.mxu0 0.0
  %11629 = vmatpush1.msra.mxu0 0.0
  %11630 = vmatprep.subr.mxu0 0.0
  %11631 = vmatpush1.msra.mxu0 0.0
  %11632 = vmatprep.subr.mxu0 0.0
  %11633 = vmatpush1.msra.mxu0 0.0
  %11634 = vmatprep.subr.mxu0 0.0
  %11635 = vmatpush1.msra.mxu0 0.0
  %11636 = vmatprep.subr.mxu0 0.0
  %11637 = vmatpush1.msra.mxu0 0.0
  %11638 = vmatprep.subr.mxu0 0.0
  %11639 = vmatpush1.msra.mxu0 0.0
  %11640 = vmatprep.subr.mxu0 0.0
  %11641 = vmatpush1.msra.mxu0 0.0
  %11642 = vmatprep.subr.mxu0 0.0
  %11643 = vmatpush1.msra.mxu0 0.0
  %11644 = vmatprep.subr.mxu0 0.0
  %11645 = vmatpush1.msra.mxu0 0.0
  %11646 = vmatprep.subr.mxu0 0.0
  %11647 = vmatpush1.msra.mxu0 0.0
  %11648 = vmatprep.subr.mxu0 0.0
  %11649 = vmatpush1.msra.mxu0 0.0
  %11650 = vmatprep.mubr.f32.mxu0 0.0
  %v11651 = vand.u32 %v11330, 4294901760
  %v11652 = vsub.f32 %v11330, %v11651
  %v11653 = vand.u32 %v11652, 4294901760
  %11654 = vmatmul.mubr.f32.gmra.mrb[0].mxu0 %v11653
  %v11655 = vpop.f32.mrb[0].mxu0
  %v11656 = vadd.f32 %v11579, %v11655
  %v11657 = vpop.f32.mrb[0].mxu0
  %11658 = vdwg.mxu0
  %11659 = vmatprep.subr.mxu0 0.0
  %v11660 = vand.u32 %v43, 4294901760
  %v11661 = vsub.f32 %v43, %v11660
  %v11662 = vand.u32 %v11661, 4294901760
  %11663 = vmatpush1.msra.mxu0 %v11662
  %11664 = vmatprep.subr.mxu0 0.0
  %v11665 = vand.u32 %v44, 4294901760
  %v11666 = vsub.f32 %v44, %v11665
  %v11667 = vand.u32 %v11666, 4294901760
  %11668 = vmatpush1.msra.mxu0 %v11667
  %11669 = vmatprep.subr.mxu0 0.0
  %v11670 = vand.u32 %v45, 4294901760
  %v11671 = vsub.f32 %v45, %v11670
  %v11672 = vand.u32 %v11671, 4294901760
  %11673 = vmatpush1.msra.mxu0 %v11672
  %11674 = vmatprep.subr.mxu0 0.0
  %v11675 = vand.u32 %v46, 4294901760
  %v11676 = vsub.f32 %v46, %v11675
  %v11677 = vand.u32 %v11676, 4294901760
  %11678 = vmatpush1.msra.mxu0 %v11677
  %11679 = vmatprep.subr.mxu0 0.0
  %11680 = vmatpush1.msra.mxu0 0.0
  %11681 = vmatprep.subr.mxu0 0.0
  %11682 = vmatpush1.msra.mxu0 0.0
  %11683 = vmatprep.subr.mxu0 0.0
  %11684 = vmatpush1.msra.mxu0 0.0
  %11685 = vmatprep.subr.mxu0 0.0
  %11686 = vmatpush1.msra.mxu0 0.0
  %11687 = vmatprep.subr.mxu0 0.0
  %11688 = vmatpush1.msra.mxu0 0.0
  %11689 = vmatprep.subr.mxu0 0.0
  %11690 = vmatpush1.msra.mxu0 0.0
  %11691 = vmatprep.subr.mxu0 0.0
  %11692 = vmatpush1.msra.mxu0 0.0
  %11693 = vmatprep.subr.mxu0 0.0
  %11694 = vmatpush1.msra.mxu0 0.0
  %11695 = vmatprep.subr.mxu0 0.0
  %11696 = vmatpush1.msra.mxu0 0.0
  %11697 = vmatprep.subr.mxu0 0.0
  %11698 = vmatpush1.msra.mxu0 0.0
  %11699 = vmatprep.subr.mxu0 0.0
  %11700 = vmatpush1.msra.mxu0 0.0
  %11701 = vmatprep.subr.mxu0 0.0
  %11702 = vmatpush1.msra.mxu0 0.0
  %11703 = vmatprep.subr.mxu0 0.0
  %11704 = vmatpush1.msra.mxu0 0.0
  %11705 = vmatprep.subr.mxu0 0.0
  %11706 = vmatpush1.msra.mxu0 0.0
  %11707 = vmatprep.subr.mxu0 0.0
  %11708 = vmatpush1.msra.mxu0 0.0
  %11709 = vmatprep.subr.mxu0 0.0
  %11710 = vmatpush1.msra.mxu0 0.0
  %11711 = vmatprep.subr.mxu0 0.0
  %11712 = vmatpush1.msra.mxu0 0.0
  %11713 = vmatprep.subr.mxu0 0.0
  %11714 = vmatpush1.msra.mxu0 0.0
  %11715 = vmatprep.subr.mxu0 0.0
  %11716 = vmatpush1.msra.mxu0 0.0
  %11717 = vmatprep.subr.mxu0 0.0
  %11718 = vmatpush1.msra.mxu0 0.0
  %11719 = vmatprep.subr.mxu0 0.0
  %11720 = vmatpush1.msra.mxu0 0.0
  %11721 = vmatprep.subr.mxu0 0.0
  %11722 = vmatpush1.msra.mxu0 0.0
  %11723 = vmatprep.subr.mxu0 0.0
  %11724 = vmatpush1.msra.mxu0 0.0
  %11725 = vmatprep.subr.mxu0 0.0
  %11726 = vmatpush1.msra.mxu0 0.0
  %11727 = vmatprep.subr.mxu0 0.0
  %11728 = vmatpush1.msra.mxu0 0.0
  %11729 = vmatprep.subr.mxu0 0.0
  %11730 = vmatpush1.msra.mxu0 0.0
  %11731 = vmatprep.subr.mxu0 0.0
  %11732 = vmatpush1.msra.mxu0 0.0
  %11733 = vmatprep.subr.mxu0 0.0
  %11734 = vmatpush1.msra.mxu0 0.0
  %11735 = vmatprep.mubr.f32.mxu0 0.0
  %v11736 = vand.u32 %v11330, 4294901760
  %11737 = vmatmul.mubr.f32.gmra.mrb[0].mxu0 %v11736
  %v11738 = vpop.f32.mrb[0].mxu0
  %v11739 = vadd.f32 %v11656, %v11738
  %v11740 = vpop.f32.mrb[0].mxu0
  %11741 = vdwg.mxu0
  %11742 = vmatprep.subr.mxu0 0.0
  %v11743 = vand.u32 %v43, 4294901760
  %11744 = vmatpush1.msra.mxu0 %v11743
  %11745 = vmatprep.subr.mxu0 0.0
  %v11746 = vand.u32 %v44, 4294901760
  %11747 = vmatpush1.msra.mxu0 %v11746
  %11748 = vmatprep.subr.mxu0 0.0
  %v11749 = vand.u32 %v45, 4294901760
  %11750 = vmatpush1.msra.mxu0 %v11749
  %11751 = vmatprep.subr.mxu0 0.0
  %v11752 = vand.u32 %v46, 4294901760
  %11753 = vmatpush1.msra.mxu0 %v11752
  %11754 = vmatprep.subr.mxu0 0.0
  %11755 = vmatpush1.msra.mxu0 0.0
  %11756 = vmatprep.subr.mxu0 0.0
  %11757 = vmatpush1.msra.mxu0 0.0
  %11758 = vmatprep.subr.mxu0 0.0
  %11759 = vmatpush1.msra.mxu0 0.0
  %11760 = vmatprep.subr.mxu0 0.0
  %11761 = vmatpush1.msra.mxu0 0.0
  %11762 = vmatprep.subr.mxu0 0.0
  %11763 = vmatpush1.msra.mxu0 0.0
  %11764 = vmatprep.subr.mxu0 0.0
  %11765 = vmatpush1.msra.mxu0 0.0
  %11766 = vmatprep.subr.mxu0 0.0
  %11767 = vmatpush1.msra.mxu0 0.0
  %11768 = vmatprep.subr.mxu0 0.0
  %11769 = vmatpush1.msra.mxu0 0.0
  %11770 = vmatprep.subr.mxu0 0.0
  %11771 = vmatpush1.msra.mxu0 0.0
  %11772 = vmatprep.subr.mxu0 0.0
  %11773 = vmatpush1.msra.mxu0 0.0
  %11774 = vmatprep.subr.mxu0 0.0
  %11775 = vmatpush1.msra.mxu0 0.0
  %11776 = vmatprep.subr.mxu0 0.0
  %11777 = vmatpush1.msra.mxu0 0.0
  %11778 = vmatprep.subr.mxu0 0.0
  %11779 = vmatpush1.msra.mxu0 0.0
  %11780 = vmatprep.subr.mxu0 0.0
  %11781 = vmatpush1.msra.mxu0 0.0
  %11782 = vmatprep.subr.mxu0 0.0
  %11783 = vmatpush1.msra.mxu0 0.0
  %11784 = vmatprep.subr.mxu0 0.0
  %11785 = vmatpush1.msra.mxu0 0.0
  %11786 = vmatprep.subr.mxu0 0.0
  %11787 = vmatpush1.msra.mxu0 0.0
  %11788 = vmatprep.subr.mxu0 0.0
  %11789 = vmatpush1.msra.mxu0 0.0
  %11790 = vmatprep.subr.mxu0 0.0
  %11791 = vmatpush1.msra.mxu0 0.0
  %11792 = vmatprep.subr.mxu0 0.0
  %11793 = vmatpush1.msra.mxu0 0.0
  %11794 = vmatprep.subr.mxu0 0.0
  %11795 = vmatpush1.msra.mxu0 0.0
  %11796 = vmatprep.subr.mxu0 0.0
  %11797 = vmatpush1.msra.mxu0 0.0
  %11798 = vmatprep.subr.mxu0 0.0
  %11799 = vmatpush1.msra.mxu0 0.0
  %11800 = vmatprep.subr.mxu0 0.0
  %11801 = vmatpush1.msra.mxu0 0.0
  %11802 = vmatprep.subr.mxu0 0.0
  %11803 = vmatpush1.msra.mxu0 0.0
  %11804 = vmatprep.subr.mxu0 0.0
  %11805 = vmatpush1.msra.mxu0 0.0
  %11806 = vmatprep.subr.mxu0 0.0
  %11807 = vmatpush1.msra.mxu0 0.0
  %11808 = vmatprep.subr.mxu0 0.0
  %11809 = vmatpush1.msra.mxu0 0.0
  %11810 = vmatprep.mubr.f32.mxu0 0.0
  %v11811 = vand.u32 %v11330, 4294901760
  %11812 = vmatmul.mubr.f32.gmra.mrb[0].mxu0 %v11811
  %v11813 = vpop.f32.mrb[0].mxu0
  %v11814 = vadd.f32 %v11739, %v11813
  %v11815 = vpop.f32.mrb[0].mxu0
  %11816 = vdwg.mxu0
  %11818 = vrot.lane.b32.xlu0 %v10806, 32
  %v11819 = vpop.permute.xlu0 %11818
  %v11820 = vsel %vm117, %v11819, 0
  %11822 = vmatprep.subr.mxu0 0.0
  %v11823 = vand.u32 %v51, 4294901760
  %11824 = vmatpush1.msra.mxu0 %v11823
  %11825 = vmatprep.subr.mxu0 0.0
  %v11826 = vand.u32 %v52, 4294901760
  %11827 = vmatpush1.msra.mxu0 %v11826
  %11828 = vmatprep.subr.mxu0 0.0
  %v11829 = vand.u32 %v53, 4294901760
  %11830 = vmatpush1.msra.mxu0 %v11829
  %11831 = vmatprep.subr.mxu0 0.0
  %v11832 = vand.u32 %v54, 4294901760
  %11833 = vmatpush1.msra.mxu0 %v11832
  %11834 = vmatprep.subr.mxu0 0.0
  %11835 = vmatpush1.msra.mxu0 0.0
  %11836 = vmatprep.subr.mxu0 0.0
  %11837 = vmatpush1.msra.mxu0 0.0
  %11838 = vmatprep.subr.mxu0 0.0
  %11839 = vmatpush1.msra.mxu0 0.0
  %11840 = vmatprep.subr.mxu0 0.0
  %11841 = vmatpush1.msra.mxu0 0.0
  %11842 = vmatprep.subr.mxu0 0.0
  %11843 = vmatpush1.msra.mxu0 0.0
  %11844 = vmatprep.subr.mxu0 0.0
  %11845 = vmatpush1.msra.mxu0 0.0
  %11846 = vmatprep.subr.mxu0 0.0
  %11847 = vmatpush1.msra.mxu0 0.0
  %11848 = vmatprep.subr.mxu0 0.0
  %11849 = vmatpush1.msra.mxu0 0.0
  %11850 = vmatprep.subr.mxu0 0.0
  %11851 = vmatpush1.msra.mxu0 0.0
  %11852 = vmatprep.subr.mxu0 0.0
  %11853 = vmatpush1.msra.mxu0 0.0
  %11854 = vmatprep.subr.mxu0 0.0
  %11855 = vmatpush1.msra.mxu0 0.0
  %11856 = vmatprep.subr.mxu0 0.0
  %11857 = vmatpush1.msra.mxu0 0.0
  %11858 = vmatprep.subr.mxu0 0.0
  %11859 = vmatpush1.msra.mxu0 0.0
  %11860 = vmatprep.subr.mxu0 0.0
  %11861 = vmatpush1.msra.mxu0 0.0
  %11862 = vmatprep.subr.mxu0 0.0
  %11863 = vmatpush1.msra.mxu0 0.0
  %11864 = vmatprep.subr.mxu0 0.0
  %11865 = vmatpush1.msra.mxu0 0.0
  %11866 = vmatprep.subr.mxu0 0.0
  %11867 = vmatpush1.msra.mxu0 0.0
  %11868 = vmatprep.subr.mxu0 0.0
  %11869 = vmatpush1.msra.mxu0 0.0
  %11870 = vmatprep.subr.mxu0 0.0
  %11871 = vmatpush1.msra.mxu0 0.0
  %11872 = vmatprep.subr.mxu0 0.0
  %11873 = vmatpush1.msra.mxu0 0.0
  %11874 = vmatprep.subr.mxu0 0.0
  %11875 = vmatpush1.msra.mxu0 0.0
  %11876 = vmatprep.subr.mxu0 0.0
  %11877 = vmatpush1.msra.mxu0 0.0
  %11878 = vmatprep.subr.mxu0 0.0
  %11879 = vmatpush1.msra.mxu0 0.0
  %11880 = vmatprep.subr.mxu0 0.0
  %11881 = vmatpush1.msra.mxu0 0.0
  %11882 = vmatprep.subr.mxu0 0.0
  %11883 = vmatpush1.msra.mxu0 0.0
  %11884 = vmatprep.subr.mxu0 0.0
  %11885 = vmatpush1.msra.mxu0 0.0
  %11886 = vmatprep.subr.mxu0 0.0
  %11887 = vmatpush1.msra.mxu0 0.0
  %11888 = vmatprep.subr.mxu0 0.0
  %11889 = vmatpush1.msra.mxu0 0.0
  %11890 = vmatprep.mubr.f32.mxu0 0.0
  %v11891 = vand.u32 %v11820, 4294901760
  %v11892 = vsub.f32 %v11820, %v11891
  %v11893 = vand.u32 %v11892, 4294901760
  %v11894 = vsub.f32 %v11892, %v11893
  %v11895 = vand.u32 %v11894, 4294901760
  %11896 = vmatmul.mubr.f32.gmra.mrb[0].mxu0 %v11895
  %v11897 = vpop.f32.mrb[0].mxu0
  %v11898 = vadd.f32 0.0, %v11897
  %v11899 = vpop.f32.mrb[0].mxu0
  %11900 = vdwg.mxu0
  %11901 = vmatprep.subr.mxu0 0.0
  %v11902 = vand.u32 %v51, 4294901760
  %v11903 = vsub.f32 %v51, %v11902
  %v11904 = vand.u32 %v11903, 4294901760
  %v11905 = vsub.f32 %v11903, %v11904
  %v11906 = vand.u32 %v11905, 4294901760
  %11907 = vmatpush1.msra.mxu0 %v11906
  %11908 = vmatprep.subr.mxu0 0.0
  %v11909 = vand.u32 %v52, 4294901760
  %v11910 = vsub.f32 %v52, %v11909
  %v11911 = vand.u32 %v11910, 4294901760
  %v11912 = vsub.f32 %v11910, %v11911
  %v11913 = vand.u32 %v11912, 4294901760
  %11914 = vmatpush1.msra.mxu0 %v11913
  %11915 = vmatprep.subr.mxu0 0.0
  %v11916 = vand.u32 %v53, 4294901760
  %v11917 = vsub.f32 %v53, %v11916
  %v11918 = vand.u32 %v11917, 4294901760
  %v11919 = vsub.f32 %v11917, %v11918
  %v11920 = vand.u32 %v11919, 4294901760
  %11921 = vmatpush1.msra.mxu0 %v11920
  %11922 = vmatprep.subr.mxu0 0.0
  %v11923 = vand.u32 %v54, 4294901760
  %v11924 = vsub.f32 %v54, %v11923
  %v11925 = vand.u32 %v11924, 4294901760
  %v11926 = vsub.f32 %v11924, %v11925
  %v11927 = vand.u32 %v11926, 4294901760
  %11928 = vmatpush1.msra.mxu0 %v11927
  %11929 = vmatprep.subr.mxu0 0.0
  %11930 = vmatpush1.msra.mxu0 0.0
  %11931 = vmatprep.subr.mxu0 0.0
  %11932 = vmatpush1.msra.mxu0 0.0
  %11933 = vmatprep.subr.mxu0 0.0
  %11934 = vmatpush1.msra.mxu0 0.0
  %11935 = vmatprep.subr.mxu0 0.0
  %11936 = vmatpush1.msra.mxu0 0.0
  %11937 = vmatprep.subr.mxu0 0.0
  %11938 = vmatpush1.msra.mxu0 0.0
  %11939 = vmatprep.subr.mxu0 0.0
  %11940 = vmatpush1.msra.mxu0 0.0
  %11941 = vmatprep.subr.mxu0 0.0
  %11942 = vmatpush1.msra.mxu0 0.0
  %11943 = vmatprep.subr.mxu0 0.0
  %11944 = vmatpush1.msra.mxu0 0.0
  %11945 = vmatprep.subr.mxu0 0.0
  %11946 = vmatpush1.msra.mxu0 0.0
  %11947 = vmatprep.subr.mxu0 0.0
  %11948 = vmatpush1.msra.mxu0 0.0
  %11949 = vmatprep.subr.mxu0 0.0
  %11950 = vmatpush1.msra.mxu0 0.0
  %11951 = vmatprep.subr.mxu0 0.0
  %11952 = vmatpush1.msra.mxu0 0.0
  %11953 = vmatprep.subr.mxu0 0.0
  %11954 = vmatpush1.msra.mxu0 0.0
  %11955 = vmatprep.subr.mxu0 0.0
  %11956 = vmatpush1.msra.mxu0 0.0
  %11957 = vmatprep.subr.mxu0 0.0
  %11958 = vmatpush1.msra.mxu0 0.0
  %11959 = vmatprep.subr.mxu0 0.0
  %11960 = vmatpush1.msra.mxu0 0.0
  %11961 = vmatprep.subr.mxu0 0.0
  %11962 = vmatpush1.msra.mxu0 0.0
  %11963 = vmatprep.subr.mxu0 0.0
  %11964 = vmatpush1.msra.mxu0 0.0
  %11965 = vmatprep.subr.mxu0 0.0
  %11966 = vmatpush1.msra.mxu0 0.0
  %11967 = vmatprep.subr.mxu0 0.0
  %11968 = vmatpush1.msra.mxu0 0.0
  %11969 = vmatprep.subr.mxu0 0.0
  %11970 = vmatpush1.msra.mxu0 0.0
  %11971 = vmatprep.subr.mxu0 0.0
  %11972 = vmatpush1.msra.mxu0 0.0
  %11973 = vmatprep.subr.mxu0 0.0
  %11974 = vmatpush1.msra.mxu0 0.0
  %11975 = vmatprep.subr.mxu0 0.0
  %11976 = vmatpush1.msra.mxu0 0.0
  %11977 = vmatprep.subr.mxu0 0.0
  %11978 = vmatpush1.msra.mxu0 0.0
  %11979 = vmatprep.subr.mxu0 0.0
  %11980 = vmatpush1.msra.mxu0 0.0
  %11981 = vmatprep.subr.mxu0 0.0
  %11982 = vmatpush1.msra.mxu0 0.0
  %11983 = vmatprep.subr.mxu0 0.0
  %11984 = vmatpush1.msra.mxu0 0.0
  %11985 = vmatprep.mubr.f32.mxu0 0.0
  %v11986 = vand.u32 %v11820, 4294901760
  %11987 = vmatmul.mubr.f32.gmra.mrb[0].mxu0 %v11986
  %v11988 = vpop.f32.mrb[0].mxu0
  %v11989 = vadd.f32 %v11898, %v11988
  %v11990 = vpop.f32.mrb[0].mxu0
  %11991 = vdwg.mxu0
  %11992 = vmatprep.subr.mxu0 0.0
  %v11993 = vand.u32 %v51, 4294901760
  %v11994 = vsub.f32 %v51, %v11993
  %11995 = vmatpush1.msra.mxu0 %v11994
  %11996 = vmatprep.subr.mxu0 0.0
  %v11997 = vand.u32 %v52, 4294901760
  %v11998 = vsub.f32 %v52, %v11997
  %11999 = vmatpush1.msra.mxu0 %v11998
  %12000 = vmatprep.subr.mxu0 0.0
  %v12001 = vand.u32 %v53, 4294901760
  %v12002 = vsub.f32 %v53, %v12001
  %12003 = vmatpush1.msra.mxu0 %v12002
  %12004 = vmatprep.subr.mxu0 0.0
  %v12005 = vand.u32 %v54, 4294901760
  %v12006 = vsub.f32 %v54, %v12005
  %12007 = vmatpush1.msra.mxu0 %v12006
  %12008 = vmatprep.subr.mxu0 0.0
  %12009 = vmatpush1.msra.mxu0 0.0
  %12010 = vmatprep.subr.mxu0 0.0
  %12011 = vmatpush1.msra.mxu0 0.0
  %12012 = vmatprep.subr.mxu0 0.0
  %12013 = vmatpush1.msra.mxu0 0.0
  %12014 = vmatprep.subr.mxu0 0.0
  %12015 = vmatpush1.msra.mxu0 0.0
  %12016 = vmatprep.subr.mxu0 0.0
  %12017 = vmatpush1.msra.mxu0 0.0
  %12018 = vmatprep.subr.mxu0 0.0
  %12019 = vmatpush1.msra.mxu0 0.0
  %12020 = vmatprep.subr.mxu0 0.0
  %12021 = vmatpush1.msra.mxu0 0.0
  %12022 = vmatprep.subr.mxu0 0.0
  %12023 = vmatpush1.msra.mxu0 0.0
  %12024 = vmatprep.subr.mxu0 0.0
  %12025 = vmatpush1.msra.mxu0 0.0
  %12026 = vmatprep.subr.mxu0 0.0
  %12027 = vmatpush1.msra.mxu0 0.0
  %12028 = vmatprep.subr.mxu0 0.0
  %12029 = vmatpush1.msra.mxu0 0.0
  %12030 = vmatprep.subr.mxu0 0.0
  %12031 = vmatpush1.msra.mxu0 0.0
  %12032 = vmatprep.subr.mxu0 0.0
  %12033 = vmatpush1.msra.mxu0 0.0
  %12034 = vmatprep.subr.mxu0 0.0
  %12035 = vmatpush1.msra.mxu0 0.0
  %12036 = vmatprep.subr.mxu0 0.0
  %12037 = vmatpush1.msra.mxu0 0.0
  %12038 = vmatprep.subr.mxu0 0.0
  %12039 = vmatpush1.msra.mxu0 0.0
  %12040 = vmatprep.subr.mxu0 0.0
  %12041 = vmatpush1.msra.mxu0 0.0
  %12042 = vmatprep.subr.mxu0 0.0
  %12043 = vmatpush1.msra.mxu0 0.0
  %12044 = vmatprep.subr.mxu0 0.0
  %12045 = vmatpush1.msra.mxu0 0.0
  %12046 = vmatprep.subr.mxu0 0.0
  %12047 = vmatpush1.msra.mxu0 0.0
  %12048 = vmatprep.subr.mxu0 0.0
  %12049 = vmatpush1.msra.mxu0 0.0
  %12050 = vmatprep.subr.mxu0 0.0
  %12051 = vmatpush1.msra.mxu0 0.0
  %12052 = vmatprep.subr.mxu0 0.0
  %12053 = vmatpush1.msra.mxu0 0.0
  %12054 = vmatprep.subr.mxu0 0.0
  %12055 = vmatpush1.msra.mxu0 0.0
  %12056 = vmatprep.subr.mxu0 0.0
  %12057 = vmatpush1.msra.mxu0 0.0
  %12058 = vmatprep.subr.mxu0 0.0
  %12059 = vmatpush1.msra.mxu0 0.0
  %12060 = vmatprep.subr.mxu0 0.0
  %12061 = vmatpush1.msra.mxu0 0.0
  %12062 = vmatprep.subr.mxu0 0.0
  %12063 = vmatpush1.msra.mxu0 0.0
  %12064 = vmatprep.mubr.f32.mxu0 0.0
  %v12065 = vand.u32 %v11820, 4294901760
  %v12066 = vsub.f32 %v11820, %v12065
  %12067 = vmatmul.mubr.f32.gmra.mrb[0].mxu0 %v12066
  %v12068 = vpop.f32.mrb[0].mxu0
  %v12069 = vadd.f32 %v11989, %v12068
  %v12070 = vpop.f32.mrb[0].mxu0
  %12071 = vdwg.mxu0
  %12072 = vmatprep.subr.mxu0 0.0
  %v12073 = vand.u32 %v51, 4294901760
  %12074 = vmatpush1.msra.mxu0 %v12073
  %12075 = vmatprep.subr.mxu0 0.0
  %v12076 = vand.u32 %v52, 4294901760
  %12077 = vmatpush1.msra.mxu0 %v12076
  %12078 = vmatprep.subr.mxu0 0.0
  %v12079 = vand.u32 %v53, 4294901760
  %12080 = vmatpush1.msra.mxu0 %v12079
  %12081 = vmatprep.subr.mxu0 0.0
  %v12082 = vand.u32 %v54, 4294901760
  %12083 = vmatpush1.msra.mxu0 %v12082
  %12084 = vmatprep.subr.mxu0 0.0
  %12085 = vmatpush1.msra.mxu0 0.0
  %12086 = vmatprep.subr.mxu0 0.0
  %12087 = vmatpush1.msra.mxu0 0.0
  %12088 = vmatprep.subr.mxu0 0.0
  %12089 = vmatpush1.msra.mxu0 0.0
  %12090 = vmatprep.subr.mxu0 0.0
  %12091 = vmatpush1.msra.mxu0 0.0
  %12092 = vmatprep.subr.mxu0 0.0
  %12093 = vmatpush1.msra.mxu0 0.0
  %12094 = vmatprep.subr.mxu0 0.0
  %12095 = vmatpush1.msra.mxu0 0.0
  %12096 = vmatprep.subr.mxu0 0.0
  %12097 = vmatpush1.msra.mxu0 0.0
  %12098 = vmatprep.subr.mxu0 0.0
  %12099 = vmatpush1.msra.mxu0 0.0
  %12100 = vmatprep.subr.mxu0 0.0
  %12101 = vmatpush1.msra.mxu0 0.0
  %12102 = vmatprep.subr.mxu0 0.0
  %12103 = vmatpush1.msra.mxu0 0.0
  %12104 = vmatprep.subr.mxu0 0.0
  %12105 = vmatpush1.msra.mxu0 0.0
  %12106 = vmatprep.subr.mxu0 0.0
  %12107 = vmatpush1.msra.mxu0 0.0
  %12108 = vmatprep.subr.mxu0 0.0
  %12109 = vmatpush1.msra.mxu0 0.0
  %12110 = vmatprep.subr.mxu0 0.0
  %12111 = vmatpush1.msra.mxu0 0.0
  %12112 = vmatprep.subr.mxu0 0.0
  %12113 = vmatpush1.msra.mxu0 0.0
  %12114 = vmatprep.subr.mxu0 0.0
  %12115 = vmatpush1.msra.mxu0 0.0
  %12116 = vmatprep.subr.mxu0 0.0
  %12117 = vmatpush1.msra.mxu0 0.0
  %12118 = vmatprep.subr.mxu0 0.0
  %12119 = vmatpush1.msra.mxu0 0.0
  %12120 = vmatprep.subr.mxu0 0.0
  %12121 = vmatpush1.msra.mxu0 0.0
  %12122 = vmatprep.subr.mxu0 0.0
  %12123 = vmatpush1.msra.mxu0 0.0
  %12124 = vmatprep.subr.mxu0 0.0
  %12125 = vmatpush1.msra.mxu0 0.0
  %12126 = vmatprep.subr.mxu0 0.0
  %12127 = vmatpush1.msra.mxu0 0.0
  %12128 = vmatprep.subr.mxu0 0.0
  %12129 = vmatpush1.msra.mxu0 0.0
  %12130 = vmatprep.subr.mxu0 0.0
  %12131 = vmatpush1.msra.mxu0 0.0
  %12132 = vmatprep.subr.mxu0 0.0
  %12133 = vmatpush1.msra.mxu0 0.0
  %12134 = vmatprep.subr.mxu0 0.0
  %12135 = vmatpush1.msra.mxu0 0.0
  %12136 = vmatprep.subr.mxu0 0.0
  %12137 = vmatpush1.msra.mxu0 0.0
  %12138 = vmatprep.subr.mxu0 0.0
  %12139 = vmatpush1.msra.mxu0 0.0
  %12140 = vmatprep.mubr.f32.mxu0 0.0
  %v12141 = vand.u32 %v11820, 4294901760
  %v12142 = vsub.f32 %v11820, %v12141
  %v12143 = vand.u32 %v12142, 4294901760
  %12144 = vmatmul.mubr.f32.gmra.mrb[0].mxu0 %v12143
  %v12145 = vpop.f32.mrb[0].mxu0
  %v12146 = vadd.f32 %v12069, %v12145
  %v12147 = vpop.f32.mrb[0].mxu0
  %12148 = vdwg.mxu0
  %12149 = vmatprep.subr.mxu0 0.0
  %v12150 = vand.u32 %v51, 4294901760
  %v12151 = vsub.f32 %v51, %v12150
  %v12152 = vand.u32 %v12151, 4294901760
  %12153 = vmatpush1.msra.mxu0 %v12152
  %12154 = vmatprep.subr.mxu0 0.0
  %v12155 = vand.u32 %v52, 4294901760
  %v12156 = vsub.f32 %v52, %v12155
  %v12157 = vand.u32 %v12156, 4294901760
  %12158 = vmatpush1.msra.mxu0 %v12157
  %12159 = vmatprep.subr.mxu0 0.0
  %v12160 = vand.u32 %v53, 4294901760
  %v12161 = vsub.f32 %v53, %v12160
  %v12162 = vand.u32 %v12161, 4294901760
  %12163 = vmatpush1.msra.mxu0 %v12162
  %12164 = vmatprep.subr.mxu0 0.0
  %v12165 = vand.u32 %v54, 4294901760
  %v12166 = vsub.f32 %v54, %v12165
  %v12167 = vand.u32 %v12166, 4294901760
  %12168 = vmatpush1.msra.mxu0 %v12167
  %12169 = vmatprep.subr.mxu0 0.0
  %12170 = vmatpush1.msra.mxu0 0.0
  %12171 = vmatprep.subr.mxu0 0.0
  %12172 = vmatpush1.msra.mxu0 0.0
  %12173 = vmatprep.subr.mxu0 0.0
  %12174 = vmatpush1.msra.mxu0 0.0
  %12175 = vmatprep.subr.mxu0 0.0
  %12176 = vmatpush1.msra.mxu0 0.0
  %12177 = vmatprep.subr.mxu0 0.0
  %12178 = vmatpush1.msra.mxu0 0.0
  %12179 = vmatprep.subr.mxu0 0.0
  %12180 = vmatpush1.msra.mxu0 0.0
  %12181 = vmatprep.subr.mxu0 0.0
  %12182 = vmatpush1.msra.mxu0 0.0
  %12183 = vmatprep.subr.mxu0 0.0
  %12184 = vmatpush1.msra.mxu0 0.0
  %12185 = vmatprep.subr.mxu0 0.0
  %12186 = vmatpush1.msra.mxu0 0.0
  %12187 = vmatprep.subr.mxu0 0.0
  %12188 = vmatpush1.msra.mxu0 0.0
  %12189 = vmatprep.subr.mxu0 0.0
  %12190 = vmatpush1.msra.mxu0 0.0
  %12191 = vmatprep.subr.mxu0 0.0
  %12192 = vmatpush1.msra.mxu0 0.0
  %12193 = vmatprep.subr.mxu0 0.0
  %12194 = vmatpush1.msra.mxu0 0.0
  %12195 = vmatprep.subr.mxu0 0.0
  %12196 = vmatpush1.msra.mxu0 0.0
  %12197 = vmatprep.subr.mxu0 0.0
  %12198 = vmatpush1.msra.mxu0 0.0
  %12199 = vmatprep.subr.mxu0 0.0
  %12200 = vmatpush1.msra.mxu0 0.0
  %12201 = vmatprep.subr.mxu0 0.0
  %12202 = vmatpush1.msra.mxu0 0.0
  %12203 = vmatprep.subr.mxu0 0.0
  %12204 = vmatpush1.msra.mxu0 0.0
  %12205 = vmatprep.subr.mxu0 0.0
  %12206 = vmatpush1.msra.mxu0 0.0
  %12207 = vmatprep.subr.mxu0 0.0
  %12208 = vmatpush1.msra.mxu0 0.0
  %12209 = vmatprep.subr.mxu0 0.0
  %12210 = vmatpush1.msra.mxu0 0.0
  %12211 = vmatprep.subr.mxu0 0.0
  %12212 = vmatpush1.msra.mxu0 0.0
  %12213 = vmatprep.subr.mxu0 0.0
  %12214 = vmatpush1.msra.mxu0 0.0
  %12215 = vmatprep.subr.mxu0 0.0
  %12216 = vmatpush1.msra.mxu0 0.0
  %12217 = vmatprep.subr.mxu0 0.0
  %12218 = vmatpush1.msra.mxu0 0.0
  %12219 = vmatprep.subr.mxu0 0.0
  %12220 = vmatpush1.msra.mxu0 0.0
  %12221 = vmatprep.subr.mxu0 0.0
  %12222 = vmatpush1.msra.mxu0 0.0
  %12223 = vmatprep.subr.mxu0 0.0
  %12224 = vmatpush1.msra.mxu0 0.0
  %12225 = vmatprep.mubr.f32.mxu0 0.0
  %v12226 = vand.u32 %v11820, 4294901760
  %12227 = vmatmul.mubr.f32.gmra.mrb[0].mxu0 %v12226
  %v12228 = vpop.f32.mrb[0].mxu0
  %v12229 = vadd.f32 %v12146, %v12228
  %v12230 = vpop.f32.mrb[0].mxu0
  %12231 = vdwg.mxu0
  %12232 = vmatprep.subr.mxu0 0.0
  %v12233 = vand.u32 %v51, 4294901760
  %12234 = vmatpush1.msra.mxu0 %v12233
  %12235 = vmatprep.subr.mxu0 0.0
  %v12236 = vand.u32 %v52, 4294901760
  %12237 = vmatpush1.msra.mxu0 %v12236
  %12238 = vmatprep.subr.mxu0 0.0
  %v12239 = vand.u32 %v53, 4294901760
  %12240 = vmatpush1.msra.mxu0 %v12239
  %12241 = vmatprep.subr.mxu0 0.0
  %v12242 = vand.u32 %v54, 4294901760
  %12243 = vmatpush1.msra.mxu0 %v12242
  %12244 = vmatprep.subr.mxu0 0.0
  %12245 = vmatpush1.msra.mxu0 0.0
  %12246 = vmatprep.subr.mxu0 0.0
  %12247 = vmatpush1.msra.mxu0 0.0
  %12248 = vmatprep.subr.mxu0 0.0
  %12249 = vmatpush1.msra.mxu0 0.0
  %12250 = vmatprep.subr.mxu0 0.0
  %12251 = vmatpush1.msra.mxu0 0.0
  %12252 = vmatprep.subr.mxu0 0.0
  %12253 = vmatpush1.msra.mxu0 0.0
  %12254 = vmatprep.subr.mxu0 0.0
  %12255 = vmatpush1.msra.mxu0 0.0
  %12256 = vmatprep.subr.mxu0 0.0
  %12257 = vmatpush1.msra.mxu0 0.0
  %12258 = vmatprep.subr.mxu0 0.0
  %12259 = vmatpush1.msra.mxu0 0.0
  %12260 = vmatprep.subr.mxu0 0.0
  %12261 = vmatpush1.msra.mxu0 0.0
  %12262 = vmatprep.subr.mxu0 0.0
  %12263 = vmatpush1.msra.mxu0 0.0
  %12264 = vmatprep.subr.mxu0 0.0
  %12265 = vmatpush1.msra.mxu0 0.0
  %12266 = vmatprep.subr.mxu0 0.0
  %12267 = vmatpush1.msra.mxu0 0.0
  %12268 = vmatprep.subr.mxu0 0.0
  %12269 = vmatpush1.msra.mxu0 0.0
  %12270 = vmatprep.subr.mxu0 0.0
  %12271 = vmatpush1.msra.mxu0 0.0
  %12272 = vmatprep.subr.mxu0 0.0
  %12273 = vmatpush1.msra.mxu0 0.0
  %12274 = vmatprep.subr.mxu0 0.0
  %12275 = vmatpush1.msra.mxu0 0.0
  %12276 = vmatprep.subr.mxu0 0.0
  %12277 = vmatpush1.msra.mxu0 0.0
  %12278 = vmatprep.subr.mxu0 0.0
  %12279 = vmatpush1.msra.mxu0 0.0
  %12280 = vmatprep.subr.mxu0 0.0
  %12281 = vmatpush1.msra.mxu0 0.0
  %12282 = vmatprep.subr.mxu0 0.0
  %12283 = vmatpush1.msra.mxu0 0.0
  %12284 = vmatprep.subr.mxu0 0.0
  %12285 = vmatpush1.msra.mxu0 0.0
  %12286 = vmatprep.subr.mxu0 0.0
  %12287 = vmatpush1.msra.mxu0 0.0
  %12288 = vmatprep.subr.mxu0 0.0
  %12289 = vmatpush1.msra.mxu0 0.0
  %12290 = vmatprep.subr.mxu0 0.0
  %12291 = vmatpush1.msra.mxu0 0.0
  %12292 = vmatprep.subr.mxu0 0.0
  %12293 = vmatpush1.msra.mxu0 0.0
  %12294 = vmatprep.subr.mxu0 0.0
  %12295 = vmatpush1.msra.mxu0 0.0
  %12296 = vmatprep.subr.mxu0 0.0
  %12297 = vmatpush1.msra.mxu0 0.0
  %12298 = vmatprep.subr.mxu0 0.0
  %12299 = vmatpush1.msra.mxu0 0.0
  %12300 = vmatprep.mubr.f32.mxu0 0.0
  %v12301 = vand.u32 %v11820, 4294901760
  %12302 = vmatmul.mubr.f32.gmra.mrb[0].mxu0 %v12301
  %v12303 = vpop.f32.mrb[0].mxu0
  %v12304 = vadd.f32 %v12229, %v12303
  %v12305 = vpop.f32.mrb[0].mxu0
  %12306 = vdwg.mxu0
  %v12307 = vadd.f32 %v11814, %v12304
  %v12308 = vmul.f32 %v12307, %v40
  %v12309 = vxor.u32 %v12308, 2147483648
  %v12310 = vmul.f32 %v12309, 1.442695
  %v12311 = vpow.pop %v12310
  %v12312 = vadd.f32 %v12311, 1.0
  %v12313 = vrcp.pop %v12312
  %v12314 = vmul.f32 1.0, %v12313
  %v12315 = vmul.f32 %v12314, 2.0
  %v12316 = vsub.f32 %v12315, 1.0
  %v12317 = vsel %vm39, %v12316, %v12314
  %v12318 = vmul.f32 %v12317, %v10800
  %12320 = vrot.lane.b32.xlu0 %v12317, 64
  %v12321 = vpop.permute.xlu0 %12320
  %v12323 = vmul.f32 %v12317, %v12321
  %12325 = vrot.lane.b32.xlu0 %v12323, 32
  %v12326 = vpop.permute.xlu0 %12325
  %v12328 = vadd.f32 %v12318, %v12326
  %v12329 = vtanh.pop %v12328
  %12331 = vrot.lane.b32.xlu0 %v12329, 64
  %v12332 = vpop.permute.xlu0 %12331
  %v12334 = vmul.f32 %v12317, %v12332
  %v12335 = vrot.slane %v3170, 6
  %v12337 = vrot.slane %v4698, 4
  %v12339 = vrot.slane %v6226, 2
  %v12341 = vrot.slane %v9278, 6
  %v12343 = vrot.slane %v10806, 4
  %v12346 = vrot.slane %v12334, 2
  %vm12348 = vcmask 1041408
  %v12349 = vsel %vm12348, %v1642, %v12335
  %vm12350 = vcmask 1043456
  %v12351 = vsel %vm12350, %v12349, %v12337
  %vm12352 = vcmask 1045504
  %v12353 = vsel %vm12352, %v12351, %v12339
  %v12354 = vsel %vm12348, %v7750, %v12341
  %v12355 = vsel %vm12350, %v12354, %v12343
  %v12356 = vsel %vm12352, %v12355, %v12346
  %12359 = vrot.lane.b32.xlu0 %v12353, 32
  %v12360 = vpop.permute.xlu0 %12359
  %12361 = vrot.lane.b32.xlu0 %v12356, 32
  %v12362 = vpop.permute.xlu0 %12361
  %12365 = vst.msk [vmem:[%s9] sm:$0xff] %vm117, %v12360
  %12366 = vst.msk [vmem:[%s9 + $0x8] sm:$0xff] %vm117, %v12362
  %v12367 = vpack.c.bf16 %v12356, %v12353
  %v12368 = vld [vmem:[%s7] sm:$0xf]
  %v12369 = vld [vmem:[%s7 + $0x4] sm:$0xf]
  %v12370 = vld [vmem:[%s7 + $0x8] sm:$0xf]
  %v12371 = vld [vmem:[%s7 + $0xc] sm:$0xf]
  %v12372 = vld [vmem:[%s8] sm:$0x1]
  %v12374 = vlaneseq
  %v12375 = vshrl.u32 %v12374, 7
  %v12376 = vsub.s32 0, %v12375
  %v12377 = vrot.slane %v12372, %v12376
  %12380 = vrot.lane.b32.xlu0 %v12367, 32
  %v12381 = vpop.permute.xlu0 %12380
  %v12386 = vunpack.c.l.b16 %v12368
  %v12387 = vunpack.c.l.b16 %v12369
  %v12388 = vunpack.c.l.b16 %v12370
  %v12389 = vunpack.c.l.b16 %v12371
  %v12390 = vpack.c.b16 %v12387, %v12386
  %v12391 = vpack.c.b16 %v12389, %v12388
  %v12395 = vsel %vm117, %v12381, 0
  %12397 = vmatprep.subr.bf16.mxu0 0
  %12398 = vmatpush1.bf16.msra.mxu0 %v12390
  %12399 = vmatprep.subr.bf16.mxu0 0
  %12400 = vmatpush1.bf16.msra.mxu0 %v12391
  %12401 = vmatprep.subr.bf16.mxu0 0
  %12402 = vmatpush1.bf16.msra.mxu0 0
  %12403 = vmatprep.subr.bf16.mxu0 0
  %12404 = vmatpush1.bf16.msra.mxu0 0
  %12405 = vmatprep.subr.bf16.mxu0 0
  %12406 = vmatpush1.bf16.msra.mxu0 0
  %12407 = vmatprep.subr.bf16.mxu0 0
  %12408 = vmatpush1.bf16.msra.mxu0 0
  %12409 = vmatprep.subr.bf16.mxu0 0
  %12410 = vmatpush1.bf16.msra.mxu0 0
  %12411 = vmatprep.subr.bf16.mxu0 0
  %12412 = vmatpush1.bf16.msra.mxu0 0
  %12413 = vmatprep.subr.bf16.mxu0 0
  %12414 = vmatpush1.bf16.msra.mxu0 0
  %12415 = vmatprep.subr.bf16.mxu0 0
  %12416 = vmatpush1.bf16.msra.mxu0 0
  %12417 = vmatprep.subr.bf16.mxu0 0
  %12418 = vmatpush1.bf16.msra.mxu0 0
  %12419 = vmatprep.subr.bf16.mxu0 0
  %12420 = vmatpush1.bf16.msra.mxu0 0
  %12421 = vmatprep.subr.bf16.mxu0 0
  %12422 = vmatpush1.bf16.msra.mxu0 0
  %12423 = vmatprep.subr.bf16.mxu0 0
  %12424 = vmatpush1.bf16.msra.mxu0 0
  %12425 = vmatprep.subr.bf16.mxu0 0
  %12426 = vmatpush1.bf16.msra.mxu0 0
  %12427 = vmatprep.subr.bf16.mxu0 0
  %12428 = vmatpush1.bf16.msra.mxu0 0
  %12429 = vmatprep.mubr.bf16.mxu0 0
  %12430 = vmatmul.mubr.bf16.gmra.mrb[0].mxu0 %v12395
  %v12431 = vpop.f32.mrb[0].mxu0
  %v12432 = vadd.f32 %v12377, %v12431
  %v12433 = vpop.f32.mrb[0].mxu0
  %v12434 = vpop.f32.mrb[0].mxu0
  %v12435 = vadd.f32 %v12377, %v12434
  %v12436 = vpop.f32.mrb[0].mxu0
  %12437 = vdwg.mxu0
  %12438 = vst.msk [vmem:[%s10] sm:$0xff] %vm72, %v12432
  %12439 = vst.msk [vmem:[%s10 + $0x8] sm:$0xff] %vm72, %v12435
  // Predicated region
  $region38: #{apc_lstm_forward.1} parent=0 // pred_check
    _
  $region39: #{apc_lstm_forward.1} parent=0 // pred_check_branch
    %12441 = sbr.rel (0) target = $region41
  $region40: #{apc_lstm_forward.1} parent=0 // pred_region
    _
  $region41: #{apc_lstm_forward.1} parent=0 // pred_fallthru
    _
  // Predicated region
  $region42: #{apc_lstm_forward.1} parent=0 // pred_check
    _
  $region43: #{apc_lstm_forward.1} parent=0 // pred_check_branch
    %12443 = sbr.rel (0) target = $region45
  $region44: #{apc_lstm_forward.1} parent=0 // pred_region
    _
  $region45: #{apc_lstm_forward.1} parent=0 // pred_fallthru
    _
  // Predicated region
  $region46: #{apc_lstm_forward.1} parent=0 // pred_check
    _
  $region47: #{apc_lstm_forward.1} parent=0 // pred_check_branch
    %12445 = sbr.rel (0) target = $region49
  $region48: #{apc_lstm_forward.1} parent=0 // pred_region
    _
  $region49: #{apc_lstm_forward.1} parent=0 // pred_fallthru
    _
  // Predicated region
  $region50: #{apc_lstm_forward.1} parent=0 // pred_check
    _
  $region51: #{apc_lstm_forward.1} parent=0 // pred_check_branch
    %12447 = sbr.rel (0) target = $region53
  $region52: #{apc_lstm_forward.1} parent=0 // pred_region
    _
  $region53: #{apc_lstm_forward.1} parent=0 // pred_fallthru
    _

</llo_original>
